<compile_context>
chip_gen: v7x
topology: tpu7x:2x2x1
jax: 0.10.0
libtpu: 0.0.40
codegen_flags: <defaults>
</compile_context>

<pallas_src>
import functools

import jax
import jax.numpy as jnp
from jax import lax
from jax.experimental import pallas as pl
from jax.experimental.pallas import tpu as pltpu

NEG_SLOPE = 0.1
BN_EPS = 1e-5

# (H, W, Cin, Cout) of each block's conv input (for a 1x16x16 input image).
BLOCK_GEOM = ((16, 16, 1, 128), (8, 8, 128, 64), (4, 4, 64, 32))


def _log2(v: int) -> int:
    l = v.bit_length() - 1
    assert (1 << l) == v, v
    return l


def _round_up(v: int, m: int) -> int:
    return (v + m - 1) // m * m


def _margin(w: int) -> int:
    # >= W+1 rows of slack on each side for the shifted 3x3 tap reads.
    return _round_up(w + 1, 8)


def _pool_tail(w: int) -> int:
    # >= W+2 extra rows so the +1 / +w / +w+1 shifted pool reads stay in range.
    return _round_up(w + 2, 8)


# ---------------------------------------------------------------------------
# In-kernel helpers
# ---------------------------------------------------------------------------
def _conv_bn_lrelu_im2col(ybuf_ref, patch_ref, w_ref, s_ref, b_ref,
                          n, h, w, cin, cout):
    """3x3 same-pad conv + folded bias/BN + LeakyReLU via ONE merged-K matmul.

    ybuf_ref : (2*marg + m, cin) bf16; activation staged at rows [marg, marg+m),
               rows ordered (image, row, col). Margins are never read unmasked.
    patch_ref: (m, 9*cin) bf16 scratch; column block t = dy*3+dx.
    Returns (m, cout) float32.
    """
    m = n * h * w
    marg = _margin(w)

    # Hoisted (m,1) coordinate masks: one AND + one lane-broadcast select/tap.
    rows = lax.broadcasted_iota(jnp.int32, (m, 1), 0)
    h_idx = (rows >> _log2(w)) & (h - 1)
    w_idx = rows & (w - 1)
    hmask = [(h_idx >= 1 - dy) & (h_idx <= h - dy) for dy in range(3)]
    wmask = [(w_idx >= 1 - dx) & (w_idx <= w - dx) for dx in range(3)]

    for dy in range(3):
        for dx in range(3):
            t = dy * 3 + dx
            off = (dy - 1) * w + (dx - 1)
            tap = ybuf_ref[pl.ds(marg + off, m), :]              # (m, cin) bf16
            valid = hmask[dy] & wmask[dx]                        # (m, 1)
            # Select (not multiply) so uninitialised margin garbage can't leak.
            patch_ref[:, t * cin:(t + 1) * cin] = jnp.where(
                valid, tap, jnp.zeros_like(tap))

    acc = jnp.dot(patch_ref[...], w_ref[...],
                  preferred_element_type=jnp.float32)            # (m, cout) f32
    z = acc * s_ref[...] + b_ref[...]                            # bias + BN
    return jnp.where(z > 0, z, NEG_SLOPE * z)                    # LeakyReLU(0.1)


def _maxpool2x2(pbuf_ref, sel_ref, z, n, h, w):
    """2x2 / stride-2 max pool on the flat (m, c) activation z.

    The 2x2-neighbour max uses three shifted sublane reads + jnp.maximum (VPU),
    then ONE host-precomputed 0/1 bf16 selection matmul compacts the rows.
    Returns (n*(h//2)*(w//2), c) float32.
    """
    m = n * h * w
    c = z.shape[1]
    tail = pbuf_ref.shape[0] - m

    zb = z.astype(jnp.bfloat16)
    pbuf_ref[pl.ds(0, m), :] = zb
    # Zero only the tail rows: the (discarded) trailing neighbour-max rows read
    # past the data and garbage there would reach the sel matmul (0 * NaN).
    pbuf_ref[pl.ds(m, tail), :] = jnp.zeros((tail, c), jnp.bfloat16)

    ymax = jnp.maximum(
        jnp.maximum(zb, pbuf_ref[pl.ds(1, m), :]),
        jnp.maximum(pbuf_ref[pl.ds(w, m), :], pbuf_ref[pl.ds(w + 1, m), :]))
    return jnp.dot(sel_ref[...], ymax, preferred_element_type=jnp.float32)


def _cnn_kernel(p1_ref, w1_ref, s1_ref, b1_ref,
                w2_ref, s2_ref, b2_ref,
                w3_ref, s3_ref, b3_ref,
                sel1_ref, sel2_ref, sel3_ref,
                out_ref,
                pbuf1, ybuf2, patch2, pbuf2, ybuf3, patch3, pbuf3,
                *, batch):
    n = batch
    (h1, w1s, _, _), (h2, w2s, ci2, c2), (h3, w3s, ci3, c3) = BLOCK_GEOM

    # ---- Block 1: host-built im2col patch (9 taps padded to 16 on K) -> one
    #      MXU matmul + folded BN + LeakyReLU.
    z1 = jnp.dot(p1_ref[...], w1_ref[...], preferred_element_type=jnp.float32)
    z1 = z1 * s1_ref[...] + b1_ref[...]
    z1 = jnp.where(z1 > 0, z1, NEG_SLOPE * z1)
    y1 = _maxpool2x2(pbuf1, sel1_ref, z1, n, h1, w1s)            # (n*64, 128)

    # ---- Block 2
    ybuf2[pl.ds(_margin(w2s), n * h2 * w2s), :] = y1.astype(jnp.bfloat16)
    z2 = _conv_bn_lrelu_im2col(ybuf2, patch2, w2_ref, s2_ref, b2_ref,
                               n, h2, w2s, ci2, c2)
    y2 = _maxpool2x2(pbuf2, sel2_ref, z2, n, h2, w2s)            # (n*16, 64)

    # ---- Block 3
    ybuf3[pl.ds(_margin(w3s), n * h3 * w3s), :] = y2.astype(jnp.bfloat16)
    z3 = _conv_bn_lrelu_im2col(ybuf3, patch3, w3_ref, s3_ref, b3_ref,
                               n, h3, w3s, ci3, c3)
    out_ref[...] = _maxpool2x2(pbuf3, sel3_ref, z3, n, h3, w3s)  # (n*4, 32)


# ---------------------------------------------------------------------------
# Host-side preprocessing + wrapper
# ---------------------------------------------------------------------------
def _make_sel(n, h, w):
    """0/1 bf16 selection matrix gathering row (img, 2i, 2j) of a flat (m,c)."""
    hp, wp = h // 2, w // 2
    mp, m = n * hp * wp, n * h * w
    rp = jnp.arange(mp)
    img = rp // (hp * wp)
    rem = rp % (hp * wp)
    i = rem // wp
    j = rem % wp
    base = img * h * w + 2 * i * w + 2 * j
    return jnp.zeros((mp, m), jnp.bfloat16).at[rp, base].set(1.0)


def _im2col_block1(x_nhwc):
    """(n,16,16,1) -> (n*256, 16) im2col patch (9 taps, zero-padded to K=16)."""
    n, h, w, _ = x_nhwc.shape
    xp = jnp.pad(x_nhwc[..., 0], ((0, 0), (1, 1), (1, 1)))
    cols = [xp[:, dy:dy + h, dx:dx + w] for dy in range(3) for dx in range(3)]
    patch = jnp.stack(cols, axis=-1).reshape(n * h * w, 9)
    return jnp.pad(patch, ((0, 0), (0, 7)))


def cnn_forward(x_nchw, params):
    n, c0, h0, w0 = x_nchw.shape
    assert (c0, h0, w0) == (1, 16, 16)

    x_nhwc = jnp.transpose(x_nchw, (0, 2, 3, 1)).astype(jnp.float32)
    patch1 = _im2col_block1(x_nhwc).astype(jnp.bfloat16)         # (n*256, 16)

    weights = []
    for (h, w, cin, cout), (wgt, b, gamma, beta, mean, var) in zip(BLOCK_GEOM,
                                                                   params):
        # Merged-K im2col weight matrix: row index k = (dy*3+dx)*cin + ci.
        w_mat = jnp.transpose(wgt, (2, 3, 1, 0)).reshape(9 * cin, cout)
        if cin == 1:
            w_mat = jnp.pad(w_mat, ((0, 7), (0, 0)))             # K: 9 -> 16
        scale = gamma / jnp.sqrt(var + BN_EPS)
        bias = (b - mean) * scale + beta
        weights += [w_mat.astype(jnp.bfloat16),
                    scale.reshape(1, cout).astype(jnp.float32),
                    bias.reshape(1, cout).astype(jnp.float32)]

    sels = [_make_sel(n, h, w) for (h, w, _, _) in BLOCK_GEOM]
    inputs = [patch1] + weights + sels

    (h1, w1, _, c1), (h2, w2, ci2, c2), (h3, w3, ci3, c3) = BLOCK_GEOM
    m1, m2, m3 = n * h1 * w1, n * h2 * w2, n * h3 * w3
    scratch = [
        pltpu.VMEM((m1 + _pool_tail(w1), c1), jnp.bfloat16),     # pbuf1
        pltpu.VMEM((2 * _margin(w2) + m2, ci2), jnp.bfloat16),   # ybuf2
        pltpu.VMEM((m2, 9 * ci2), jnp.bfloat16),                 # patch2
        pltpu.VMEM((m2 + _pool_tail(w2), c2), jnp.bfloat16),     # pbuf2
        pltpu.VMEM((2 * _margin(w3) + m3, ci3), jnp.bfloat16),   # ybuf3
        pltpu.VMEM((m3, 9 * ci3), jnp.bfloat16),                 # patch3
        pltpu.VMEM((m3 + _pool_tail(w3), c3), jnp.bfloat16),     # pbuf3
    ]

    out_flat = pl.pallas_call(
        functools.partial(_cnn_kernel, batch=n),
        out_shape=jax.ShapeDtypeStruct((n * 2 * 2, c3), jnp.float32),
        in_specs=[pl.BlockSpec(memory_space=pltpu.MemorySpace.VMEM)] * len(inputs),
        out_specs=pl.BlockSpec(memory_space=pltpu.MemorySpace.VMEM),
        scratch_shapes=scratch,
    )(*inputs)

    out = out_flat.reshape(n, 2, 2, c3)                          # NHWC
    return jnp.transpose(out, (0, 3, 1, 2))                      # NCHW


def init_params(key):
    """Deterministic synthetic parameters for the 3 blocks (1->128->64->32)."""
    specs = [(1, 128), (128, 64), (64, 32)]
    params = []
    for cin, cout in specs:
        key, k1, k2, k3, k4, k5, k6 = jax.random.split(key, 7)
        # He-like scaling keeps activations O(1) through the net.
        w = jax.random.normal(k1, (cout, cin, 3, 3), jnp.float32) / jnp.sqrt(9.0 * cin)
        b = 0.1 * jax.random.normal(k2, (cout,), jnp.float32)
        gamma = 1.0 + 0.1 * jax.random.normal(k3, (cout,), jnp.float32)
        beta = 0.1 * jax.random.normal(k4, (cout,), jnp.float32)
        mean = 0.1 * jax.random.normal(k5, (cout,), jnp.float32)
        var = jax.random.uniform(k6, (cout,), jnp.float32, 0.5, 1.5)
        params.append((w, b, gamma, beta, mean, var))
    return params


def cnn_reference(x_nchw, params, conv_dtype=jnp.float32):
    """Pure-JAX reference.  conv_dtype=bfloat16 reproduces the kernel's
    precision choices (bf16 MXU operands, f32 accumulation, bf16 pre-pool)."""
    y = jnp.transpose(x_nchw, (0, 2, 3, 1)).astype(jnp.float32)
    for (w, b, gamma, beta, mean, var) in params:
        z = lax.conv_general_dilated(
            y.astype(conv_dtype),
            jnp.transpose(w, (2, 3, 1, 0)).astype(conv_dtype),   # HWIO
            window_strides=(1, 1), padding=((1, 1), (1, 1)),
            dimension_numbers=("NHWC", "HWIO", "NHWC"),
            preferred_element_type=jnp.float32)
        z = z + b
        z = (z - mean) / jnp.sqrt(var + BN_EPS) * gamma + beta
        z = jnp.where(z > 0, z, NEG_SLOPE * z)
        z = z.astype(conv_dtype).astype(jnp.float32)             # pre-pool round
        N, H, W, C = z.shape
        y = z.reshape(N, H // 2, 2, W // 2, 2, C).max(axis=(2, 4))
    return jnp.transpose(y, (0, 3, 1, 2))


if __name__ == "__main__":
    key = jax.random.PRNGKey(0)
    kx, kp = jax.random.split(key)
    # Input follows the module: Conv2d(in_channels=1, ...) -> NCHW (2, 1, 16, 16)
    x = jax.random.normal(kx, (2, 1, 16, 16), jnp.float32)
    params = init_params(kp)

    out = jax.jit(cnn_forward)(x, params)
    out = jax.block_until_ready(out)
    assert out.shape == (2, 32, 2, 2), out.shape

    # Tight structural check vs. a reference with the kernel's exact precision
    # choices (bf16 matmul operands, f32 accumulation, bf16 rounding pre-pool).
    ref_bf16 = cnn_reference(x, params, conv_dtype=jnp.bfloat16)
    err_match = float(jnp.max(jnp.abs(out - ref_bf16)))
    assert err_match < 5e-3, f"mismatch vs precision-matched reference: {err_match}"

    # Sanity check vs. the full float32 reference (bounded by bf16 precision).
    ref_f32 = cnn_reference(x, params, conv_dtype=jnp.float32)
    rel = float(jnp.max(jnp.abs(out - ref_f32)) / jnp.max(jnp.abs(ref_f32)))
    assert rel < 5e-2, f"relative error vs float32 reference: {rel}"

    print("KERNEL_OK")
</pallas_src>

<mosaic_0001>
module attributes {stable_mosaic.version = 11 : i64} {
  func.func @_cnn_kernel(%arg0: memref<512x16xbf16, #tpu.memory_space<vmem>>, %arg1: memref<16x128xbf16, #tpu.memory_space<vmem>>, %arg2: memref<1x128xf32, #tpu.memory_space<vmem>>, %arg3: memref<1x128xf32, #tpu.memory_space<vmem>>, %arg4: memref<1152x64xbf16, #tpu.memory_space<vmem>>, %arg5: memref<1x64xf32, #tpu.memory_space<vmem>>, %arg6: memref<1x64xf32, #tpu.memory_space<vmem>>, %arg7: memref<576x32xbf16, #tpu.memory_space<vmem>>, %arg8: memref<1x32xf32, #tpu.memory_space<vmem>>, %arg9: memref<1x32xf32, #tpu.memory_space<vmem>>, %arg10: memref<128x512xbf16, #tpu.memory_space<vmem>>, %arg11: memref<32x128xbf16, #tpu.memory_space<vmem>>, %arg12: memref<8x32xbf16, #tpu.memory_space<vmem>>, %arg13: memref<8x32xf32, #tpu.memory_space<vmem>>, %arg14: memref<536x128xbf16, #tpu.memory_space<vmem>>, %arg15: memref<160x128xbf16, #tpu.memory_space<vmem>>, %arg16: memref<128x1152xbf16, #tpu.memory_space<vmem>>, %arg17: memref<144x64xbf16, #tpu.memory_space<vmem>>, %arg18: memref<48x64xbf16, #tpu.memory_space<vmem>>, %arg19: memref<32x576xbf16, #tpu.memory_space<vmem>>, %arg20: memref<40x32xbf16, #tpu.memory_space<vmem>>) attributes {dimension_semantics = [], scalar_prefetch = 0 : i64, scratch_operands = 7 : i64, tpu.core_type = #tpu.core_type<tc>} {
    %c0 = arith.constant 0 : index
    %c0_0 = arith.constant 0 : index
    %0 = vector.load %arg0[%c0, %c0_0] : memref<512x16xbf16, #tpu.memory_space<vmem>>, vector<512x16xbf16>
    %c0_1 = arith.constant 0 : index
    %c0_2 = arith.constant 0 : index
    %1 = vector.load %arg1[%c0_1, %c0_2] : memref<16x128xbf16, #tpu.memory_space<vmem>>, vector<16x128xbf16>
    %cst = arith.constant dense<0.000000e+00> : vector<512x128xf32>
    %2 = tpu.matmul %0, %1, %cst {dimension_numbers = #tpu.dot_dimension_numbers<[1], [0], [0], [1], [0, 0, 1, 1], [], []>} : vector<512x16xbf16>, vector<16x128xbf16>, vector<512x128xf32> -> vector<512x128xf32>
    %c0_3 = arith.constant 0 : index
    %c0_4 = arith.constant 0 : index
    %3 = vector.load %arg2[%c0_3, %c0_4] : memref<1x128xf32, #tpu.memory_space<vmem>>, vector<1x128xf32>
    %4 = vector.broadcast %3 : vector<1x128xf32> to vector<512x128xf32>
    %5 = arith.mulf %2, %4 : vector<512x128xf32>
    %c0_5 = arith.constant 0 : index
    %c0_6 = arith.constant 0 : index
    %6 = vector.load %arg3[%c0_5, %c0_6] : memref<1x128xf32, #tpu.memory_space<vmem>>, vector<1x128xf32>
    %7 = vector.broadcast %6 : vector<1x128xf32> to vector<512x128xf32>
    %8 = arith.addf %5, %7 : vector<512x128xf32>
    %cst_7 = arith.constant 0.000000e+00 : f32
    %9 = vector.broadcast %cst_7 : f32 to vector<512x128xf32>
    %10 = arith.cmpf ogt, %8, %9 : vector<512x128xf32>
    %cst_8 = arith.constant 1.000000e-01 : f32
    %11 = vector.broadcast %cst_8 : f32 to vector<512x128xf32>
    %12 = arith.mulf %11, %8 : vector<512x128xf32>
    %13 = arith.select %10, %8, %12 : vector<512x128xi1>, vector<512x128xf32>
    %14 = arith.truncf %13 : vector<512x128xf32> to vector<512x128xbf16>
    %c0_9 = arith.constant 0 : index
    %c0_10 = arith.constant 0 : index
    %15 = vector.load %arg14[%c0_9, %c0_10] : memref<536x128xbf16, #tpu.memory_space<vmem>>, vector<512x128xbf16>
    tpu.vector_store %arg14[%c0_9, %c0_10], %14 {strides = array<i32>} : memref<536x128xbf16, #tpu.memory_space<vmem>>, vector<512x128xbf16>,
    %cst_11 = arith.constant 0.000000e+00 : bf16
    %16 = vector.broadcast %cst_11 : bf16 to vector<24x128xbf16>
    %c512 = arith.constant 512 : index
    %c0_12 = arith.constant 0 : index
    %17 = vector.load %arg14[%c512, %c0_12] : memref<536x128xbf16, #tpu.memory_space<vmem>>, vector<24x128xbf16>
    tpu.vector_store %arg14[%c512, %c0_12], %16 {strides = array<i32>} : memref<536x128xbf16, #tpu.memory_space<vmem>>, vector<24x128xbf16>,
    %c1 = arith.constant 1 : index
    %c0_13 = arith.constant 0 : index
    %18 = vector.load %arg14[%c1, %c0_13] : memref<536x128xbf16, #tpu.memory_space<vmem>>, vector<512x128xbf16>
    %19 = arith.maximumf %14, %18 : vector<512x128xbf16>
    %c16 = arith.constant 16 : index
    %c0_14 = arith.constant 0 : index
    %20 = vector.load %arg14[%c16, %c0_14] : memref<536x128xbf16, #tpu.memory_space<vmem>>, vector<512x128xbf16>
    %c17 = arith.constant 17 : index
    %c0_15 = arith.constant 0 : index
    %21 = vector.load %arg14[%c17, %c0_15] : memref<536x128xbf16, #tpu.memory_space<vmem>>, vector<512x128xbf16>
    %22 = arith.maximumf %20, %21 : vector<512x128xbf16>
    %23 = arith.maximumf %19, %22 : vector<512x128xbf16>
    %c0_16 = arith.constant 0 : index
    %c0_17 = arith.constant 0 : index
    %24 = vector.load %arg10[%c0_16, %c0_17] : memref<128x512xbf16, #tpu.memory_space<vmem>>, vector<128x512xbf16>
    %cst_18 = arith.constant dense<0.000000e+00> : vector<128x128xf32>
    %25 = tpu.matmul %24, %23, %cst_18 {dimension_numbers = #tpu.dot_dimension_numbers<[1], [0], [0], [1], [0, 0, 1, 1], [], []>} : vector<128x512xbf16>, vector<512x128xbf16>, vector<128x128xf32> -> vector<128x128xf32>
    %26 = arith.truncf %25 : vector<128x128xf32> to vector<128x128xbf16>
    %c16_19 = arith.constant 16 : index
    %c0_20 = arith.constant 0 : index
    %27 = vector.load %arg15[%c16_19, %c0_20] : memref<160x128xbf16, #tpu.memory_space<vmem>>, vector<128x128xbf16>
    tpu.vector_store %arg15[%c16_19, %c0_20], %26 {strides = array<i32>} : memref<160x128xbf16, #tpu.memory_space<vmem>>, vector<128x128xbf16>,
    %28 = tpu.iota {dimensions = array<i32: 0>} : vector<128x1xi32>
    %c3_i32 = arith.constant 3 : i32
    %29 = vector.broadcast %c3_i32 : i32 to vector<128x1xi32>
    %30 = arith.shrsi %28, %29 : vector<128x1xi32>
    %c7_i32 = arith.constant 7 : i32
    %31 = vector.broadcast %c7_i32 : i32 to vector<128x1xi32>
    %32 = arith.andi %30, %31 : vector<128x1xi32>
    %c7_i32_21 = arith.constant 7 : i32
    %33 = vector.broadcast %c7_i32_21 : i32 to vector<128x1xi32>
    %34 = arith.andi %28, %33 : vector<128x1xi32>
    %c1_i32 = arith.constant 1 : i32
    %35 = vector.broadcast %c1_i32 : i32 to vector<128x1xi32>
    %36 = arith.cmpi sge, %32, %35 : vector<128x1xi32>
    %c8_i32 = arith.constant 8 : i32
    %37 = vector.broadcast %c8_i32 : i32 to vector<128x1xi32>
    %38 = arith.cmpi sle, %32, %37 : vector<128x1xi32>
    %39 = arith.andi %36, %38 : vector<128x1xi1>
    %c0_i32 = arith.constant 0 : i32
    %40 = vector.broadcast %c0_i32 : i32 to vector<128x1xi32>
    %41 = arith.cmpi sge, %32, %40 : vector<128x1xi32>
    %c7_i32_22 = arith.constant 7 : i32
    %42 = vector.broadcast %c7_i32_22 : i32 to vector<128x1xi32>
    %43 = arith.cmpi sle, %32, %42 : vector<128x1xi32>
    %44 = arith.andi %41, %43 : vector<128x1xi1>
    %c-1_i32 = arith.constant -1 : i32
    %45 = vector.broadcast %c-1_i32 : i32 to vector<128x1xi32>
    %46 = arith.cmpi sge, %32, %45 : vector<128x1xi32>
    %c6_i32 = arith.constant 6 : i32
    %47 = vector.broadcast %c6_i32 : i32 to vector<128x1xi32>
    %48 = arith.cmpi sle, %32, %47 : vector<128x1xi32>
    %49 = arith.andi %46, %48 : vector<128x1xi1>
    %c1_i32_23 = arith.constant 1 : i32
    %50 = vector.broadcast %c1_i32_23 : i32 to vector<128x1xi32>
    %51 = arith.cmpi sge, %34, %50 : vector<128x1xi32>
    %c8_i32_24 = arith.constant 8 : i32
    %52 = vector.broadcast %c8_i32_24 : i32 to vector<128x1xi32>
    %53 = arith.cmpi sle, %34, %52 : vector<128x1xi32>
    %54 = arith.andi %51, %53 : vector<128x1xi1>
    %c0_i32_25 = arith.constant 0 : i32
    %55 = vector.broadcast %c0_i32_25 : i32 to vector<128x1xi32>
    %56 = arith.cmpi sge, %34, %55 : vector<128x1xi32>
    %c7_i32_26 = arith.constant 7 : i32
    %57 = vector.broadcast %c7_i32_26 : i32 to vector<128x1xi32>
    %58 = arith.cmpi sle, %34, %57 : vector<128x1xi32>
    %59 = arith.andi %56, %58 : vector<128x1xi1>
    %c-1_i32_27 = arith.constant -1 : i32
    %60 = vector.broadcast %c-1_i32_27 : i32 to vector<128x1xi32>
    %61 = arith.cmpi sge, %34, %60 : vector<128x1xi32>
    %c6_i32_28 = arith.constant 6 : i32
    %62 = vector.broadcast %c6_i32_28 : i32 to vector<128x1xi32>
    %63 = arith.cmpi sle, %34, %62 : vector<128x1xi32>
    %64 = arith.andi %61, %63 : vector<128x1xi1>
    %c7 = arith.constant 7 : index
    %c0_29 = arith.constant 0 : index
    %65 = vector.load %arg15[%c7, %c0_29] : memref<160x128xbf16, #tpu.memory_space<vmem>>, vector<128x128xbf16>
    %66 = arith.andi %39, %54 : vector<128x1xi1>
    %cst_30 = arith.constant 0.000000e+00 : bf16
    %67 = vector.broadcast %cst_30 : bf16 to vector<128x128xbf16>
    %68 = vector.shape_cast %66 : vector<128x1xi1> to vector<128x1xi1>
    %69 = vector.broadcast %68 : vector<128x1xi1> to vector<128x128xi1>
    %70 = arith.select %69, %65, %67 : vector<128x128xi1>, vector<128x128xbf16>
    %c0_31 = arith.constant 0 : index
    %c0_32 = arith.constant 0 : index
    %71 = vector.load %arg16[%c0_31, %c0_32] : memref<128x1152xbf16, #tpu.memory_space<vmem>>, vector<128x128xbf16>
    tpu.vector_store %arg16[%c0_31, %c0_32], %70 {strides = array<i32>} : memref<128x1152xbf16, #tpu.memory_space<vmem>>, vector<128x128xbf16>,
    %c8 = arith.constant 8 : index
    %c0_33 = arith.constant 0 : index
    %72 = vector.load %arg15[%c8, %c0_33] : memref<160x128xbf16, #tpu.memory_space<vmem>>, vector<128x128xbf16>
    %73 = arith.andi %39, %59 : vector<128x1xi1>
    %cst_34 = arith.constant 0.000000e+00 : bf16
    %74 = vector.broadcast %cst_34 : bf16 to vector<128x128xbf16>
    %75 = vector.shape_cast %73 : vector<128x1xi1> to vector<128x1xi1>
    %76 = vector.broadcast %75 : vector<128x1xi1> to vector<128x128xi1>
    %77 = arith.select %76, %72, %74 : vector<128x128xi1>, vector<128x128xbf16>
    %c0_35 = arith.constant 0 : index
    %c128 = arith.constant 128 : index
    %78 = vector.load %arg16[%c0_35, %c128] : memref<128x1152xbf16, #tpu.memory_space<vmem>>, vector<128x128xbf16>
    tpu.vector_store %arg16[%c0_35, %c128], %77 {strides = array<i32>} : memref<128x1152xbf16, #tpu.memory_space<vmem>>, vector<128x128xbf16>,
    %c9 = arith.constant 9 : index
    %c0_36 = arith.constant 0 : index
    %79 = vector.load %arg15[%c9, %c0_36] : memref<160x128xbf16, #tpu.memory_space<vmem>>, vector<128x128xbf16>
    %80 = arith.andi %39, %64 : vector<128x1xi1>
    %cst_37 = arith.constant 0.000000e+00 : bf16
    %81 = vector.broadcast %cst_37 : bf16 to vector<128x128xbf16>
    %82 = vector.shape_cast %80 : vector<128x1xi1> to vector<128x1xi1>
    %83 = vector.broadcast %82 : vector<128x1xi1> to vector<128x128xi1>
    %84 = arith.select %83, %79, %81 : vector<128x128xi1>, vector<128x128xbf16>
    %c0_38 = arith.constant 0 : index
    %c256 = arith.constant 256 : index
    %85 = vector.load %arg16[%c0_38, %c256] : memref<128x1152xbf16, #tpu.memory_space<vmem>>, vector<128x128xbf16>
    tpu.vector_store %arg16[%c0_38, %c256], %84 {strides = array<i32>} : memref<128x1152xbf16, #tpu.memory_space<vmem>>, vector<128x128xbf16>,
    %c15 = arith.constant 15 : index
    %c0_39 = arith.constant 0 : index
    %86 = vector.load %arg15[%c15, %c0_39] : memref<160x128xbf16, #tpu.memory_space<vmem>>, vector<128x128xbf16>
    %87 = arith.andi %44, %54 : vector<128x1xi1>
    %cst_40 = arith.constant 0.000000e+00 : bf16
    %88 = vector.broadcast %cst_40 : bf16 to vector<128x128xbf16>
    %89 = vector.shape_cast %87 : vector<128x1xi1> to vector<128x1xi1>
    %90 = vector.broadcast %89 : vector<128x1xi1> to vector<128x128xi1>
    %91 = arith.select %90, %86, %88 : vector<128x128xi1>, vector<128x128xbf16>
    %c0_41 = arith.constant 0 : index
    %c384 = arith.constant 384 : index
    %92 = vector.load %arg16[%c0_41, %c384] : memref<128x1152xbf16, #tpu.memory_space<vmem>>, vector<128x128xbf16>
    tpu.vector_store %arg16[%c0_41, %c384], %91 {strides = array<i32>} : memref<128x1152xbf16, #tpu.memory_space<vmem>>, vector<128x128xbf16>,
    %c16_42 = arith.constant 16 : index
    %c0_43 = arith.constant 0 : index
    %93 = vector.load %arg15[%c16_42, %c0_43] : memref<160x128xbf16, #tpu.memory_space<vmem>>, vector<128x128xbf16>
    %94 = arith.andi %44, %59 : vector<128x1xi1>
    %cst_44 = arith.constant 0.000000e+00 : bf16
    %95 = vector.broadcast %cst_44 : bf16 to vector<128x128xbf16>
    %96 = vector.shape_cast %94 : vector<128x1xi1> to vector<128x1xi1>
    %97 = vector.broadcast %96 : vector<128x1xi1> to vector<128x128xi1>
    %98 = arith.select %97, %93, %95 : vector<128x128xi1>, vector<128x128xbf16>
    %c0_45 = arith.constant 0 : index
    %c512_46 = arith.constant 512 : index
    %99 = vector.load %arg16[%c0_45, %c512_46] : memref<128x1152xbf16, #tpu.memory_space<vmem>>, vector<128x128xbf16>
    tpu.vector_store %arg16[%c0_45, %c512_46], %98 {strides = array<i32>} : memref<128x1152xbf16, #tpu.memory_space<vmem>>, vector<128x128xbf16>,
    %c17_47 = arith.constant 17 : index
    %c0_48 = arith.constant 0 : index
    %100 = vector.load %arg15[%c17_47, %c0_48] : memref<160x128xbf16, #tpu.memory_space<vmem>>, vector<128x128xbf16>
    %101 = arith.andi %44, %64 : vector<128x1xi1>
    %cst_49 = arith.constant 0.000000e+00 : bf16
    %102 = vector.broadcast %cst_49 : bf16 to vector<128x128xbf16>
    %103 = vector.shape_cast %101 : vector<128x1xi1> to vector<128x1xi1>
    %104 = vector.broadcast %103 : vector<128x1xi1> to vector<128x128xi1>
    %105 = arith.select %104, %100, %102 : vector<128x128xi1>, vector<128x128xbf16>
    %c0_50 = arith.constant 0 : index
    %c640 = arith.constant 640 : index
    %106 = vector.load %arg16[%c0_50, %c640] : memref<128x1152xbf16, #tpu.memory_space<vmem>>, vector<128x128xbf16>
    tpu.vector_store %arg16[%c0_50, %c640], %105 {strides = array<i32>} : memref<128x1152xbf16, #tpu.memory_space<vmem>>, vector<128x128xbf16>,
    %c23 = arith.constant 23 : index
    %c0_51 = arith.constant 0 : index
    %107 = vector.load %arg15[%c23, %c0_51] : memref<160x128xbf16, #tpu.memory_space<vmem>>, vector<128x128xbf16>
    %108 = arith.andi %49, %54 : vector<128x1xi1>
    %cst_52 = arith.constant 0.000000e+00 : bf16
    %109 = vector.broadcast %cst_52 : bf16 to vector<128x128xbf16>
    %110 = vector.shape_cast %108 : vector<128x1xi1> to vector<128x1xi1>
    %111 = vector.broadcast %110 : vector<128x1xi1> to vector<128x128xi1>
    %112 = arith.select %111, %107, %109 : vector<128x128xi1>, vector<128x128xbf16>
    %c0_53 = arith.constant 0 : index
    %c768 = arith.constant 768 : index
    %113 = vector.load %arg16[%c0_53, %c768] : memref<128x1152xbf16, #tpu.memory_space<vmem>>, vector<128x128xbf16>
    tpu.vector_store %arg16[%c0_53, %c768], %112 {strides = array<i32>} : memref<128x1152xbf16, #tpu.memory_space<vmem>>, vector<128x128xbf16>,
    %c24 = arith.constant 24 : index
    %c0_54 = arith.constant 0 : index
    %114 = vector.load %arg15[%c24, %c0_54] : memref<160x128xbf16, #tpu.memory_space<vmem>>, vector<128x128xbf16>
    %115 = arith.andi %49, %59 : vector<128x1xi1>
    %cst_55 = arith.constant 0.000000e+00 : bf16
    %116 = vector.broadcast %cst_55 : bf16 to vector<128x128xbf16>
    %117 = vector.shape_cast %115 : vector<128x1xi1> to vector<128x1xi1>
    %118 = vector.broadcast %117 : vector<128x1xi1> to vector<128x128xi1>
    %119 = arith.select %118, %114, %116 : vector<128x128xi1>, vector<128x128xbf16>
    %c0_56 = arith.constant 0 : index
    %c896 = arith.constant 896 : index
    %120 = vector.load %arg16[%c0_56, %c896] : memref<128x1152xbf16, #tpu.memory_space<vmem>>, vector<128x128xbf16>
    tpu.vector_store %arg16[%c0_56, %c896], %119 {strides = array<i32>} : memref<128x1152xbf16, #tpu.memory_space<vmem>>, vector<128x128xbf16>,
    %c25 = arith.constant 25 : index
    %c0_57 = arith.constant 0 : index
    %121 = vector.load %arg15[%c25, %c0_57] : memref<160x128xbf16, #tpu.memory_space<vmem>>, vector<128x128xbf16>
    %122 = arith.andi %49, %64 : vector<128x1xi1>
    %cst_58 = arith.constant 0.000000e+00 : bf16
    %123 = vector.broadcast %cst_58 : bf16 to vector<128x128xbf16>
    %124 = vector.shape_cast %122 : vector<128x1xi1> to vector<128x1xi1>
    %125 = vector.broadcast %124 : vector<128x1xi1> to vector<128x128xi1>
    %126 = arith.select %125, %121, %123 : vector<128x128xi1>, vector<128x128xbf16>
    %c0_59 = arith.constant 0 : index
    %c1024 = arith.constant 1024 : index
    %127 = vector.load %arg16[%c0_59, %c1024] : memref<128x1152xbf16, #tpu.memory_space<vmem>>, vector<128x128xbf16>
    tpu.vector_store %arg16[%c0_59, %c1024], %126 {strides = array<i32>} : memref<128x1152xbf16, #tpu.memory_space<vmem>>, vector<128x128xbf16>,
    %c0_60 = arith.constant 0 : index
    %c0_61 = arith.constant 0 : index
    %128 = vector.load %arg16[%c0_60, %c0_61] : memref<128x1152xbf16, #tpu.memory_space<vmem>>, vector<128x1152xbf16>
    %c0_62 = arith.constant 0 : index
    %c0_63 = arith.constant 0 : index
    %129 = vector.load %arg4[%c0_62, %c0_63] : memref<1152x64xbf16, #tpu.memory_space<vmem>>, vector<1152x64xbf16>
    %cst_64 = arith.constant dense<0.000000e+00> : vector<128x64xf32>
    %130 = tpu.matmul %128, %129, %cst_64 {dimension_numbers = #tpu.dot_dimension_numbers<[1], [0], [0], [1], [0, 0, 1, 1], [], []>} : vector<128x1152xbf16>, vector<1152x64xbf16>, vector<128x64xf32> -> vector<128x64xf32>
    %c0_65 = arith.constant 0 : index
    %c0_66 = arith.constant 0 : index
    %131 = vector.load %arg5[%c0_65, %c0_66] : memref<1x64xf32, #tpu.memory_space<vmem>>, vector<1x64xf32>
    %132 = vector.broadcast %131 : vector<1x64xf32> to vector<128x64xf32>
    %133 = arith.mulf %130, %132 : vector<128x64xf32>
    %c0_67 = arith.constant 0 : index
    %c0_68 = arith.constant 0 : index
    %134 = vector.load %arg6[%c0_67, %c0_68] : memref<1x64xf32, #tpu.memory_space<vmem>>, vector<1x64xf32>
    %135 = vector.broadcast %134 : vector<1x64xf32> to vector<128x64xf32>
    %136 = arith.addf %133, %135 : vector<128x64xf32>
    %cst_69 = arith.constant 0.000000e+00 : f32
    %137 = vector.broadcast %cst_69 : f32 to vector<128x64xf32>
    %138 = arith.cmpf ogt, %136, %137 : vector<128x64xf32>
    %cst_70 = arith.constant 1.000000e-01 : f32
    %139 = vector.broadcast %cst_70 : f32 to vector<128x64xf32>
    %140 = arith.mulf %139, %136 : vector<128x64xf32>
    %141 = arith.select %138, %136, %140 : vector<128x64xi1>, vector<128x64xf32>
    %142 = arith.truncf %141 : vector<128x64xf32> to vector<128x64xbf16>
    %c0_71 = arith.constant 0 : index
    %c0_72 = arith.constant 0 : index
    %143 = vector.load %arg17[%c0_71, %c0_72] : memref<144x64xbf16, #tpu.memory_space<vmem>>, vector<128x64xbf16>
    tpu.vector_store %arg17[%c0_71, %c0_72], %142 {strides = array<i32>} : memref<144x64xbf16, #tpu.memory_space<vmem>>, vector<128x64xbf16>,
    %cst_73 = arith.constant 0.000000e+00 : bf16
    %144 = vector.broadcast %cst_73 : bf16 to vector<16x64xbf16>
    %c128_74 = arith.constant 128 : index
    %c0_75 = arith.constant 0 : index
    %145 = vector.load %arg17[%c128_74, %c0_75] : memref<144x64xbf16, #tpu.memory_space<vmem>>, vector<16x64xbf16>
    tpu.vector_store %arg17[%c128_74, %c0_75], %144 {strides = array<i32>} : memref<144x64xbf16, #tpu.memory_space<vmem>>, vector<16x64xbf16>,
    %c1_76 = arith.constant 1 : index
    %c0_77 = arith.constant 0 : index
    %146 = vector.load %arg17[%c1_76, %c0_77] : memref<144x64xbf16, #tpu.memory_space<vmem>>, vector<128x64xbf16>
    %147 = arith.maximumf %142, %146 : vector<128x64xbf16>
    %c8_78 = arith.constant 8 : index
    %c0_79 = arith.constant 0 : index
    %148 = vector.load %arg17[%c8_78, %c0_79] : memref<144x64xbf16, #tpu.memory_space<vmem>>, vector<128x64xbf16>
    %c9_80 = arith.constant 9 : index
    %c0_81 = arith.constant 0 : index
    %149 = vector.load %arg17[%c9_80, %c0_81] : memref<144x64xbf16, #tpu.memory_space<vmem>>, vector<128x64xbf16>
    %150 = arith.maximumf %148, %149 : vector<128x64xbf16>
    %151 = arith.maximumf %147, %150 : vector<128x64xbf16>
    %c0_82 = arith.constant 0 : index
    %c0_83 = arith.constant 0 : index
    %152 = vector.load %arg11[%c0_82, %c0_83] : memref<32x128xbf16, #tpu.memory_space<vmem>>, vector<32x128xbf16>
    %cst_84 = arith.constant dense<0.000000e+00> : vector<32x64xf32>
    %153 = tpu.matmul %152, %151, %cst_84 {dimension_numbers = #tpu.dot_dimension_numbers<[1], [0], [0], [1], [0, 0, 1, 1], [], []>} : vector<32x128xbf16>, vector<128x64xbf16>, vector<32x64xf32> -> vector<32x64xf32>
    %154 = arith.truncf %153 : vector<32x64xf32> to vector<32x64xbf16>
    %c8_85 = arith.constant 8 : index
    %c0_86 = arith.constant 0 : index
    %155 = vector.load %arg18[%c8_85, %c0_86] : memref<48x64xbf16, #tpu.memory_space<vmem>>, vector<32x64xbf16>
    tpu.vector_store %arg18[%c8_85, %c0_86], %154 {strides = array<i32>} : memref<48x64xbf16, #tpu.memory_space<vmem>>, vector<32x64xbf16>,
    %156 = tpu.iota {dimensions = array<i32: 0>} : vector<32x1xi32>
    %c2_i32 = arith.constant 2 : i32
    %157 = vector.broadcast %c2_i32 : i32 to vector<32x1xi32>
    %158 = arith.shrsi %156, %157 : vector<32x1xi32>
    %c3_i32_87 = arith.constant 3 : i32
    %159 = vector.broadcast %c3_i32_87 : i32 to vector<32x1xi32>
    %160 = arith.andi %158, %159 : vector<32x1xi32>
    %c3_i32_88 = arith.constant 3 : i32
    %161 = vector.broadcast %c3_i32_88 : i32 to vector<32x1xi32>
    %162 = arith.andi %156, %161 : vector<32x1xi32>
    %c1_i32_89 = arith.constant 1 : i32
    %163 = vector.broadcast %c1_i32_89 : i32 to vector<32x1xi32>
    %164 = arith.cmpi sge, %160, %163 : vector<32x1xi32>
    %c4_i32 = arith.constant 4 : i32
    %165 = vector.broadcast %c4_i32 : i32 to vector<32x1xi32>
    %166 = arith.cmpi sle, %160, %165 : vector<32x1xi32>
    %167 = arith.andi %164, %166 : vector<32x1xi1>
    %c0_i32_90 = arith.constant 0 : i32
    %168 = vector.broadcast %c0_i32_90 : i32 to vector<32x1xi32>
    %169 = arith.cmpi sge, %160, %168 : vector<32x1xi32>
    %c3_i32_91 = arith.constant 3 : i32
    %170 = vector.broadcast %c3_i32_91 : i32 to vector<32x1xi32>
    %171 = arith.cmpi sle, %160, %170 : vector<32x1xi32>
    %172 = arith.andi %169, %171 : vector<32x1xi1>
    %c-1_i32_92 = arith.constant -1 : i32
    %173 = vector.broadcast %c-1_i32_92 : i32 to vector<32x1xi32>
    %174 = arith.cmpi sge, %160, %173 : vector<32x1xi32>
    %c2_i32_93 = arith.constant 2 : i32
    %175 = vector.broadcast %c2_i32_93 : i32 to vector<32x1xi32>
    %176 = arith.cmpi sle, %160, %175 : vector<32x1xi32>
    %177 = arith.andi %174, %176 : vector<32x1xi1>
    %c1_i32_94 = arith.constant 1 : i32
    %178 = vector.broadcast %c1_i32_94 : i32 to vector<32x1xi32>
    %179 = arith.cmpi sge, %162, %178 : vector<32x1xi32>
    %c4_i32_95 = arith.constant 4 : i32
    %180 = vector.broadcast %c4_i32_95 : i32 to vector<32x1xi32>
    %181 = arith.cmpi sle, %162, %180 : vector<32x1xi32>
    %182 = arith.andi %179, %181 : vector<32x1xi1>
    %c0_i32_96 = arith.constant 0 : i32
    %183 = vector.broadcast %c0_i32_96 : i32 to vector<32x1xi32>
    %184 = arith.cmpi sge, %162, %183 : vector<32x1xi32>
    %c3_i32_97 = arith.constant 3 : i32
    %185 = vector.broadcast %c3_i32_97 : i32 to vector<32x1xi32>
    %186 = arith.cmpi sle, %162, %185 : vector<32x1xi32>
    %187 = arith.andi %184, %186 : vector<32x1xi1>
    %c-1_i32_98 = arith.constant -1 : i32
    %188 = vector.broadcast %c-1_i32_98 : i32 to vector<32x1xi32>
    %189 = arith.cmpi sge, %162, %188 : vector<32x1xi32>
    %c2_i32_99 = arith.constant 2 : i32
    %190 = vector.broadcast %c2_i32_99 : i32 to vector<32x1xi32>
    %191 = arith.cmpi sle, %162, %190 : vector<32x1xi32>
    %192 = arith.andi %189, %191 : vector<32x1xi1>
    %c3 = arith.constant 3 : index
    %c0_100 = arith.constant 0 : index
    %193 = vector.load %arg18[%c3, %c0_100] : memref<48x64xbf16, #tpu.memory_space<vmem>>, vector<32x64xbf16>
    %194 = arith.andi %167, %182 : vector<32x1xi1>
    %cst_101 = arith.constant 0.000000e+00 : bf16
    %195 = vector.broadcast %cst_101 : bf16 to vector<32x64xbf16>
    %196 = vector.shape_cast %194 : vector<32x1xi1> to vector<32x1xi1>
    %197 = vector.broadcast %196 : vector<32x1xi1> to vector<32x64xi1>
    %198 = arith.select %197, %193, %195 : vector<32x64xi1>, vector<32x64xbf16>
    %c0_102 = arith.constant 0 : index
    %c0_103 = arith.constant 0 : index
    %199 = vector.load %arg19[%c0_102, %c0_103] : memref<32x576xbf16, #tpu.memory_space<vmem>>, vector<32x64xbf16>
    tpu.vector_store %arg19[%c0_102, %c0_103], %198 {strides = array<i32>} : memref<32x576xbf16, #tpu.memory_space<vmem>>, vector<32x64xbf16>,
    %c4 = arith.constant 4 : index
    %c0_104 = arith.constant 0 : index
    %200 = vector.load %arg18[%c4, %c0_104] : memref<48x64xbf16, #tpu.memory_space<vmem>>, vector<32x64xbf16>
    %201 = arith.andi %167, %187 : vector<32x1xi1>
    %cst_105 = arith.constant 0.000000e+00 : bf16
    %202 = vector.broadcast %cst_105 : bf16 to vector<32x64xbf16>
    %203 = vector.shape_cast %201 : vector<32x1xi1> to vector<32x1xi1>
    %204 = vector.broadcast %203 : vector<32x1xi1> to vector<32x64xi1>
    %205 = arith.select %204, %200, %202 : vector<32x64xi1>, vector<32x64xbf16>
    %c0_106 = arith.constant 0 : index
    %c64 = arith.constant 64 : index
    %206 = vector.load %arg19[%c0_106, %c64] : memref<32x576xbf16, #tpu.memory_space<vmem>>, vector<32x64xbf16>
    tpu.vector_store %arg19[%c0_106, %c64], %205 {strides = array<i32>} : memref<32x576xbf16, #tpu.memory_space<vmem>>, vector<32x64xbf16>,
    %c5 = arith.constant 5 : index
    %c0_107 = arith.constant 0 : index
    %207 = vector.load %arg18[%c5, %c0_107] : memref<48x64xbf16, #tpu.memory_space<vmem>>, vector<32x64xbf16>
    %208 = arith.andi %167, %192 : vector<32x1xi1>
    %cst_108 = arith.constant 0.000000e+00 : bf16
    %209 = vector.broadcast %cst_108 : bf16 to vector<32x64xbf16>
    %210 = vector.shape_cast %208 : vector<32x1xi1> to vector<32x1xi1>
    %211 = vector.broadcast %210 : vector<32x1xi1> to vector<32x64xi1>
    %212 = arith.select %211, %207, %209 : vector<32x64xi1>, vector<32x64xbf16>
    %c0_109 = arith.constant 0 : index
    %c128_110 = arith.constant 128 : index
    %213 = vector.load %arg19[%c0_109, %c128_110] : memref<32x576xbf16, #tpu.memory_space<vmem>>, vector<32x64xbf16>
    tpu.vector_store %arg19[%c0_109, %c128_110], %212 {strides = array<i32>} : memref<32x576xbf16, #tpu.memory_space<vmem>>, vector<32x64xbf16>,
    %c7_111 = arith.constant 7 : index
    %c0_112 = arith.constant 0 : index
    %214 = vector.load %arg18[%c7_111, %c0_112] : memref<48x64xbf16, #tpu.memory_space<vmem>>, vector<32x64xbf16>
    %215 = arith.andi %172, %182 : vector<32x1xi1>
    %cst_113 = arith.constant 0.000000e+00 : bf16
    %216 = vector.broadcast %cst_113 : bf16 to vector<32x64xbf16>
    %217 = vector.shape_cast %215 : vector<32x1xi1> to vector<32x1xi1>
    %218 = vector.broadcast %217 : vector<32x1xi1> to vector<32x64xi1>
    %219 = arith.select %218, %214, %216 : vector<32x64xi1>, vector<32x64xbf16>
    %c0_114 = arith.constant 0 : index
    %c192 = arith.constant 192 : index
    %220 = vector.load %arg19[%c0_114, %c192] : memref<32x576xbf16, #tpu.memory_space<vmem>>, vector<32x64xbf16>
    tpu.vector_store %arg19[%c0_114, %c192], %219 {strides = array<i32>} : memref<32x576xbf16, #tpu.memory_space<vmem>>, vector<32x64xbf16>,
    %c8_115 = arith.constant 8 : index
    %c0_116 = arith.constant 0 : index
    %221 = vector.load %arg18[%c8_115, %c0_116] : memref<48x64xbf16, #tpu.memory_space<vmem>>, vector<32x64xbf16>
    %222 = arith.andi %172, %187 : vector<32x1xi1>
    %cst_117 = arith.constant 0.000000e+00 : bf16
    %223 = vector.broadcast %cst_117 : bf16 to vector<32x64xbf16>
    %224 = vector.shape_cast %222 : vector<32x1xi1> to vector<32x1xi1>
    %225 = vector.broadcast %224 : vector<32x1xi1> to vector<32x64xi1>
    %226 = arith.select %225, %221, %223 : vector<32x64xi1>, vector<32x64xbf16>
    %c0_118 = arith.constant 0 : index
    %c256_119 = arith.constant 256 : index
    %227 = vector.load %arg19[%c0_118, %c256_119] : memref<32x576xbf16, #tpu.memory_space<vmem>>, vector<32x64xbf16>
    tpu.vector_store %arg19[%c0_118, %c256_119], %226 {strides = array<i32>} : memref<32x576xbf16, #tpu.memory_space<vmem>>, vector<32x64xbf16>,
    %c9_120 = arith.constant 9 : index
    %c0_121 = arith.constant 0 : index
    %228 = vector.load %arg18[%c9_120, %c0_121] : memref<48x64xbf16, #tpu.memory_space<vmem>>, vector<32x64xbf16>
    %229 = arith.andi %172, %192 : vector<32x1xi1>
    %cst_122 = arith.constant 0.000000e+00 : bf16
    %230 = vector.broadcast %cst_122 : bf16 to vector<32x64xbf16>
    %231 = vector.shape_cast %229 : vector<32x1xi1> to vector<32x1xi1>
    %232 = vector.broadcast %231 : vector<32x1xi1> to vector<32x64xi1>
    %233 = arith.select %232, %228, %230 : vector<32x64xi1>, vector<32x64xbf16>
    %c0_123 = arith.constant 0 : index
    %c320 = arith.constant 320 : index
    %234 = vector.load %arg19[%c0_123, %c320] : memref<32x576xbf16, #tpu.memory_space<vmem>>, vector<32x64xbf16>
    tpu.vector_store %arg19[%c0_123, %c320], %233 {strides = array<i32>} : memref<32x576xbf16, #tpu.memory_space<vmem>>, vector<32x64xbf16>,
    %c11 = arith.constant 11 : index
    %c0_124 = arith.constant 0 : index
    %235 = vector.load %arg18[%c11, %c0_124] : memref<48x64xbf16, #tpu.memory_space<vmem>>, vector<32x64xbf16>
    %236 = arith.andi %177, %182 : vector<32x1xi1>
    %cst_125 = arith.constant 0.000000e+00 : bf16
    %237 = vector.broadcast %cst_125 : bf16 to vector<32x64xbf16>
    %238 = vector.shape_cast %236 : vector<32x1xi1> to vector<32x1xi1>
    %239 = vector.broadcast %238 : vector<32x1xi1> to vector<32x64xi1>
    %240 = arith.select %239, %235, %237 : vector<32x64xi1>, vector<32x64xbf16>
    %c0_126 = arith.constant 0 : index
    %c384_127 = arith.constant 384 : index
    %241 = vector.load %arg19[%c0_126, %c384_127] : memref<32x576xbf16, #tpu.memory_space<vmem>>, vector<32x64xbf16>
    tpu.vector_store %arg19[%c0_126, %c384_127], %240 {strides = array<i32>} : memref<32x576xbf16, #tpu.memory_space<vmem>>, vector<32x64xbf16>,
    %c12 = arith.constant 12 : index
    %c0_128 = arith.constant 0 : index
    %242 = vector.load %arg18[%c12, %c0_128] : memref<48x64xbf16, #tpu.memory_space<vmem>>, vector<32x64xbf16>
    %243 = arith.andi %177, %187 : vector<32x1xi1>
    %cst_129 = arith.constant 0.000000e+00 : bf16
    %244 = vector.broadcast %cst_129 : bf16 to vector<32x64xbf16>
    %245 = vector.shape_cast %243 : vector<32x1xi1> to vector<32x1xi1>
    %246 = vector.broadcast %245 : vector<32x1xi1> to vector<32x64xi1>
    %247 = arith.select %246, %242, %244 : vector<32x64xi1>, vector<32x64xbf16>
    %c0_130 = arith.constant 0 : index
    %c448 = arith.constant 448 : index
    %248 = vector.load %arg19[%c0_130, %c448] : memref<32x576xbf16, #tpu.memory_space<vmem>>, vector<32x64xbf16>
    tpu.vector_store %arg19[%c0_130, %c448], %247 {strides = array<i32>} : memref<32x576xbf16, #tpu.memory_space<vmem>>, vector<32x64xbf16>,
    %c13 = arith.constant 13 : index
    %c0_131 = arith.constant 0 : index
    %249 = vector.load %arg18[%c13, %c0_131] : memref<48x64xbf16, #tpu.memory_space<vmem>>, vector<32x64xbf16>
    %250 = arith.andi %177, %192 : vector<32x1xi1>
    %cst_132 = arith.constant 0.000000e+00 : bf16
    %251 = vector.broadcast %cst_132 : bf16 to vector<32x64xbf16>
    %252 = vector.shape_cast %250 : vector<32x1xi1> to vector<32x1xi1>
    %253 = vector.broadcast %252 : vector<32x1xi1> to vector<32x64xi1>
    %254 = arith.select %253, %249, %251 : vector<32x64xi1>, vector<32x64xbf16>
    %c0_133 = arith.constant 0 : index
    %c512_134 = arith.constant 512 : index
    %255 = vector.load %arg19[%c0_133, %c512_134] : memref<32x576xbf16, #tpu.memory_space<vmem>>, vector<32x64xbf16>
    tpu.vector_store %arg19[%c0_133, %c512_134], %254 {strides = array<i32>} : memref<32x576xbf16, #tpu.memory_space<vmem>>, vector<32x64xbf16>,
    %c0_135 = arith.constant 0 : index
    %c0_136 = arith.constant 0 : index
    %256 = vector.load %arg19[%c0_135, %c0_136] : memref<32x576xbf16, #tpu.memory_space<vmem>>, vector<32x576xbf16>
    %c0_137 = arith.constant 0 : index
    %c0_138 = arith.constant 0 : index
    %257 = vector.load %arg7[%c0_137, %c0_138] : memref<576x32xbf16, #tpu.memory_space<vmem>>, vector<576x32xbf16>
    %cst_139 = arith.constant dense<0.000000e+00> : vector<32x32xf32>
    %258 = tpu.matmul %256, %257, %cst_139 {dimension_numbers = #tpu.dot_dimension_numbers<[1], [0], [0], [1], [0, 0, 1, 1], [], []>} : vector<32x576xbf16>, vector<576x32xbf16>, vector<32x32xf32> -> vector<32x32xf32>
    %c0_140 = arith.constant 0 : index
    %c0_141 = arith.constant 0 : index
    %259 = vector.load %arg8[%c0_140, %c0_141] : memref<1x32xf32, #tpu.memory_space<vmem>>, vector<1x32xf32>
    %260 = vector.broadcast %259 : vector<1x32xf32> to vector<32x32xf32>
    %261 = arith.mulf %258, %260 : vector<32x32xf32>
    %c0_142 = arith.constant 0 : index
    %c0_143 = arith.constant 0 : index
    %262 = vector.load %arg9[%c0_142, %c0_143] : memref<1x32xf32, #tpu.memory_space<vmem>>, vector<1x32xf32>
    %263 = vector.broadcast %262 : vector<1x32xf32> to vector<32x32xf32>
    %264 = arith.addf %261, %263 : vector<32x32xf32>
    %cst_144 = arith.constant 0.000000e+00 : f32
    %265 = vector.broadcast %cst_144 : f32 to vector<32x32xf32>
    %266 = arith.cmpf ogt, %264, %265 : vector<32x32xf32>
    %cst_145 = arith.constant 1.000000e-01 : f32
    %267 = vector.broadcast %cst_145 : f32 to vector<32x32xf32>
    %268 = arith.mulf %267, %264 : vector<32x32xf32>
    %269 = arith.select %266, %264, %268 : vector<32x32xi1>, vector<32x32xf32>
    %270 = arith.truncf %269 : vector<32x32xf32> to vector<32x32xbf16>
    %c0_146 = arith.constant 0 : index
    %c0_147 = arith.constant 0 : index
    %271 = vector.load %arg20[%c0_146, %c0_147] : memref<40x32xbf16, #tpu.memory_space<vmem>>, vector<32x32xbf16>
    tpu.vector_store %arg20[%c0_146, %c0_147], %270 {strides = array<i32>} : memref<40x32xbf16, #tpu.memory_space<vmem>>, vector<32x32xbf16>,
    %cst_148 = arith.constant 0.000000e+00 : bf16
    %272 = vector.broadcast %cst_148 : bf16 to vector<8x32xbf16>
    %c32 = arith.constant 32 : index
    %c0_149 = arith.constant 0 : index
    %273 = vector.load %arg20[%c32, %c0_149] : memref<40x32xbf16, #tpu.memory_space<vmem>>, vector<8x32xbf16>
    tpu.vector_store %arg20[%c32, %c0_149], %272 {strides = array<i32>} : memref<40x32xbf16, #tpu.memory_space<vmem>>, vector<8x32xbf16>,
    %c1_150 = arith.constant 1 : index
    %c0_151 = arith.constant 0 : index
    %274 = vector.load %arg20[%c1_150, %c0_151] : memref<40x32xbf16, #tpu.memory_space<vmem>>, vector<32x32xbf16>
    %275 = arith.maximumf %270, %274 : vector<32x32xbf16>
    %c4_152 = arith.constant 4 : index
    %c0_153 = arith.constant 0 : index
    %276 = vector.load %arg20[%c4_152, %c0_153] : memref<40x32xbf16, #tpu.memory_space<vmem>>, vector<32x32xbf16>
    %c5_154 = arith.constant 5 : index
    %c0_155 = arith.constant 0 : index
    %277 = vector.load %arg20[%c5_154, %c0_155] : memref<40x32xbf16, #tpu.memory_space<vmem>>, vector<32x32xbf16>
    %278 = arith.maximumf %276, %277 : vector<32x32xbf16>
    %279 = arith.maximumf %275, %278 : vector<32x32xbf16>
    %c0_156 = arith.constant 0 : index
    %c0_157 = arith.constant 0 : index
    %280 = vector.load %arg12[%c0_156, %c0_157] : memref<8x32xbf16, #tpu.memory_space<vmem>>, vector<8x32xbf16>
    %cst_158 = arith.constant dense<0.000000e+00> : vector<8x32xf32>
    %281 = tpu.matmul %280, %279, %cst_158 {dimension_numbers = #tpu.dot_dimension_numbers<[1], [0], [0], [1], [0, 0, 1, 1], [], []>} : vector<8x32xbf16>, vector<32x32xbf16>, vector<8x32xf32> -> vector<8x32xf32>
    %c0_159 = arith.constant 0 : index
    %c0_160 = arith.constant 0 : index
    %282 = vector.load %arg13[%c0_159, %c0_160] : memref<8x32xf32, #tpu.memory_space<vmem>>, vector<8x32xf32>
    tpu.vector_store %arg13[%c0_159, %c0_160], %281 {strides = array<i32>} : memref<8x32xf32, #tpu.memory_space<vmem>>, vector<8x32xf32>,
    return
  }
}

</mosaic_0001>

<llo_original>
// kernel: cnn_forward.1
$region0: #{cnn_forward.1}
  #allocation0 [shape = 'u32[]', space=smem, size = 0x4, offset = 0x4, fixed_abs, tag = 'smem constant byte address 0x4 - core index']
  #allocation1 [shape = 'u32[144,128]{1,0:T(1,128)}', space=vmem, size = 0x12000, scoped, tag = 'internal scratch']
  #allocation2 [shape = 'bf16[536,128]{1,0:T(8,128)(2,1)}', space=vmem, size = 0x21800, scoped, tag = 'scratch operand']
  #allocation3 [shape = 'bf16[160,128]{1,0:T(16,128)(2,1)}', space=vmem, size = 0xa000, scoped, tag = 'scratch operand']
  #allocation4 [shape = 'bf16[128,1152]{1,0:T(16,128)(2,1)}', space=vmem, size = 0x48000, scoped, tag = 'scratch operand']
  #allocation5 [shape = 'bf16[144,64]{1,0:T(16,128)(2,1)}', space=vmem, size = 0x9000, scoped, tag = 'scratch operand']
  #allocation6 [shape = 'bf16[48,64]{1,0:T(16,128)(2,1)}', space=vmem, size = 0x3000, scoped, tag = 'scratch operand']
  #allocation7 [shape = 'bf16[32,576]{1,0:T(16,128)(2,1)}', space=vmem, size = 0xa000, scoped, tag = 'scratch operand']
  #allocation8 [shape = 'bf16[40,32]{1,0:T(8,128)(2,1)}', space=vmem, size = 0x2800, scoped, tag = 'scratch operand']
  %s0 = inlined_call_operand.vmem [shape: bf16[512,16], index: 0, kind: input, shape index: {}]
  %s1 = inlined_call_operand.vmem [shape: bf16[16,128], index: 1, kind: input, shape index: {}]
  %s2 = inlined_call_operand.vmem [shape: f32[1,128], index: 2, kind: input, shape index: {}]
  %s3 = inlined_call_operand.vmem [shape: f32[1,128], index: 3, kind: input, shape index: {}]
  %s4 = inlined_call_operand.vmem [shape: bf16[1152,64], index: 4, kind: input, shape index: {}]
  %s5 = inlined_call_operand.vmem [shape: f32[1,64], index: 5, kind: input, shape index: {}]
  %s6 = inlined_call_operand.vmem [shape: f32[1,64], index: 6, kind: input, shape index: {}]
  %s7 = inlined_call_operand.vmem [shape: bf16[576,32], index: 7, kind: input, shape index: {}]
  %s8 = inlined_call_operand.vmem [shape: f32[1,32], index: 8, kind: input, shape index: {}]
  %s9 = inlined_call_operand.vmem [shape: f32[1,32], index: 9, kind: input, shape index: {}]
  %s10 = inlined_call_operand.vmem [shape: bf16[128,512], index: 10, kind: input, shape index: {}]
  %s11 = inlined_call_operand.vmem [shape: bf16[32,128], index: 11, kind: input, shape index: {}]
  %s12 = inlined_call_operand.vmem [shape: bf16[8,32], index: 12, kind: input, shape index: {}]
  %s13 = inlined_call_operand.hbm [shape: f32[8,32], index: 13, kind: output, shape index: {}]
  %s14 = sld [smem:[#allocation0]]
  $region62: #{cnn_forward.1} parent=0
    _
  %s16 = ssub.s32 1, %s14
  %s17 = scalar_select 0, %s16, %s14
  $region1: #{cnn_forward.1} parent=0
    #allocation9 [shape = 'u8[4096]{0}', space=vmem, size = 0x1000, scoped, tag = 'output window, operand 0, single buffered']
    #allocation10 [shape = 's32[1]{0}', space=sflag, size = 0x4, scoped, tag = 'scoped memory for cnn_forward.1']
    %18 = vsyncpa [#allocation10], 0
    // Predicated region
    $region2: #{cnn_forward.1} parent=1 // pred_check
      _
    $region3: #{cnn_forward.1} parent=1 // pred_check_branch
      %20 = sbr.rel (0) target = $region5
    $region4: #{cnn_forward.1} parent=1 // pred_region
      _
    $region5: #{cnn_forward.1} parent=1 // pred_fallthru
      _
    // Predicated region
    $region6: #{cnn_forward.1} parent=1 // pred_check
      _
    $region7: #{cnn_forward.1} parent=1 // pred_check_branch
      %22 = sbr.rel (0) target = $region9
    $region8: #{cnn_forward.1} parent=1 // pred_region
      _
    $region9: #{cnn_forward.1} parent=1 // pred_fallthru
      _
    // Predicated region
    $region10: #{cnn_forward.1} parent=1 // pred_check
      _
    $region11: #{cnn_forward.1} parent=1 // pred_check_branch
      %24 = sbr.rel (0) target = $region13
    $region12: #{cnn_forward.1} parent=1 // pred_region
      _
    $region13: #{cnn_forward.1} parent=1 // pred_fallthru
      _
    // Predicated region
    $region14: #{cnn_forward.1} parent=1 // pred_check
      _
    $region15: #{cnn_forward.1} parent=1 // pred_check_branch
      %26 = sbr.rel (0) target = $region17
    $region16: #{cnn_forward.1} parent=1 // pred_region
      _
    $region17: #{cnn_forward.1} parent=1 // pred_fallthru
      _
    // Predicated region
    $region18: #{cnn_forward.1} parent=1 // pred_check
      _
    $region19: #{cnn_forward.1} parent=1 // pred_check_branch
      %28 = sbr.rel (0) target = $region21
    $region20: #{cnn_forward.1} parent=1 // pred_region
      _
    $region21: #{cnn_forward.1} parent=1 // pred_fallthru
      _
    // Predicated region
    $region22: #{cnn_forward.1} parent=1 // pred_check
      _
    $region23: #{cnn_forward.1} parent=1 // pred_check_branch
      %30 = sbr.rel (0) target = $region25
    $region24: #{cnn_forward.1} parent=1 // pred_region
      _
    $region25: #{cnn_forward.1} parent=1 // pred_fallthru
      _
    // Predicated region
    $region26: #{cnn_forward.1} parent=1 // pred_check
      _
    $region27: #{cnn_forward.1} parent=1 // pred_check_branch
      %32 = sbr.rel (0) target = $region29
    $region28: #{cnn_forward.1} parent=1 // pred_region
      _
    $region29: #{cnn_forward.1} parent=1 // pred_fallthru
      _
    // Predicated region
    $region30: #{cnn_forward.1} parent=1 // pred_check
      _
    $region31: #{cnn_forward.1} parent=1 // pred_check_branch
      %34 = sbr.rel (0) target = $region33
    $region32: #{cnn_forward.1} parent=1 // pred_region
      _
    $region33: #{cnn_forward.1} parent=1 // pred_fallthru
      _
    // Predicated region
    $region34: #{cnn_forward.1} parent=1 // pred_check
      _
    $region35: #{cnn_forward.1} parent=1 // pred_check_branch
      %36 = sbr.rel (0) target = $region37
    $region36: #{cnn_forward.1} parent=1 // pred_region
      _
    $region37: #{cnn_forward.1} parent=1 // pred_fallthru
      _
    // Predicated region
    $region38: #{cnn_forward.1} parent=1 // pred_check
      _
    $region39: #{cnn_forward.1} parent=1 // pred_check_branch
      %38 = sbr.rel (0) target = $region41
    $region40: #{cnn_forward.1} parent=1 // pred_region
      _
    $region41: #{cnn_forward.1} parent=1 // pred_fallthru
      _
    // Predicated region
    $region42: #{cnn_forward.1} parent=1 // pred_check
      _
    $region43: #{cnn_forward.1} parent=1 // pred_check_branch
      %40 = sbr.rel (0) target = $region45
    $region44: #{cnn_forward.1} parent=1 // pred_region
      _
    $region45: #{cnn_forward.1} parent=1 // pred_fallthru
      _
    // Predicated region
    $region46: #{cnn_forward.1} parent=1 // pred_check
      _
    $region47: #{cnn_forward.1} parent=1 // pred_check_branch
      %42 = sbr.rel (0) target = $region49
    $region48: #{cnn_forward.1} parent=1 // pred_region
      _
    $region49: #{cnn_forward.1} parent=1 // pred_fallthru
      _
    // Predicated region
    $region50: #{cnn_forward.1} parent=1 // pred_check
      _
    $region51: #{cnn_forward.1} parent=1 // pred_check_branch
      %44 = sbr.rel (0) target = $region53
    $region52: #{cnn_forward.1} parent=1 // pred_region
      _
    $region53: #{cnn_forward.1} parent=1 // pred_fallthru
      _
    %v48 = vld [vmem:[%s0] sm:$0xf]
    %v49 = vld [vmem:[%s0 + $0x4] sm:$0xf]
    %v50 = vld [vmem:[%s0 + $0x8] sm:$0xf]
    %v51 = vld [vmem:[%s0 + $0xc] sm:$0xf]
    %v52 = vld [vmem:[%s0 + $0x10] sm:$0xf]
    %v53 = vld [vmem:[%s0 + $0x14] sm:$0xf]
    %v54 = vld [vmem:[%s0 + $0x18] sm:$0xf]
    %v55 = vld [vmem:[%s0 + $0x1c] sm:$0xf]
    %v56 = vld [vmem:[%s0 + $0x20] sm:$0xf]
    %v57 = vld [vmem:[%s0 + $0x24] sm:$0xf]
    %v58 = vld [vmem:[%s0 + $0x28] sm:$0xf]
    %v59 = vld [vmem:[%s0 + $0x2c] sm:$0xf]
    %v60 = vld [vmem:[%s0 + $0x30] sm:$0xf]
    %v61 = vld [vmem:[%s0 + $0x34] sm:$0xf]
    %v62 = vld [vmem:[%s0 + $0x38] sm:$0xf]
    %v63 = vld [vmem:[%s0 + $0x3c] sm:$0xf]
    %v64 = vld [vmem:[%s0 + $0x40] sm:$0xf]
    %v65 = vld [vmem:[%s0 + $0x44] sm:$0xf]
    %v66 = vld [vmem:[%s0 + $0x48] sm:$0xf]
    %v67 = vld [vmem:[%s0 + $0x4c] sm:$0xf]
    %v68 = vld [vmem:[%s0 + $0x50] sm:$0xf]
    %v69 = vld [vmem:[%s0 + $0x54] sm:$0xf]
    %v70 = vld [vmem:[%s0 + $0x58] sm:$0xf]
    %v71 = vld [vmem:[%s0 + $0x5c] sm:$0xf]
    %v72 = vld [vmem:[%s0 + $0x60] sm:$0xf]
    %v73 = vld [vmem:[%s0 + $0x64] sm:$0xf]
    %v74 = vld [vmem:[%s0 + $0x68] sm:$0xf]
    %v75 = vld [vmem:[%s0 + $0x6c] sm:$0xf]
    %v76 = vld [vmem:[%s0 + $0x70] sm:$0xf]
    %v77 = vld [vmem:[%s0 + $0x74] sm:$0xf]
    %v78 = vld [vmem:[%s0 + $0x78] sm:$0xf]
    %v79 = vld [vmem:[%s0 + $0x7c] sm:$0xf]
    %v80 = vld [vmem:[%s0 + $0x80] sm:$0xf]
    %v81 = vld [vmem:[%s0 + $0x84] sm:$0xf]
    %v82 = vld [vmem:[%s0 + $0x88] sm:$0xf]
    %v83 = vld [vmem:[%s0 + $0x8c] sm:$0xf]
    %v84 = vld [vmem:[%s0 + $0x90] sm:$0xf]
    %v85 = vld [vmem:[%s0 + $0x94] sm:$0xf]
    %v86 = vld [vmem:[%s0 + $0x98] sm:$0xf]
    %v87 = vld [vmem:[%s0 + $0x9c] sm:$0xf]
    %v88 = vld [vmem:[%s0 + $0xa0] sm:$0xf]
    %v89 = vld [vmem:[%s0 + $0xa4] sm:$0xf]
    %v90 = vld [vmem:[%s0 + $0xa8] sm:$0xf]
    %v91 = vld [vmem:[%s0 + $0xac] sm:$0xf]
    %v92 = vld [vmem:[%s0 + $0xb0] sm:$0xf]
    %v93 = vld [vmem:[%s0 + $0xb4] sm:$0xf]
    %v94 = vld [vmem:[%s0 + $0xb8] sm:$0xf]
    %v95 = vld [vmem:[%s0 + $0xbc] sm:$0xf]
    %v96 = vld [vmem:[%s0 + $0xc0] sm:$0xf]
    %v97 = vld [vmem:[%s0 + $0xc4] sm:$0xf]
    %v98 = vld [vmem:[%s0 + $0xc8] sm:$0xf]
    %v99 = vld [vmem:[%s0 + $0xcc] sm:$0xf]
    %v100 = vld [vmem:[%s0 + $0xd0] sm:$0xf]
    %v101 = vld [vmem:[%s0 + $0xd4] sm:$0xf]
    %v102 = vld [vmem:[%s0 + $0xd8] sm:$0xf]
    %v103 = vld [vmem:[%s0 + $0xdc] sm:$0xf]
    %v104 = vld [vmem:[%s0 + $0xe0] sm:$0xf]
    %v105 = vld [vmem:[%s0 + $0xe4] sm:$0xf]
    %v106 = vld [vmem:[%s0 + $0xe8] sm:$0xf]
    %v107 = vld [vmem:[%s0 + $0xec] sm:$0xf]
    %v108 = vld [vmem:[%s0 + $0xf0] sm:$0xf]
    %v109 = vld [vmem:[%s0 + $0xf4] sm:$0xf]
    %v110 = vld [vmem:[%s0 + $0xf8] sm:$0xf]
    %v111 = vld [vmem:[%s0 + $0xfc] sm:$0xf]
    %v112 = vld [vmem:[%s1] sm:$0xf]
    %v113 = vld [vmem:[%s1 + $0x4] sm:$0xf]
    %v178 = vunpack.c.l.b16 %v48
    %v179 = vunpack.c.l.b16 %v49
    %v180 = vunpack.c.l.b16 %v50
    %v181 = vunpack.c.l.b16 %v51
    %v182 = vunpack.c.l.b16 %v52
    %v183 = vunpack.c.l.b16 %v53
    %v184 = vunpack.c.l.b16 %v54
    %v185 = vunpack.c.l.b16 %v55
    %v186 = vunpack.c.l.b16 %v56
    %v187 = vunpack.c.l.b16 %v57
    %v188 = vunpack.c.l.b16 %v58
    %v189 = vunpack.c.l.b16 %v59
    %v190 = vunpack.c.l.b16 %v60
    %v191 = vunpack.c.l.b16 %v61
    %v192 = vunpack.c.l.b16 %v62
    %v193 = vunpack.c.l.b16 %v63
    %v194 = vunpack.c.l.b16 %v64
    %v195 = vunpack.c.l.b16 %v65
    %v196 = vunpack.c.l.b16 %v66
    %v197 = vunpack.c.l.b16 %v67
    %v198 = vunpack.c.l.b16 %v68
    %v199 = vunpack.c.l.b16 %v69
    %v200 = vunpack.c.l.b16 %v70
    %v201 = vunpack.c.l.b16 %v71
    %v202 = vunpack.c.l.b16 %v72
    %v203 = vunpack.c.l.b16 %v73
    %v204 = vunpack.c.l.b16 %v74
    %v205 = vunpack.c.l.b16 %v75
    %v206 = vunpack.c.l.b16 %v76
    %v207 = vunpack.c.l.b16 %v77
    %v208 = vunpack.c.l.b16 %v78
    %v209 = vunpack.c.l.b16 %v79
    %v210 = vunpack.c.l.b16 %v80
    %v211 = vunpack.c.l.b16 %v81
    %v212 = vunpack.c.l.b16 %v82
    %v213 = vunpack.c.l.b16 %v83
    %v214 = vunpack.c.l.b16 %v84
    %v215 = vunpack.c.l.b16 %v85
    %v216 = vunpack.c.l.b16 %v86
    %v217 = vunpack.c.l.b16 %v87
    %v218 = vunpack.c.l.b16 %v88
    %v219 = vunpack.c.l.b16 %v89
    %v220 = vunpack.c.l.b16 %v90
    %v221 = vunpack.c.l.b16 %v91
    %v222 = vunpack.c.l.b16 %v92
    %v223 = vunpack.c.l.b16 %v93
    %v224 = vunpack.c.l.b16 %v94
    %v225 = vunpack.c.l.b16 %v95
    %v226 = vunpack.c.l.b16 %v96
    %v227 = vunpack.c.l.b16 %v97
    %v228 = vunpack.c.l.b16 %v98
    %v229 = vunpack.c.l.b16 %v99
    %v230 = vunpack.c.l.b16 %v100
    %v231 = vunpack.c.l.b16 %v101
    %v232 = vunpack.c.l.b16 %v102
    %v233 = vunpack.c.l.b16 %v103
    %v234 = vunpack.c.l.b16 %v104
    %v235 = vunpack.c.l.b16 %v105
    %v236 = vunpack.c.l.b16 %v106
    %v237 = vunpack.c.l.b16 %v107
    %v238 = vunpack.c.l.b16 %v108
    %v239 = vunpack.c.l.b16 %v109
    %v240 = vunpack.c.l.b16 %v110
    %v241 = vunpack.c.l.b16 %v111
    %v242 = vpack.c.b16 %v179, %v178
    %v243 = vpack.c.b16 %v181, %v180
    %v244 = vpack.c.b16 %v183, %v182
    %v245 = vpack.c.b16 %v185, %v184
    %v246 = vpack.c.b16 %v187, %v186
    %v247 = vpack.c.b16 %v189, %v188
    %v248 = vpack.c.b16 %v191, %v190
    %v249 = vpack.c.b16 %v193, %v192
    %v250 = vpack.c.b16 %v195, %v194
    %v251 = vpack.c.b16 %v197, %v196
    %v252 = vpack.c.b16 %v199, %v198
    %v253 = vpack.c.b16 %v201, %v200
    %v254 = vpack.c.b16 %v203, %v202
    %v255 = vpack.c.b16 %v205, %v204
    %v256 = vpack.c.b16 %v207, %v206
    %v257 = vpack.c.b16 %v209, %v208
    %v258 = vpack.c.b16 %v211, %v210
    %v259 = vpack.c.b16 %v213, %v212
    %v260 = vpack.c.b16 %v215, %v214
    %v261 = vpack.c.b16 %v217, %v216
    %v262 = vpack.c.b16 %v219, %v218
    %v263 = vpack.c.b16 %v221, %v220
    %v264 = vpack.c.b16 %v223, %v222
    %v265 = vpack.c.b16 %v225, %v224
    %v266 = vpack.c.b16 %v227, %v226
    %v267 = vpack.c.b16 %v229, %v228
    %v268 = vpack.c.b16 %v231, %v230
    %v269 = vpack.c.b16 %v233, %v232
    %v270 = vpack.c.b16 %v235, %v234
    %v271 = vpack.c.b16 %v237, %v236
    %v272 = vpack.c.b16 %v239, %v238
    %v273 = vpack.c.b16 %v241, %v240
    %v276 = vunpack.c.l.b16 %v112
    %v277 = vunpack.c.l.b16 %v113
    %v278 = vpack.c.b16 %v277, %v276
    %vm280 = vcmask 130048
    %v282 = vsel %vm280, %v242, 0
    %v285 = vsel %vm280, %v243, 0
    %v288 = vsel %vm280, %v244, 0
    %v291 = vsel %vm280, %v245, 0
    %v294 = vsel %vm280, %v246, 0
    %v297 = vsel %vm280, %v247, 0
    %v300 = vsel %vm280, %v248, 0
    %v303 = vsel %vm280, %v249, 0
    %v306 = vsel %vm280, %v250, 0
    %v309 = vsel %vm280, %v251, 0
    %v312 = vsel %vm280, %v252, 0
    %v315 = vsel %vm280, %v253, 0
    %v318 = vsel %vm280, %v254, 0
    %v321 = vsel %vm280, %v255, 0
    %v324 = vsel %vm280, %v256, 0
    %v327 = vsel %vm280, %v257, 0
    %v330 = vsel %vm280, %v258, 0
    %v333 = vsel %vm280, %v259, 0
    %v336 = vsel %vm280, %v260, 0
    %v339 = vsel %vm280, %v261, 0
    %v342 = vsel %vm280, %v262, 0
    %v345 = vsel %vm280, %v263, 0
    %v348 = vsel %vm280, %v264, 0
    %v351 = vsel %vm280, %v265, 0
    %v354 = vsel %vm280, %v266, 0
    %v357 = vsel %vm280, %v267, 0
    %v360 = vsel %vm280, %v268, 0
    %v363 = vsel %vm280, %v269, 0
    %v366 = vsel %vm280, %v270, 0
    %v369 = vsel %vm280, %v271, 0
    %v372 = vsel %vm280, %v272, 0
    %v375 = vsel %vm280, %v273, 0
    %377 = vmatprep.subr.bf16.mxu0 0
    %378 = vmatpush1.bf16.msra.mxu0 %v278
    %379 = vmatprep.subr.bf16.mxu0 0
    %380 = vmatpush1.bf16.msra.mxu0 0
    %381 = vmatprep.subr.bf16.mxu0 0
    %382 = vmatpush1.bf16.msra.mxu0 0
    %383 = vmatprep.subr.bf16.mxu0 0
    %384 = vmatpush1.bf16.msra.mxu0 0
    %385 = vmatprep.subr.bf16.mxu0 0
    %386 = vmatpush1.bf16.msra.mxu0 0
    %387 = vmatprep.subr.bf16.mxu0 0
    %388 = vmatpush1.bf16.msra.mxu0 0
    %389 = vmatprep.subr.bf16.mxu0 0
    %390 = vmatpush1.bf16.msra.mxu0 0
    %391 = vmatprep.subr.bf16.mxu0 0
    %392 = vmatpush1.bf16.msra.mxu0 0
    %393 = vmatprep.subr.bf16.mxu0 0
    %394 = vmatpush1.bf16.msra.mxu0 0
    %395 = vmatprep.subr.bf16.mxu0 0
    %396 = vmatpush1.bf16.msra.mxu0 0
    %397 = vmatprep.subr.bf16.mxu0 0
    %398 = vmatpush1.bf16.msra.mxu0 0
    %399 = vmatprep.subr.bf16.mxu0 0
    %400 = vmatpush1.bf16.msra.mxu0 0
    %401 = vmatprep.subr.bf16.mxu0 0
    %402 = vmatpush1.bf16.msra.mxu0 0
    %403 = vmatprep.subr.bf16.mxu0 0
    %404 = vmatpush1.bf16.msra.mxu0 0
    %405 = vmatprep.subr.bf16.mxu0 0
    %406 = vmatpush1.bf16.msra.mxu0 0
    %407 = vmatprep.subr.bf16.mxu0 0
    %408 = vmatpush1.bf16.msra.mxu0 0
    %409 = vmatprep.mubr.bf16.mxu0 0
    %410 = vmatmul.mubr.bf16.gmra.mrb[0].mxu0 %v282
    %v411 = vpop.f32.mrb[0].mxu0
    %v412 = vadd.f32 0.0, %v411
    %v413 = vpop.f32.mrb[0].mxu0
    %v414 = vpop.f32.mrb[0].mxu0
    %v415 = vadd.f32 0.0, %v414
    %v416 = vpop.f32.mrb[0].mxu0
    %417 = vmatprep.mubr.bf16.mxu0 0
    %418 = vmatmul.mubr.bf16.gmra.mrb[0].mxu0 %v285
    %v419 = vpop.f32.mrb[0].mxu0
    %v420 = vadd.f32 0.0, %v419
    %v421 = vpop.f32.mrb[0].mxu0
    %v422 = vpop.f32.mrb[0].mxu0
    %v423 = vadd.f32 0.0, %v422
    %v424 = vpop.f32.mrb[0].mxu0
    %425 = vmatprep.mubr.bf16.mxu0 0
    %426 = vmatmul.mubr.bf16.gmra.mrb[0].mxu0 %v288
    %v427 = vpop.f32.mrb[0].mxu0
    %v428 = vadd.f32 0.0, %v427
    %v429 = vpop.f32.mrb[0].mxu0
    %v430 = vpop.f32.mrb[0].mxu0
    %v431 = vadd.f32 0.0, %v430
    %v432 = vpop.f32.mrb[0].mxu0
    %433 = vmatprep.mubr.bf16.mxu0 0
    %434 = vmatmul.mubr.bf16.gmra.mrb[0].mxu0 %v291
    %v435 = vpop.f32.mrb[0].mxu0
    %v436 = vadd.f32 0.0, %v435
    %v437 = vpop.f32.mrb[0].mxu0
    %v438 = vpop.f32.mrb[0].mxu0
    %v439 = vadd.f32 0.0, %v438
    %v440 = vpop.f32.mrb[0].mxu0
    %441 = vmatprep.mubr.bf16.mxu0 0
    %442 = vmatmul.mubr.bf16.gmra.mrb[0].mxu0 %v294
    %v443 = vpop.f32.mrb[0].mxu0
    %v444 = vadd.f32 0.0, %v443
    %v445 = vpop.f32.mrb[0].mxu0
    %v446 = vpop.f32.mrb[0].mxu0
    %v447 = vadd.f32 0.0, %v446
    %v448 = vpop.f32.mrb[0].mxu0
    %449 = vmatprep.mubr.bf16.mxu0 0
    %450 = vmatmul.mubr.bf16.gmra.mrb[0].mxu0 %v297
    %v451 = vpop.f32.mrb[0].mxu0
    %v452 = vadd.f32 0.0, %v451
    %v453 = vpop.f32.mrb[0].mxu0
    %v454 = vpop.f32.mrb[0].mxu0
    %v455 = vadd.f32 0.0, %v454
    %v456 = vpop.f32.mrb[0].mxu0
    %457 = vmatprep.mubr.bf16.mxu0 0
    %458 = vmatmul.mubr.bf16.gmra.mrb[0].mxu0 %v300
    %v459 = vpop.f32.mrb[0].mxu0
    %v460 = vadd.f32 0.0, %v459
    %v461 = vpop.f32.mrb[0].mxu0
    %v462 = vpop.f32.mrb[0].mxu0
    %v463 = vadd.f32 0.0, %v462
    %v464 = vpop.f32.mrb[0].mxu0
    %465 = vmatprep.mubr.bf16.mxu0 0
    %466 = vmatmul.mubr.bf16.gmra.mrb[0].mxu0 %v303
    %v467 = vpop.f32.mrb[0].mxu0
    %v468 = vadd.f32 0.0, %v467
    %v469 = vpop.f32.mrb[0].mxu0
    %v470 = vpop.f32.mrb[0].mxu0
    %v471 = vadd.f32 0.0, %v470
    %v472 = vpop.f32.mrb[0].mxu0
    %473 = vmatprep.mubr.bf16.mxu0 0
    %474 = vmatmul.mubr.bf16.gmra.mrb[0].mxu0 %v306
    %v475 = vpop.f32.mrb[0].mxu0
    %v476 = vadd.f32 0.0, %v475
    %v477 = vpop.f32.mrb[0].mxu0
    %v478 = vpop.f32.mrb[0].mxu0
    %v479 = vadd.f32 0.0, %v478
    %v480 = vpop.f32.mrb[0].mxu0
    %481 = vmatprep.mubr.bf16.mxu0 0
    %482 = vmatmul.mubr.bf16.gmra.mrb[0].mxu0 %v309
    %v483 = vpop.f32.mrb[0].mxu0
    %v484 = vadd.f32 0.0, %v483
    %v485 = vpop.f32.mrb[0].mxu0
    %v486 = vpop.f32.mrb[0].mxu0
    %v487 = vadd.f32 0.0, %v486
    %v488 = vpop.f32.mrb[0].mxu0
    %489 = vmatprep.mubr.bf16.mxu0 0
    %490 = vmatmul.mubr.bf16.gmra.mrb[0].mxu0 %v312
    %v491 = vpop.f32.mrb[0].mxu0
    %v492 = vadd.f32 0.0, %v491
    %v493 = vpop.f32.mrb[0].mxu0
    %v494 = vpop.f32.mrb[0].mxu0
    %v495 = vadd.f32 0.0, %v494
    %v496 = vpop.f32.mrb[0].mxu0
    %497 = vmatprep.mubr.bf16.mxu0 0
    %498 = vmatmul.mubr.bf16.gmra.mrb[0].mxu0 %v315
    %v499 = vpop.f32.mrb[0].mxu0
    %v500 = vadd.f32 0.0, %v499
    %v501 = vpop.f32.mrb[0].mxu0
    %v502 = vpop.f32.mrb[0].mxu0
    %v503 = vadd.f32 0.0, %v502
    %v504 = vpop.f32.mrb[0].mxu0
    %505 = vmatprep.mubr.bf16.mxu0 0
    %506 = vmatmul.mubr.bf16.gmra.mrb[0].mxu0 %v318
    %v507 = vpop.f32.mrb[0].mxu0
    %v508 = vadd.f32 0.0, %v507
    %v509 = vpop.f32.mrb[0].mxu0
    %v510 = vpop.f32.mrb[0].mxu0
    %v511 = vadd.f32 0.0, %v510
    %v512 = vpop.f32.mrb[0].mxu0
    %513 = vmatprep.mubr.bf16.mxu0 0
    %514 = vmatmul.mubr.bf16.gmra.mrb[0].mxu0 %v321
    %v515 = vpop.f32.mrb[0].mxu0
    %v516 = vadd.f32 0.0, %v515
    %v517 = vpop.f32.mrb[0].mxu0
    %v518 = vpop.f32.mrb[0].mxu0
    %v519 = vadd.f32 0.0, %v518
    %v520 = vpop.f32.mrb[0].mxu0
    %521 = vmatprep.mubr.bf16.mxu0 0
    %522 = vmatmul.mubr.bf16.gmra.mrb[0].mxu0 %v324
    %v523 = vpop.f32.mrb[0].mxu0
    %v524 = vadd.f32 0.0, %v523
    %v525 = vpop.f32.mrb[0].mxu0
    %v526 = vpop.f32.mrb[0].mxu0
    %v527 = vadd.f32 0.0, %v526
    %v528 = vpop.f32.mrb[0].mxu0
    %529 = vmatprep.mubr.bf16.mxu0 0
    %530 = vmatmul.mubr.bf16.gmra.mrb[0].mxu0 %v327
    %v531 = vpop.f32.mrb[0].mxu0
    %v532 = vadd.f32 0.0, %v531
    %v533 = vpop.f32.mrb[0].mxu0
    %v534 = vpop.f32.mrb[0].mxu0
    %v535 = vadd.f32 0.0, %v534
    %v536 = vpop.f32.mrb[0].mxu0
    %537 = vmatprep.mubr.bf16.mxu0 0
    %538 = vmatmul.mubr.bf16.gmra.mrb[0].mxu0 %v330
    %v539 = vpop.f32.mrb[0].mxu0
    %v540 = vadd.f32 0.0, %v539
    %v541 = vpop.f32.mrb[0].mxu0
    %v542 = vpop.f32.mrb[0].mxu0
    %v543 = vadd.f32 0.0, %v542
    %v544 = vpop.f32.mrb[0].mxu0
    %545 = vmatprep.mubr.bf16.mxu0 0
    %546 = vmatmul.mubr.bf16.gmra.mrb[0].mxu0 %v333
    %v547 = vpop.f32.mrb[0].mxu0
    %v548 = vadd.f32 0.0, %v547
    %v549 = vpop.f32.mrb[0].mxu0
    %v550 = vpop.f32.mrb[0].mxu0
    %v551 = vadd.f32 0.0, %v550
    %v552 = vpop.f32.mrb[0].mxu0
    %553 = vmatprep.mubr.bf16.mxu0 0
    %554 = vmatmul.mubr.bf16.gmra.mrb[0].mxu0 %v336
    %v555 = vpop.f32.mrb[0].mxu0
    %v556 = vadd.f32 0.0, %v555
    %v557 = vpop.f32.mrb[0].mxu0
    %v558 = vpop.f32.mrb[0].mxu0
    %v559 = vadd.f32 0.0, %v558
    %v560 = vpop.f32.mrb[0].mxu0
    %561 = vmatprep.mubr.bf16.mxu0 0
    %562 = vmatmul.mubr.bf16.gmra.mrb[0].mxu0 %v339
    %v563 = vpop.f32.mrb[0].mxu0
    %v564 = vadd.f32 0.0, %v563
    %v565 = vpop.f32.mrb[0].mxu0
    %v566 = vpop.f32.mrb[0].mxu0
    %v567 = vadd.f32 0.0, %v566
    %v568 = vpop.f32.mrb[0].mxu0
    %569 = vmatprep.mubr.bf16.mxu0 0
    %570 = vmatmul.mubr.bf16.gmra.mrb[0].mxu0 %v342
    %v571 = vpop.f32.mrb[0].mxu0
    %v572 = vadd.f32 0.0, %v571
    %v573 = vpop.f32.mrb[0].mxu0
    %v574 = vpop.f32.mrb[0].mxu0
    %v575 = vadd.f32 0.0, %v574
    %v576 = vpop.f32.mrb[0].mxu0
    %577 = vmatprep.mubr.bf16.mxu0 0
    %578 = vmatmul.mubr.bf16.gmra.mrb[0].mxu0 %v345
    %v579 = vpop.f32.mrb[0].mxu0
    %v580 = vadd.f32 0.0, %v579
    %v581 = vpop.f32.mrb[0].mxu0
    %v582 = vpop.f32.mrb[0].mxu0
    %v583 = vadd.f32 0.0, %v582
    %v584 = vpop.f32.mrb[0].mxu0
    %585 = vmatprep.mubr.bf16.mxu0 0
    %586 = vmatmul.mubr.bf16.gmra.mrb[0].mxu0 %v348
    %v587 = vpop.f32.mrb[0].mxu0
    %v588 = vadd.f32 0.0, %v587
    %v589 = vpop.f32.mrb[0].mxu0
    %v590 = vpop.f32.mrb[0].mxu0
    %v591 = vadd.f32 0.0, %v590
    %v592 = vpop.f32.mrb[0].mxu0
    %593 = vmatprep.mubr.bf16.mxu0 0
    %594 = vmatmul.mubr.bf16.gmra.mrb[0].mxu0 %v351
    %v595 = vpop.f32.mrb[0].mxu0
    %v596 = vadd.f32 0.0, %v595
    %v597 = vpop.f32.mrb[0].mxu0
    %v598 = vpop.f32.mrb[0].mxu0
    %v599 = vadd.f32 0.0, %v598
    %v600 = vpop.f32.mrb[0].mxu0
    %601 = vmatprep.mubr.bf16.mxu0 0
    %602 = vmatmul.mubr.bf16.gmra.mrb[0].mxu0 %v354
    %v603 = vpop.f32.mrb[0].mxu0
    %v604 = vadd.f32 0.0, %v603
    %v605 = vpop.f32.mrb[0].mxu0
    %v606 = vpop.f32.mrb[0].mxu0
    %v607 = vadd.f32 0.0, %v606
    %v608 = vpop.f32.mrb[0].mxu0
    %609 = vmatprep.mubr.bf16.mxu0 0
    %610 = vmatmul.mubr.bf16.gmra.mrb[0].mxu0 %v357
    %v611 = vpop.f32.mrb[0].mxu0
    %v612 = vadd.f32 0.0, %v611
    %v613 = vpop.f32.mrb[0].mxu0
    %v614 = vpop.f32.mrb[0].mxu0
    %v615 = vadd.f32 0.0, %v614
    %v616 = vpop.f32.mrb[0].mxu0
    %617 = vmatprep.mubr.bf16.mxu0 0
    %618 = vmatmul.mubr.bf16.gmra.mrb[0].mxu0 %v360
    %v619 = vpop.f32.mrb[0].mxu0
    %v620 = vadd.f32 0.0, %v619
    %v621 = vpop.f32.mrb[0].mxu0
    %v622 = vpop.f32.mrb[0].mxu0
    %v623 = vadd.f32 0.0, %v622
    %v624 = vpop.f32.mrb[0].mxu0
    %625 = vmatprep.mubr.bf16.mxu0 0
    %626 = vmatmul.mubr.bf16.gmra.mrb[0].mxu0 %v363
    %v627 = vpop.f32.mrb[0].mxu0
    %v628 = vadd.f32 0.0, %v627
    %v629 = vpop.f32.mrb[0].mxu0
    %v630 = vpop.f32.mrb[0].mxu0
    %v631 = vadd.f32 0.0, %v630
    %v632 = vpop.f32.mrb[0].mxu0
    %633 = vmatprep.mubr.bf16.mxu0 0
    %634 = vmatmul.mubr.bf16.gmra.mrb[0].mxu0 %v366
    %v635 = vpop.f32.mrb[0].mxu0
    %v636 = vadd.f32 0.0, %v635
    %v637 = vpop.f32.mrb[0].mxu0
    %v638 = vpop.f32.mrb[0].mxu0
    %v639 = vadd.f32 0.0, %v638
    %v640 = vpop.f32.mrb[0].mxu0
    %641 = vmatprep.mubr.bf16.mxu0 0
    %642 = vmatmul.mubr.bf16.gmra.mrb[0].mxu0 %v369
    %v643 = vpop.f32.mrb[0].mxu0
    %v644 = vadd.f32 0.0, %v643
    %v645 = vpop.f32.mrb[0].mxu0
    %v646 = vpop.f32.mrb[0].mxu0
    %v647 = vadd.f32 0.0, %v646
    %v648 = vpop.f32.mrb[0].mxu0
    %649 = vmatprep.mubr.bf16.mxu0 0
    %650 = vmatmul.mubr.bf16.gmra.mrb[0].mxu0 %v372
    %v651 = vpop.f32.mrb[0].mxu0
    %v652 = vadd.f32 0.0, %v651
    %v653 = vpop.f32.mrb[0].mxu0
    %v654 = vpop.f32.mrb[0].mxu0
    %v655 = vadd.f32 0.0, %v654
    %v656 = vpop.f32.mrb[0].mxu0
    %657 = vmatprep.mubr.bf16.mxu0 0
    %658 = vmatmul.mubr.bf16.gmra.mrb[0].mxu0 %v375
    %v659 = vpop.f32.mrb[0].mxu0
    %v660 = vadd.f32 0.0, %v659
    %v661 = vpop.f32.mrb[0].mxu0
    %v662 = vpop.f32.mrb[0].mxu0
    %v663 = vadd.f32 0.0, %v662
    %v664 = vpop.f32.mrb[0].mxu0
    %665 = vdwg.mxu0
    %v666 = vld [vmem:[%s2] sm:$0x1]
    %v668 = vlaneseq
    %v669 = vshrl.u32 %v668, 7
    %v670 = vsub.s32 0, %v669
    %v671 = vrot.slane %v666, %v670
    %v673 = vmul.f32 %v412, %v671
    %v674 = vmul.f32 %v415, %v671
    %v675 = vmul.f32 %v420, %v671
    %v676 = vmul.f32 %v423, %v671
    %v677 = vmul.f32 %v428, %v671
    %v678 = vmul.f32 %v431, %v671
    %v679 = vmul.f32 %v436, %v671
    %v680 = vmul.f32 %v439, %v671
    %v681 = vmul.f32 %v444, %v671
    %v682 = vmul.f32 %v447, %v671
    %v683 = vmul.f32 %v452, %v671
    %v684 = vmul.f32 %v455, %v671
    %v685 = vmul.f32 %v460, %v671
    %v686 = vmul.f32 %v463, %v671
    %v687 = vmul.f32 %v468, %v671
    %v688 = vmul.f32 %v471, %v671
    %v689 = vmul.f32 %v476, %v671
    %v690 = vmul.f32 %v479, %v671
    %v691 = vmul.f32 %v484, %v671
    %v692 = vmul.f32 %v487, %v671
    %v693 = vmul.f32 %v492, %v671
    %v694 = vmul.f32 %v495, %v671
    %v695 = vmul.f32 %v500, %v671
    %v696 = vmul.f32 %v503, %v671
    %v697 = vmul.f32 %v508, %v671
    %v698 = vmul.f32 %v511, %v671
    %v699 = vmul.f32 %v516, %v671
    %v700 = vmul.f32 %v519, %v671
    %v701 = vmul.f32 %v524, %v671
    %v702 = vmul.f32 %v527, %v671
    %v703 = vmul.f32 %v532, %v671
    %v704 = vmul.f32 %v535, %v671
    %v705 = vmul.f32 %v540, %v671
    %v706 = vmul.f32 %v543, %v671
    %v707 = vmul.f32 %v548, %v671
    %v708 = vmul.f32 %v551, %v671
    %v709 = vmul.f32 %v556, %v671
    %v710 = vmul.f32 %v559, %v671
    %v711 = vmul.f32 %v564, %v671
    %v712 = vmul.f32 %v567, %v671
    %v713 = vmul.f32 %v572, %v671
    %v714 = vmul.f32 %v575, %v671
    %v715 = vmul.f32 %v580, %v671
    %v716 = vmul.f32 %v583, %v671
    %v717 = vmul.f32 %v588, %v671
    %v718 = vmul.f32 %v591, %v671
    %v719 = vmul.f32 %v596, %v671
    %v720 = vmul.f32 %v599, %v671
    %v721 = vmul.f32 %v604, %v671
    %v722 = vmul.f32 %v607, %v671
    %v723 = vmul.f32 %v612, %v671
    %v724 = vmul.f32 %v615, %v671
    %v725 = vmul.f32 %v620, %v671
    %v726 = vmul.f32 %v623, %v671
    %v727 = vmul.f32 %v628, %v671
    %v728 = vmul.f32 %v631, %v671
    %v729 = vmul.f32 %v636, %v671
    %v730 = vmul.f32 %v639, %v671
    %v731 = vmul.f32 %v644, %v671
    %v732 = vmul.f32 %v647, %v671
    %v733 = vmul.f32 %v652, %v671
    %v734 = vmul.f32 %v655, %v671
    %v735 = vmul.f32 %v660, %v671
    %v736 = vmul.f32 %v663, %v671
    %v737 = vld [vmem:[%s3] sm:$0x1]
    %v739 = vlaneseq
    %v740 = vshrl.u32 %v739, 7
    %v741 = vsub.s32 0, %v740
    %v742 = vrot.slane %v737, %v741
    %v744 = vadd.f32 %v673, %v742
    %v745 = vadd.f32 %v674, %v742
    %v746 = vadd.f32 %v675, %v742
    %v747 = vadd.f32 %v676, %v742
    %v748 = vadd.f32 %v677, %v742
    %v749 = vadd.f32 %v678, %v742
    %v750 = vadd.f32 %v679, %v742
    %v751 = vadd.f32 %v680, %v742
    %v752 = vadd.f32 %v681, %v742
    %v753 = vadd.f32 %v682, %v742
    %v754 = vadd.f32 %v683, %v742
    %v755 = vadd.f32 %v684, %v742
    %v756 = vadd.f32 %v685, %v742
    %v757 = vadd.f32 %v686, %v742
    %v758 = vadd.f32 %v687, %v742
    %v759 = vadd.f32 %v688, %v742
    %v760 = vadd.f32 %v689, %v742
    %v761 = vadd.f32 %v690, %v742
    %v762 = vadd.f32 %v691, %v742
    %v763 = vadd.f32 %v692, %v742
    %v764 = vadd.f32 %v693, %v742
    %v765 = vadd.f32 %v694, %v742
    %v766 = vadd.f32 %v695, %v742
    %v767 = vadd.f32 %v696, %v742
    %v768 = vadd.f32 %v697, %v742
    %v769 = vadd.f32 %v698, %v742
    %v770 = vadd.f32 %v699, %v742
    %v771 = vadd.f32 %v700, %v742
    %v772 = vadd.f32 %v701, %v742
    %v773 = vadd.f32 %v702, %v742
    %v774 = vadd.f32 %v703, %v742
    %v775 = vadd.f32 %v704, %v742
    %v776 = vadd.f32 %v705, %v742
    %v777 = vadd.f32 %v706, %v742
    %v778 = vadd.f32 %v707, %v742
    %v779 = vadd.f32 %v708, %v742
    %v780 = vadd.f32 %v709, %v742
    %v781 = vadd.f32 %v710, %v742
    %v782 = vadd.f32 %v711, %v742
    %v783 = vadd.f32 %v712, %v742
    %v784 = vadd.f32 %v713, %v742
    %v785 = vadd.f32 %v714, %v742
    %v786 = vadd.f32 %v715, %v742
    %v787 = vadd.f32 %v716, %v742
    %v788 = vadd.f32 %v717, %v742
    %v789 = vadd.f32 %v718, %v742
    %v790 = vadd.f32 %v719, %v742
    %v791 = vadd.f32 %v720, %v742
    %v792 = vadd.f32 %v721, %v742
    %v793 = vadd.f32 %v722, %v742
    %v794 = vadd.f32 %v723, %v742
    %v795 = vadd.f32 %v724, %v742
    %v796 = vadd.f32 %v725, %v742
    %v797 = vadd.f32 %v726, %v742
    %v798 = vadd.f32 %v727, %v742
    %v799 = vadd.f32 %v728, %v742
    %v800 = vadd.f32 %v729, %v742
    %v801 = vadd.f32 %v730, %v742
    %v802 = vadd.f32 %v731, %v742
    %v803 = vadd.f32 %v732, %v742
    %v804 = vadd.f32 %v733, %v742
    %v805 = vadd.f32 %v734, %v742
    %v806 = vadd.f32 %v735, %v742
    %v807 = vadd.f32 %v736, %v742
    %vm808 = vcmp.gt.f32.partialorder %v744, 0.0
    %vm809 = vcmp.gt.f32.partialorder %v745, 0.0
    %vm810 = vcmp.gt.f32.partialorder %v746, 0.0
    %vm811 = vcmp.gt.f32.partialorder %v747, 0.0
    %vm812 = vcmp.gt.f32.partialorder %v748, 0.0
    %vm813 = vcmp.gt.f32.partialorder %v749, 0.0
    %vm814 = vcmp.gt.f32.partialorder %v750, 0.0
    %vm815 = vcmp.gt.f32.partialorder %v751, 0.0
    %vm816 = vcmp.gt.f32.partialorder %v752, 0.0
    %vm817 = vcmp.gt.f32.partialorder %v753, 0.0
    %vm818 = vcmp.gt.f32.partialorder %v754, 0.0
    %vm819 = vcmp.gt.f32.partialorder %v755, 0.0
    %vm820 = vcmp.gt.f32.partialorder %v756, 0.0
    %vm821 = vcmp.gt.f32.partialorder %v757, 0.0
    %vm822 = vcmp.gt.f32.partialorder %v758, 0.0
    %vm823 = vcmp.gt.f32.partialorder %v759, 0.0
    %vm824 = vcmp.gt.f32.partialorder %v760, 0.0
    %vm825 = vcmp.gt.f32.partialorder %v761, 0.0
    %vm826 = vcmp.gt.f32.partialorder %v762, 0.0
    %vm827 = vcmp.gt.f32.partialorder %v763, 0.0
    %vm828 = vcmp.gt.f32.partialorder %v764, 0.0
    %vm829 = vcmp.gt.f32.partialorder %v765, 0.0
    %vm830 = vcmp.gt.f32.partialorder %v766, 0.0
    %vm831 = vcmp.gt.f32.partialorder %v767, 0.0
    %vm832 = vcmp.gt.f32.partialorder %v768, 0.0
    %vm833 = vcmp.gt.f32.partialorder %v769, 0.0
    %vm834 = vcmp.gt.f32.partialorder %v770, 0.0
    %vm835 = vcmp.gt.f32.partialorder %v771, 0.0
    %vm836 = vcmp.gt.f32.partialorder %v772, 0.0
    %vm837 = vcmp.gt.f32.partialorder %v773, 0.0
    %vm838 = vcmp.gt.f32.partialorder %v774, 0.0
    %vm839 = vcmp.gt.f32.partialorder %v775, 0.0
    %vm840 = vcmp.gt.f32.partialorder %v776, 0.0
    %vm841 = vcmp.gt.f32.partialorder %v777, 0.0
    %vm842 = vcmp.gt.f32.partialorder %v778, 0.0
    %vm843 = vcmp.gt.f32.partialorder %v779, 0.0
    %vm844 = vcmp.gt.f32.partialorder %v780, 0.0
    %vm845 = vcmp.gt.f32.partialorder %v781, 0.0
    %vm846 = vcmp.gt.f32.partialorder %v782, 0.0
    %vm847 = vcmp.gt.f32.partialorder %v783, 0.0
    %vm848 = vcmp.gt.f32.partialorder %v784, 0.0
    %vm849 = vcmp.gt.f32.partialorder %v785, 0.0
    %vm850 = vcmp.gt.f32.partialorder %v786, 0.0
    %vm851 = vcmp.gt.f32.partialorder %v787, 0.0
    %vm852 = vcmp.gt.f32.partialorder %v788, 0.0
    %vm853 = vcmp.gt.f32.partialorder %v789, 0.0
    %vm854 = vcmp.gt.f32.partialorder %v790, 0.0
    %vm855 = vcmp.gt.f32.partialorder %v791, 0.0
    %vm856 = vcmp.gt.f32.partialorder %v792, 0.0
    %vm857 = vcmp.gt.f32.partialorder %v793, 0.0
    %vm858 = vcmp.gt.f32.partialorder %v794, 0.0
    %vm859 = vcmp.gt.f32.partialorder %v795, 0.0
    %vm860 = vcmp.gt.f32.partialorder %v796, 0.0
    %vm861 = vcmp.gt.f32.partialorder %v797, 0.0
    %vm862 = vcmp.gt.f32.partialorder %v798, 0.0
    %vm863 = vcmp.gt.f32.partialorder %v799, 0.0
    %vm864 = vcmp.gt.f32.partialorder %v800, 0.0
    %vm865 = vcmp.gt.f32.partialorder %v801, 0.0
    %vm866 = vcmp.gt.f32.partialorder %v802, 0.0
    %vm867 = vcmp.gt.f32.partialorder %v803, 0.0
    %vm868 = vcmp.gt.f32.partialorder %v804, 0.0
    %vm869 = vcmp.gt.f32.partialorder %v805, 0.0
    %vm870 = vcmp.gt.f32.partialorder %v806, 0.0
    %vm871 = vcmp.gt.f32.partialorder %v807, 0.0
    %v872 = vmul.f32 %v744, 0.1
    %v873 = vmul.f32 %v745, 0.1
    %v874 = vmul.f32 %v746, 0.1
    %v875 = vmul.f32 %v747, 0.1
    %v876 = vmul.f32 %v748, 0.1
    %v877 = vmul.f32 %v749, 0.1
    %v878 = vmul.f32 %v750, 0.1
    %v879 = vmul.f32 %v751, 0.1
    %v880 = vmul.f32 %v752, 0.1
    %v881 = vmul.f32 %v753, 0.1
    %v882 = vmul.f32 %v754, 0.1
    %v883 = vmul.f32 %v755, 0.1
    %v884 = vmul.f32 %v756, 0.1
    %v885 = vmul.f32 %v757, 0.1
    %v886 = vmul.f32 %v758, 0.1
    %v887 = vmul.f32 %v759, 0.1
    %v888 = vmul.f32 %v760, 0.1
    %v889 = vmul.f32 %v761, 0.1
    %v890 = vmul.f32 %v762, 0.1
    %v891 = vmul.f32 %v763, 0.1
    %v892 = vmul.f32 %v764, 0.1
    %v893 = vmul.f32 %v765, 0.1
    %v894 = vmul.f32 %v766, 0.1
    %v895 = vmul.f32 %v767, 0.1
    %v896 = vmul.f32 %v768, 0.1
    %v897 = vmul.f32 %v769, 0.1
    %v898 = vmul.f32 %v770, 0.1
    %v899 = vmul.f32 %v771, 0.1
    %v900 = vmul.f32 %v772, 0.1
    %v901 = vmul.f32 %v773, 0.1
    %v902 = vmul.f32 %v774, 0.1
    %v903 = vmul.f32 %v775, 0.1
    %v904 = vmul.f32 %v776, 0.1
    %v905 = vmul.f32 %v777, 0.1
    %v906 = vmul.f32 %v778, 0.1
    %v907 = vmul.f32 %v779, 0.1
    %v908 = vmul.f32 %v780, 0.1
    %v909 = vmul.f32 %v781, 0.1
    %v910 = vmul.f32 %v782, 0.1
    %v911 = vmul.f32 %v783, 0.1
    %v912 = vmul.f32 %v784, 0.1
    %v913 = vmul.f32 %v785, 0.1
    %v914 = vmul.f32 %v786, 0.1
    %v915 = vmul.f32 %v787, 0.1
    %v916 = vmul.f32 %v788, 0.1
    %v917 = vmul.f32 %v789, 0.1
    %v918 = vmul.f32 %v790, 0.1
    %v919 = vmul.f32 %v791, 0.1
    %v920 = vmul.f32 %v792, 0.1
    %v921 = vmul.f32 %v793, 0.1
    %v922 = vmul.f32 %v794, 0.1
    %v923 = vmul.f32 %v795, 0.1
    %v924 = vmul.f32 %v796, 0.1
    %v925 = vmul.f32 %v797, 0.1
    %v926 = vmul.f32 %v798, 0.1
    %v927 = vmul.f32 %v799, 0.1
    %v928 = vmul.f32 %v800, 0.1
    %v929 = vmul.f32 %v801, 0.1
    %v930 = vmul.f32 %v802, 0.1
    %v931 = vmul.f32 %v803, 0.1
    %v932 = vmul.f32 %v804, 0.1
    %v933 = vmul.f32 %v805, 0.1
    %v934 = vmul.f32 %v806, 0.1
    %v935 = vmul.f32 %v807, 0.1
    %v936 = vsel %vm808, %v744, %v872
    %v937 = vsel %vm809, %v745, %v873
    %v938 = vsel %vm810, %v746, %v874
    %v939 = vsel %vm811, %v747, %v875
    %v940 = vsel %vm812, %v748, %v876
    %v941 = vsel %vm813, %v749, %v877
    %v942 = vsel %vm814, %v750, %v878
    %v943 = vsel %vm815, %v751, %v879
    %v944 = vsel %vm816, %v752, %v880
    %v945 = vsel %vm817, %v753, %v881
    %v946 = vsel %vm818, %v754, %v882
    %v947 = vsel %vm819, %v755, %v883
    %v948 = vsel %vm820, %v756, %v884
    %v949 = vsel %vm821, %v757, %v885
    %v950 = vsel %vm822, %v758, %v886
    %v951 = vsel %vm823, %v759, %v887
    %v952 = vsel %vm824, %v760, %v888
    %v953 = vsel %vm825, %v761, %v889
    %v954 = vsel %vm826, %v762, %v890
    %v955 = vsel %vm827, %v763, %v891
    %v956 = vsel %vm828, %v764, %v892
    %v957 = vsel %vm829, %v765, %v893
    %v958 = vsel %vm830, %v766, %v894
    %v959 = vsel %vm831, %v767, %v895
    %v960 = vsel %vm832, %v768, %v896
    %v961 = vsel %vm833, %v769, %v897
    %v962 = vsel %vm834, %v770, %v898
    %v963 = vsel %vm835, %v771, %v899
    %v964 = vsel %vm836, %v772, %v900
    %v965 = vsel %vm837, %v773, %v901
    %v966 = vsel %vm838, %v774, %v902
    %v967 = vsel %vm839, %v775, %v903
    %v968 = vsel %vm840, %v776, %v904
    %v969 = vsel %vm841, %v777, %v905
    %v970 = vsel %vm842, %v778, %v906
    %v971 = vsel %vm843, %v779, %v907
    %v972 = vsel %vm844, %v780, %v908
    %v973 = vsel %vm845, %v781, %v909
    %v974 = vsel %vm846, %v782, %v910
    %v975 = vsel %vm847, %v783, %v911
    %v976 = vsel %vm848, %v784, %v912
    %v977 = vsel %vm849, %v785, %v913
    %v978 = vsel %vm850, %v786, %v914
    %v979 = vsel %vm851, %v787, %v915
    %v980 = vsel %vm852, %v788, %v916
    %v981 = vsel %vm853, %v789, %v917
    %v982 = vsel %vm854, %v790, %v918
    %v983 = vsel %vm855, %v791, %v919
    %v984 = vsel %vm856, %v792, %v920
    %v985 = vsel %vm857, %v793, %v921
    %v986 = vsel %vm858, %v794, %v922
    %v987 = vsel %vm859, %v795, %v923
    %v988 = vsel %vm860, %v796, %v924
    %v989 = vsel %vm861, %v797, %v925
    %v990 = vsel %vm862, %v798, %v926
    %v991 = vsel %vm863, %v799, %v927
    %v992 = vsel %vm864, %v800, %v928
    %v993 = vsel %vm865, %v801, %v929
    %v994 = vsel %vm866, %v802, %v930
    %v995 = vsel %vm867, %v803, %v931
    %v996 = vsel %vm868, %v804, %v932
    %v997 = vsel %vm869, %v805, %v933
    %v998 = vsel %vm870, %v806, %v934
    %v999 = vsel %vm871, %v807, %v935
    %v1000 = vpack.c.bf16 %v937, %v936
    %v1001 = vpack.c.bf16 %v939, %v938
    %v1002 = vpack.c.bf16 %v941, %v940
    %v1003 = vpack.c.bf16 %v943, %v942
    %v1004 = vpack.c.bf16 %v945, %v944
    %v1005 = vpack.c.bf16 %v947, %v946
    %v1006 = vpack.c.bf16 %v949, %v948
    %v1007 = vpack.c.bf16 %v951, %v950
    %v1008 = vpack.c.bf16 %v953, %v952
    %v1009 = vpack.c.bf16 %v955, %v954
    %v1010 = vpack.c.bf16 %v957, %v956
    %v1011 = vpack.c.bf16 %v959, %v958
    %v1012 = vpack.c.bf16 %v961, %v960
    %v1013 = vpack.c.bf16 %v963, %v962
    %v1014 = vpack.c.bf16 %v965, %v964
    %v1015 = vpack.c.bf16 %v967, %v966
    %v1016 = vpack.c.bf16 %v969, %v968
    %v1017 = vpack.c.bf16 %v971, %v970
    %v1018 = vpack.c.bf16 %v973, %v972
    %v1019 = vpack.c.bf16 %v975, %v974
    %v1020 = vpack.c.bf16 %v977, %v976
    %v1021 = vpack.c.bf16 %v979, %v978
    %v1022 = vpack.c.bf16 %v981, %v980
    %v1023 = vpack.c.bf16 %v983, %v982
    %v1024 = vpack.c.bf16 %v985, %v984
    %v1025 = vpack.c.bf16 %v987, %v986
    %v1026 = vpack.c.bf16 %v989, %v988
    %v1027 = vpack.c.bf16 %v991, %v990
    %v1028 = vpack.c.bf16 %v993, %v992
    %v1029 = vpack.c.bf16 %v995, %v994
    %v1030 = vpack.c.bf16 %v997, %v996
    %v1031 = vpack.c.bf16 %v999, %v998
    %v1064 = vunpack.c.l.b16 %v1000
    %v1065 = vunpack.c.h.b16 %v1000
    %v1066 = vunpack.c.l.b16 %v1001
    %v1067 = vunpack.c.h.b16 %v1001
    %v1068 = vunpack.c.l.b16 %v1002
    %v1069 = vunpack.c.h.b16 %v1002
    %v1070 = vunpack.c.l.b16 %v1003
    %v1071 = vunpack.c.h.b16 %v1003
    %v1072 = vunpack.c.l.b16 %v1004
    %v1073 = vunpack.c.h.b16 %v1004
    %v1074 = vunpack.c.l.b16 %v1005
    %v1075 = vunpack.c.h.b16 %v1005
    %v1076 = vunpack.c.l.b16 %v1006
    %v1077 = vunpack.c.h.b16 %v1006
    %v1078 = vunpack.c.l.b16 %v1007
    %v1079 = vunpack.c.h.b16 %v1007
    %v1080 = vunpack.c.l.b16 %v1008
    %v1081 = vunpack.c.h.b16 %v1008
    %v1082 = vunpack.c.l.b16 %v1009
    %v1083 = vunpack.c.h.b16 %v1009
    %v1084 = vunpack.c.l.b16 %v1010
    %v1085 = vunpack.c.h.b16 %v1010
    %v1086 = vunpack.c.l.b16 %v1011
    %v1087 = vunpack.c.h.b16 %v1011
    %v1088 = vunpack.c.l.b16 %v1012
    %v1089 = vunpack.c.h.b16 %v1012
    %v1090 = vunpack.c.l.b16 %v1013
    %v1091 = vunpack.c.h.b16 %v1013
    %v1092 = vunpack.c.l.b16 %v1014
    %v1093 = vunpack.c.h.b16 %v1014
    %v1094 = vunpack.c.l.b16 %v1015
    %v1095 = vunpack.c.h.b16 %v1015
    %v1096 = vunpack.c.l.b16 %v1016
    %v1097 = vunpack.c.h.b16 %v1016
    %v1098 = vunpack.c.l.b16 %v1017
    %v1099 = vunpack.c.h.b16 %v1017
    %v1100 = vunpack.c.l.b16 %v1018
    %v1101 = vunpack.c.h.b16 %v1018
    %v1102 = vunpack.c.l.b16 %v1019
    %v1103 = vunpack.c.h.b16 %v1019
    %v1104 = vunpack.c.l.b16 %v1020
    %v1105 = vunpack.c.h.b16 %v1020
    %v1106 = vunpack.c.l.b16 %v1021
    %v1107 = vunpack.c.h.b16 %v1021
    %v1108 = vunpack.c.l.b16 %v1022
    %v1109 = vunpack.c.h.b16 %v1022
    %v1110 = vunpack.c.l.b16 %v1023
    %v1111 = vunpack.c.h.b16 %v1023
    %v1112 = vunpack.c.l.b16 %v1024
    %v1113 = vunpack.c.h.b16 %v1024
    %v1114 = vunpack.c.l.b16 %v1025
    %v1115 = vunpack.c.h.b16 %v1025
    %v1116 = vunpack.c.l.b16 %v1026
    %v1117 = vunpack.c.h.b16 %v1026
    %v1118 = vunpack.c.l.b16 %v1027
    %v1119 = vunpack.c.h.b16 %v1027
    %v1120 = vunpack.c.l.b16 %v1028
    %v1121 = vunpack.c.h.b16 %v1028
    %v1122 = vunpack.c.l.b16 %v1029
    %v1123 = vunpack.c.h.b16 %v1029
    %v1124 = vunpack.c.l.b16 %v1030
    %v1125 = vunpack.c.h.b16 %v1030
    %v1126 = vunpack.c.l.b16 %v1031
    %v1127 = vunpack.c.h.b16 %v1031
    %v1128 = vpack.c.b16 %v1064, %v1064
    %v1129 = vpack.c.b16 %v1065, %v1065
    %v1130 = vpack.c.b16 %v1066, %v1066
    %v1131 = vpack.c.b16 %v1067, %v1067
    %v1132 = vpack.c.b16 %v1068, %v1068
    %v1133 = vpack.c.b16 %v1069, %v1069
    %v1134 = vpack.c.b16 %v1070, %v1070
    %v1135 = vpack.c.b16 %v1071, %v1071
    %v1136 = vpack.c.b16 %v1072, %v1072
    %v1137 = vpack.c.b16 %v1073, %v1073
    %v1138 = vpack.c.b16 %v1074, %v1074
    %v1139 = vpack.c.b16 %v1075, %v1075
    %v1140 = vpack.c.b16 %v1076, %v1076
    %v1141 = vpack.c.b16 %v1077, %v1077
    %v1142 = vpack.c.b16 %v1078, %v1078
    %v1143 = vpack.c.b16 %v1079, %v1079
    %v1144 = vpack.c.b16 %v1080, %v1080
    %v1145 = vpack.c.b16 %v1081, %v1081
    %v1146 = vpack.c.b16 %v1082, %v1082
    %v1147 = vpack.c.b16 %v1083, %v1083
    %v1148 = vpack.c.b16 %v1084, %v1084
    %v1149 = vpack.c.b16 %v1085, %v1085
    %v1150 = vpack.c.b16 %v1086, %v1086
    %v1151 = vpack.c.b16 %v1087, %v1087
    %v1152 = vpack.c.b16 %v1088, %v1088
    %v1153 = vpack.c.b16 %v1089, %v1089
    %v1154 = vpack.c.b16 %v1090, %v1090
    %v1155 = vpack.c.b16 %v1091, %v1091
    %v1156 = vpack.c.b16 %v1092, %v1092
    %v1157 = vpack.c.b16 %v1093, %v1093
    %v1158 = vpack.c.b16 %v1094, %v1094
    %v1159 = vpack.c.b16 %v1095, %v1095
    %v1160 = vpack.c.b16 %v1096, %v1096
    %v1161 = vpack.c.b16 %v1097, %v1097
    %v1162 = vpack.c.b16 %v1098, %v1098
    %v1163 = vpack.c.b16 %v1099, %v1099
    %v1164 = vpack.c.b16 %v1100, %v1100
    %v1165 = vpack.c.b16 %v1101, %v1101
    %v1166 = vpack.c.b16 %v1102, %v1102
    %v1167 = vpack.c.b16 %v1103, %v1103
    %v1168 = vpack.c.b16 %v1104, %v1104
    %v1169 = vpack.c.b16 %v1105, %v1105
    %v1170 = vpack.c.b16 %v1106, %v1106
    %v1171 = vpack.c.b16 %v1107, %v1107
    %v1172 = vpack.c.b16 %v1108, %v1108
    %v1173 = vpack.c.b16 %v1109, %v1109
    %v1174 = vpack.c.b16 %v1110, %v1110
    %v1175 = vpack.c.b16 %v1111, %v1111
    %v1176 = vpack.c.b16 %v1112, %v1112
    %v1177 = vpack.c.b16 %v1113, %v1113
    %v1178 = vpack.c.b16 %v1114, %v1114
    %v1179 = vpack.c.b16 %v1115, %v1115
    %v1180 = vpack.c.b16 %v1116, %v1116
    %v1181 = vpack.c.b16 %v1117, %v1117
    %v1182 = vpack.c.b16 %v1118, %v1118
    %v1183 = vpack.c.b16 %v1119, %v1119
    %v1184 = vpack.c.b16 %v1120, %v1120
    %v1185 = vpack.c.b16 %v1121, %v1121
    %v1186 = vpack.c.b16 %v1122, %v1122
    %v1187 = vpack.c.b16 %v1123, %v1123
    %v1188 = vpack.c.b16 %v1124, %v1124
    %v1189 = vpack.c.b16 %v1125, %v1125
    %v1190 = vpack.c.b16 %v1126, %v1126
    %v1191 = vpack.c.b16 %v1127, %v1127
    %1256 = vst [vmem:[#allocation2] sm:$0xf] %v1128
    %1257 = vst [vmem:[#allocation2 + $0x4] sm:$0xf] %v1129
    %1258 = vst [vmem:[#allocation2 + $0x8] sm:$0xf] %v1130
    %1259 = vst [vmem:[#allocation2 + $0xc] sm:$0xf] %v1131
    %1260 = vst [vmem:[#allocation2 + $0x10] sm:$0xf] %v1132
    %1261 = vst [vmem:[#allocation2 + $0x14] sm:$0xf] %v1133
    %1262 = vst [vmem:[#allocation2 + $0x18] sm:$0xf] %v1134
    %1263 = vst [vmem:[#allocation2 + $0x1c] sm:$0xf] %v1135
    %1264 = vst [vmem:[#allocation2 + $0x20] sm:$0xf] %v1136
    %1265 = vst [vmem:[#allocation2 + $0x24] sm:$0xf] %v1137
    %1266 = vst [vmem:[#allocation2 + $0x28] sm:$0xf] %v1138
    %1267 = vst [vmem:[#allocation2 + $0x2c] sm:$0xf] %v1139
    %1268 = vst [vmem:[#allocation2 + $0x30] sm:$0xf] %v1140
    %1269 = vst [vmem:[#allocation2 + $0x34] sm:$0xf] %v1141
    %1270 = vst [vmem:[#allocation2 + $0x38] sm:$0xf] %v1142
    %1271 = vst [vmem:[#allocation2 + $0x3c] sm:$0xf] %v1143
    %1272 = vst [vmem:[#allocation2 + $0x40] sm:$0xf] %v1144
    %1273 = vst [vmem:[#allocation2 + $0x44] sm:$0xf] %v1145
    %1274 = vst [vmem:[#allocation2 + $0x48] sm:$0xf] %v1146
    %1275 = vst [vmem:[#allocation2 + $0x4c] sm:$0xf] %v1147
    %1276 = vst [vmem:[#allocation2 + $0x50] sm:$0xf] %v1148
    %1277 = vst [vmem:[#allocation2 + $0x54] sm:$0xf] %v1149
    %1278 = vst [vmem:[#allocation2 + $0x58] sm:$0xf] %v1150
    %1279 = vst [vmem:[#allocation2 + $0x5c] sm:$0xf] %v1151
    %1280 = vst [vmem:[#allocation2 + $0x60] sm:$0xf] %v1152
    %1281 = vst [vmem:[#allocation2 + $0x64] sm:$0xf] %v1153
    %1282 = vst [vmem:[#allocation2 + $0x68] sm:$0xf] %v1154
    %1283 = vst [vmem:[#allocation2 + $0x6c] sm:$0xf] %v1155
    %1284 = vst [vmem:[#allocation2 + $0x70] sm:$0xf] %v1156
    %1285 = vst [vmem:[#allocation2 + $0x74] sm:$0xf] %v1157
    %1286 = vst [vmem:[#allocation2 + $0x78] sm:$0xf] %v1158
    %1287 = vst [vmem:[#allocation2 + $0x7c] sm:$0xf] %v1159
    %1288 = vst [vmem:[#allocation2 + $0x80] sm:$0xf] %v1160
    %1289 = vst [vmem:[#allocation2 + $0x84] sm:$0xf] %v1161
    %1290 = vst [vmem:[#allocation2 + $0x88] sm:$0xf] %v1162
    %1291 = vst [vmem:[#allocation2 + $0x8c] sm:$0xf] %v1163
    %1292 = vst [vmem:[#allocation2 + $0x90] sm:$0xf] %v1164
    %1293 = vst [vmem:[#allocation2 + $0x94] sm:$0xf] %v1165
    %1294 = vst [vmem:[#allocation2 + $0x98] sm:$0xf] %v1166
    %1295 = vst [vmem:[#allocation2 + $0x9c] sm:$0xf] %v1167
    %1296 = vst [vmem:[#allocation2 + $0xa0] sm:$0xf] %v1168
    %1297 = vst [vmem:[#allocation2 + $0xa4] sm:$0xf] %v1169
    %1298 = vst [vmem:[#allocation2 + $0xa8] sm:$0xf] %v1170
    %1299 = vst [vmem:[#allocation2 + $0xac] sm:$0xf] %v1171
    %1300 = vst [vmem:[#allocation2 + $0xb0] sm:$0xf] %v1172
    %1301 = vst [vmem:[#allocation2 + $0xb4] sm:$0xf] %v1173
    %1302 = vst [vmem:[#allocation2 + $0xb8] sm:$0xf] %v1174
    %1303 = vst [vmem:[#allocation2 + $0xbc] sm:$0xf] %v1175
    %1304 = vst [vmem:[#allocation2 + $0xc0] sm:$0xf] %v1176
    %1305 = vst [vmem:[#allocation2 + $0xc4] sm:$0xf] %v1177
    %1306 = vst [vmem:[#allocation2 + $0xc8] sm:$0xf] %v1178
    %1307 = vst [vmem:[#allocation2 + $0xcc] sm:$0xf] %v1179
    %1308 = vst [vmem:[#allocation2 + $0xd0] sm:$0xf] %v1180
    %1309 = vst [vmem:[#allocation2 + $0xd4] sm:$0xf] %v1181
    %1310 = vst [vmem:[#allocation2 + $0xd8] sm:$0xf] %v1182
    %1311 = vst [vmem:[#allocation2 + $0xdc] sm:$0xf] %v1183
    %1312 = vst [vmem:[#allocation2 + $0xe0] sm:$0xf] %v1184
    %1313 = vst [vmem:[#allocation2 + $0xe4] sm:$0xf] %v1185
    %1314 = vst [vmem:[#allocation2 + $0xe8] sm:$0xf] %v1186
    %1315 = vst [vmem:[#allocation2 + $0xec] sm:$0xf] %v1187
    %1316 = vst [vmem:[#allocation2 + $0xf0] sm:$0xf] %v1188
    %1317 = vst [vmem:[#allocation2 + $0xf4] sm:$0xf] %v1189
    %1318 = vst [vmem:[#allocation2 + $0xf8] sm:$0xf] %v1190
    %1319 = vst [vmem:[#allocation2 + $0xfc] sm:$0xf] %v1191
    %1320 = vst [vmem:[#allocation2 + $0x100] sm:$0xf] 0
    %1321 = vst [vmem:[#allocation2 + $0x104] sm:$0xf] 0
    %1322 = vst [vmem:[#allocation2 + $0x108] sm:$0xf] 0
    %v1323 = vld [vmem:[#allocation2] sm:$0xf]
    %v1324 = vld [vmem:[#allocation2 + $0x4] sm:$0xf]
    %v1325 = vld [vmem:[#allocation2 + $0x8] sm:$0xf]
    %v1326 = vld [vmem:[#allocation2 + $0xc] sm:$0xf]
    %v1327 = vld [vmem:[#allocation2 + $0x10] sm:$0xf]
    %v1328 = vld [vmem:[#allocation2 + $0x14] sm:$0xf]
    %v1329 = vld [vmem:[#allocation2 + $0x18] sm:$0xf]
    %v1330 = vld [vmem:[#allocation2 + $0x1c] sm:$0xf]
    %v1331 = vld [vmem:[#allocation2 + $0x20] sm:$0xf]
    %v1332 = vld [vmem:[#allocation2 + $0x24] sm:$0xf]
    %v1333 = vld [vmem:[#allocation2 + $0x28] sm:$0xf]
    %v1334 = vld [vmem:[#allocation2 + $0x2c] sm:$0xf]
    %v1335 = vld [vmem:[#allocation2 + $0x30] sm:$0xf]
    %v1336 = vld [vmem:[#allocation2 + $0x34] sm:$0xf]
    %v1337 = vld [vmem:[#allocation2 + $0x38] sm:$0xf]
    %v1338 = vld [vmem:[#allocation2 + $0x3c] sm:$0xf]
    %v1339 = vld [vmem:[#allocation2 + $0x40] sm:$0xf]
    %v1340 = vld [vmem:[#allocation2 + $0x44] sm:$0xf]
    %v1341 = vld [vmem:[#allocation2 + $0x48] sm:$0xf]
    %v1342 = vld [vmem:[#allocation2 + $0x4c] sm:$0xf]
    %v1343 = vld [vmem:[#allocation2 + $0x50] sm:$0xf]
    %v1344 = vld [vmem:[#allocation2 + $0x54] sm:$0xf]
    %v1345 = vld [vmem:[#allocation2 + $0x58] sm:$0xf]
    %v1346 = vld [vmem:[#allocation2 + $0x5c] sm:$0xf]
    %v1347 = vld [vmem:[#allocation2 + $0x60] sm:$0xf]
    %v1348 = vld [vmem:[#allocation2 + $0x64] sm:$0xf]
    %v1349 = vld [vmem:[#allocation2 + $0x68] sm:$0xf]
    %v1350 = vld [vmem:[#allocation2 + $0x6c] sm:$0xf]
    %v1351 = vld [vmem:[#allocation2 + $0x70] sm:$0xf]
    %v1352 = vld [vmem:[#allocation2 + $0x74] sm:$0xf]
    %v1353 = vld [vmem:[#allocation2 + $0x78] sm:$0xf]
    %v1354 = vld [vmem:[#allocation2 + $0x7c] sm:$0xf]
    %v1355 = vld [vmem:[#allocation2 + $0x80] sm:$0xf]
    %v1356 = vld [vmem:[#allocation2 + $0x84] sm:$0xf]
    %v1357 = vld [vmem:[#allocation2 + $0x88] sm:$0xf]
    %v1358 = vld [vmem:[#allocation2 + $0x8c] sm:$0xf]
    %v1359 = vld [vmem:[#allocation2 + $0x90] sm:$0xf]
    %v1360 = vld [vmem:[#allocation2 + $0x94] sm:$0xf]
    %v1361 = vld [vmem:[#allocation2 + $0x98] sm:$0xf]
    %v1362 = vld [vmem:[#allocation2 + $0x9c] sm:$0xf]
    %v1363 = vld [vmem:[#allocation2 + $0xa0] sm:$0xf]
    %v1364 = vld [vmem:[#allocation2 + $0xa4] sm:$0xf]
    %v1365 = vld [vmem:[#allocation2 + $0xa8] sm:$0xf]
    %v1366 = vld [vmem:[#allocation2 + $0xac] sm:$0xf]
    %v1367 = vld [vmem:[#allocation2 + $0xb0] sm:$0xf]
    %v1368 = vld [vmem:[#allocation2 + $0xb4] sm:$0xf]
    %v1369 = vld [vmem:[#allocation2 + $0xb8] sm:$0xf]
    %v1370 = vld [vmem:[#allocation2 + $0xbc] sm:$0xf]
    %v1371 = vld [vmem:[#allocation2 + $0xc0] sm:$0xf]
    %v1372 = vld [vmem:[#allocation2 + $0xc4] sm:$0xf]
    %v1373 = vld [vmem:[#allocation2 + $0xc8] sm:$0xf]
    %v1374 = vld [vmem:[#allocation2 + $0xcc] sm:$0xf]
    %v1375 = vld [vmem:[#allocation2 + $0xd0] sm:$0xf]
    %v1376 = vld [vmem:[#allocation2 + $0xd4] sm:$0xf]
    %v1377 = vld [vmem:[#allocation2 + $0xd8] sm:$0xf]
    %v1378 = vld [vmem:[#allocation2 + $0xdc] sm:$0xf]
    %v1379 = vld [vmem:[#allocation2 + $0xe0] sm:$0xf]
    %v1380 = vld [vmem:[#allocation2 + $0xe4] sm:$0xf]
    %v1381 = vld [vmem:[#allocation2 + $0xe8] sm:$0xf]
    %v1382 = vld [vmem:[#allocation2 + $0xec] sm:$0xf]
    %v1383 = vld [vmem:[#allocation2 + $0xf0] sm:$0xf]
    %v1384 = vld [vmem:[#allocation2 + $0xf4] sm:$0xf]
    %v1385 = vld [vmem:[#allocation2 + $0xf8] sm:$0xf]
    %v1386 = vld [vmem:[#allocation2 + $0xfc] sm:$0xf]
    %v1387 = vld [vmem:[#allocation2 + $0x100] sm:$0x1]
    %v1453 = vunpack.c.l.b16 %v1323
    %v1454 = vunpack.c.l.b16 %v1324
    %v1455 = vunpack.c.l.b16 %v1325
    %v1456 = vunpack.c.l.b16 %v1326
    %v1457 = vunpack.c.l.b16 %v1327
    %v1458 = vunpack.c.l.b16 %v1328
    %v1459 = vunpack.c.l.b16 %v1329
    %v1460 = vunpack.c.l.b16 %v1330
    %v1461 = vunpack.c.l.b16 %v1331
    %v1462 = vunpack.c.l.b16 %v1332
    %v1463 = vunpack.c.l.b16 %v1333
    %v1464 = vunpack.c.l.b16 %v1334
    %v1465 = vunpack.c.l.b16 %v1335
    %v1466 = vunpack.c.l.b16 %v1336
    %v1467 = vunpack.c.l.b16 %v1337
    %v1468 = vunpack.c.l.b16 %v1338
    %v1469 = vunpack.c.l.b16 %v1339
    %v1470 = vunpack.c.l.b16 %v1340
    %v1471 = vunpack.c.l.b16 %v1341
    %v1472 = vunpack.c.l.b16 %v1342
    %v1473 = vunpack.c.l.b16 %v1343
    %v1474 = vunpack.c.l.b16 %v1344
    %v1475 = vunpack.c.l.b16 %v1345
    %v1476 = vunpack.c.l.b16 %v1346
    %v1477 = vunpack.c.l.b16 %v1347
    %v1478 = vunpack.c.l.b16 %v1348
    %v1479 = vunpack.c.l.b16 %v1349
    %v1480 = vunpack.c.l.b16 %v1350
    %v1481 = vunpack.c.l.b16 %v1351
    %v1482 = vunpack.c.l.b16 %v1352
    %v1483 = vunpack.c.l.b16 %v1353
    %v1484 = vunpack.c.l.b16 %v1354
    %v1485 = vunpack.c.l.b16 %v1355
    %v1486 = vunpack.c.l.b16 %v1356
    %v1487 = vunpack.c.l.b16 %v1357
    %v1488 = vunpack.c.l.b16 %v1358
    %v1489 = vunpack.c.l.b16 %v1359
    %v1490 = vunpack.c.l.b16 %v1360
    %v1491 = vunpack.c.l.b16 %v1361
    %v1492 = vunpack.c.l.b16 %v1362
    %v1493 = vunpack.c.l.b16 %v1363
    %v1494 = vunpack.c.l.b16 %v1364
    %v1495 = vunpack.c.l.b16 %v1365
    %v1496 = vunpack.c.l.b16 %v1366
    %v1497 = vunpack.c.l.b16 %v1367
    %v1498 = vunpack.c.l.b16 %v1368
    %v1499 = vunpack.c.l.b16 %v1369
    %v1500 = vunpack.c.l.b16 %v1370
    %v1501 = vunpack.c.l.b16 %v1371
    %v1502 = vunpack.c.l.b16 %v1372
    %v1503 = vunpack.c.l.b16 %v1373
    %v1504 = vunpack.c.l.b16 %v1374
    %v1505 = vunpack.c.l.b16 %v1375
    %v1506 = vunpack.c.l.b16 %v1376
    %v1507 = vunpack.c.l.b16 %v1377
    %v1508 = vunpack.c.l.b16 %v1378
    %v1509 = vunpack.c.l.b16 %v1379
    %v1510 = vunpack.c.l.b16 %v1380
    %v1511 = vunpack.c.l.b16 %v1381
    %v1512 = vunpack.c.l.b16 %v1382
    %v1513 = vunpack.c.l.b16 %v1383
    %v1514 = vunpack.c.l.b16 %v1384
    %v1515 = vunpack.c.l.b16 %v1385
    %v1516 = vunpack.c.l.b16 %v1386
    %v1517 = vunpack.c.l.b16 %v1387
    %v1518 = vpack.c.b16 %v1454, %v1453
    %v1519 = vpack.c.b16 %v1456, %v1455
    %v1520 = vpack.c.b16 %v1458, %v1457
    %v1521 = vpack.c.b16 %v1460, %v1459
    %v1522 = vpack.c.b16 %v1462, %v1461
    %v1523 = vpack.c.b16 %v1464, %v1463
    %v1524 = vpack.c.b16 %v1466, %v1465
    %v1525 = vpack.c.b16 %v1468, %v1467
    %v1526 = vpack.c.b16 %v1470, %v1469
    %v1527 = vpack.c.b16 %v1472, %v1471
    %v1528 = vpack.c.b16 %v1474, %v1473
    %v1529 = vpack.c.b16 %v1476, %v1475
    %v1530 = vpack.c.b16 %v1478, %v1477
    %v1531 = vpack.c.b16 %v1480, %v1479
    %v1532 = vpack.c.b16 %v1482, %v1481
    %v1533 = vpack.c.b16 %v1484, %v1483
    %v1534 = vpack.c.b16 %v1486, %v1485
    %v1535 = vpack.c.b16 %v1488, %v1487
    %v1536 = vpack.c.b16 %v1490, %v1489
    %v1537 = vpack.c.b16 %v1492, %v1491
    %v1538 = vpack.c.b16 %v1494, %v1493
    %v1539 = vpack.c.b16 %v1496, %v1495
    %v1540 = vpack.c.b16 %v1498, %v1497
    %v1541 = vpack.c.b16 %v1500, %v1499
    %v1542 = vpack.c.b16 %v1502, %v1501
    %v1543 = vpack.c.b16 %v1504, %v1503
    %v1544 = vpack.c.b16 %v1506, %v1505
    %v1545 = vpack.c.b16 %v1508, %v1507
    %v1546 = vpack.c.b16 %v1510, %v1509
    %v1547 = vpack.c.b16 %v1512, %v1511
    %v1548 = vpack.c.b16 %v1514, %v1513
    %v1549 = vpack.c.b16 %v1516, %v1515
    %v1550 = vpack.c.b16 %v1517, %v1517
    %vm1551 = vsmask.f32 7424
    %v1553 = vshrl.u32 %v1518, 16
    %v1555 = vshll.u32 %v1518, 16
    %v1557 = vrot.slane %v1555, 1
    %v1558 = vor.u32 %v1553, %v1557
    %v1560 = vshll.u32 %v1519, 16
    %v1562 = vrot.slane %v1560, 1
    %v1563 = vsel %vm1551, %v1558, %v1562
    %v1564 = vshrl.u32 %v1519, 16
    %v1566 = vor.u32 %v1564, %v1562
    %v1568 = vshll.u32 %v1520, 16
    %v1570 = vrot.slane %v1568, 1
    %v1571 = vsel %vm1551, %v1566, %v1570
    %v1572 = vshrl.u32 %v1520, 16
    %v1574 = vor.u32 %v1572, %v1570
    %v1576 = vshll.u32 %v1521, 16
    %v1578 = vrot.slane %v1576, 1
    %v1579 = vsel %vm1551, %v1574, %v1578
    %v1580 = vshrl.u32 %v1521, 16
    %v1582 = vor.u32 %v1580, %v1578
    %v1584 = vshll.u32 %v1522, 16
    %v1586 = vrot.slane %v1584, 1
    %v1587 = vsel %vm1551, %v1582, %v1586
    %v1588 = vshrl.u32 %v1522, 16
    %v1590 = vor.u32 %v1588, %v1586
    %v1592 = vshll.u32 %v1523, 16
    %v1594 = vrot.slane %v1592, 1
    %v1595 = vsel %vm1551, %v1590, %v1594
    %v1596 = vshrl.u32 %v1523, 16
    %v1598 = vor.u32 %v1596, %v1594
    %v1600 = vshll.u32 %v1524, 16
    %v1602 = vrot.slane %v1600, 1
    %v1603 = vsel %vm1551, %v1598, %v1602
    %v1604 = vshrl.u32 %v1524, 16
    %v1606 = vor.u32 %v1604, %v1602
    %v1608 = vshll.u32 %v1525, 16
    %v1610 = vrot.slane %v1608, 1
    %v1611 = vsel %vm1551, %v1606, %v1610
    %v1612 = vshrl.u32 %v1525, 16
    %v1614 = vor.u32 %v1612, %v1610
    %v1616 = vshll.u32 %v1526, 16
    %v1618 = vrot.slane %v1616, 1
    %v1619 = vsel %vm1551, %v1614, %v1618
    %v1620 = vshrl.u32 %v1526, 16
    %v1622 = vor.u32 %v1620, %v1618
    %v1624 = vshll.u32 %v1527, 16
    %v1626 = vrot.slane %v1624, 1
    %v1627 = vsel %vm1551, %v1622, %v1626
    %v1628 = vshrl.u32 %v1527, 16
    %v1630 = vor.u32 %v1628, %v1626
    %v1632 = vshll.u32 %v1528, 16
    %v1634 = vrot.slane %v1632, 1
    %v1635 = vsel %vm1551, %v1630, %v1634
    %v1636 = vshrl.u32 %v1528, 16
    %v1638 = vor.u32 %v1636, %v1634
    %v1640 = vshll.u32 %v1529, 16
    %v1642 = vrot.slane %v1640, 1
    %v1643 = vsel %vm1551, %v1638, %v1642
    %v1644 = vshrl.u32 %v1529, 16
    %v1646 = vor.u32 %v1644, %v1642
    %v1648 = vshll.u32 %v1530, 16
    %v1650 = vrot.slane %v1648, 1
    %v1651 = vsel %vm1551, %v1646, %v1650
    %v1652 = vshrl.u32 %v1530, 16
    %v1654 = vor.u32 %v1652, %v1650
    %v1656 = vshll.u32 %v1531, 16
    %v1658 = vrot.slane %v1656, 1
    %v1659 = vsel %vm1551, %v1654, %v1658
    %v1660 = vshrl.u32 %v1531, 16
    %v1662 = vor.u32 %v1660, %v1658
    %v1664 = vshll.u32 %v1532, 16
    %v1666 = vrot.slane %v1664, 1
    %v1667 = vsel %vm1551, %v1662, %v1666
    %v1668 = vshrl.u32 %v1532, 16
    %v1670 = vor.u32 %v1668, %v1666
    %v1672 = vshll.u32 %v1533, 16
    %v1674 = vrot.slane %v1672, 1
    %v1675 = vsel %vm1551, %v1670, %v1674
    %v1676 = vshrl.u32 %v1533, 16
    %v1678 = vor.u32 %v1676, %v1674
    %v1680 = vshll.u32 %v1534, 16
    %v1682 = vrot.slane %v1680, 1
    %v1683 = vsel %vm1551, %v1678, %v1682
    %v1684 = vshrl.u32 %v1534, 16
    %v1686 = vor.u32 %v1684, %v1682
    %v1688 = vshll.u32 %v1535, 16
    %v1690 = vrot.slane %v1688, 1
    %v1691 = vsel %vm1551, %v1686, %v1690
    %v1692 = vshrl.u32 %v1535, 16
    %v1694 = vor.u32 %v1692, %v1690
    %v1696 = vshll.u32 %v1536, 16
    %v1698 = vrot.slane %v1696, 1
    %v1699 = vsel %vm1551, %v1694, %v1698
    %v1700 = vshrl.u32 %v1536, 16
    %v1702 = vor.u32 %v1700, %v1698
    %v1704 = vshll.u32 %v1537, 16
    %v1706 = vrot.slane %v1704, 1
    %v1707 = vsel %vm1551, %v1702, %v1706
    %v1708 = vshrl.u32 %v1537, 16
    %v1710 = vor.u32 %v1708, %v1706
    %v1712 = vshll.u32 %v1538, 16
    %v1714 = vrot.slane %v1712, 1
    %v1715 = vsel %vm1551, %v1710, %v1714
    %v1716 = vshrl.u32 %v1538, 16
    %v1718 = vor.u32 %v1716, %v1714
    %v1720 = vshll.u32 %v1539, 16
    %v1722 = vrot.slane %v1720, 1
    %v1723 = vsel %vm1551, %v1718, %v1722
    %v1724 = vshrl.u32 %v1539, 16
    %v1726 = vor.u32 %v1724, %v1722
    %v1728 = vshll.u32 %v1540, 16
    %v1730 = vrot.slane %v1728, 1
    %v1731 = vsel %vm1551, %v1726, %v1730
    %v1732 = vshrl.u32 %v1540, 16
    %v1734 = vor.u32 %v1732, %v1730
    %v1736 = vshll.u32 %v1541, 16
    %v1738 = vrot.slane %v1736, 1
    %v1739 = vsel %vm1551, %v1734, %v1738
    %v1740 = vshrl.u32 %v1541, 16
    %v1742 = vor.u32 %v1740, %v1738
    %v1744 = vshll.u32 %v1542, 16
    %v1746 = vrot.slane %v1744, 1
    %v1747 = vsel %vm1551, %v1742, %v1746
    %v1748 = vshrl.u32 %v1542, 16
    %v1750 = vor.u32 %v1748, %v1746
    %v1752 = vshll.u32 %v1543, 16
    %v1754 = vrot.slane %v1752, 1
    %v1755 = vsel %vm1551, %v1750, %v1754
    %v1756 = vshrl.u32 %v1543, 16
    %v1758 = vor.u32 %v1756, %v1754
    %v1760 = vshll.u32 %v1544, 16
    %v1762 = vrot.slane %v1760, 1
    %v1763 = vsel %vm1551, %v1758, %v1762
    %v1764 = vshrl.u32 %v1544, 16
    %v1766 = vor.u32 %v1764, %v1762
    %v1768 = vshll.u32 %v1545, 16
    %v1770 = vrot.slane %v1768, 1
    %v1771 = vsel %vm1551, %v1766, %v1770
    %v1772 = vshrl.u32 %v1545, 16
    %v1774 = vor.u32 %v1772, %v1770
    %v1776 = vshll.u32 %v1546, 16
    %v1778 = vrot.slane %v1776, 1
    %v1779 = vsel %vm1551, %v1774, %v1778
    %v1780 = vshrl.u32 %v1546, 16
    %v1782 = vor.u32 %v1780, %v1778
    %v1784 = vshll.u32 %v1547, 16
    %v1786 = vrot.slane %v1784, 1
    %v1787 = vsel %vm1551, %v1782, %v1786
    %v1788 = vshrl.u32 %v1547, 16
    %v1790 = vor.u32 %v1788, %v1786
    %v1792 = vshll.u32 %v1548, 16
    %v1794 = vrot.slane %v1792, 1
    %v1795 = vsel %vm1551, %v1790, %v1794
    %v1796 = vshrl.u32 %v1548, 16
    %v1798 = vor.u32 %v1796, %v1794
    %v1800 = vshll.u32 %v1549, 16
    %v1802 = vrot.slane %v1800, 1
    %v1803 = vsel %vm1551, %v1798, %v1802
    %v1804 = vshrl.u32 %v1549, 16
    %v1806 = vor.u32 %v1804, %v1802
    %v1808 = vshll.u32 %v1550, 16
    %v1810 = vrot.slane %v1808, 1
    %v1811 = vsel %vm1551, %v1806, %v1810
    %v1844 = vmax.bf16 %v1000, %v1563
    %v1845 = vmax.bf16 %v1001, %v1571
    %v1846 = vmax.bf16 %v1002, %v1579
    %v1847 = vmax.bf16 %v1003, %v1587
    %v1848 = vmax.bf16 %v1004, %v1595
    %v1849 = vmax.bf16 %v1005, %v1603
    %v1850 = vmax.bf16 %v1006, %v1611
    %v1851 = vmax.bf16 %v1007, %v1619
    %v1852 = vmax.bf16 %v1008, %v1627
    %v1853 = vmax.bf16 %v1009, %v1635
    %v1854 = vmax.bf16 %v1010, %v1643
    %v1855 = vmax.bf16 %v1011, %v1651
    %v1856 = vmax.bf16 %v1012, %v1659
    %v1857 = vmax.bf16 %v1013, %v1667
    %v1858 = vmax.bf16 %v1014, %v1675
    %v1859 = vmax.bf16 %v1015, %v1683
    %v1860 = vmax.bf16 %v1016, %v1691
    %v1861 = vmax.bf16 %v1017, %v1699
    %v1862 = vmax.bf16 %v1018, %v1707
    %v1863 = vmax.bf16 %v1019, %v1715
    %v1864 = vmax.bf16 %v1020, %v1723
    %v1865 = vmax.bf16 %v1021, %v1731
    %v1866 = vmax.bf16 %v1022, %v1739
    %v1867 = vmax.bf16 %v1023, %v1747
    %v1868 = vmax.bf16 %v1024, %v1755
    %v1869 = vmax.bf16 %v1025, %v1763
    %v1870 = vmax.bf16 %v1026, %v1771
    %v1871 = vmax.bf16 %v1027, %v1779
    %v1872 = vmax.bf16 %v1028, %v1787
    %v1873 = vmax.bf16 %v1029, %v1795
    %v1874 = vmax.bf16 %v1030, %v1803
    %v1875 = vmax.bf16 %v1031, %v1811
    %v1876 = vld [vmem:[#allocation2 + $0x100] sm:$0xf]
    %v1877 = vld [vmem:[#allocation2 + $0x104] sm:$0xf]
    %v1878 = vld [vmem:[#allocation2 + $0x8] sm:$0xf]
    %v1879 = vld [vmem:[#allocation2 + $0xc] sm:$0xf]
    %v1880 = vld [vmem:[#allocation2 + $0x10] sm:$0xf]
    %v1881 = vld [vmem:[#allocation2 + $0x14] sm:$0xf]
    %v1882 = vld [vmem:[#allocation2 + $0x18] sm:$0xf]
    %v1883 = vld [vmem:[#allocation2 + $0x1c] sm:$0xf]
    %v1884 = vld [vmem:[#allocation2 + $0x20] sm:$0xf]
    %v1885 = vld [vmem:[#allocation2 + $0x24] sm:$0xf]
    %v1886 = vld [vmem:[#allocation2 + $0x28] sm:$0xf]
    %v1887 = vld [vmem:[#allocation2 + $0x2c] sm:$0xf]
    %v1888 = vld [vmem:[#allocation2 + $0x30] sm:$0xf]
    %v1889 = vld [vmem:[#allocation2 + $0x34] sm:$0xf]
    %v1890 = vld [vmem:[#allocation2 + $0x38] sm:$0xf]
    %v1891 = vld [vmem:[#allocation2 + $0x3c] sm:$0xf]
    %v1892 = vld [vmem:[#allocation2 + $0x40] sm:$0xf]
    %v1893 = vld [vmem:[#allocation2 + $0x44] sm:$0xf]
    %v1894 = vld [vmem:[#allocation2 + $0x48] sm:$0xf]
    %v1895 = vld [vmem:[#allocation2 + $0x4c] sm:$0xf]
    %v1896 = vld [vmem:[#allocation2 + $0x50] sm:$0xf]
    %v1897 = vld [vmem:[#allocation2 + $0x54] sm:$0xf]
    %v1898 = vld [vmem:[#allocation2 + $0x58] sm:$0xf]
    %v1899 = vld [vmem:[#allocation2 + $0x5c] sm:$0xf]
    %v1900 = vld [vmem:[#allocation2 + $0x60] sm:$0xf]
    %v1901 = vld [vmem:[#allocation2 + $0x64] sm:$0xf]
    %v1902 = vld [vmem:[#allocation2 + $0x68] sm:$0xf]
    %v1903 = vld [vmem:[#allocation2 + $0x6c] sm:$0xf]
    %v1904 = vld [vmem:[#allocation2 + $0x70] sm:$0xf]
    %v1905 = vld [vmem:[#allocation2 + $0x74] sm:$0xf]
    %v1906 = vld [vmem:[#allocation2 + $0x78] sm:$0xf]
    %v1907 = vld [vmem:[#allocation2 + $0x7c] sm:$0xf]
    %v1908 = vld [vmem:[#allocation2 + $0x80] sm:$0xf]
    %v1909 = vld [vmem:[#allocation2 + $0x84] sm:$0xf]
    %v1910 = vld [vmem:[#allocation2 + $0x88] sm:$0xf]
    %v1911 = vld [vmem:[#allocation2 + $0x8c] sm:$0xf]
    %v1912 = vld [vmem:[#allocation2 + $0x90] sm:$0xf]
    %v1913 = vld [vmem:[#allocation2 + $0x94] sm:$0xf]
    %v1914 = vld [vmem:[#allocation2 + $0x98] sm:$0xf]
    %v1915 = vld [vmem:[#allocation2 + $0x9c] sm:$0xf]
    %v1916 = vld [vmem:[#allocation2 + $0xa0] sm:$0xf]
    %v1917 = vld [vmem:[#allocation2 + $0xa4] sm:$0xf]
    %v1918 = vld [vmem:[#allocation2 + $0xa8] sm:$0xf]
    %v1919 = vld [vmem:[#allocation2 + $0xac] sm:$0xf]
    %v1920 = vld [vmem:[#allocation2 + $0xb0] sm:$0xf]
    %v1921 = vld [vmem:[#allocation2 + $0xb4] sm:$0xf]
    %v1922 = vld [vmem:[#allocation2 + $0xb8] sm:$0xf]
    %v1923 = vld [vmem:[#allocation2 + $0xbc] sm:$0xf]
    %v1924 = vld [vmem:[#allocation2 + $0xc0] sm:$0xf]
    %v1925 = vld [vmem:[#allocation2 + $0xc4] sm:$0xf]
    %v1926 = vld [vmem:[#allocation2 + $0xc8] sm:$0xf]
    %v1927 = vld [vmem:[#allocation2 + $0xcc] sm:$0xf]
    %v1928 = vld [vmem:[#allocation2 + $0xd0] sm:$0xf]
    %v1929 = vld [vmem:[#allocation2 + $0xd4] sm:$0xf]
    %v1930 = vld [vmem:[#allocation2 + $0xd8] sm:$0xf]
    %v1931 = vld [vmem:[#allocation2 + $0xdc] sm:$0xf]
    %v1932 = vld [vmem:[#allocation2 + $0xe0] sm:$0xf]
    %v1933 = vld [vmem:[#allocation2 + $0xe4] sm:$0xf]
    %v1934 = vld [vmem:[#allocation2 + $0xe8] sm:$0xf]
    %v1935 = vld [vmem:[#allocation2 + $0xec] sm:$0xf]
    %v1936 = vld [vmem:[#allocation2 + $0xf0] sm:$0xf]
    %v1937 = vld [vmem:[#allocation2 + $0xf4] sm:$0xf]
    %v1938 = vld [vmem:[#allocation2 + $0xf8] sm:$0xf]
    %v1939 = vld [vmem:[#allocation2 + $0xfc] sm:$0xf]
    %v1940 = vld [vmem:[#allocation2 + $0x100] sm:$0xf]
    %v1941 = vld [vmem:[#allocation2 + $0x104] sm:$0xf]
    %v1942 = vld [vmem:[#allocation2 + $0x108] sm:$0x1]
    %vm1943 = vsmask.f32 3328
    %vm1944 = vsmask.f32 7440
    %vm1945 = vmor %vm1943, %vm1944
    %v1947 = vshrl.u32 %v1878, 16
    %v1949 = vrot.slane %v1947, 4
    %v1950 = vshll.u32 %v1878, 16
    %v1952 = vrot.slane %v1950, 5
    %v1953 = vor.u32 %v1949, %v1952
    %v1954 = vrot.slane %v1953, 4
    %v1956 = vshll.u32 %v1879, 16
    %v1958 = vrot.slane %v1956, 5
    %v1959 = vsel %vm1945, %v1954, %v1958
    %v1960 = vshrl.u32 %v1879, 16
    %v1962 = vrot.slane %v1960, 4
    %v1963 = vor.u32 %v1962, %v1958
    %v1964 = vrot.slane %v1963, 4
    %v1966 = vshll.u32 %v1880, 16
    %v1968 = vrot.slane %v1966, 5
    %v1969 = vsel %vm1945, %v1964, %v1968
    %v1970 = vshrl.u32 %v1880, 16
    %v1972 = vrot.slane %v1970, 4
    %v1973 = vor.u32 %v1972, %v1968
    %v1974 = vrot.slane %v1973, 4
    %v1976 = vshll.u32 %v1881, 16
    %v1978 = vrot.slane %v1976, 5
    %v1979 = vsel %vm1945, %v1974, %v1978
    %v1980 = vshrl.u32 %v1881, 16
    %v1982 = vrot.slane %v1980, 4
    %v1983 = vor.u32 %v1982, %v1978
    %v1984 = vrot.slane %v1983, 4
    %v1986 = vshll.u32 %v1882, 16
    %v1988 = vrot.slane %v1986, 5
    %v1989 = vsel %vm1945, %v1984, %v1988
    %v1990 = vshrl.u32 %v1882, 16
    %v1992 = vrot.slane %v1990, 4
    %v1993 = vor.u32 %v1992, %v1988
    %v1994 = vrot.slane %v1993, 4
    %v1996 = vshll.u32 %v1883, 16
    %v1998 = vrot.slane %v1996, 5
    %v1999 = vsel %vm1945, %v1994, %v1998
    %v2000 = vshrl.u32 %v1883, 16
    %v2002 = vrot.slane %v2000, 4
    %v2003 = vor.u32 %v2002, %v1998
    %v2004 = vrot.slane %v2003, 4
    %v2006 = vshll.u32 %v1884, 16
    %v2008 = vrot.slane %v2006, 5
    %v2009 = vsel %vm1945, %v2004, %v2008
    %v2010 = vshrl.u32 %v1884, 16
    %v2012 = vrot.slane %v2010, 4
    %v2013 = vor.u32 %v2012, %v2008
    %v2014 = vrot.slane %v2013, 4
    %v2016 = vshll.u32 %v1885, 16
    %v2018 = vrot.slane %v2016, 5
    %v2019 = vsel %vm1945, %v2014, %v2018
    %v2020 = vshrl.u32 %v1885, 16
    %v2022 = vrot.slane %v2020, 4
    %v2023 = vor.u32 %v2022, %v2018
    %v2024 = vrot.slane %v2023, 4
    %v2026 = vshll.u32 %v1886, 16
    %v2028 = vrot.slane %v2026, 5
    %v2029 = vsel %vm1945, %v2024, %v2028
    %v2030 = vshrl.u32 %v1886, 16
    %v2032 = vrot.slane %v2030, 4
    %v2033 = vor.u32 %v2032, %v2028
    %v2034 = vrot.slane %v2033, 4
    %v2036 = vshll.u32 %v1887, 16
    %v2038 = vrot.slane %v2036, 5
    %v2039 = vsel %vm1945, %v2034, %v2038
    %v2040 = vshrl.u32 %v1887, 16
    %v2042 = vrot.slane %v2040, 4
    %v2043 = vor.u32 %v2042, %v2038
    %v2044 = vrot.slane %v2043, 4
    %v2046 = vshll.u32 %v1888, 16
    %v2048 = vrot.slane %v2046, 5
    %v2049 = vsel %vm1945, %v2044, %v2048
    %v2050 = vshrl.u32 %v1888, 16
    %v2052 = vrot.slane %v2050, 4
    %v2053 = vor.u32 %v2052, %v2048
    %v2054 = vrot.slane %v2053, 4
    %v2056 = vshll.u32 %v1889, 16
    %v2058 = vrot.slane %v2056, 5
    %v2059 = vsel %vm1945, %v2054, %v2058
    %v2060 = vshrl.u32 %v1889, 16
    %v2062 = vrot.slane %v2060, 4
    %v2063 = vor.u32 %v2062, %v2058
    %v2064 = vrot.slane %v2063, 4
    %v2066 = vshll.u32 %v1890, 16
    %v2068 = vrot.slane %v2066, 5
    %v2069 = vsel %vm1945, %v2064, %v2068
    %v2070 = vshrl.u32 %v1890, 16
    %v2072 = vrot.slane %v2070, 4
    %v2073 = vor.u32 %v2072, %v2068
    %v2074 = vrot.slane %v2073, 4
    %v2076 = vshll.u32 %v1891, 16
    %v2078 = vrot.slane %v2076, 5
    %v2079 = vsel %vm1945, %v2074, %v2078
    %v2080 = vshrl.u32 %v1891, 16
    %v2082 = vrot.slane %v2080, 4
    %v2083 = vor.u32 %v2082, %v2078
    %v2084 = vrot.slane %v2083, 4
    %v2086 = vshll.u32 %v1892, 16
    %v2088 = vrot.slane %v2086, 5
    %v2089 = vsel %vm1945, %v2084, %v2088
    %v2090 = vshrl.u32 %v1892, 16
    %v2092 = vrot.slane %v2090, 4
    %v2093 = vor.u32 %v2092, %v2088
    %v2094 = vrot.slane %v2093, 4
    %v2096 = vshll.u32 %v1893, 16
    %v2098 = vrot.slane %v2096, 5
    %v2099 = vsel %vm1945, %v2094, %v2098
    %v2100 = vshrl.u32 %v1893, 16
    %v2102 = vrot.slane %v2100, 4
    %v2103 = vor.u32 %v2102, %v2098
    %v2104 = vrot.slane %v2103, 4
    %v2106 = vshll.u32 %v1894, 16
    %v2108 = vrot.slane %v2106, 5
    %v2109 = vsel %vm1945, %v2104, %v2108
    %v2110 = vshrl.u32 %v1894, 16
    %v2112 = vrot.slane %v2110, 4
    %v2113 = vor.u32 %v2112, %v2108
    %v2114 = vrot.slane %v2113, 4
    %v2116 = vshll.u32 %v1895, 16
    %v2118 = vrot.slane %v2116, 5
    %v2119 = vsel %vm1945, %v2114, %v2118
    %v2120 = vshrl.u32 %v1895, 16
    %v2122 = vrot.slane %v2120, 4
    %v2123 = vor.u32 %v2122, %v2118
    %v2124 = vrot.slane %v2123, 4
    %v2126 = vshll.u32 %v1896, 16
    %v2128 = vrot.slane %v2126, 5
    %v2129 = vsel %vm1945, %v2124, %v2128
    %v2130 = vshrl.u32 %v1896, 16
    %v2132 = vrot.slane %v2130, 4
    %v2133 = vor.u32 %v2132, %v2128
    %v2134 = vrot.slane %v2133, 4
    %v2136 = vshll.u32 %v1897, 16
    %v2138 = vrot.slane %v2136, 5
    %v2139 = vsel %vm1945, %v2134, %v2138
    %v2140 = vshrl.u32 %v1897, 16
    %v2142 = vrot.slane %v2140, 4
    %v2143 = vor.u32 %v2142, %v2138
    %v2144 = vrot.slane %v2143, 4
    %v2146 = vshll.u32 %v1898, 16
    %v2148 = vrot.slane %v2146, 5
    %v2149 = vsel %vm1945, %v2144, %v2148
    %v2150 = vshrl.u32 %v1898, 16
    %v2152 = vrot.slane %v2150, 4
    %v2153 = vor.u32 %v2152, %v2148
    %v2154 = vrot.slane %v2153, 4
    %v2156 = vshll.u32 %v1899, 16
    %v2158 = vrot.slane %v2156, 5
    %v2159 = vsel %vm1945, %v2154, %v2158
    %v2160 = vshrl.u32 %v1899, 16
    %v2162 = vrot.slane %v2160, 4
    %v2163 = vor.u32 %v2162, %v2158
    %v2164 = vrot.slane %v2163, 4
    %v2166 = vshll.u32 %v1900, 16
    %v2168 = vrot.slane %v2166, 5
    %v2169 = vsel %vm1945, %v2164, %v2168
    %v2170 = vshrl.u32 %v1900, 16
    %v2172 = vrot.slane %v2170, 4
    %v2173 = vor.u32 %v2172, %v2168
    %v2174 = vrot.slane %v2173, 4
    %v2176 = vshll.u32 %v1901, 16
    %v2178 = vrot.slane %v2176, 5
    %v2179 = vsel %vm1945, %v2174, %v2178
    %v2180 = vshrl.u32 %v1901, 16
    %v2182 = vrot.slane %v2180, 4
    %v2183 = vor.u32 %v2182, %v2178
    %v2184 = vrot.slane %v2183, 4
    %v2186 = vshll.u32 %v1902, 16
    %v2188 = vrot.slane %v2186, 5
    %v2189 = vsel %vm1945, %v2184, %v2188
    %v2190 = vshrl.u32 %v1902, 16
    %v2192 = vrot.slane %v2190, 4
    %v2193 = vor.u32 %v2192, %v2188
    %v2194 = vrot.slane %v2193, 4
    %v2196 = vshll.u32 %v1903, 16
    %v2198 = vrot.slane %v2196, 5
    %v2199 = vsel %vm1945, %v2194, %v2198
    %v2200 = vshrl.u32 %v1903, 16
    %v2202 = vrot.slane %v2200, 4
    %v2203 = vor.u32 %v2202, %v2198
    %v2204 = vrot.slane %v2203, 4
    %v2206 = vshll.u32 %v1904, 16
    %v2208 = vrot.slane %v2206, 5
    %v2209 = vsel %vm1945, %v2204, %v2208
    %v2210 = vshrl.u32 %v1904, 16
    %v2212 = vrot.slane %v2210, 4
    %v2213 = vor.u32 %v2212, %v2208
    %v2214 = vrot.slane %v2213, 4
    %v2216 = vshll.u32 %v1905, 16
    %v2218 = vrot.slane %v2216, 5
    %v2219 = vsel %vm1945, %v2214, %v2218
    %v2220 = vshrl.u32 %v1905, 16
    %v2222 = vrot.slane %v2220, 4
    %v2223 = vor.u32 %v2222, %v2218
    %v2224 = vrot.slane %v2223, 4
    %v2226 = vshll.u32 %v1906, 16
    %v2228 = vrot.slane %v2226, 5
    %v2229 = vsel %vm1945, %v2224, %v2228
    %v2230 = vshrl.u32 %v1906, 16
    %v2232 = vrot.slane %v2230, 4
    %v2233 = vor.u32 %v2232, %v2228
    %v2234 = vrot.slane %v2233, 4
    %v2236 = vshll.u32 %v1907, 16
    %v2238 = vrot.slane %v2236, 5
    %v2239 = vsel %vm1945, %v2234, %v2238
    %v2240 = vshrl.u32 %v1907, 16
    %v2242 = vrot.slane %v2240, 4
    %v2243 = vor.u32 %v2242, %v2238
    %v2244 = vrot.slane %v2243, 4
    %v2246 = vshll.u32 %v1908, 16
    %v2248 = vrot.slane %v2246, 5
    %v2249 = vsel %vm1945, %v2244, %v2248
    %v2250 = vshrl.u32 %v1908, 16
    %v2252 = vrot.slane %v2250, 4
    %v2253 = vor.u32 %v2252, %v2248
    %v2254 = vrot.slane %v2253, 4
    %v2256 = vshll.u32 %v1909, 16
    %v2258 = vrot.slane %v2256, 5
    %v2259 = vsel %vm1945, %v2254, %v2258
    %v2260 = vshrl.u32 %v1909, 16
    %v2262 = vrot.slane %v2260, 4
    %v2263 = vor.u32 %v2262, %v2258
    %v2264 = vrot.slane %v2263, 4
    %v2266 = vshll.u32 %v1910, 16
    %v2268 = vrot.slane %v2266, 5
    %v2269 = vsel %vm1945, %v2264, %v2268
    %v2270 = vshrl.u32 %v1910, 16
    %v2272 = vrot.slane %v2270, 4
    %v2273 = vor.u32 %v2272, %v2268
    %v2274 = vrot.slane %v2273, 4
    %v2276 = vshll.u32 %v1911, 16
    %v2278 = vrot.slane %v2276, 5
    %v2279 = vsel %vm1945, %v2274, %v2278
    %v2280 = vshrl.u32 %v1911, 16
    %v2282 = vrot.slane %v2280, 4
    %v2283 = vor.u32 %v2282, %v2278
    %v2284 = vrot.slane %v2283, 4
    %v2286 = vshll.u32 %v1912, 16
    %v2288 = vrot.slane %v2286, 5
    %v2289 = vsel %vm1945, %v2284, %v2288
    %v2290 = vshrl.u32 %v1912, 16
    %v2292 = vrot.slane %v2290, 4
    %v2293 = vor.u32 %v2292, %v2288
    %v2294 = vrot.slane %v2293, 4
    %v2296 = vshll.u32 %v1913, 16
    %v2298 = vrot.slane %v2296, 5
    %v2299 = vsel %vm1945, %v2294, %v2298
    %v2300 = vshrl.u32 %v1913, 16
    %v2302 = vrot.slane %v2300, 4
    %v2303 = vor.u32 %v2302, %v2298
    %v2304 = vrot.slane %v2303, 4
    %v2306 = vshll.u32 %v1914, 16
    %v2308 = vrot.slane %v2306, 5
    %v2309 = vsel %vm1945, %v2304, %v2308
    %v2310 = vshrl.u32 %v1914, 16
    %v2312 = vrot.slane %v2310, 4
    %v2313 = vor.u32 %v2312, %v2308
    %v2314 = vrot.slane %v2313, 4
    %v2316 = vshll.u32 %v1915, 16
    %v2318 = vrot.slane %v2316, 5
    %v2319 = vsel %vm1945, %v2314, %v2318
    %v2320 = vshrl.u32 %v1915, 16
    %v2322 = vrot.slane %v2320, 4
    %v2323 = vor.u32 %v2322, %v2318
    %v2324 = vrot.slane %v2323, 4
    %v2326 = vshll.u32 %v1916, 16
    %v2328 = vrot.slane %v2326, 5
    %v2329 = vsel %vm1945, %v2324, %v2328
    %v2330 = vshrl.u32 %v1916, 16
    %v2332 = vrot.slane %v2330, 4
    %v2333 = vor.u32 %v2332, %v2328
    %v2334 = vrot.slane %v2333, 4
    %v2336 = vshll.u32 %v1917, 16
    %v2338 = vrot.slane %v2336, 5
    %v2339 = vsel %vm1945, %v2334, %v2338
    %v2340 = vshrl.u32 %v1917, 16
    %v2342 = vrot.slane %v2340, 4
    %v2343 = vor.u32 %v2342, %v2338
    %v2344 = vrot.slane %v2343, 4
    %v2346 = vshll.u32 %v1918, 16
    %v2348 = vrot.slane %v2346, 5
    %v2349 = vsel %vm1945, %v2344, %v2348
    %v2350 = vshrl.u32 %v1918, 16
    %v2352 = vrot.slane %v2350, 4
    %v2353 = vor.u32 %v2352, %v2348
    %v2354 = vrot.slane %v2353, 4
    %v2356 = vshll.u32 %v1919, 16
    %v2358 = vrot.slane %v2356, 5
    %v2359 = vsel %vm1945, %v2354, %v2358
    %v2360 = vshrl.u32 %v1919, 16
    %v2362 = vrot.slane %v2360, 4
    %v2363 = vor.u32 %v2362, %v2358
    %v2364 = vrot.slane %v2363, 4
    %v2366 = vshll.u32 %v1920, 16
    %v2368 = vrot.slane %v2366, 5
    %v2369 = vsel %vm1945, %v2364, %v2368
    %v2370 = vshrl.u32 %v1920, 16
    %v2372 = vrot.slane %v2370, 4
    %v2373 = vor.u32 %v2372, %v2368
    %v2374 = vrot.slane %v2373, 4
    %v2376 = vshll.u32 %v1921, 16
    %v2378 = vrot.slane %v2376, 5
    %v2379 = vsel %vm1945, %v2374, %v2378
    %v2380 = vshrl.u32 %v1921, 16
    %v2382 = vrot.slane %v2380, 4
    %v2383 = vor.u32 %v2382, %v2378
    %v2384 = vrot.slane %v2383, 4
    %v2386 = vshll.u32 %v1922, 16
    %v2388 = vrot.slane %v2386, 5
    %v2389 = vsel %vm1945, %v2384, %v2388
    %v2390 = vshrl.u32 %v1922, 16
    %v2392 = vrot.slane %v2390, 4
    %v2393 = vor.u32 %v2392, %v2388
    %v2394 = vrot.slane %v2393, 4
    %v2396 = vshll.u32 %v1923, 16
    %v2398 = vrot.slane %v2396, 5
    %v2399 = vsel %vm1945, %v2394, %v2398
    %v2400 = vshrl.u32 %v1923, 16
    %v2402 = vrot.slane %v2400, 4
    %v2403 = vor.u32 %v2402, %v2398
    %v2404 = vrot.slane %v2403, 4
    %v2406 = vshll.u32 %v1924, 16
    %v2408 = vrot.slane %v2406, 5
    %v2409 = vsel %vm1945, %v2404, %v2408
    %v2410 = vshrl.u32 %v1924, 16
    %v2412 = vrot.slane %v2410, 4
    %v2413 = vor.u32 %v2412, %v2408
    %v2414 = vrot.slane %v2413, 4
    %v2416 = vshll.u32 %v1925, 16
    %v2418 = vrot.slane %v2416, 5
    %v2419 = vsel %vm1945, %v2414, %v2418
    %v2420 = vshrl.u32 %v1925, 16
    %v2422 = vrot.slane %v2420, 4
    %v2423 = vor.u32 %v2422, %v2418
    %v2424 = vrot.slane %v2423, 4
    %v2426 = vshll.u32 %v1926, 16
    %v2428 = vrot.slane %v2426, 5
    %v2429 = vsel %vm1945, %v2424, %v2428
    %v2430 = vshrl.u32 %v1926, 16
    %v2432 = vrot.slane %v2430, 4
    %v2433 = vor.u32 %v2432, %v2428
    %v2434 = vrot.slane %v2433, 4
    %v2436 = vshll.u32 %v1927, 16
    %v2438 = vrot.slane %v2436, 5
    %v2439 = vsel %vm1945, %v2434, %v2438
    %v2440 = vshrl.u32 %v1927, 16
    %v2442 = vrot.slane %v2440, 4
    %v2443 = vor.u32 %v2442, %v2438
    %v2444 = vrot.slane %v2443, 4
    %v2446 = vshll.u32 %v1928, 16
    %v2448 = vrot.slane %v2446, 5
    %v2449 = vsel %vm1945, %v2444, %v2448
    %v2450 = vshrl.u32 %v1928, 16
    %v2452 = vrot.slane %v2450, 4
    %v2453 = vor.u32 %v2452, %v2448
    %v2454 = vrot.slane %v2453, 4
    %v2456 = vshll.u32 %v1929, 16
    %v2458 = vrot.slane %v2456, 5
    %v2459 = vsel %vm1945, %v2454, %v2458
    %v2460 = vshrl.u32 %v1929, 16
    %v2462 = vrot.slane %v2460, 4
    %v2463 = vor.u32 %v2462, %v2458
    %v2464 = vrot.slane %v2463, 4
    %v2466 = vshll.u32 %v1930, 16
    %v2468 = vrot.slane %v2466, 5
    %v2469 = vsel %vm1945, %v2464, %v2468
    %v2470 = vshrl.u32 %v1930, 16
    %v2472 = vrot.slane %v2470, 4
    %v2473 = vor.u32 %v2472, %v2468
    %v2474 = vrot.slane %v2473, 4
    %v2476 = vshll.u32 %v1931, 16
    %v2478 = vrot.slane %v2476, 5
    %v2479 = vsel %vm1945, %v2474, %v2478
    %v2480 = vshrl.u32 %v1931, 16
    %v2482 = vrot.slane %v2480, 4
    %v2483 = vor.u32 %v2482, %v2478
    %v2484 = vrot.slane %v2483, 4
    %v2486 = vshll.u32 %v1932, 16
    %v2488 = vrot.slane %v2486, 5
    %v2489 = vsel %vm1945, %v2484, %v2488
    %v2490 = vshrl.u32 %v1932, 16
    %v2492 = vrot.slane %v2490, 4
    %v2493 = vor.u32 %v2492, %v2488
    %v2494 = vrot.slane %v2493, 4
    %v2496 = vshll.u32 %v1933, 16
    %v2498 = vrot.slane %v2496, 5
    %v2499 = vsel %vm1945, %v2494, %v2498
    %v2500 = vshrl.u32 %v1933, 16
    %v2502 = vrot.slane %v2500, 4
    %v2503 = vor.u32 %v2502, %v2498
    %v2504 = vrot.slane %v2503, 4
    %v2506 = vshll.u32 %v1934, 16
    %v2508 = vrot.slane %v2506, 5
    %v2509 = vsel %vm1945, %v2504, %v2508
    %v2510 = vshrl.u32 %v1934, 16
    %v2512 = vrot.slane %v2510, 4
    %v2513 = vor.u32 %v2512, %v2508
    %v2514 = vrot.slane %v2513, 4
    %v2516 = vshll.u32 %v1935, 16
    %v2518 = vrot.slane %v2516, 5
    %v2519 = vsel %vm1945, %v2514, %v2518
    %v2520 = vshrl.u32 %v1935, 16
    %v2522 = vrot.slane %v2520, 4
    %v2523 = vor.u32 %v2522, %v2518
    %v2524 = vrot.slane %v2523, 4
    %v2526 = vshll.u32 %v1936, 16
    %v2528 = vrot.slane %v2526, 5
    %v2529 = vsel %vm1945, %v2524, %v2528
    %v2530 = vshrl.u32 %v1936, 16
    %v2532 = vrot.slane %v2530, 4
    %v2533 = vor.u32 %v2532, %v2528
    %v2534 = vrot.slane %v2533, 4
    %v2536 = vshll.u32 %v1937, 16
    %v2538 = vrot.slane %v2536, 5
    %v2539 = vsel %vm1945, %v2534, %v2538
    %v2540 = vshrl.u32 %v1937, 16
    %v2542 = vrot.slane %v2540, 4
    %v2543 = vor.u32 %v2542, %v2538
    %v2544 = vrot.slane %v2543, 4
    %v2546 = vshll.u32 %v1938, 16
    %v2548 = vrot.slane %v2546, 5
    %v2549 = vsel %vm1945, %v2544, %v2548
    %v2550 = vshrl.u32 %v1938, 16
    %v2552 = vrot.slane %v2550, 4
    %v2553 = vor.u32 %v2552, %v2548
    %v2554 = vrot.slane %v2553, 4
    %v2556 = vshll.u32 %v1939, 16
    %v2558 = vrot.slane %v2556, 5
    %v2559 = vsel %vm1945, %v2554, %v2558
    %v2560 = vshrl.u32 %v1939, 16
    %v2562 = vrot.slane %v2560, 4
    %v2563 = vor.u32 %v2562, %v2558
    %v2564 = vrot.slane %v2563, 4
    %v2566 = vshll.u32 %v1940, 16
    %v2568 = vrot.slane %v2566, 5
    %v2569 = vsel %vm1945, %v2564, %v2568
    %v2570 = vshrl.u32 %v1940, 16
    %v2572 = vrot.slane %v2570, 4
    %v2573 = vor.u32 %v2572, %v2568
    %v2574 = vrot.slane %v2573, 4
    %v2576 = vshll.u32 %v1941, 16
    %v2578 = vrot.slane %v2576, 5
    %v2579 = vsel %vm1945, %v2574, %v2578
    %v2580 = vshrl.u32 %v1941, 16
    %v2582 = vrot.slane %v2580, 4
    %v2583 = vor.u32 %v2582, %v2578
    %v2584 = vrot.slane %v2583, 4
    %v2586 = vshll.u32 %v1942, 16
    %v2588 = vrot.slane %v2586, 5
    %v2589 = vsel %vm1945, %v2584, %v2588
    %v2654 = vmax.bf16 %v1325, %v1959
    %v2655 = vmax.bf16 %v1326, %v1969
    %v2656 = vmax.bf16 %v1327, %v1979
    %v2657 = vmax.bf16 %v1328, %v1989
    %v2658 = vmax.bf16 %v1329, %v1999
    %v2659 = vmax.bf16 %v1330, %v2009
    %v2660 = vmax.bf16 %v1331, %v2019
    %v2661 = vmax.bf16 %v1332, %v2029
    %v2662 = vmax.bf16 %v1333, %v2039
    %v2663 = vmax.bf16 %v1334, %v2049
    %v2664 = vmax.bf16 %v1335, %v2059
    %v2665 = vmax.bf16 %v1336, %v2069
    %v2666 = vmax.bf16 %v1337, %v2079
    %v2667 = vmax.bf16 %v1338, %v2089
    %v2668 = vmax.bf16 %v1339, %v2099
    %v2669 = vmax.bf16 %v1340, %v2109
    %v2670 = vmax.bf16 %v1341, %v2119
    %v2671 = vmax.bf16 %v1342, %v2129
    %v2672 = vmax.bf16 %v1343, %v2139
    %v2673 = vmax.bf16 %v1344, %v2149
    %v2674 = vmax.bf16 %v1345, %v2159
    %v2675 = vmax.bf16 %v1346, %v2169
    %v2676 = vmax.bf16 %v1347, %v2179
    %v2677 = vmax.bf16 %v1348, %v2189
    %v2678 = vmax.bf16 %v1349, %v2199
    %v2679 = vmax.bf16 %v1350, %v2209
    %v2680 = vmax.bf16 %v1351, %v2219
    %v2681 = vmax.bf16 %v1352, %v2229
    %v2682 = vmax.bf16 %v1353, %v2239
    %v2683 = vmax.bf16 %v1354, %v2249
    %v2684 = vmax.bf16 %v1355, %v2259
    %v2685 = vmax.bf16 %v1356, %v2269
    %v2686 = vmax.bf16 %v1357, %v2279
    %v2687 = vmax.bf16 %v1358, %v2289
    %v2688 = vmax.bf16 %v1359, %v2299
    %v2689 = vmax.bf16 %v1360, %v2309
    %v2690 = vmax.bf16 %v1361, %v2319
    %v2691 = vmax.bf16 %v1362, %v2329
    %v2692 = vmax.bf16 %v1363, %v2339
    %v2693 = vmax.bf16 %v1364, %v2349
    %v2694 = vmax.bf16 %v1365, %v2359
    %v2695 = vmax.bf16 %v1366, %v2369
    %v2696 = vmax.bf16 %v1367, %v2379
    %v2697 = vmax.bf16 %v1368, %v2389
    %v2698 = vmax.bf16 %v1369, %v2399
    %v2699 = vmax.bf16 %v1370, %v2409
    %v2700 = vmax.bf16 %v1371, %v2419
    %v2701 = vmax.bf16 %v1372, %v2429
    %v2702 = vmax.bf16 %v1373, %v2439
    %v2703 = vmax.bf16 %v1374, %v2449
    %v2704 = vmax.bf16 %v1375, %v2459
    %v2705 = vmax.bf16 %v1376, %v2469
    %v2706 = vmax.bf16 %v1377, %v2479
    %v2707 = vmax.bf16 %v1378, %v2489
    %v2708 = vmax.bf16 %v1379, %v2499
    %v2709 = vmax.bf16 %v1380, %v2509
    %v2710 = vmax.bf16 %v1381, %v2519
    %v2711 = vmax.bf16 %v1382, %v2529
    %v2712 = vmax.bf16 %v1383, %v2539
    %v2713 = vmax.bf16 %v1384, %v2549
    %v2714 = vmax.bf16 %v1385, %v2559
    %v2715 = vmax.bf16 %v1386, %v2569
    %v2716 = vmax.bf16 %v1876, %v2579
    %v2717 = vmax.bf16 %v1877, %v2589
    %v2782 = vunpack.c.l.b16 %v2654
    %v2783 = vunpack.c.l.b16 %v2655
    %v2784 = vunpack.c.l.b16 %v2656
    %v2785 = vunpack.c.l.b16 %v2657
    %v2786 = vunpack.c.l.b16 %v2658
    %v2787 = vunpack.c.l.b16 %v2659
    %v2788 = vunpack.c.l.b16 %v2660
    %v2789 = vunpack.c.l.b16 %v2661
    %v2790 = vunpack.c.l.b16 %v2662
    %v2791 = vunpack.c.l.b16 %v2663
    %v2792 = vunpack.c.l.b16 %v2664
    %v2793 = vunpack.c.l.b16 %v2665
    %v2794 = vunpack.c.l.b16 %v2666
    %v2795 = vunpack.c.l.b16 %v2667
    %v2796 = vunpack.c.l.b16 %v2668
    %v2797 = vunpack.c.l.b16 %v2669
    %v2798 = vunpack.c.l.b16 %v2670
    %v2799 = vunpack.c.l.b16 %v2671
    %v2800 = vunpack.c.l.b16 %v2672
    %v2801 = vunpack.c.l.b16 %v2673
    %v2802 = vunpack.c.l.b16 %v2674
    %v2803 = vunpack.c.l.b16 %v2675
    %v2804 = vunpack.c.l.b16 %v2676
    %v2805 = vunpack.c.l.b16 %v2677
    %v2806 = vunpack.c.l.b16 %v2678
    %v2807 = vunpack.c.l.b16 %v2679
    %v2808 = vunpack.c.l.b16 %v2680
    %v2809 = vunpack.c.l.b16 %v2681
    %v2810 = vunpack.c.l.b16 %v2682
    %v2811 = vunpack.c.l.b16 %v2683
    %v2812 = vunpack.c.l.b16 %v2684
    %v2813 = vunpack.c.l.b16 %v2685
    %v2814 = vunpack.c.l.b16 %v2686
    %v2815 = vunpack.c.l.b16 %v2687
    %v2816 = vunpack.c.l.b16 %v2688
    %v2817 = vunpack.c.l.b16 %v2689
    %v2818 = vunpack.c.l.b16 %v2690
    %v2819 = vunpack.c.l.b16 %v2691
    %v2820 = vunpack.c.l.b16 %v2692
    %v2821 = vunpack.c.l.b16 %v2693
    %v2822 = vunpack.c.l.b16 %v2694
    %v2823 = vunpack.c.l.b16 %v2695
    %v2824 = vunpack.c.l.b16 %v2696
    %v2825 = vunpack.c.l.b16 %v2697
    %v2826 = vunpack.c.l.b16 %v2698
    %v2827 = vunpack.c.l.b16 %v2699
    %v2828 = vunpack.c.l.b16 %v2700
    %v2829 = vunpack.c.l.b16 %v2701
    %v2830 = vunpack.c.l.b16 %v2702
    %v2831 = vunpack.c.l.b16 %v2703
    %v2832 = vunpack.c.l.b16 %v2704
    %v2833 = vunpack.c.l.b16 %v2705
    %v2834 = vunpack.c.l.b16 %v2706
    %v2835 = vunpack.c.l.b16 %v2707
    %v2836 = vunpack.c.l.b16 %v2708
    %v2837 = vunpack.c.l.b16 %v2709
    %v2838 = vunpack.c.l.b16 %v2710
    %v2839 = vunpack.c.l.b16 %v2711
    %v2840 = vunpack.c.l.b16 %v2712
    %v2841 = vunpack.c.l.b16 %v2713
    %v2842 = vunpack.c.l.b16 %v2714
    %v2843 = vunpack.c.l.b16 %v2715
    %v2844 = vunpack.c.l.b16 %v2716
    %v2845 = vunpack.c.l.b16 %v2717
    %v2846 = vpack.c.b16 %v2783, %v2782
    %v2847 = vpack.c.b16 %v2785, %v2784
    %v2848 = vpack.c.b16 %v2787, %v2786
    %v2849 = vpack.c.b16 %v2789, %v2788
    %v2850 = vpack.c.b16 %v2791, %v2790
    %v2851 = vpack.c.b16 %v2793, %v2792
    %v2852 = vpack.c.b16 %v2795, %v2794
    %v2853 = vpack.c.b16 %v2797, %v2796
    %v2854 = vpack.c.b16 %v2799, %v2798
    %v2855 = vpack.c.b16 %v2801, %v2800
    %v2856 = vpack.c.b16 %v2803, %v2802
    %v2857 = vpack.c.b16 %v2805, %v2804
    %v2858 = vpack.c.b16 %v2807, %v2806
    %v2859 = vpack.c.b16 %v2809, %v2808
    %v2860 = vpack.c.b16 %v2811, %v2810
    %v2861 = vpack.c.b16 %v2813, %v2812
    %v2862 = vpack.c.b16 %v2815, %v2814
    %v2863 = vpack.c.b16 %v2817, %v2816
    %v2864 = vpack.c.b16 %v2819, %v2818
    %v2865 = vpack.c.b16 %v2821, %v2820
    %v2866 = vpack.c.b16 %v2823, %v2822
    %v2867 = vpack.c.b16 %v2825, %v2824
    %v2868 = vpack.c.b16 %v2827, %v2826
    %v2869 = vpack.c.b16 %v2829, %v2828
    %v2870 = vpack.c.b16 %v2831, %v2830
    %v2871 = vpack.c.b16 %v2833, %v2832
    %v2872 = vpack.c.b16 %v2835, %v2834
    %v2873 = vpack.c.b16 %v2837, %v2836
    %v2874 = vpack.c.b16 %v2839, %v2838
    %v2875 = vpack.c.b16 %v2841, %v2840
    %v2876 = vpack.c.b16 %v2843, %v2842
    %v2877 = vpack.c.b16 %v2845, %v2844
    %v2910 = vmax.bf16 %v1844, %v2846
    %v2911 = vmax.bf16 %v1845, %v2847
    %v2912 = vmax.bf16 %v1846, %v2848
    %v2913 = vmax.bf16 %v1847, %v2849
    %v2914 = vmax.bf16 %v1848, %v2850
    %v2915 = vmax.bf16 %v1849, %v2851
    %v2916 = vmax.bf16 %v1850, %v2852
    %v2917 = vmax.bf16 %v1851, %v2853
    %v2918 = vmax.bf16 %v1852, %v2854
    %v2919 = vmax.bf16 %v1853, %v2855
    %v2920 = vmax.bf16 %v1854, %v2856
    %v2921 = vmax.bf16 %v1855, %v2857
    %v2922 = vmax.bf16 %v1856, %v2858
    %v2923 = vmax.bf16 %v1857, %v2859
    %v2924 = vmax.bf16 %v1858, %v2860
    %v2925 = vmax.bf16 %v1859, %v2861
    %v2926 = vmax.bf16 %v1860, %v2862
    %v2927 = vmax.bf16 %v1861, %v2863
    %v2928 = vmax.bf16 %v1862, %v2864
    %v2929 = vmax.bf16 %v1863, %v2865
    %v2930 = vmax.bf16 %v1864, %v2866
    %v2931 = vmax.bf16 %v1865, %v2867
    %v2932 = vmax.bf16 %v1866, %v2868
    %v2933 = vmax.bf16 %v1867, %v2869
    %v2934 = vmax.bf16 %v1868, %v2870
    %v2935 = vmax.bf16 %v1869, %v2871
    %v2936 = vmax.bf16 %v1870, %v2872
    %v2937 = vmax.bf16 %v1871, %v2873
    %v2938 = vmax.bf16 %v1872, %v2874
    %v2939 = vmax.bf16 %v1873, %v2875
    %v2940 = vmax.bf16 %v1874, %v2876
    %v2941 = vmax.bf16 %v1875, %v2877
    %v2942 = vld [vmem:[%s10] sm:$0xff]
    %v2943 = vld [vmem:[%s10 + $0x8] sm:$0xff]
    %v2944 = vld [vmem:[%s10 + $0x10] sm:$0xff]
    %v2945 = vld [vmem:[%s10 + $0x18] sm:$0xff]
    %v2946 = vld [vmem:[%s10 + $0x20] sm:$0xff]
    %v2947 = vld [vmem:[%s10 + $0x28] sm:$0xff]
    %v2948 = vld [vmem:[%s10 + $0x30] sm:$0xff]
    %v2949 = vld [vmem:[%s10 + $0x38] sm:$0xff]
    %v2950 = vld [vmem:[%s10 + $0x40] sm:$0xff]
    %v2951 = vld [vmem:[%s10 + $0x48] sm:$0xff]
    %v2952 = vld [vmem:[%s10 + $0x50] sm:$0xff]
    %v2953 = vld [vmem:[%s10 + $0x58] sm:$0xff]
    %v2954 = vld [vmem:[%s10 + $0x60] sm:$0xff]
    %v2955 = vld [vmem:[%s10 + $0x68] sm:$0xff]
    %v2956 = vld [vmem:[%s10 + $0x70] sm:$0xff]
    %v2957 = vld [vmem:[%s10 + $0x78] sm:$0xff]
    %v2958 = vld [vmem:[%s10 + $0x80] sm:$0xff]
    %v2959 = vld [vmem:[%s10 + $0x88] sm:$0xff]
    %v2960 = vld [vmem:[%s10 + $0x90] sm:$0xff]
    %v2961 = vld [vmem:[%s10 + $0x98] sm:$0xff]
    %v2962 = vld [vmem:[%s10 + $0xa0] sm:$0xff]
    %v2963 = vld [vmem:[%s10 + $0xa8] sm:$0xff]
    %v2964 = vld [vmem:[%s10 + $0xb0] sm:$0xff]
    %v2965 = vld [vmem:[%s10 + $0xb8] sm:$0xff]
    %v2966 = vld [vmem:[%s10 + $0xc0] sm:$0xff]
    %v2967 = vld [vmem:[%s10 + $0xc8] sm:$0xff]
    %v2968 = vld [vmem:[%s10 + $0xd0] sm:$0xff]
    %v2969 = vld [vmem:[%s10 + $0xd8] sm:$0xff]
    %v2970 = vld [vmem:[%s10 + $0xe0] sm:$0xff]
    %v2971 = vld [vmem:[%s10 + $0xe8] sm:$0xff]
    %v2972 = vld [vmem:[%s10 + $0xf0] sm:$0xff]
    %v2973 = vld [vmem:[%s10 + $0xf8] sm:$0xff]
    %v3006 = vunpack.c.l.b16 %v2942
    %v3007 = vunpack.c.h.b16 %v2942
    %v3008 = vunpack.c.l.b16 %v2943
    %v3009 = vunpack.c.h.b16 %v2943
    %v3010 = vunpack.c.l.b16 %v2944
    %v3011 = vunpack.c.h.b16 %v2944
    %v3012 = vunpack.c.l.b16 %v2945
    %v3013 = vunpack.c.h.b16 %v2945
    %v3014 = vunpack.c.l.b16 %v2946
    %v3015 = vunpack.c.h.b16 %v2946
    %v3016 = vunpack.c.l.b16 %v2947
    %v3017 = vunpack.c.h.b16 %v2947
    %v3018 = vunpack.c.l.b16 %v2948
    %v3019 = vunpack.c.h.b16 %v2948
    %v3020 = vunpack.c.l.b16 %v2949
    %v3021 = vunpack.c.h.b16 %v2949
    %v3022 = vunpack.c.l.b16 %v2950
    %v3023 = vunpack.c.h.b16 %v2950
    %v3024 = vunpack.c.l.b16 %v2951
    %v3025 = vunpack.c.h.b16 %v2951
    %v3026 = vunpack.c.l.b16 %v2952
    %v3027 = vunpack.c.h.b16 %v2952
    %v3028 = vunpack.c.l.b16 %v2953
    %v3029 = vunpack.c.h.b16 %v2953
    %v3030 = vunpack.c.l.b16 %v2954
    %v3031 = vunpack.c.h.b16 %v2954
    %v3032 = vunpack.c.l.b16 %v2955
    %v3033 = vunpack.c.h.b16 %v2955
    %v3034 = vunpack.c.l.b16 %v2956
    %v3035 = vunpack.c.h.b16 %v2956
    %v3036 = vunpack.c.l.b16 %v2957
    %v3037 = vunpack.c.h.b16 %v2957
    %v3038 = vunpack.c.l.b16 %v2958
    %v3039 = vunpack.c.h.b16 %v2958
    %v3040 = vunpack.c.l.b16 %v2959
    %v3041 = vunpack.c.h.b16 %v2959
    %v3042 = vunpack.c.l.b16 %v2960
    %v3043 = vunpack.c.h.b16 %v2960
    %v3044 = vunpack.c.l.b16 %v2961
    %v3045 = vunpack.c.h.b16 %v2961
    %v3046 = vunpack.c.l.b16 %v2962
    %v3047 = vunpack.c.h.b16 %v2962
    %v3048 = vunpack.c.l.b16 %v2963
    %v3049 = vunpack.c.h.b16 %v2963
    %v3050 = vunpack.c.l.b16 %v2964
    %v3051 = vunpack.c.h.b16 %v2964
    %v3052 = vunpack.c.l.b16 %v2965
    %v3053 = vunpack.c.h.b16 %v2965
    %v3054 = vunpack.c.l.b16 %v2966
    %v3055 = vunpack.c.h.b16 %v2966
    %v3056 = vunpack.c.l.b16 %v2967
    %v3057 = vunpack.c.h.b16 %v2967
    %v3058 = vunpack.c.l.b16 %v2968
    %v3059 = vunpack.c.h.b16 %v2968
    %v3060 = vunpack.c.l.b16 %v2969
    %v3061 = vunpack.c.h.b16 %v2969
    %v3062 = vunpack.c.l.b16 %v2970
    %v3063 = vunpack.c.h.b16 %v2970
    %v3064 = vunpack.c.l.b16 %v2971
    %v3065 = vunpack.c.h.b16 %v2971
    %v3066 = vunpack.c.l.b16 %v2972
    %v3067 = vunpack.c.h.b16 %v2972
    %v3068 = vunpack.c.l.b16 %v2973
    %v3069 = vunpack.c.h.b16 %v2973
    %v3070 = vpack.c.b16 %v3010, %v3006
    %v3071 = vpack.c.b16 %v3011, %v3007
    %v3072 = vpack.c.b16 %v3012, %v3008
    %v3073 = vpack.c.b16 %v3013, %v3009
    %v3074 = vpack.c.b16 %v3018, %v3014
    %v3075 = vpack.c.b16 %v3019, %v3015
    %v3076 = vpack.c.b16 %v3020, %v3016
    %v3077 = vpack.c.b16 %v3021, %v3017
    %v3078 = vpack.c.b16 %v3026, %v3022
    %v3079 = vpack.c.b16 %v3027, %v3023
    %v3080 = vpack.c.b16 %v3028, %v3024
    %v3081 = vpack.c.b16 %v3029, %v3025
    %v3082 = vpack.c.b16 %v3034, %v3030
    %v3083 = vpack.c.b16 %v3035, %v3031
    %v3084 = vpack.c.b16 %v3036, %v3032
    %v3085 = vpack.c.b16 %v3037, %v3033
    %v3086 = vpack.c.b16 %v3042, %v3038
    %v3087 = vpack.c.b16 %v3043, %v3039
    %v3088 = vpack.c.b16 %v3044, %v3040
    %v3089 = vpack.c.b16 %v3045, %v3041
    %v3090 = vpack.c.b16 %v3050, %v3046
    %v3091 = vpack.c.b16 %v3051, %v3047
    %v3092 = vpack.c.b16 %v3052, %v3048
    %v3093 = vpack.c.b16 %v3053, %v3049
    %v3094 = vpack.c.b16 %v3058, %v3054
    %v3095 = vpack.c.b16 %v3059, %v3055
    %v3096 = vpack.c.b16 %v3060, %v3056
    %v3097 = vpack.c.b16 %v3061, %v3057
    %v3098 = vpack.c.b16 %v3066, %v3062
    %v3099 = vpack.c.b16 %v3067, %v3063
    %v3100 = vpack.c.b16 %v3068, %v3064
    %v3101 = vpack.c.b16 %v3069, %v3065
    %3134 = vmatprep.subr.bf16.mxu0 0
    %3135 = vmatpush1.bf16.msra.mxu0 %v2910
    %3136 = vmatprep.subr.bf16.mxu0 0
    %3137 = vmatpush1.bf16.msra.mxu0 %v2911
    %3138 = vmatprep.subr.bf16.mxu0 0
    %3139 = vmatpush1.bf16.msra.mxu0 %v2912
    %3140 = vmatprep.subr.bf16.mxu0 0
    %3141 = vmatpush1.bf16.msra.mxu0 %v2913
    %3142 = vmatprep.subr.bf16.mxu0 0
    %3143 = vmatpush1.bf16.msra.mxu0 %v2914
    %3144 = vmatprep.subr.bf16.mxu0 0
    %3145 = vmatpush1.bf16.msra.mxu0 %v2915
    %3146 = vmatprep.subr.bf16.mxu0 0
    %3147 = vmatpush1.bf16.msra.mxu0 %v2916
    %3148 = vmatprep.subr.bf16.mxu0 0
    %3149 = vmatpush1.bf16.msra.mxu0 %v2917
    %3150 = vmatprep.subr.bf16.mxu0 0
    %3151 = vmatpush1.bf16.msra.mxu0 %v2918
    %3152 = vmatprep.subr.bf16.mxu0 0
    %3153 = vmatpush1.bf16.msra.mxu0 %v2919
    %3154 = vmatprep.subr.bf16.mxu0 0
    %3155 = vmatpush1.bf16.msra.mxu0 %v2920
    %3156 = vmatprep.subr.bf16.mxu0 0
    %3157 = vmatpush1.bf16.msra.mxu0 %v2921
    %3158 = vmatprep.subr.bf16.mxu0 0
    %3159 = vmatpush1.bf16.msra.mxu0 %v2922
    %3160 = vmatprep.subr.bf16.mxu0 0
    %3161 = vmatpush1.bf16.msra.mxu0 %v2923
    %3162 = vmatprep.subr.bf16.mxu0 0
    %3163 = vmatpush1.bf16.msra.mxu0 %v2924
    %3164 = vmatprep.subr.bf16.mxu0 0
    %3165 = vmatpush1.bf16.msra.mxu0 %v2925
    %3166 = vmatprep.mubr.bf16.mxu0 %v3071
    %3167 = vmatmul.mubr.bf16.gmra.mrb[0].mxu0 %v3070
    %v3168 = vpop.f32.mrb[0].mxu0
    %v3169 = vadd.f32 0.0, %v3168
    %v3170 = vpop.f32.mrb[0].mxu0
    %v3171 = vpop.f32.mrb[0].mxu0
    %v3172 = vadd.f32 0.0, %v3171
    %v3173 = vpop.f32.mrb[0].mxu0
    %3174 = vmatprep.mubr.bf16.mxu0 %v3075
    %3175 = vmatmul.mubr.bf16.gmra.mrb[0].mxu0 %v3074
    %v3176 = vpop.f32.mrb[0].mxu0
    %v3177 = vadd.f32 0.0, %v3176
    %v3178 = vpop.f32.mrb[0].mxu0
    %v3179 = vpop.f32.mrb[0].mxu0
    %v3180 = vadd.f32 0.0, %v3179
    %v3181 = vpop.f32.mrb[0].mxu0
    %3182 = vmatprep.mubr.bf16.mxu0 %v3079
    %3183 = vmatmul.mubr.bf16.gmra.mrb[0].mxu0 %v3078
    %v3184 = vpop.f32.mrb[0].mxu0
    %v3185 = vadd.f32 0.0, %v3184
    %v3186 = vpop.f32.mrb[0].mxu0
    %v3187 = vpop.f32.mrb[0].mxu0
    %v3188 = vadd.f32 0.0, %v3187
    %v3189 = vpop.f32.mrb[0].mxu0
    %3190 = vmatprep.mubr.bf16.mxu0 %v3083
    %3191 = vmatmul.mubr.bf16.gmra.mrb[0].mxu0 %v3082
    %v3192 = vpop.f32.mrb[0].mxu0
    %v3193 = vadd.f32 0.0, %v3192
    %v3194 = vpop.f32.mrb[0].mxu0
    %v3195 = vpop.f32.mrb[0].mxu0
    %v3196 = vadd.f32 0.0, %v3195
    %v3197 = vpop.f32.mrb[0].mxu0
    %3198 = vmatprep.mubr.bf16.mxu0 %v3087
    %3199 = vmatmul.mubr.bf16.gmra.mrb[0].mxu0 %v3086
    %v3200 = vpop.f32.mrb[0].mxu0
    %v3201 = vadd.f32 0.0, %v3200
    %v3202 = vpop.f32.mrb[0].mxu0
    %v3203 = vpop.f32.mrb[0].mxu0
    %v3204 = vadd.f32 0.0, %v3203
    %v3205 = vpop.f32.mrb[0].mxu0
    %3206 = vmatprep.mubr.bf16.mxu0 %v3091
    %3207 = vmatmul.mubr.bf16.gmra.mrb[0].mxu0 %v3090
    %v3208 = vpop.f32.mrb[0].mxu0
    %v3209 = vadd.f32 0.0, %v3208
    %v3210 = vpop.f32.mrb[0].mxu0
    %v3211 = vpop.f32.mrb[0].mxu0
    %v3212 = vadd.f32 0.0, %v3211
    %v3213 = vpop.f32.mrb[0].mxu0
    %3214 = vmatprep.mubr.bf16.mxu0 %v3095
    %3215 = vmatmul.mubr.bf16.gmra.mrb[0].mxu0 %v3094
    %v3216 = vpop.f32.mrb[0].mxu0
    %v3217 = vadd.f32 0.0, %v3216
    %v3218 = vpop.f32.mrb[0].mxu0
    %v3219 = vpop.f32.mrb[0].mxu0
    %v3220 = vadd.f32 0.0, %v3219
    %v3221 = vpop.f32.mrb[0].mxu0
    %3222 = vmatprep.mubr.bf16.mxu0 %v3099
    %3223 = vmatmul.mubr.bf16.gmra.mrb[0].mxu0 %v3098
    %v3224 = vpop.f32.mrb[0].mxu0
    %v3225 = vadd.f32 0.0, %v3224
    %v3226 = vpop.f32.mrb[0].mxu0
    %v3227 = vpop.f32.mrb[0].mxu0
    %v3228 = vadd.f32 0.0, %v3227
    %v3229 = vpop.f32.mrb[0].mxu0
    %3230 = vdwg.mxu0
    %3231 = vmatprep.subr.bf16.mxu0 0
    %3232 = vmatpush1.bf16.msra.mxu0 %v2926
    %3233 = vmatprep.subr.bf16.mxu0 0
    %3234 = vmatpush1.bf16.msra.mxu0 %v2927
    %3235 = vmatprep.subr.bf16.mxu0 0
    %3236 = vmatpush1.bf16.msra.mxu0 %v2928
    %3237 = vmatprep.subr.bf16.mxu0 0
    %3238 = vmatpush1.bf16.msra.mxu0 %v2929
    %3239 = vmatprep.subr.bf16.mxu0 0
    %3240 = vmatpush1.bf16.msra.mxu0 %v2930
    %3241 = vmatprep.subr.bf16.mxu0 0
    %3242 = vmatpush1.bf16.msra.mxu0 %v2931
    %3243 = vmatprep.subr.bf16.mxu0 0
    %3244 = vmatpush1.bf16.msra.mxu0 %v2932
    %3245 = vmatprep.subr.bf16.mxu0 0
    %3246 = vmatpush1.bf16.msra.mxu0 %v2933
    %3247 = vmatprep.subr.bf16.mxu0 0
    %3248 = vmatpush1.bf16.msra.mxu0 %v2934
    %3249 = vmatprep.subr.bf16.mxu0 0
    %3250 = vmatpush1.bf16.msra.mxu0 %v2935
    %3251 = vmatprep.subr.bf16.mxu0 0
    %3252 = vmatpush1.bf16.msra.mxu0 %v2936
    %3253 = vmatprep.subr.bf16.mxu0 0
    %3254 = vmatpush1.bf16.msra.mxu0 %v2937
    %3255 = vmatprep.subr.bf16.mxu0 0
    %3256 = vmatpush1.bf16.msra.mxu0 %v2938
    %3257 = vmatprep.subr.bf16.mxu0 0
    %3258 = vmatpush1.bf16.msra.mxu0 %v2939
    %3259 = vmatprep.subr.bf16.mxu0 0
    %3260 = vmatpush1.bf16.msra.mxu0 %v2940
    %3261 = vmatprep.subr.bf16.mxu0 0
    %3262 = vmatpush1.bf16.msra.mxu0 %v2941
    %3263 = vmatprep.mubr.bf16.mxu0 %v3073
    %3264 = vmatmul.mubr.bf16.gmra.mrb[0].mxu0 %v3072
    %v3265 = vpop.f32.mrb[0].mxu0
    %v3266 = vadd.f32 %v3169, %v3265
    %v3267 = vpop.f32.mrb[0].mxu0
    %v3268 = vpop.f32.mrb[0].mxu0
    %v3269 = vadd.f32 %v3172, %v3268
    %v3270 = vpop.f32.mrb[0].mxu0
    %3271 = vmatprep.mubr.bf16.mxu0 %v3077
    %3272 = vmatmul.mubr.bf16.gmra.mrb[0].mxu0 %v3076
    %v3273 = vpop.f32.mrb[0].mxu0
    %v3274 = vadd.f32 %v3177, %v3273
    %v3275 = vpop.f32.mrb[0].mxu0
    %v3276 = vpop.f32.mrb[0].mxu0
    %v3277 = vadd.f32 %v3180, %v3276
    %v3278 = vpop.f32.mrb[0].mxu0
    %3279 = vmatprep.mubr.bf16.mxu0 %v3081
    %3280 = vmatmul.mubr.bf16.gmra.mrb[0].mxu0 %v3080
    %v3281 = vpop.f32.mrb[0].mxu0
    %v3282 = vadd.f32 %v3185, %v3281
    %v3283 = vpop.f32.mrb[0].mxu0
    %v3284 = vpop.f32.mrb[0].mxu0
    %v3285 = vadd.f32 %v3188, %v3284
    %v3286 = vpop.f32.mrb[0].mxu0
    %3287 = vmatprep.mubr.bf16.mxu0 %v3085
    %3288 = vmatmul.mubr.bf16.gmra.mrb[0].mxu0 %v3084
    %v3289 = vpop.f32.mrb[0].mxu0
    %v3290 = vadd.f32 %v3193, %v3289
    %v3291 = vpop.f32.mrb[0].mxu0
    %v3292 = vpop.f32.mrb[0].mxu0
    %v3293 = vadd.f32 %v3196, %v3292
    %v3294 = vpop.f32.mrb[0].mxu0
    %3295 = vmatprep.mubr.bf16.mxu0 %v3089
    %3296 = vmatmul.mubr.bf16.gmra.mrb[0].mxu0 %v3088
    %v3297 = vpop.f32.mrb[0].mxu0
    %v3298 = vadd.f32 %v3201, %v3297
    %v3299 = vpop.f32.mrb[0].mxu0
    %v3300 = vpop.f32.mrb[0].mxu0
    %v3301 = vadd.f32 %v3204, %v3300
    %v3302 = vpop.f32.mrb[0].mxu0
    %3303 = vmatprep.mubr.bf16.mxu0 %v3093
    %3304 = vmatmul.mubr.bf16.gmra.mrb[0].mxu0 %v3092
    %v3305 = vpop.f32.mrb[0].mxu0
    %v3306 = vadd.f32 %v3209, %v3305
    %v3307 = vpop.f32.mrb[0].mxu0
    %v3308 = vpop.f32.mrb[0].mxu0
    %v3309 = vadd.f32 %v3212, %v3308
    %v3310 = vpop.f32.mrb[0].mxu0
    %3311 = vmatprep.mubr.bf16.mxu0 %v3097
    %3312 = vmatmul.mubr.bf16.gmra.mrb[0].mxu0 %v3096
    %v3313 = vpop.f32.mrb[0].mxu0
    %v3314 = vadd.f32 %v3217, %v3313
    %v3315 = vpop.f32.mrb[0].mxu0
    %v3316 = vpop.f32.mrb[0].mxu0
    %v3317 = vadd.f32 %v3220, %v3316
    %v3318 = vpop.f32.mrb[0].mxu0
    %3319 = vmatprep.mubr.bf16.mxu0 %v3101
    %3320 = vmatmul.mubr.bf16.gmra.mrb[0].mxu0 %v3100
    %v3321 = vpop.f32.mrb[0].mxu0
    %v3322 = vadd.f32 %v3225, %v3321
    %v3323 = vpop.f32.mrb[0].mxu0
    %v3324 = vpop.f32.mrb[0].mxu0
    %v3325 = vadd.f32 %v3228, %v3324
    %v3326 = vpop.f32.mrb[0].mxu0
    %3327 = vdwg.mxu0
    %v3328 = vpack.c.bf16 %v3269, %v3266
    %v3329 = vpack.c.bf16 %v3277, %v3274
    %v3330 = vpack.c.bf16 %v3285, %v3282
    %v3331 = vpack.c.bf16 %v3293, %v3290
    %v3332 = vpack.c.bf16 %v3301, %v3298
    %v3333 = vpack.c.bf16 %v3309, %v3306
    %v3334 = vpack.c.bf16 %v3317, %v3314
    %v3335 = vpack.c.bf16 %v3325, %v3322
    %3336 = vst [vmem:[#allocation3 + $0x8] sm:$0xff] %v3328
    %3337 = vst [vmem:[#allocation3 + $0x10] sm:$0xff] %v3329
    %3338 = vst [vmem:[#allocation3 + $0x18] sm:$0xff] %v3330
    %3339 = vst [vmem:[#allocation3 + $0x20] sm:$0xff] %v3331
    %3340 = vst [vmem:[#allocation3 + $0x28] sm:$0xff] %v3332
    %3341 = vst [vmem:[#allocation3 + $0x30] sm:$0xff] %v3333
    %3342 = vst [vmem:[#allocation3 + $0x38] sm:$0xff] %v3334
    %3343 = vst [vmem:[#allocation3 + $0x40] sm:$0xff] %v3335
    %v3344 = vlaneseq
    %v3345 = vshrl.u32 %v3344, 7
    %v3346 = vadd.s32 %v3345, 8
    %v3347 = vadd.s32 %v3345, 16
    %v3348 = vadd.s32 %v3345, 24
    %v3349 = vadd.s32 %v3345, 32
    %v3350 = vadd.s32 %v3345, 40
    %v3351 = vadd.s32 %v3345, 48
    %v3352 = vadd.s32 %v3345, 56
    %v3353 = vadd.s32 %v3345, 64
    %v3354 = vadd.s32 %v3345, 72
    %v3355 = vadd.s32 %v3345, 80
    %v3356 = vadd.s32 %v3345, 88
    %v3357 = vadd.s32 %v3345, 96
    %v3358 = vadd.s32 %v3345, 104
    %v3359 = vadd.s32 %v3345, 112
    %v3360 = vadd.s32 %v3345, 120
    %v3361 = vshra.s32 %v3345, 3
    %v3362 = vshra.s32 %v3346, 3
    %v3363 = vshra.s32 %v3347, 3
    %v3364 = vshra.s32 %v3348, 3
    %v3365 = vshra.s32 %v3349, 3
    %v3366 = vshra.s32 %v3350, 3
    %v3367 = vshra.s32 %v3351, 3
    %v3368 = vshra.s32 %v3352, 3
    %v3369 = vshra.s32 %v3353, 3
    %v3370 = vshra.s32 %v3354, 3
    %v3371 = vshra.s32 %v3355, 3
    %v3372 = vshra.s32 %v3356, 3
    %v3373 = vshra.s32 %v3357, 3
    %v3374 = vshra.s32 %v3358, 3
    %v3375 = vshra.s32 %v3359, 3
    %v3376 = vshra.s32 %v3360, 3
    %v3377 = vand.u32 %v3361, 7
    %v3378 = vand.u32 %v3362, 7
    %v3379 = vand.u32 %v3363, 7
    %v3380 = vand.u32 %v3364, 7
    %v3381 = vand.u32 %v3365, 7
    %v3382 = vand.u32 %v3366, 7
    %v3383 = vand.u32 %v3367, 7
    %v3384 = vand.u32 %v3368, 7
    %v3385 = vand.u32 %v3369, 7
    %v3386 = vand.u32 %v3370, 7
    %v3387 = vand.u32 %v3371, 7
    %v3388 = vand.u32 %v3372, 7
    %v3389 = vand.u32 %v3373, 7
    %v3390 = vand.u32 %v3374, 7
    %v3391 = vand.u32 %v3375, 7
    %v3392 = vand.u32 %v3376, 7
    %v3393 = vand.u32 %v3345, 7
    %v3394 = vand.u32 %v3346, 7
    %v3395 = vand.u32 %v3347, 7
    %v3396 = vand.u32 %v3348, 7
    %v3397 = vand.u32 %v3349, 7
    %v3398 = vand.u32 %v3350, 7
    %v3399 = vand.u32 %v3351, 7
    %v3400 = vand.u32 %v3352, 7
    %v3401 = vand.u32 %v3353, 7
    %v3402 = vand.u32 %v3354, 7
    %v3403 = vand.u32 %v3355, 7
    %v3404 = vand.u32 %v3356, 7
    %v3405 = vand.u32 %v3357, 7
    %v3406 = vand.u32 %v3358, 7
    %v3407 = vand.u32 %v3359, 7
    %v3408 = vand.u32 %v3360, 7
    %vm3409 = vcmp.ge.s32.totalorder %v3377, 1
    %vm3410 = vcmp.ge.s32.totalorder %v3378, 1
    %vm3411 = vcmp.ge.s32.totalorder %v3379, 1
    %vm3412 = vcmp.ge.s32.totalorder %v3380, 1
    %vm3413 = vcmp.ge.s32.totalorder %v3381, 1
    %vm3414 = vcmp.ge.s32.totalorder %v3382, 1
    %vm3415 = vcmp.ge.s32.totalorder %v3383, 1
    %vm3416 = vcmp.ge.s32.totalorder %v3384, 1
    %vm3417 = vcmp.ge.s32.totalorder %v3385, 1
    %vm3418 = vcmp.ge.s32.totalorder %v3386, 1
    %vm3419 = vcmp.ge.s32.totalorder %v3387, 1
    %vm3420 = vcmp.ge.s32.totalorder %v3388, 1
    %vm3421 = vcmp.ge.s32.totalorder %v3389, 1
    %vm3422 = vcmp.ge.s32.totalorder %v3390, 1
    %vm3423 = vcmp.ge.s32.totalorder %v3391, 1
    %vm3424 = vcmp.ge.s32.totalorder %v3392, 1
    %vm3425 = vcmp.le.s32.totalorder %v3377, 8
    %vm3426 = vcmp.le.s32.totalorder %v3378, 8
    %vm3427 = vcmp.le.s32.totalorder %v3379, 8
    %vm3428 = vcmp.le.s32.totalorder %v3380, 8
    %vm3429 = vcmp.le.s32.totalorder %v3381, 8
    %vm3430 = vcmp.le.s32.totalorder %v3382, 8
    %vm3431 = vcmp.le.s32.totalorder %v3383, 8
    %vm3432 = vcmp.le.s32.totalorder %v3384, 8
    %vm3433 = vcmp.le.s32.totalorder %v3385, 8
    %vm3434 = vcmp.le.s32.totalorder %v3386, 8
    %vm3435 = vcmp.le.s32.totalorder %v3387, 8
    %vm3436 = vcmp.le.s32.totalorder %v3388, 8
    %vm3437 = vcmp.le.s32.totalorder %v3389, 8
    %vm3438 = vcmp.le.s32.totalorder %v3390, 8
    %vm3439 = vcmp.le.s32.totalorder %v3391, 8
    %vm3440 = vcmp.le.s32.totalorder %v3392, 8
    %vm3441 = vmand %vm3409, %vm3425
    %vm3442 = vmand %vm3410, %vm3426
    %vm3443 = vmand %vm3411, %vm3427
    %vm3444 = vmand %vm3412, %vm3428
    %vm3445 = vmand %vm3413, %vm3429
    %vm3446 = vmand %vm3414, %vm3430
    %vm3447 = vmand %vm3415, %vm3431
    %vm3448 = vmand %vm3416, %vm3432
    %vm3449 = vmand %vm3417, %vm3433
    %vm3450 = vmand %vm3418, %vm3434
    %vm3451 = vmand %vm3419, %vm3435
    %vm3452 = vmand %vm3420, %vm3436
    %vm3453 = vmand %vm3421, %vm3437
    %vm3454 = vmand %vm3422, %vm3438
    %vm3455 = vmand %vm3423, %vm3439
    %vm3456 = vmand %vm3424, %vm3440
    %vm3457 = vcmp.ge.s32.totalorder %v3377, 0
    %vm3458 = vcmp.ge.s32.totalorder %v3378, 0
    %vm3459 = vcmp.ge.s32.totalorder %v3379, 0
    %vm3460 = vcmp.ge.s32.totalorder %v3380, 0
    %vm3461 = vcmp.ge.s32.totalorder %v3381, 0
    %vm3462 = vcmp.ge.s32.totalorder %v3382, 0
    %vm3463 = vcmp.ge.s32.totalorder %v3383, 0
    %vm3464 = vcmp.ge.s32.totalorder %v3384, 0
    %vm3465 = vcmp.ge.s32.totalorder %v3385, 0
    %vm3466 = vcmp.ge.s32.totalorder %v3386, 0
    %vm3467 = vcmp.ge.s32.totalorder %v3387, 0
    %vm3468 = vcmp.ge.s32.totalorder %v3388, 0
    %vm3469 = vcmp.ge.s32.totalorder %v3389, 0
    %vm3470 = vcmp.ge.s32.totalorder %v3390, 0
    %vm3471 = vcmp.ge.s32.totalorder %v3391, 0
    %vm3472 = vcmp.ge.s32.totalorder %v3392, 0
    %vm3473 = vcmp.le.s32.totalorder %v3377, 7
    %vm3474 = vcmp.le.s32.totalorder %v3378, 7
    %vm3475 = vcmp.le.s32.totalorder %v3379, 7
    %vm3476 = vcmp.le.s32.totalorder %v3380, 7
    %vm3477 = vcmp.le.s32.totalorder %v3381, 7
    %vm3478 = vcmp.le.s32.totalorder %v3382, 7
    %vm3479 = vcmp.le.s32.totalorder %v3383, 7
    %vm3480 = vcmp.le.s32.totalorder %v3384, 7
    %vm3481 = vcmp.le.s32.totalorder %v3385, 7
    %vm3482 = vcmp.le.s32.totalorder %v3386, 7
    %vm3483 = vcmp.le.s32.totalorder %v3387, 7
    %vm3484 = vcmp.le.s32.totalorder %v3388, 7
    %vm3485 = vcmp.le.s32.totalorder %v3389, 7
    %vm3486 = vcmp.le.s32.totalorder %v3390, 7
    %vm3487 = vcmp.le.s32.totalorder %v3391, 7
    %vm3488 = vcmp.le.s32.totalorder %v3392, 7
    %vm3489 = vmand %vm3457, %vm3473
    %vm3490 = vmand %vm3458, %vm3474
    %vm3491 = vmand %vm3459, %vm3475
    %vm3492 = vmand %vm3460, %vm3476
    %vm3493 = vmand %vm3461, %vm3477
    %vm3494 = vmand %vm3462, %vm3478
    %vm3495 = vmand %vm3463, %vm3479
    %vm3496 = vmand %vm3464, %vm3480
    %vm3497 = vmand %vm3465, %vm3481
    %vm3498 = vmand %vm3466, %vm3482
    %vm3499 = vmand %vm3467, %vm3483
    %vm3500 = vmand %vm3468, %vm3484
    %vm3501 = vmand %vm3469, %vm3485
    %vm3502 = vmand %vm3470, %vm3486
    %vm3503 = vmand %vm3471, %vm3487
    %vm3504 = vmand %vm3472, %vm3488
    %vm3505 = vcmp.ge.s32.totalorder %v3377, 4294967295
    %vm3506 = vcmp.ge.s32.totalorder %v3378, 4294967295
    %vm3507 = vcmp.ge.s32.totalorder %v3379, 4294967295
    %vm3508 = vcmp.ge.s32.totalorder %v3380, 4294967295
    %vm3509 = vcmp.ge.s32.totalorder %v3381, 4294967295
    %vm3510 = vcmp.ge.s32.totalorder %v3382, 4294967295
    %vm3511 = vcmp.ge.s32.totalorder %v3383, 4294967295
    %vm3512 = vcmp.ge.s32.totalorder %v3384, 4294967295
    %vm3513 = vcmp.ge.s32.totalorder %v3385, 4294967295
    %vm3514 = vcmp.ge.s32.totalorder %v3386, 4294967295
    %vm3515 = vcmp.ge.s32.totalorder %v3387, 4294967295
    %vm3516 = vcmp.ge.s32.totalorder %v3388, 4294967295
    %vm3517 = vcmp.ge.s32.totalorder %v3389, 4294967295
    %vm3518 = vcmp.ge.s32.totalorder %v3390, 4294967295
    %vm3519 = vcmp.ge.s32.totalorder %v3391, 4294967295
    %vm3520 = vcmp.ge.s32.totalorder %v3392, 4294967295
    %vm3521 = vcmp.le.s32.totalorder %v3377, 6
    %vm3522 = vcmp.le.s32.totalorder %v3378, 6
    %vm3523 = vcmp.le.s32.totalorder %v3379, 6
    %vm3524 = vcmp.le.s32.totalorder %v3380, 6
    %vm3525 = vcmp.le.s32.totalorder %v3381, 6
    %vm3526 = vcmp.le.s32.totalorder %v3382, 6
    %vm3527 = vcmp.le.s32.totalorder %v3383, 6
    %vm3528 = vcmp.le.s32.totalorder %v3384, 6
    %vm3529 = vcmp.le.s32.totalorder %v3385, 6
    %vm3530 = vcmp.le.s32.totalorder %v3386, 6
    %vm3531 = vcmp.le.s32.totalorder %v3387, 6
    %vm3532 = vcmp.le.s32.totalorder %v3388, 6
    %vm3533 = vcmp.le.s32.totalorder %v3389, 6
    %vm3534 = vcmp.le.s32.totalorder %v3390, 6
    %vm3535 = vcmp.le.s32.totalorder %v3391, 6
    %vm3536 = vcmp.le.s32.totalorder %v3392, 6
    %vm3537 = vmand %vm3505, %vm3521
    %vm3538 = vmand %vm3506, %vm3522
    %vm3539 = vmand %vm3507, %vm3523
    %vm3540 = vmand %vm3508, %vm3524
    %vm3541 = vmand %vm3509, %vm3525
    %vm3542 = vmand %vm3510, %vm3526
    %vm3543 = vmand %vm3511, %vm3527
    %vm3544 = vmand %vm3512, %vm3528
    %vm3545 = vmand %vm3513, %vm3529
    %vm3546 = vmand %vm3514, %vm3530
    %vm3547 = vmand %vm3515, %vm3531
    %vm3548 = vmand %vm3516, %vm3532
    %vm3549 = vmand %vm3517, %vm3533
    %vm3550 = vmand %vm3518, %vm3534
    %vm3551 = vmand %vm3519, %vm3535
    %vm3552 = vmand %vm3520, %vm3536
    %vm3553 = vcmp.ge.s32.totalorder %v3393, 1
    %vm3554 = vcmp.ge.s32.totalorder %v3394, 1
    %vm3555 = vcmp.ge.s32.totalorder %v3395, 1
    %vm3556 = vcmp.ge.s32.totalorder %v3396, 1
    %vm3557 = vcmp.ge.s32.totalorder %v3397, 1
    %vm3558 = vcmp.ge.s32.totalorder %v3398, 1
    %vm3559 = vcmp.ge.s32.totalorder %v3399, 1
    %vm3560 = vcmp.ge.s32.totalorder %v3400, 1
    %vm3561 = vcmp.ge.s32.totalorder %v3401, 1
    %vm3562 = vcmp.ge.s32.totalorder %v3402, 1
    %vm3563 = vcmp.ge.s32.totalorder %v3403, 1
    %vm3564 = vcmp.ge.s32.totalorder %v3404, 1
    %vm3565 = vcmp.ge.s32.totalorder %v3405, 1
    %vm3566 = vcmp.ge.s32.totalorder %v3406, 1
    %vm3567 = vcmp.ge.s32.totalorder %v3407, 1
    %vm3568 = vcmp.ge.s32.totalorder %v3408, 1
    %vm3569 = vcmp.le.s32.totalorder %v3393, 8
    %vm3570 = vcmp.le.s32.totalorder %v3394, 8
    %vm3571 = vcmp.le.s32.totalorder %v3395, 8
    %vm3572 = vcmp.le.s32.totalorder %v3396, 8
    %vm3573 = vcmp.le.s32.totalorder %v3397, 8
    %vm3574 = vcmp.le.s32.totalorder %v3398, 8
    %vm3575 = vcmp.le.s32.totalorder %v3399, 8
    %vm3576 = vcmp.le.s32.totalorder %v3400, 8
    %vm3577 = vcmp.le.s32.totalorder %v3401, 8
    %vm3578 = vcmp.le.s32.totalorder %v3402, 8
    %vm3579 = vcmp.le.s32.totalorder %v3403, 8
    %vm3580 = vcmp.le.s32.totalorder %v3404, 8
    %vm3581 = vcmp.le.s32.totalorder %v3405, 8
    %vm3582 = vcmp.le.s32.totalorder %v3406, 8
    %vm3583 = vcmp.le.s32.totalorder %v3407, 8
    %vm3584 = vcmp.le.s32.totalorder %v3408, 8
    %vm3585 = vmand %vm3553, %vm3569
    %vm3586 = vmand %vm3554, %vm3570
    %vm3587 = vmand %vm3555, %vm3571
    %vm3588 = vmand %vm3556, %vm3572
    %vm3589 = vmand %vm3557, %vm3573
    %vm3590 = vmand %vm3558, %vm3574
    %vm3591 = vmand %vm3559, %vm3575
    %vm3592 = vmand %vm3560, %vm3576
    %vm3593 = vmand %vm3561, %vm3577
    %vm3594 = vmand %vm3562, %vm3578
    %vm3595 = vmand %vm3563, %vm3579
    %vm3596 = vmand %vm3564, %vm3580
    %vm3597 = vmand %vm3565, %vm3581
    %vm3598 = vmand %vm3566, %vm3582
    %vm3599 = vmand %vm3567, %vm3583
    %vm3600 = vmand %vm3568, %vm3584
    %vm3601 = vcmp.ge.s32.totalorder %v3393, 0
    %vm3602 = vcmp.ge.s32.totalorder %v3394, 0
    %vm3603 = vcmp.ge.s32.totalorder %v3395, 0
    %vm3604 = vcmp.ge.s32.totalorder %v3396, 0
    %vm3605 = vcmp.ge.s32.totalorder %v3397, 0
    %vm3606 = vcmp.ge.s32.totalorder %v3398, 0
    %vm3607 = vcmp.ge.s32.totalorder %v3399, 0
    %vm3608 = vcmp.ge.s32.totalorder %v3400, 0
    %vm3609 = vcmp.ge.s32.totalorder %v3401, 0
    %vm3610 = vcmp.ge.s32.totalorder %v3402, 0
    %vm3611 = vcmp.ge.s32.totalorder %v3403, 0
    %vm3612 = vcmp.ge.s32.totalorder %v3404, 0
    %vm3613 = vcmp.ge.s32.totalorder %v3405, 0
    %vm3614 = vcmp.ge.s32.totalorder %v3406, 0
    %vm3615 = vcmp.ge.s32.totalorder %v3407, 0
    %vm3616 = vcmp.ge.s32.totalorder %v3408, 0
    %vm3617 = vcmp.le.s32.totalorder %v3393, 7
    %vm3618 = vcmp.le.s32.totalorder %v3394, 7
    %vm3619 = vcmp.le.s32.totalorder %v3395, 7
    %vm3620 = vcmp.le.s32.totalorder %v3396, 7
    %vm3621 = vcmp.le.s32.totalorder %v3397, 7
    %vm3622 = vcmp.le.s32.totalorder %v3398, 7
    %vm3623 = vcmp.le.s32.totalorder %v3399, 7
    %vm3624 = vcmp.le.s32.totalorder %v3400, 7
    %vm3625 = vcmp.le.s32.totalorder %v3401, 7
    %vm3626 = vcmp.le.s32.totalorder %v3402, 7
    %vm3627 = vcmp.le.s32.totalorder %v3403, 7
    %vm3628 = vcmp.le.s32.totalorder %v3404, 7
    %vm3629 = vcmp.le.s32.totalorder %v3405, 7
    %vm3630 = vcmp.le.s32.totalorder %v3406, 7
    %vm3631 = vcmp.le.s32.totalorder %v3407, 7
    %vm3632 = vcmp.le.s32.totalorder %v3408, 7
    %vm3633 = vmand %vm3601, %vm3617
    %vm3634 = vmand %vm3602, %vm3618
    %vm3635 = vmand %vm3603, %vm3619
    %vm3636 = vmand %vm3604, %vm3620
    %vm3637 = vmand %vm3605, %vm3621
    %vm3638 = vmand %vm3606, %vm3622
    %vm3639 = vmand %vm3607, %vm3623
    %vm3640 = vmand %vm3608, %vm3624
    %vm3641 = vmand %vm3609, %vm3625
    %vm3642 = vmand %vm3610, %vm3626
    %vm3643 = vmand %vm3611, %vm3627
    %vm3644 = vmand %vm3612, %vm3628
    %vm3645 = vmand %vm3613, %vm3629
    %vm3646 = vmand %vm3614, %vm3630
    %vm3647 = vmand %vm3615, %vm3631
    %vm3648 = vmand %vm3616, %vm3632
    %vm3649 = vcmp.ge.s32.totalorder %v3393, 4294967295
    %vm3650 = vcmp.ge.s32.totalorder %v3394, 4294967295
    %vm3651 = vcmp.ge.s32.totalorder %v3395, 4294967295
    %vm3652 = vcmp.ge.s32.totalorder %v3396, 4294967295
    %vm3653 = vcmp.ge.s32.totalorder %v3397, 4294967295
    %vm3654 = vcmp.ge.s32.totalorder %v3398, 4294967295
    %vm3655 = vcmp.ge.s32.totalorder %v3399, 4294967295
    %vm3656 = vcmp.ge.s32.totalorder %v3400, 4294967295
    %vm3657 = vcmp.ge.s32.totalorder %v3401, 4294967295
    %vm3658 = vcmp.ge.s32.totalorder %v3402, 4294967295
    %vm3659 = vcmp.ge.s32.totalorder %v3403, 4294967295
    %vm3660 = vcmp.ge.s32.totalorder %v3404, 4294967295
    %vm3661 = vcmp.ge.s32.totalorder %v3405, 4294967295
    %vm3662 = vcmp.ge.s32.totalorder %v3406, 4294967295
    %vm3663 = vcmp.ge.s32.totalorder %v3407, 4294967295
    %vm3664 = vcmp.ge.s32.totalorder %v3408, 4294967295
    %vm3665 = vcmp.le.s32.totalorder %v3393, 6
    %vm3666 = vcmp.le.s32.totalorder %v3394, 6
    %vm3667 = vcmp.le.s32.totalorder %v3395, 6
    %vm3668 = vcmp.le.s32.totalorder %v3396, 6
    %vm3669 = vcmp.le.s32.totalorder %v3397, 6
    %vm3670 = vcmp.le.s32.totalorder %v3398, 6
    %vm3671 = vcmp.le.s32.totalorder %v3399, 6
    %vm3672 = vcmp.le.s32.totalorder %v3400, 6
    %vm3673 = vcmp.le.s32.totalorder %v3401, 6
    %vm3674 = vcmp.le.s32.totalorder %v3402, 6
    %vm3675 = vcmp.le.s32.totalorder %v3403, 6
    %vm3676 = vcmp.le.s32.totalorder %v3404, 6
    %vm3677 = vcmp.le.s32.totalorder %v3405, 6
    %vm3678 = vcmp.le.s32.totalorder %v3406, 6
    %vm3679 = vcmp.le.s32.totalorder %v3407, 6
    %vm3680 = vcmp.le.s32.totalorder %v3408, 6
    %vm3681 = vmand %vm3649, %vm3665
    %vm3682 = vmand %vm3650, %vm3666
    %vm3683 = vmand %vm3651, %vm3667
    %vm3684 = vmand %vm3652, %vm3668
    %vm3685 = vmand %vm3653, %vm3669
    %vm3686 = vmand %vm3654, %vm3670
    %vm3687 = vmand %vm3655, %vm3671
    %vm3688 = vmand %vm3656, %vm3672
    %vm3689 = vmand %vm3657, %vm3673
    %vm3690 = vmand %vm3658, %vm3674
    %vm3691 = vmand %vm3659, %vm3675
    %vm3692 = vmand %vm3660, %vm3676
    %vm3693 = vmand %vm3661, %vm3677
    %vm3694 = vmand %vm3662, %vm3678
    %vm3695 = vmand %vm3663, %vm3679
    %vm3696 = vmand %vm3664, %vm3680
    %v3697 = vld [vmem:[#allocation3] sm:$0xf8]
    %v3698 = vld [vmem:[#allocation3 + $0x8] sm:$0xff]
    %v3699 = vld [vmem:[#allocation3 + $0x10] sm:$0xff]
    %v3700 = vld [vmem:[#allocation3 + $0x18] sm:$0xff]
    %v3701 = vld [vmem:[#allocation3 + $0x20] sm:$0xff]
    %v3702 = vld [vmem:[#allocation3 + $0x28] sm:$0xff]
    %v3703 = vld [vmem:[#allocation3 + $0x30] sm:$0xff]
    %v3704 = vld [vmem:[#allocation3 + $0x38] sm:$0xff]
    %v3705 = vld [vmem:[#allocation3 + $0x40] sm:$0xf]
    %vm3706 = vmand %vm3441, %vm3585
    %vm3707 = vmand %vm3442, %vm3586
    %vm3708 = vmand %vm3443, %vm3587
    %vm3709 = vmand %vm3444, %vm3588
    %vm3710 = vmand %vm3445, %vm3589
    %vm3711 = vmand %vm3446, %vm3590
    %vm3712 = vmand %vm3447, %vm3591
    %vm3713 = vmand %vm3448, %vm3592
    %vm3714 = vmand %vm3449, %vm3593
    %vm3715 = vmand %vm3450, %vm3594
    %vm3716 = vmand %vm3451, %vm3595
    %vm3717 = vmand %vm3452, %vm3596
    %vm3718 = vmand %vm3453, %vm3597
    %vm3719 = vmand %vm3454, %vm3598
    %vm3720 = vmand %vm3455, %vm3599
    %vm3721 = vmand %vm3456, %vm3600
    %v3722 = vsel %vm3706, 1, 0
    %v3723 = vsel %vm3707, 1, 0
    %v3724 = vsel %vm3708, 1, 0
    %v3725 = vsel %vm3709, 1, 0
    %v3726 = vsel %vm3710, 1, 0
    %v3727 = vsel %vm3711, 1, 0
    %v3728 = vsel %vm3712, 1, 0
    %v3729 = vsel %vm3713, 1, 0
    %v3730 = vsel %vm3714, 1, 0
    %v3731 = vsel %vm3715, 1, 0
    %v3732 = vsel %vm3716, 1, 0
    %v3733 = vsel %vm3717, 1, 0
    %v3734 = vsel %vm3718, 1, 0
    %v3735 = vsel %vm3719, 1, 0
    %v3736 = vsel %vm3720, 1, 0
    %v3737 = vsel %vm3721, 1, 0
    %vm3738 = vcmp.eq.s32.totalorder %v3722, 1
    %vm3739 = vcmp.eq.s32.totalorder %v3723, 1
    %vm3740 = vcmp.eq.s32.totalorder %v3724, 1
    %vm3741 = vcmp.eq.s32.totalorder %v3725, 1
    %vm3742 = vcmp.eq.s32.totalorder %v3726, 1
    %vm3743 = vcmp.eq.s32.totalorder %v3727, 1
    %vm3744 = vcmp.eq.s32.totalorder %v3728, 1
    %vm3745 = vcmp.eq.s32.totalorder %v3729, 1
    %vm3746 = vcmp.eq.s32.totalorder %v3730, 1
    %vm3747 = vcmp.eq.s32.totalorder %v3731, 1
    %vm3748 = vcmp.eq.s32.totalorder %v3732, 1
    %vm3749 = vcmp.eq.s32.totalorder %v3733, 1
    %vm3750 = vcmp.eq.s32.totalorder %v3734, 1
    %vm3751 = vcmp.eq.s32.totalorder %v3735, 1
    %vm3752 = vcmp.eq.s32.totalorder %v3736, 1
    %vm3753 = vcmp.eq.s32.totalorder %v3737, 1
    %vm3754 = vmpackc.low %vm3738, %vm3738
    %vm3755 = vmpackc.low %vm3739, %vm3739
    %vm3756 = vmpackc.low %vm3740, %vm3740
    %vm3757 = vmpackc.low %vm3741, %vm3741
    %vm3758 = vmpackc.low %vm3742, %vm3742
    %vm3759 = vmpackc.low %vm3743, %vm3743
    %vm3760 = vmpackc.low %vm3744, %vm3744
    %vm3761 = vmpackc.low %vm3745, %vm3745
    %vm3762 = vmpackc.low %vm3746, %vm3746
    %vm3763 = vmpackc.low %vm3747, %vm3747
    %vm3764 = vmpackc.low %vm3748, %vm3748
    %vm3765 = vmpackc.low %vm3749, %vm3749
    %vm3766 = vmpackc.low %vm3750, %vm3750
    %vm3767 = vmpackc.low %vm3751, %vm3751
    %vm3768 = vmpackc.low %vm3752, %vm3752
    %vm3769 = vmpackc.low %vm3753, %vm3753
    %v3770 = vsel %vm3754, 65537, 0
    %v3771 = vsel %vm3755, 65537, 0
    %v3772 = vsel %vm3756, 65537, 0
    %v3773 = vsel %vm3757, 65537, 0
    %v3774 = vsel %vm3758, 65537, 0
    %v3775 = vsel %vm3759, 65537, 0
    %v3776 = vsel %vm3760, 65537, 0
    %v3777 = vsel %vm3761, 65537, 0
    %v3778 = vsel %vm3762, 65537, 0
    %v3779 = vsel %vm3763, 65537, 0
    %v3780 = vsel %vm3764, 65537, 0
    %v3781 = vsel %vm3765, 65537, 0
    %v3782 = vsel %vm3766, 65537, 0
    %v3783 = vsel %vm3767, 65537, 0
    %v3784 = vsel %vm3768, 65537, 0
    %v3785 = vsel %vm3769, 65537, 0
    %v3786 = vunpack.c.l.b16 %v3770
    %v3787 = vunpack.c.l.b16 %v3771
    %v3788 = vunpack.c.l.b16 %v3772
    %v3789 = vunpack.c.l.b16 %v3773
    %v3790 = vunpack.c.l.b16 %v3774
    %v3791 = vunpack.c.l.b16 %v3775
    %v3792 = vunpack.c.l.b16 %v3776
    %v3793 = vunpack.c.l.b16 %v3777
    %v3794 = vunpack.c.l.b16 %v3778
    %v3795 = vunpack.c.l.b16 %v3779
    %v3796 = vunpack.c.l.b16 %v3780
    %v3797 = vunpack.c.l.b16 %v3781
    %v3798 = vunpack.c.l.b16 %v3782
    %v3799 = vunpack.c.l.b16 %v3783
    %v3800 = vunpack.c.l.b16 %v3784
    %v3801 = vunpack.c.l.b16 %v3785
    %v3802 = vpack.c.b16 %v3787, %v3786
    %v3803 = vpack.c.b16 %v3789, %v3788
    %v3804 = vpack.c.b16 %v3791, %v3790
    %v3805 = vpack.c.b16 %v3793, %v3792
    %v3806 = vpack.c.b16 %v3795, %v3794
    %v3807 = vpack.c.b16 %v3797, %v3796
    %v3808 = vpack.c.b16 %v3799, %v3798
    %v3809 = vpack.c.b16 %v3801, %v3800
    %v3811 = vshrl.u32 %v3802, 16
    %v3813 = vrot.slane %v3811, 4
    %v3814 = vshll.u32 %v3802, 16
    %v3816 = vrot.slane %v3814, 5
    %v3817 = vor.u32 %v3813, %v3816
    %v3819 = vshrl.u32 %v3803, 16
    %v3821 = vrot.slane %v3819, 4
    %v3822 = vshll.u32 %v3803, 16
    %v3824 = vrot.slane %v3822, 5
    %v3825 = vor.u32 %v3821, %v3824
    %v3826 = vsel %vm1943, %v3817, %v3825
    %v3828 = vshrl.u32 %v3804, 16
    %v3830 = vrot.slane %v3828, 4
    %v3831 = vshll.u32 %v3804, 16
    %v3833 = vrot.slane %v3831, 5
    %v3834 = vor.u32 %v3830, %v3833
    %v3835 = vsel %vm1943, %v3825, %v3834
    %v3837 = vshrl.u32 %v3805, 16
    %v3839 = vrot.slane %v3837, 4
    %v3840 = vshll.u32 %v3805, 16
    %v3842 = vrot.slane %v3840, 5
    %v3843 = vor.u32 %v3839, %v3842
    %v3844 = vsel %vm1943, %v3834, %v3843
    %v3846 = vshrl.u32 %v3806, 16
    %v3848 = vrot.slane %v3846, 4
    %v3849 = vshll.u32 %v3806, 16
    %v3851 = vrot.slane %v3849, 5
    %v3852 = vor.u32 %v3848, %v3851
    %v3853 = vsel %vm1943, %v3843, %v3852
    %v3855 = vshrl.u32 %v3807, 16
    %v3857 = vrot.slane %v3855, 4
    %v3858 = vshll.u32 %v3807, 16
    %v3860 = vrot.slane %v3858, 5
    %v3861 = vor.u32 %v3857, %v3860
    %v3862 = vsel %vm1943, %v3852, %v3861
    %v3864 = vshrl.u32 %v3808, 16
    %v3866 = vrot.slane %v3864, 4
    %v3867 = vshll.u32 %v3808, 16
    %v3869 = vrot.slane %v3867, 5
    %v3870 = vor.u32 %v3866, %v3869
    %v3871 = vsel %vm1943, %v3861, %v3870
    %v3873 = vshrl.u32 %v3809, 16
    %v3875 = vrot.slane %v3873, 4
    %v3876 = vshll.u32 %v3809, 16
    %v3878 = vrot.slane %v3876, 5
    %v3879 = vor.u32 %v3875, %v3878
    %v3880 = vsel %vm1943, %v3870, %v3879
    %vm3881 = vcmp.ne.s16.totalorder %v3817, 0
    %vm3882 = vcmp.ne.s16.totalorder %v3826, 0
    %vm3883 = vcmp.ne.s16.totalorder %v3835, 0
    %vm3884 = vcmp.ne.s16.totalorder %v3844, 0
    %vm3885 = vcmp.ne.s16.totalorder %v3853, 0
    %vm3886 = vcmp.ne.s16.totalorder %v3862, 0
    %vm3887 = vcmp.ne.s16.totalorder %v3871, 0
    %vm3888 = vcmp.ne.s16.totalorder %v3880, 0
    %vm3889 = vcmp.ne.s16.totalorder %v3879, 0
    %v3890 = vsel %vm3881, %v3697, 0
    %v3891 = vsel %vm3882, %v3698, 0
    %v3892 = vsel %vm3883, %v3699, 0
    %v3893 = vsel %vm3884, %v3700, 0
    %v3894 = vsel %vm3885, %v3701, 0
    %v3895 = vsel %vm3886, %v3702, 0
    %v3896 = vsel %vm3887, %v3703, 0
    %v3897 = vsel %vm3888, %v3704, 0
    %v3898 = vsel %vm3889, %v3705, 0
    %vm3899 = vsmask.f32 4352
    %v3901 = vshrl.u32 %v3890, 16
    %v3903 = vrot.slane %v3901, 3
    %v3904 = vshll.u32 %v3890, 16
    %v3906 = vrot.slane %v3904, 4
    %v3907 = vor.u32 %v3903, %v3906
    %v3909 = vshrl.u32 %v3891, 16
    %v3911 = vrot.slane %v3909, 3
    %v3912 = vshll.u32 %v3891, 16
    %v3914 = vrot.slane %v3912, 4
    %v3915 = vor.u32 %v3911, %v3914
    %v3916 = vsel %vm3899, %v3907, %v3915
    %v3918 = vshrl.u32 %v3892, 16
    %v3920 = vrot.slane %v3918, 3
    %v3921 = vshll.u32 %v3892, 16
    %v3923 = vrot.slane %v3921, 4
    %v3924 = vor.u32 %v3920, %v3923
    %v3925 = vsel %vm3899, %v3915, %v3924
    %v3927 = vshrl.u32 %v3893, 16
    %v3929 = vrot.slane %v3927, 3
    %v3930 = vshll.u32 %v3893, 16
    %v3932 = vrot.slane %v3930, 4
    %v3933 = vor.u32 %v3929, %v3932
    %v3934 = vsel %vm3899, %v3924, %v3933
    %v3936 = vshrl.u32 %v3894, 16
    %v3938 = vrot.slane %v3936, 3
    %v3939 = vshll.u32 %v3894, 16
    %v3941 = vrot.slane %v3939, 4
    %v3942 = vor.u32 %v3938, %v3941
    %v3943 = vsel %vm3899, %v3933, %v3942
    %v3945 = vshrl.u32 %v3895, 16
    %v3947 = vrot.slane %v3945, 3
    %v3948 = vshll.u32 %v3895, 16
    %v3950 = vrot.slane %v3948, 4
    %v3951 = vor.u32 %v3947, %v3950
    %v3952 = vsel %vm3899, %v3942, %v3951
    %v3954 = vshrl.u32 %v3896, 16
    %v3956 = vrot.slane %v3954, 3
    %v3957 = vshll.u32 %v3896, 16
    %v3959 = vrot.slane %v3957, 4
    %v3960 = vor.u32 %v3956, %v3959
    %v3961 = vsel %vm3899, %v3951, %v3960
    %v3963 = vshrl.u32 %v3897, 16
    %v3965 = vrot.slane %v3963, 3
    %v3966 = vshll.u32 %v3897, 16
    %v3968 = vrot.slane %v3966, 4
    %v3969 = vor.u32 %v3965, %v3968
    %v3970 = vsel %vm3899, %v3960, %v3969
    %v3972 = vshrl.u32 %v3898, 16
    %v3974 = vrot.slane %v3972, 3
    %v3975 = vshll.u32 %v3898, 16
    %v3977 = vrot.slane %v3975, 4
    %v3978 = vor.u32 %v3974, %v3977
    %v3979 = vsel %vm3899, %v3969, %v3978
    %3988 = vst [vmem:[#allocation4] sm:$0xff] %v3916
    %3989 = vst [vmem:[#allocation4 + $0x48] sm:$0xff] %v3925
    %3990 = vst [vmem:[#allocation4 + $0x90] sm:$0xff] %v3934
    %3991 = vst [vmem:[#allocation4 + $0xd8] sm:$0xff] %v3943
    %3992 = vst [vmem:[#allocation4 + $0x120] sm:$0xff] %v3952
    %3993 = vst [vmem:[#allocation4 + $0x168] sm:$0xff] %v3961
    %3994 = vst [vmem:[#allocation4 + $0x1b0] sm:$0xff] %v3970
    %3995 = vst [vmem:[#allocation4 + $0x1f8] sm:$0xff] %v3979
    %v3996 = vld [vmem:[#allocation3] sm:$0xf0]
    %v3997 = vld [vmem:[#allocation3 + $0x8] sm:$0xff]
    %v3998 = vld [vmem:[#allocation3 + $0x10] sm:$0xff]
    %v3999 = vld [vmem:[#allocation3 + $0x18] sm:$0xff]
    %v4000 = vld [vmem:[#allocation3 + $0x20] sm:$0xff]
    %v4001 = vld [vmem:[#allocation3 + $0x28] sm:$0xff]
    %v4002 = vld [vmem:[#allocation3 + $0x30] sm:$0xff]
    %v4003 = vld [vmem:[#allocation3 + $0x38] sm:$0xff]
    %v4004 = vld [vmem:[#allocation3 + $0x40] sm:$0xf]
    %vm4005 = vmand %vm3441, %vm3633
    %vm4006 = vmand %vm3442, %vm3634
    %vm4007 = vmand %vm3443, %vm3635
    %vm4008 = vmand %vm3444, %vm3636
    %vm4009 = vmand %vm3445, %vm3637
    %vm4010 = vmand %vm3446, %vm3638
    %vm4011 = vmand %vm3447, %vm3639
    %vm4012 = vmand %vm3448, %vm3640
    %vm4013 = vmand %vm3449, %vm3641
    %vm4014 = vmand %vm3450, %vm3642
    %vm4015 = vmand %vm3451, %vm3643
    %vm4016 = vmand %vm3452, %vm3644
    %vm4017 = vmand %vm3453, %vm3645
    %vm4018 = vmand %vm3454, %vm3646
    %vm4019 = vmand %vm3455, %vm3647
    %vm4020 = vmand %vm3456, %vm3648
    %v4021 = vsel %vm4005, 1, 0
    %v4022 = vsel %vm4006, 1, 0
    %v4023 = vsel %vm4007, 1, 0
    %v4024 = vsel %vm4008, 1, 0
    %v4025 = vsel %vm4009, 1, 0
    %v4026 = vsel %vm4010, 1, 0
    %v4027 = vsel %vm4011, 1, 0
    %v4028 = vsel %vm4012, 1, 0
    %v4029 = vsel %vm4013, 1, 0
    %v4030 = vsel %vm4014, 1, 0
    %v4031 = vsel %vm4015, 1, 0
    %v4032 = vsel %vm4016, 1, 0
    %v4033 = vsel %vm4017, 1, 0
    %v4034 = vsel %vm4018, 1, 0
    %v4035 = vsel %vm4019, 1, 0
    %v4036 = vsel %vm4020, 1, 0
    %vm4037 = vcmp.eq.s32.totalorder %v4021, 1
    %vm4038 = vcmp.eq.s32.totalorder %v4022, 1
    %vm4039 = vcmp.eq.s32.totalorder %v4023, 1
    %vm4040 = vcmp.eq.s32.totalorder %v4024, 1
    %vm4041 = vcmp.eq.s32.totalorder %v4025, 1
    %vm4042 = vcmp.eq.s32.totalorder %v4026, 1
    %vm4043 = vcmp.eq.s32.totalorder %v4027, 1
    %vm4044 = vcmp.eq.s32.totalorder %v4028, 1
    %vm4045 = vcmp.eq.s32.totalorder %v4029, 1
    %vm4046 = vcmp.eq.s32.totalorder %v4030, 1
    %vm4047 = vcmp.eq.s32.totalorder %v4031, 1
    %vm4048 = vcmp.eq.s32.totalorder %v4032, 1
    %vm4049 = vcmp.eq.s32.totalorder %v4033, 1
    %vm4050 = vcmp.eq.s32.totalorder %v4034, 1
    %vm4051 = vcmp.eq.s32.totalorder %v4035, 1
    %vm4052 = vcmp.eq.s32.totalorder %v4036, 1
    %vm4053 = vmpackc.low %vm4037, %vm4037
    %vm4054 = vmpackc.low %vm4038, %vm4038
    %vm4055 = vmpackc.low %vm4039, %vm4039
    %vm4056 = vmpackc.low %vm4040, %vm4040
    %vm4057 = vmpackc.low %vm4041, %vm4041
    %vm4058 = vmpackc.low %vm4042, %vm4042
    %vm4059 = vmpackc.low %vm4043, %vm4043
    %vm4060 = vmpackc.low %vm4044, %vm4044
    %vm4061 = vmpackc.low %vm4045, %vm4045
    %vm4062 = vmpackc.low %vm4046, %vm4046
    %vm4063 = vmpackc.low %vm4047, %vm4047
    %vm4064 = vmpackc.low %vm4048, %vm4048
    %vm4065 = vmpackc.low %vm4049, %vm4049
    %vm4066 = vmpackc.low %vm4050, %vm4050
    %vm4067 = vmpackc.low %vm4051, %vm4051
    %vm4068 = vmpackc.low %vm4052, %vm4052
    %v4069 = vsel %vm4053, 65537, 0
    %v4070 = vsel %vm4054, 65537, 0
    %v4071 = vsel %vm4055, 65537, 0
    %v4072 = vsel %vm4056, 65537, 0
    %v4073 = vsel %vm4057, 65537, 0
    %v4074 = vsel %vm4058, 65537, 0
    %v4075 = vsel %vm4059, 65537, 0
    %v4076 = vsel %vm4060, 65537, 0
    %v4077 = vsel %vm4061, 65537, 0
    %v4078 = vsel %vm4062, 65537, 0
    %v4079 = vsel %vm4063, 65537, 0
    %v4080 = vsel %vm4064, 65537, 0
    %v4081 = vsel %vm4065, 65537, 0
    %v4082 = vsel %vm4066, 65537, 0
    %v4083 = vsel %vm4067, 65537, 0
    %v4084 = vsel %vm4068, 65537, 0
    %v4085 = vunpack.c.l.b16 %v4069
    %v4086 = vunpack.c.l.b16 %v4070
    %v4087 = vunpack.c.l.b16 %v4071
    %v4088 = vunpack.c.l.b16 %v4072
    %v4089 = vunpack.c.l.b16 %v4073
    %v4090 = vunpack.c.l.b16 %v4074
    %v4091 = vunpack.c.l.b16 %v4075
    %v4092 = vunpack.c.l.b16 %v4076
    %v4093 = vunpack.c.l.b16 %v4077
    %v4094 = vunpack.c.l.b16 %v4078
    %v4095 = vunpack.c.l.b16 %v4079
    %v4096 = vunpack.c.l.b16 %v4080
    %v4097 = vunpack.c.l.b16 %v4081
    %v4098 = vunpack.c.l.b16 %v4082
    %v4099 = vunpack.c.l.b16 %v4083
    %v4100 = vunpack.c.l.b16 %v4084
    %v4101 = vpack.c.b16 %v4085, %v4085
    %v4102 = vpack.c.b16 %v4087, %v4086
    %v4103 = vpack.c.b16 %v4089, %v4088
    %v4104 = vpack.c.b16 %v4091, %v4090
    %v4105 = vpack.c.b16 %v4093, %v4092
    %v4106 = vpack.c.b16 %v4095, %v4094
    %v4107 = vpack.c.b16 %v4097, %v4096
    %v4108 = vpack.c.b16 %v4099, %v4098
    %v4109 = vpack.c.b16 %v4100, %v4100
    %vm4110 = vcmp.ne.s16.totalorder %v4101, 0
    %vm4111 = vcmp.ne.s16.totalorder %v4102, 0
    %vm4112 = vcmp.ne.s16.totalorder %v4103, 0
    %vm4113 = vcmp.ne.s16.totalorder %v4104, 0
    %vm4114 = vcmp.ne.s16.totalorder %v4105, 0
    %vm4115 = vcmp.ne.s16.totalorder %v4106, 0
    %vm4116 = vcmp.ne.s16.totalorder %v4107, 0
    %vm4117 = vcmp.ne.s16.totalorder %v4108, 0
    %vm4118 = vcmp.ne.s16.totalorder %v4109, 0
    %v4119 = vsel %vm4110, %v3996, 0
    %v4120 = vsel %vm4111, %v3997, 0
    %v4121 = vsel %vm4112, %v3998, 0
    %v4122 = vsel %vm4113, %v3999, 0
    %v4123 = vsel %vm4114, %v4000, 0
    %v4124 = vsel %vm4115, %v4001, 0
    %v4125 = vsel %vm4116, %v4002, 0
    %v4126 = vsel %vm4117, %v4003, 0
    %v4127 = vsel %vm4118, %v4004, 0
    %vm4137 = vcmask 1043456
    %v4138 = vrot.slane %v4119, 4
    %v4139 = vrot.slane %v4120, 4
    %v4140 = vsel %vm4137, %v4138, %v4139
    %v4141 = vrot.slane %v4121, 4
    %v4142 = vsel %vm4137, %v4139, %v4141
    %v4143 = vrot.slane %v4122, 4
    %v4144 = vsel %vm4137, %v4141, %v4143
    %v4145 = vrot.slane %v4123, 4
    %v4146 = vsel %vm4137, %v4143, %v4145
    %v4147 = vrot.slane %v4124, 4
    %v4148 = vsel %vm4137, %v4145, %v4147
    %v4149 = vrot.slane %v4125, 4
    %v4150 = vsel %vm4137, %v4147, %v4149
    %v4151 = vrot.slane %v4126, 4
    %v4152 = vsel %vm4137, %v4149, %v4151
    %v4153 = vrot.slane %v4127, 4
    %v4154 = vsel %vm4137, %v4151, %v4153
    %4163 = vst [vmem:[#allocation4 + $0x8] sm:$0xff] %v4140
    %4164 = vst [vmem:[#allocation4 + $0x50] sm:$0xff] %v4142
    %4165 = vst [vmem:[#allocation4 + $0x98] sm:$0xff] %v4144
    %4166 = vst [vmem:[#allocation4 + $0xe0] sm:$0xff] %v4146
    %4167 = vst [vmem:[#allocation4 + $0x128] sm:$0xff] %v4148
    %4168 = vst [vmem:[#allocation4 + $0x170] sm:$0xff] %v4150
    %4169 = vst [vmem:[#allocation4 + $0x1b8] sm:$0xff] %v4152
    %4170 = vst [vmem:[#allocation4 + $0x200] sm:$0xff] %v4154
    %v4171 = vld [vmem:[#allocation3] sm:$0xf0]
    %v4172 = vld [vmem:[#allocation3 + $0x8] sm:$0xff]
    %v4173 = vld [vmem:[#allocation3 + $0x10] sm:$0xff]
    %v4174 = vld [vmem:[#allocation3 + $0x18] sm:$0xff]
    %v4175 = vld [vmem:[#allocation3 + $0x20] sm:$0xff]
    %v4176 = vld [vmem:[#allocation3 + $0x28] sm:$0xff]
    %v4177 = vld [vmem:[#allocation3 + $0x30] sm:$0xff]
    %v4178 = vld [vmem:[#allocation3 + $0x38] sm:$0xff]
    %v4179 = vld [vmem:[#allocation3 + $0x40] sm:$0x1f]
    %vm4180 = vmand %vm3441, %vm3681
    %vm4181 = vmand %vm3442, %vm3682
    %vm4182 = vmand %vm3443, %vm3683
    %vm4183 = vmand %vm3444, %vm3684
    %vm4184 = vmand %vm3445, %vm3685
    %vm4185 = vmand %vm3446, %vm3686
    %vm4186 = vmand %vm3447, %vm3687
    %vm4187 = vmand %vm3448, %vm3688
    %vm4188 = vmand %vm3449, %vm3689
    %vm4189 = vmand %vm3450, %vm3690
    %vm4190 = vmand %vm3451, %vm3691
    %vm4191 = vmand %vm3452, %vm3692
    %vm4192 = vmand %vm3453, %vm3693
    %vm4193 = vmand %vm3454, %vm3694
    %vm4194 = vmand %vm3455, %vm3695
    %vm4195 = vmand %vm3456, %vm3696
    %v4196 = vsel %vm4180, 1, 0
    %v4197 = vsel %vm4181, 1, 0
    %v4198 = vsel %vm4182, 1, 0
    %v4199 = vsel %vm4183, 1, 0
    %v4200 = vsel %vm4184, 1, 0
    %v4201 = vsel %vm4185, 1, 0
    %v4202 = vsel %vm4186, 1, 0
    %v4203 = vsel %vm4187, 1, 0
    %v4204 = vsel %vm4188, 1, 0
    %v4205 = vsel %vm4189, 1, 0
    %v4206 = vsel %vm4190, 1, 0
    %v4207 = vsel %vm4191, 1, 0
    %v4208 = vsel %vm4192, 1, 0
    %v4209 = vsel %vm4193, 1, 0
    %v4210 = vsel %vm4194, 1, 0
    %v4211 = vsel %vm4195, 1, 0
    %vm4212 = vcmp.eq.s32.totalorder %v4196, 1
    %vm4213 = vcmp.eq.s32.totalorder %v4197, 1
    %vm4214 = vcmp.eq.s32.totalorder %v4198, 1
    %vm4215 = vcmp.eq.s32.totalorder %v4199, 1
    %vm4216 = vcmp.eq.s32.totalorder %v4200, 1
    %vm4217 = vcmp.eq.s32.totalorder %v4201, 1
    %vm4218 = vcmp.eq.s32.totalorder %v4202, 1
    %vm4219 = vcmp.eq.s32.totalorder %v4203, 1
    %vm4220 = vcmp.eq.s32.totalorder %v4204, 1
    %vm4221 = vcmp.eq.s32.totalorder %v4205, 1
    %vm4222 = vcmp.eq.s32.totalorder %v4206, 1
    %vm4223 = vcmp.eq.s32.totalorder %v4207, 1
    %vm4224 = vcmp.eq.s32.totalorder %v4208, 1
    %vm4225 = vcmp.eq.s32.totalorder %v4209, 1
    %vm4226 = vcmp.eq.s32.totalorder %v4210, 1
    %vm4227 = vcmp.eq.s32.totalorder %v4211, 1
    %vm4228 = vmpackc.low %vm4212, %vm4212
    %vm4229 = vmpackc.low %vm4213, %vm4213
    %vm4230 = vmpackc.low %vm4214, %vm4214
    %vm4231 = vmpackc.low %vm4215, %vm4215
    %vm4232 = vmpackc.low %vm4216, %vm4216
    %vm4233 = vmpackc.low %vm4217, %vm4217
    %vm4234 = vmpackc.low %vm4218, %vm4218
    %vm4235 = vmpackc.low %vm4219, %vm4219
    %vm4236 = vmpackc.low %vm4220, %vm4220
    %vm4237 = vmpackc.low %vm4221, %vm4221
    %vm4238 = vmpackc.low %vm4222, %vm4222
    %vm4239 = vmpackc.low %vm4223, %vm4223
    %vm4240 = vmpackc.low %vm4224, %vm4224
    %vm4241 = vmpackc.low %vm4225, %vm4225
    %vm4242 = vmpackc.low %vm4226, %vm4226
    %vm4243 = vmpackc.low %vm4227, %vm4227
    %v4244 = vsel %vm4228, 65537, 0
    %v4245 = vsel %vm4229, 65537, 0
    %v4246 = vsel %vm4230, 65537, 0
    %v4247 = vsel %vm4231, 65537, 0
    %v4248 = vsel %vm4232, 65537, 0
    %v4249 = vsel %vm4233, 65537, 0
    %v4250 = vsel %vm4234, 65537, 0
    %v4251 = vsel %vm4235, 65537, 0
    %v4252 = vsel %vm4236, 65537, 0
    %v4253 = vsel %vm4237, 65537, 0
    %v4254 = vsel %vm4238, 65537, 0
    %v4255 = vsel %vm4239, 65537, 0
    %v4256 = vsel %vm4240, 65537, 0
    %v4257 = vsel %vm4241, 65537, 0
    %v4258 = vsel %vm4242, 65537, 0
    %v4259 = vsel %vm4243, 65537, 0
    %v4260 = vunpack.c.l.b16 %v4244
    %v4261 = vunpack.c.l.b16 %v4245
    %v4262 = vunpack.c.l.b16 %v4246
    %v4263 = vunpack.c.l.b16 %v4247
    %v4264 = vunpack.c.l.b16 %v4248
    %v4265 = vunpack.c.l.b16 %v4249
    %v4266 = vunpack.c.l.b16 %v4250
    %v4267 = vunpack.c.l.b16 %v4251
    %v4268 = vunpack.c.l.b16 %v4252
    %v4269 = vunpack.c.l.b16 %v4253
    %v4270 = vunpack.c.l.b16 %v4254
    %v4271 = vunpack.c.l.b16 %v4255
    %v4272 = vunpack.c.l.b16 %v4256
    %v4273 = vunpack.c.l.b16 %v4257
    %v4274 = vunpack.c.l.b16 %v4258
    %v4275 = vunpack.c.l.b16 %v4259
    %v4276 = vpack.c.b16 %v4261, %v4260
    %v4277 = vpack.c.b16 %v4263, %v4262
    %v4278 = vpack.c.b16 %v4265, %v4264
    %v4279 = vpack.c.b16 %v4267, %v4266
    %v4280 = vpack.c.b16 %v4269, %v4268
    %v4281 = vpack.c.b16 %v4271, %v4270
    %v4282 = vpack.c.b16 %v4273, %v4272
    %v4283 = vpack.c.b16 %v4275, %v4274
    %v4285 = vshrl.u32 %v4276, 16
    %v4287 = vrot.slane %v4285, 3
    %v4288 = vshll.u32 %v4276, 16
    %v4290 = vrot.slane %v4288, 4
    %v4291 = vor.u32 %v4287, %v4290
    %v4293 = vshrl.u32 %v4277, 16
    %v4295 = vrot.slane %v4293, 3
    %v4296 = vshll.u32 %v4277, 16
    %v4298 = vrot.slane %v4296, 4
    %v4299 = vor.u32 %v4295, %v4298
    %v4300 = vsel %vm3899, %v4291, %v4299
    %v4302 = vshrl.u32 %v4278, 16
    %v4304 = vrot.slane %v4302, 3
    %v4305 = vshll.u32 %v4278, 16
    %v4307 = vrot.slane %v4305, 4
    %v4308 = vor.u32 %v4304, %v4307
    %v4309 = vsel %vm3899, %v4299, %v4308
    %v4311 = vshrl.u32 %v4279, 16
    %v4313 = vrot.slane %v4311, 3
    %v4314 = vshll.u32 %v4279, 16
    %v4316 = vrot.slane %v4314, 4
    %v4317 = vor.u32 %v4313, %v4316
    %v4318 = vsel %vm3899, %v4308, %v4317
    %v4320 = vshrl.u32 %v4280, 16
    %v4322 = vrot.slane %v4320, 3
    %v4323 = vshll.u32 %v4280, 16
    %v4325 = vrot.slane %v4323, 4
    %v4326 = vor.u32 %v4322, %v4325
    %v4327 = vsel %vm3899, %v4317, %v4326
    %v4329 = vshrl.u32 %v4281, 16
    %v4331 = vrot.slane %v4329, 3
    %v4332 = vshll.u32 %v4281, 16
    %v4334 = vrot.slane %v4332, 4
    %v4335 = vor.u32 %v4331, %v4334
    %v4336 = vsel %vm3899, %v4326, %v4335
    %v4338 = vshrl.u32 %v4282, 16
    %v4340 = vrot.slane %v4338, 3
    %v4341 = vshll.u32 %v4282, 16
    %v4343 = vrot.slane %v4341, 4
    %v4344 = vor.u32 %v4340, %v4343
    %v4345 = vsel %vm3899, %v4335, %v4344
    %v4347 = vshrl.u32 %v4283, 16
    %v4349 = vrot.slane %v4347, 3
    %v4350 = vshll.u32 %v4283, 16
    %v4352 = vrot.slane %v4350, 4
    %v4353 = vor.u32 %v4349, %v4352
    %v4354 = vsel %vm3899, %v4344, %v4353
    %vm4355 = vcmp.ne.s16.totalorder %v4291, 0
    %vm4356 = vcmp.ne.s16.totalorder %v4300, 0
    %vm4357 = vcmp.ne.s16.totalorder %v4309, 0
    %vm4358 = vcmp.ne.s16.totalorder %v4318, 0
    %vm4359 = vcmp.ne.s16.totalorder %v4327, 0
    %vm4360 = vcmp.ne.s16.totalorder %v4336, 0
    %vm4361 = vcmp.ne.s16.totalorder %v4345, 0
    %vm4362 = vcmp.ne.s16.totalorder %v4354, 0
    %vm4363 = vcmp.ne.s16.totalorder %v4353, 0
    %v4364 = vsel %vm4355, %v4171, 0
    %v4365 = vsel %vm4356, %v4172, 0
    %v4366 = vsel %vm4357, %v4173, 0
    %v4367 = vsel %vm4358, %v4174, 0
    %v4368 = vsel %vm4359, %v4175, 0
    %v4369 = vsel %vm4360, %v4176, 0
    %v4370 = vsel %vm4361, %v4177, 0
    %v4371 = vsel %vm4362, %v4178, 0
    %v4372 = vsel %vm4363, %v4179, 0
    %v4374 = vshrl.u32 %v4364, 16
    %v4376 = vrot.slane %v4374, 4
    %v4377 = vshll.u32 %v4364, 16
    %v4379 = vrot.slane %v4377, 5
    %v4380 = vor.u32 %v4376, %v4379
    %v4382 = vshrl.u32 %v4365, 16
    %v4384 = vrot.slane %v4382, 4
    %v4385 = vshll.u32 %v4365, 16
    %v4387 = vrot.slane %v4385, 5
    %v4388 = vor.u32 %v4384, %v4387
    %v4389 = vsel %vm1943, %v4380, %v4388
    %v4391 = vshrl.u32 %v4366, 16
    %v4393 = vrot.slane %v4391, 4
    %v4394 = vshll.u32 %v4366, 16
    %v4396 = vrot.slane %v4394, 5
    %v4397 = vor.u32 %v4393, %v4396
    %v4398 = vsel %vm1943, %v4388, %v4397
    %v4400 = vshrl.u32 %v4367, 16
    %v4402 = vrot.slane %v4400, 4
    %v4403 = vshll.u32 %v4367, 16
    %v4405 = vrot.slane %v4403, 5
    %v4406 = vor.u32 %v4402, %v4405
    %v4407 = vsel %vm1943, %v4397, %v4406
    %v4409 = vshrl.u32 %v4368, 16
    %v4411 = vrot.slane %v4409, 4
    %v4412 = vshll.u32 %v4368, 16
    %v4414 = vrot.slane %v4412, 5
    %v4415 = vor.u32 %v4411, %v4414
    %v4416 = vsel %vm1943, %v4406, %v4415
    %v4418 = vshrl.u32 %v4369, 16
    %v4420 = vrot.slane %v4418, 4
    %v4421 = vshll.u32 %v4369, 16
    %v4423 = vrot.slane %v4421, 5
    %v4424 = vor.u32 %v4420, %v4423
    %v4425 = vsel %vm1943, %v4415, %v4424
    %v4427 = vshrl.u32 %v4370, 16
    %v4429 = vrot.slane %v4427, 4
    %v4430 = vshll.u32 %v4370, 16
    %v4432 = vrot.slane %v4430, 5
    %v4433 = vor.u32 %v4429, %v4432
    %v4434 = vsel %vm1943, %v4424, %v4433
    %v4436 = vshrl.u32 %v4371, 16
    %v4438 = vrot.slane %v4436, 4
    %v4439 = vshll.u32 %v4371, 16
    %v4441 = vrot.slane %v4439, 5
    %v4442 = vor.u32 %v4438, %v4441
    %v4443 = vsel %vm1943, %v4433, %v4442
    %v4445 = vshrl.u32 %v4372, 16
    %v4447 = vrot.slane %v4445, 4
    %v4448 = vshll.u32 %v4372, 16
    %v4450 = vrot.slane %v4448, 5
    %v4451 = vor.u32 %v4447, %v4450
    %v4452 = vsel %vm1943, %v4442, %v4451
    %4461 = vst [vmem:[#allocation4 + $0x10] sm:$0xff] %v4389
    %4462 = vst [vmem:[#allocation4 + $0x58] sm:$0xff] %v4398
    %4463 = vst [vmem:[#allocation4 + $0xa0] sm:$0xff] %v4407
    %4464 = vst [vmem:[#allocation4 + $0xe8] sm:$0xff] %v4416
    %4465 = vst [vmem:[#allocation4 + $0x130] sm:$0xff] %v4425
    %4466 = vst [vmem:[#allocation4 + $0x178] sm:$0xff] %v4434
    %4467 = vst [vmem:[#allocation4 + $0x1c0] sm:$0xff] %v4443
    %4468 = vst [vmem:[#allocation4 + $0x208] sm:$0xff] %v4452
    %v4469 = vld [vmem:[#allocation3] sm:$0x80]
    %v4470 = vld [vmem:[#allocation3 + $0x8] sm:$0xff]
    %v4471 = vld [vmem:[#allocation3 + $0x10] sm:$0xff]
    %v4472 = vld [vmem:[#allocation3 + $0x18] sm:$0xff]
    %v4473 = vld [vmem:[#allocation3 + $0x20] sm:$0xff]
    %v4474 = vld [vmem:[#allocation3 + $0x28] sm:$0xff]
    %v4475 = vld [vmem:[#allocation3 + $0x30] sm:$0xff]
    %v4476 = vld [vmem:[#allocation3 + $0x38] sm:$0xff]
    %v4477 = vld [vmem:[#allocation3 + $0x40] sm:$0xff]
    %vm4478 = vmand %vm3489, %vm3585
    %vm4479 = vmand %vm3490, %vm3586
    %vm4480 = vmand %vm3491, %vm3587
    %vm4481 = vmand %vm3492, %vm3588
    %vm4482 = vmand %vm3493, %vm3589
    %vm4483 = vmand %vm3494, %vm3590
    %vm4484 = vmand %vm3495, %vm3591
    %vm4485 = vmand %vm3496, %vm3592
    %vm4486 = vmand %vm3497, %vm3593
    %vm4487 = vmand %vm3498, %vm3594
    %vm4488 = vmand %vm3499, %vm3595
    %vm4489 = vmand %vm3500, %vm3596
    %vm4490 = vmand %vm3501, %vm3597
    %vm4491 = vmand %vm3502, %vm3598
    %vm4492 = vmand %vm3503, %vm3599
    %vm4493 = vmand %vm3504, %vm3600
    %v4494 = vsel %vm4478, 1, 0
    %v4495 = vsel %vm4479, 1, 0
    %v4496 = vsel %vm4480, 1, 0
    %v4497 = vsel %vm4481, 1, 0
    %v4498 = vsel %vm4482, 1, 0
    %v4499 = vsel %vm4483, 1, 0
    %v4500 = vsel %vm4484, 1, 0
    %v4501 = vsel %vm4485, 1, 0
    %v4502 = vsel %vm4486, 1, 0
    %v4503 = vsel %vm4487, 1, 0
    %v4504 = vsel %vm4488, 1, 0
    %v4505 = vsel %vm4489, 1, 0
    %v4506 = vsel %vm4490, 1, 0
    %v4507 = vsel %vm4491, 1, 0
    %v4508 = vsel %vm4492, 1, 0
    %v4509 = vsel %vm4493, 1, 0
    %vm4510 = vcmp.eq.s32.totalorder %v4494, 1
    %vm4511 = vcmp.eq.s32.totalorder %v4495, 1
    %vm4512 = vcmp.eq.s32.totalorder %v4496, 1
    %vm4513 = vcmp.eq.s32.totalorder %v4497, 1
    %vm4514 = vcmp.eq.s32.totalorder %v4498, 1
    %vm4515 = vcmp.eq.s32.totalorder %v4499, 1
    %vm4516 = vcmp.eq.s32.totalorder %v4500, 1
    %vm4517 = vcmp.eq.s32.totalorder %v4501, 1
    %vm4518 = vcmp.eq.s32.totalorder %v4502, 1
    %vm4519 = vcmp.eq.s32.totalorder %v4503, 1
    %vm4520 = vcmp.eq.s32.totalorder %v4504, 1
    %vm4521 = vcmp.eq.s32.totalorder %v4505, 1
    %vm4522 = vcmp.eq.s32.totalorder %v4506, 1
    %vm4523 = vcmp.eq.s32.totalorder %v4507, 1
    %vm4524 = vcmp.eq.s32.totalorder %v4508, 1
    %vm4525 = vcmp.eq.s32.totalorder %v4509, 1
    %vm4526 = vmpackc.low %vm4510, %vm4510
    %vm4527 = vmpackc.low %vm4511, %vm4511
    %vm4528 = vmpackc.low %vm4512, %vm4512
    %vm4529 = vmpackc.low %vm4513, %vm4513
    %vm4530 = vmpackc.low %vm4514, %vm4514
    %vm4531 = vmpackc.low %vm4515, %vm4515
    %vm4532 = vmpackc.low %vm4516, %vm4516
    %vm4533 = vmpackc.low %vm4517, %vm4517
    %vm4534 = vmpackc.low %vm4518, %vm4518
    %vm4535 = vmpackc.low %vm4519, %vm4519
    %vm4536 = vmpackc.low %vm4520, %vm4520
    %vm4537 = vmpackc.low %vm4521, %vm4521
    %vm4538 = vmpackc.low %vm4522, %vm4522
    %vm4539 = vmpackc.low %vm4523, %vm4523
    %vm4540 = vmpackc.low %vm4524, %vm4524
    %vm4541 = vmpackc.low %vm4525, %vm4525
    %v4542 = vsel %vm4526, 65537, 0
    %v4543 = vsel %vm4527, 65537, 0
    %v4544 = vsel %vm4528, 65537, 0
    %v4545 = vsel %vm4529, 65537, 0
    %v4546 = vsel %vm4530, 65537, 0
    %v4547 = vsel %vm4531, 65537, 0
    %v4548 = vsel %vm4532, 65537, 0
    %v4549 = vsel %vm4533, 65537, 0
    %v4550 = vsel %vm4534, 65537, 0
    %v4551 = vsel %vm4535, 65537, 0
    %v4552 = vsel %vm4536, 65537, 0
    %v4553 = vsel %vm4537, 65537, 0
    %v4554 = vsel %vm4538, 65537, 0
    %v4555 = vsel %vm4539, 65537, 0
    %v4556 = vsel %vm4540, 65537, 0
    %v4557 = vsel %vm4541, 65537, 0
    %v4558 = vunpack.c.l.b16 %v4542
    %v4559 = vunpack.c.l.b16 %v4543
    %v4560 = vunpack.c.l.b16 %v4544
    %v4561 = vunpack.c.l.b16 %v4545
    %v4562 = vunpack.c.l.b16 %v4546
    %v4563 = vunpack.c.l.b16 %v4547
    %v4564 = vunpack.c.l.b16 %v4548
    %v4565 = vunpack.c.l.b16 %v4549
    %v4566 = vunpack.c.l.b16 %v4550
    %v4567 = vunpack.c.l.b16 %v4551
    %v4568 = vunpack.c.l.b16 %v4552
    %v4569 = vunpack.c.l.b16 %v4553
    %v4570 = vunpack.c.l.b16 %v4554
    %v4571 = vunpack.c.l.b16 %v4555
    %v4572 = vunpack.c.l.b16 %v4556
    %v4573 = vunpack.c.l.b16 %v4557
    %v4574 = vpack.c.b16 %v4559, %v4558
    %v4575 = vpack.c.b16 %v4561, %v4560
    %v4576 = vpack.c.b16 %v4563, %v4562
    %v4577 = vpack.c.b16 %v4565, %v4564
    %v4578 = vpack.c.b16 %v4567, %v4566
    %v4579 = vpack.c.b16 %v4569, %v4568
    %v4580 = vpack.c.b16 %v4571, %v4570
    %v4581 = vpack.c.b16 %v4573, %v4572
    %v4583 = vshll.u32 %v4574, 16
    %v4585 = vrot.slane %v4583, 1
    %v4586 = vshrl.u32 %v4574, 16
    %v4588 = vor.u32 %v4586, %v4585
    %v4590 = vshll.u32 %v4575, 16
    %v4592 = vrot.slane %v4590, 1
    %v4593 = vsel %vm1551, %v4588, %v4592
    %v4594 = vshrl.u32 %v4575, 16
    %v4596 = vor.u32 %v4594, %v4592
    %v4598 = vshll.u32 %v4576, 16
    %v4600 = vrot.slane %v4598, 1
    %v4601 = vsel %vm1551, %v4596, %v4600
    %v4602 = vshrl.u32 %v4576, 16
    %v4604 = vor.u32 %v4602, %v4600
    %v4606 = vshll.u32 %v4577, 16
    %v4608 = vrot.slane %v4606, 1
    %v4609 = vsel %vm1551, %v4604, %v4608
    %v4610 = vshrl.u32 %v4577, 16
    %v4612 = vor.u32 %v4610, %v4608
    %v4614 = vshll.u32 %v4578, 16
    %v4616 = vrot.slane %v4614, 1
    %v4617 = vsel %vm1551, %v4612, %v4616
    %v4618 = vshrl.u32 %v4578, 16
    %v4620 = vor.u32 %v4618, %v4616
    %v4622 = vshll.u32 %v4579, 16
    %v4624 = vrot.slane %v4622, 1
    %v4625 = vsel %vm1551, %v4620, %v4624
    %v4626 = vshrl.u32 %v4579, 16
    %v4628 = vor.u32 %v4626, %v4624
    %v4630 = vshll.u32 %v4580, 16
    %v4632 = vrot.slane %v4630, 1
    %v4633 = vsel %vm1551, %v4628, %v4632
    %v4634 = vshrl.u32 %v4580, 16
    %v4636 = vor.u32 %v4634, %v4632
    %v4638 = vshll.u32 %v4581, 16
    %v4640 = vrot.slane %v4638, 1
    %v4641 = vsel %vm1551, %v4636, %v4640
    %v4642 = vshrl.u32 %v4581, 16
    %v4644 = vor.u32 %v4642, %v4640
    %vm4645 = vcmp.ne.s16.totalorder %v4585, 0
    %vm4646 = vcmp.ne.s16.totalorder %v4593, 0
    %vm4647 = vcmp.ne.s16.totalorder %v4601, 0
    %vm4648 = vcmp.ne.s16.totalorder %v4609, 0
    %vm4649 = vcmp.ne.s16.totalorder %v4617, 0
    %vm4650 = vcmp.ne.s16.totalorder %v4625, 0
    %vm4651 = vcmp.ne.s16.totalorder %v4633, 0
    %vm4652 = vcmp.ne.s16.totalorder %v4641, 0
    %vm4653 = vcmp.ne.s16.totalorder %v4644, 0
    %v4654 = vsel %vm4645, %v4469, 0
    %v4655 = vsel %vm4646, %v4470, 0
    %v4656 = vsel %vm4647, %v4471, 0
    %v4657 = vsel %vm4648, %v4472, 0
    %v4658 = vsel %vm4649, %v4473, 0
    %v4659 = vsel %vm4650, %v4474, 0
    %v4660 = vsel %vm4651, %v4475, 0
    %v4661 = vsel %vm4652, %v4476, 0
    %v4662 = vsel %vm4653, %v4477, 0
    %vm4663 = vsmask.f32 256
    %v4665 = vshrl.u32 %v4654, 16
    %v4667 = vrot.slane %v4665, 7
    %v4669 = vshrl.u32 %v4655, 16
    %v4671 = vrot.slane %v4669, 7
    %v4672 = vshll.u32 %v4655, 16
    %v4674 = vor.u32 %v4671, %v4672
    %v4675 = vsel %vm4663, %v4667, %v4674
    %v4677 = vshrl.u32 %v4656, 16
    %v4679 = vrot.slane %v4677, 7
    %v4680 = vshll.u32 %v4656, 16
    %v4682 = vor.u32 %v4679, %v4680
    %v4683 = vsel %vm4663, %v4671, %v4682
    %v4685 = vshrl.u32 %v4657, 16
    %v4687 = vrot.slane %v4685, 7
    %v4688 = vshll.u32 %v4657, 16
    %v4690 = vor.u32 %v4687, %v4688
    %v4691 = vsel %vm4663, %v4679, %v4690
    %v4693 = vshrl.u32 %v4658, 16
    %v4695 = vrot.slane %v4693, 7
    %v4696 = vshll.u32 %v4658, 16
    %v4698 = vor.u32 %v4695, %v4696
    %v4699 = vsel %vm4663, %v4687, %v4698
    %v4701 = vshrl.u32 %v4659, 16
    %v4703 = vrot.slane %v4701, 7
    %v4704 = vshll.u32 %v4659, 16
    %v4706 = vor.u32 %v4703, %v4704
    %v4707 = vsel %vm4663, %v4695, %v4706
    %v4709 = vshrl.u32 %v4660, 16
    %v4711 = vrot.slane %v4709, 7
    %v4712 = vshll.u32 %v4660, 16
    %v4714 = vor.u32 %v4711, %v4712
    %v4715 = vsel %vm4663, %v4703, %v4714
    %v4717 = vshrl.u32 %v4661, 16
    %v4719 = vrot.slane %v4717, 7
    %v4720 = vshll.u32 %v4661, 16
    %v4722 = vor.u32 %v4719, %v4720
    %v4723 = vsel %vm4663, %v4711, %v4722
    %v4725 = vshrl.u32 %v4662, 16
    %v4727 = vrot.slane %v4725, 7
    %v4728 = vshll.u32 %v4662, 16
    %v4730 = vor.u32 %v4727, %v4728
    %v4731 = vsel %vm4663, %v4719, %v4730
    %4740 = vst [vmem:[#allocation4 + $0x18] sm:$0xff] %v4675
    %4741 = vst [vmem:[#allocation4 + $0x60] sm:$0xff] %v4683
    %4742 = vst [vmem:[#allocation4 + $0xa8] sm:$0xff] %v4691
    %4743 = vst [vmem:[#allocation4 + $0xf0] sm:$0xff] %v4699
    %4744 = vst [vmem:[#allocation4 + $0x138] sm:$0xff] %v4707
    %4745 = vst [vmem:[#allocation4 + $0x180] sm:$0xff] %v4715
    %4746 = vst [vmem:[#allocation4 + $0x1c8] sm:$0xff] %v4723
    %4747 = vst [vmem:[#allocation4 + $0x210] sm:$0xff] %v4731
    %v4748 = vld [vmem:[#allocation3 + $0x8] sm:$0xff]
    %v4749 = vld [vmem:[#allocation3 + $0x10] sm:$0xff]
    %v4750 = vld [vmem:[#allocation3 + $0x18] sm:$0xff]
    %v4751 = vld [vmem:[#allocation3 + $0x20] sm:$0xff]
    %v4752 = vld [vmem:[#allocation3 + $0x28] sm:$0xff]
    %v4753 = vld [vmem:[#allocation3 + $0x30] sm:$0xff]
    %v4754 = vld [vmem:[#allocation3 + $0x38] sm:$0xff]
    %v4755 = vld [vmem:[#allocation3 + $0x40] sm:$0xff]
    %vm4756 = vmand %vm3489, %vm3633
    %vm4757 = vmand %vm3490, %vm3634
    %vm4758 = vmand %vm3491, %vm3635
    %vm4759 = vmand %vm3492, %vm3636
    %vm4760 = vmand %vm3493, %vm3637
    %vm4761 = vmand %vm3494, %vm3638
    %vm4762 = vmand %vm3495, %vm3639
    %vm4763 = vmand %vm3496, %vm3640
    %vm4764 = vmand %vm3497, %vm3641
    %vm4765 = vmand %vm3498, %vm3642
    %vm4766 = vmand %vm3499, %vm3643
    %vm4767 = vmand %vm3500, %vm3644
    %vm4768 = vmand %vm3501, %vm3645
    %vm4769 = vmand %vm3502, %vm3646
    %vm4770 = vmand %vm3503, %vm3647
    %vm4771 = vmand %vm3504, %vm3648
    %v4772 = vsel %vm4756, 1, 0
    %v4773 = vsel %vm4757, 1, 0
    %v4774 = vsel %vm4758, 1, 0
    %v4775 = vsel %vm4759, 1, 0
    %v4776 = vsel %vm4760, 1, 0
    %v4777 = vsel %vm4761, 1, 0
    %v4778 = vsel %vm4762, 1, 0
    %v4779 = vsel %vm4763, 1, 0
    %v4780 = vsel %vm4764, 1, 0
    %v4781 = vsel %vm4765, 1, 0
    %v4782 = vsel %vm4766, 1, 0
    %v4783 = vsel %vm4767, 1, 0
    %v4784 = vsel %vm4768, 1, 0
    %v4785 = vsel %vm4769, 1, 0
    %v4786 = vsel %vm4770, 1, 0
    %v4787 = vsel %vm4771, 1, 0
    %vm4788 = vcmp.eq.s32.totalorder %v4772, 1
    %vm4789 = vcmp.eq.s32.totalorder %v4773, 1
    %vm4790 = vcmp.eq.s32.totalorder %v4774, 1
    %vm4791 = vcmp.eq.s32.totalorder %v4775, 1
    %vm4792 = vcmp.eq.s32.totalorder %v4776, 1
    %vm4793 = vcmp.eq.s32.totalorder %v4777, 1
    %vm4794 = vcmp.eq.s32.totalorder %v4778, 1
    %vm4795 = vcmp.eq.s32.totalorder %v4779, 1
    %vm4796 = vcmp.eq.s32.totalorder %v4780, 1
    %vm4797 = vcmp.eq.s32.totalorder %v4781, 1
    %vm4798 = vcmp.eq.s32.totalorder %v4782, 1
    %vm4799 = vcmp.eq.s32.totalorder %v4783, 1
    %vm4800 = vcmp.eq.s32.totalorder %v4784, 1
    %vm4801 = vcmp.eq.s32.totalorder %v4785, 1
    %vm4802 = vcmp.eq.s32.totalorder %v4786, 1
    %vm4803 = vcmp.eq.s32.totalorder %v4787, 1
    %vm4804 = vmpackc.low %vm4788, %vm4788
    %vm4805 = vmpackc.low %vm4789, %vm4789
    %vm4806 = vmpackc.low %vm4790, %vm4790
    %vm4807 = vmpackc.low %vm4791, %vm4791
    %vm4808 = vmpackc.low %vm4792, %vm4792
    %vm4809 = vmpackc.low %vm4793, %vm4793
    %vm4810 = vmpackc.low %vm4794, %vm4794
    %vm4811 = vmpackc.low %vm4795, %vm4795
    %vm4812 = vmpackc.low %vm4796, %vm4796
    %vm4813 = vmpackc.low %vm4797, %vm4797
    %vm4814 = vmpackc.low %vm4798, %vm4798
    %vm4815 = vmpackc.low %vm4799, %vm4799
    %vm4816 = vmpackc.low %vm4800, %vm4800
    %vm4817 = vmpackc.low %vm4801, %vm4801
    %vm4818 = vmpackc.low %vm4802, %vm4802
    %vm4819 = vmpackc.low %vm4803, %vm4803
    %v4820 = vsel %vm4804, 65537, 0
    %v4821 = vsel %vm4805, 65537, 0
    %v4822 = vsel %vm4806, 65537, 0
    %v4823 = vsel %vm4807, 65537, 0
    %v4824 = vsel %vm4808, 65537, 0
    %v4825 = vsel %vm4809, 65537, 0
    %v4826 = vsel %vm4810, 65537, 0
    %v4827 = vsel %vm4811, 65537, 0
    %v4828 = vsel %vm4812, 65537, 0
    %v4829 = vsel %vm4813, 65537, 0
    %v4830 = vsel %vm4814, 65537, 0
    %v4831 = vsel %vm4815, 65537, 0
    %v4832 = vsel %vm4816, 65537, 0
    %v4833 = vsel %vm4817, 65537, 0
    %v4834 = vsel %vm4818, 65537, 0
    %v4835 = vsel %vm4819, 65537, 0
    %v4836 = vunpack.c.l.b16 %v4820
    %v4837 = vunpack.c.l.b16 %v4821
    %v4838 = vunpack.c.l.b16 %v4822
    %v4839 = vunpack.c.l.b16 %v4823
    %v4840 = vunpack.c.l.b16 %v4824
    %v4841 = vunpack.c.l.b16 %v4825
    %v4842 = vunpack.c.l.b16 %v4826
    %v4843 = vunpack.c.l.b16 %v4827
    %v4844 = vunpack.c.l.b16 %v4828
    %v4845 = vunpack.c.l.b16 %v4829
    %v4846 = vunpack.c.l.b16 %v4830
    %v4847 = vunpack.c.l.b16 %v4831
    %v4848 = vunpack.c.l.b16 %v4832
    %v4849 = vunpack.c.l.b16 %v4833
    %v4850 = vunpack.c.l.b16 %v4834
    %v4851 = vunpack.c.l.b16 %v4835
    %v4852 = vpack.c.b16 %v4837, %v4836
    %v4853 = vpack.c.b16 %v4839, %v4838
    %v4854 = vpack.c.b16 %v4841, %v4840
    %v4855 = vpack.c.b16 %v4843, %v4842
    %v4856 = vpack.c.b16 %v4845, %v4844
    %v4857 = vpack.c.b16 %v4847, %v4846
    %v4858 = vpack.c.b16 %v4849, %v4848
    %v4859 = vpack.c.b16 %v4851, %v4850
    %vm4860 = vcmp.ne.s16.totalorder %v4852, 0
    %vm4861 = vcmp.ne.s16.totalorder %v4853, 0
    %vm4862 = vcmp.ne.s16.totalorder %v4854, 0
    %vm4863 = vcmp.ne.s16.totalorder %v4855, 0
    %vm4864 = vcmp.ne.s16.totalorder %v4856, 0
    %vm4865 = vcmp.ne.s16.totalorder %v4857, 0
    %vm4866 = vcmp.ne.s16.totalorder %v4858, 0
    %vm4867 = vcmp.ne.s16.totalorder %v4859, 0
    %v4868 = vsel %vm4860, %v4748, 0
    %v4869 = vsel %vm4861, %v4749, 0
    %v4870 = vsel %vm4862, %v4750, 0
    %v4871 = vsel %vm4863, %v4751, 0
    %v4872 = vsel %vm4864, %v4752, 0
    %v4873 = vsel %vm4865, %v4753, 0
    %v4874 = vsel %vm4866, %v4754, 0
    %v4875 = vsel %vm4867, %v4755, 0
    %4876 = vst [vmem:[#allocation4 + $0x20] sm:$0xff] %v4868
    %4877 = vst [vmem:[#allocation4 + $0x68] sm:$0xff] %v4869
    %4878 = vst [vmem:[#allocation4 + $0xb0] sm:$0xff] %v4870
    %4879 = vst [vmem:[#allocation4 + $0xf8] sm:$0xff] %v4871
    %4880 = vst [vmem:[#allocation4 + $0x140] sm:$0xff] %v4872
    %4881 = vst [vmem:[#allocation4 + $0x188] sm:$0xff] %v4873
    %4882 = vst [vmem:[#allocation4 + $0x1d0] sm:$0xff] %v4874
    %4883 = vst [vmem:[#allocation4 + $0x218] sm:$0xff] %v4875
    %v4884 = vld [vmem:[#allocation3 + $0x8] sm:$0xff]
    %v4885 = vld [vmem:[#allocation3 + $0x10] sm:$0xff]
    %v4886 = vld [vmem:[#allocation3 + $0x18] sm:$0xff]
    %v4887 = vld [vmem:[#allocation3 + $0x20] sm:$0xff]
    %v4888 = vld [vmem:[#allocation3 + $0x28] sm:$0xff]
    %v4889 = vld [vmem:[#allocation3 + $0x30] sm:$0xff]
    %v4890 = vld [vmem:[#allocation3 + $0x38] sm:$0xff]
    %v4891 = vld [vmem:[#allocation3 + $0x40] sm:$0xff]
    %v4892 = vld [vmem:[#allocation3 + $0x48] sm:$0x1]
    %vm4893 = vmand %vm3489, %vm3681
    %vm4894 = vmand %vm3490, %vm3682
    %vm4895 = vmand %vm3491, %vm3683
    %vm4896 = vmand %vm3492, %vm3684
    %vm4897 = vmand %vm3493, %vm3685
    %vm4898 = vmand %vm3494, %vm3686
    %vm4899 = vmand %vm3495, %vm3687
    %vm4900 = vmand %vm3496, %vm3688
    %vm4901 = vmand %vm3497, %vm3689
    %vm4902 = vmand %vm3498, %vm3690
    %vm4903 = vmand %vm3499, %vm3691
    %vm4904 = vmand %vm3500, %vm3692
    %vm4905 = vmand %vm3501, %vm3693
    %vm4906 = vmand %vm3502, %vm3694
    %vm4907 = vmand %vm3503, %vm3695
    %vm4908 = vmand %vm3504, %vm3696
    %v4909 = vsel %vm4893, 1, 0
    %v4910 = vsel %vm4894, 1, 0
    %v4911 = vsel %vm4895, 1, 0
    %v4912 = vsel %vm4896, 1, 0
    %v4913 = vsel %vm4897, 1, 0
    %v4914 = vsel %vm4898, 1, 0
    %v4915 = vsel %vm4899, 1, 0
    %v4916 = vsel %vm4900, 1, 0
    %v4917 = vsel %vm4901, 1, 0
    %v4918 = vsel %vm4902, 1, 0
    %v4919 = vsel %vm4903, 1, 0
    %v4920 = vsel %vm4904, 1, 0
    %v4921 = vsel %vm4905, 1, 0
    %v4922 = vsel %vm4906, 1, 0
    %v4923 = vsel %vm4907, 1, 0
    %v4924 = vsel %vm4908, 1, 0
    %vm4925 = vcmp.eq.s32.totalorder %v4909, 1
    %vm4926 = vcmp.eq.s32.totalorder %v4910, 1
    %vm4927 = vcmp.eq.s32.totalorder %v4911, 1
    %vm4928 = vcmp.eq.s32.totalorder %v4912, 1
    %vm4929 = vcmp.eq.s32.totalorder %v4913, 1
    %vm4930 = vcmp.eq.s32.totalorder %v4914, 1
    %vm4931 = vcmp.eq.s32.totalorder %v4915, 1
    %vm4932 = vcmp.eq.s32.totalorder %v4916, 1
    %vm4933 = vcmp.eq.s32.totalorder %v4917, 1
    %vm4934 = vcmp.eq.s32.totalorder %v4918, 1
    %vm4935 = vcmp.eq.s32.totalorder %v4919, 1
    %vm4936 = vcmp.eq.s32.totalorder %v4920, 1
    %vm4937 = vcmp.eq.s32.totalorder %v4921, 1
    %vm4938 = vcmp.eq.s32.totalorder %v4922, 1
    %vm4939 = vcmp.eq.s32.totalorder %v4923, 1
    %vm4940 = vcmp.eq.s32.totalorder %v4924, 1
    %vm4941 = vmpackc.low %vm4925, %vm4925
    %vm4942 = vmpackc.low %vm4926, %vm4926
    %vm4943 = vmpackc.low %vm4927, %vm4927
    %vm4944 = vmpackc.low %vm4928, %vm4928
    %vm4945 = vmpackc.low %vm4929, %vm4929
    %vm4946 = vmpackc.low %vm4930, %vm4930
    %vm4947 = vmpackc.low %vm4931, %vm4931
    %vm4948 = vmpackc.low %vm4932, %vm4932
    %vm4949 = vmpackc.low %vm4933, %vm4933
    %vm4950 = vmpackc.low %vm4934, %vm4934
    %vm4951 = vmpackc.low %vm4935, %vm4935
    %vm4952 = vmpackc.low %vm4936, %vm4936
    %vm4953 = vmpackc.low %vm4937, %vm4937
    %vm4954 = vmpackc.low %vm4938, %vm4938
    %vm4955 = vmpackc.low %vm4939, %vm4939
    %vm4956 = vmpackc.low %vm4940, %vm4940
    %v4957 = vsel %vm4941, 65537, 0
    %v4958 = vsel %vm4942, 65537, 0
    %v4959 = vsel %vm4943, 65537, 0
    %v4960 = vsel %vm4944, 65537, 0
    %v4961 = vsel %vm4945, 65537, 0
    %v4962 = vsel %vm4946, 65537, 0
    %v4963 = vsel %vm4947, 65537, 0
    %v4964 = vsel %vm4948, 65537, 0
    %v4965 = vsel %vm4949, 65537, 0
    %v4966 = vsel %vm4950, 65537, 0
    %v4967 = vsel %vm4951, 65537, 0
    %v4968 = vsel %vm4952, 65537, 0
    %v4969 = vsel %vm4953, 65537, 0
    %v4970 = vsel %vm4954, 65537, 0
    %v4971 = vsel %vm4955, 65537, 0
    %v4972 = vsel %vm4956, 65537, 0
    %v4973 = vunpack.c.l.b16 %v4957
    %v4974 = vunpack.c.l.b16 %v4958
    %v4975 = vunpack.c.l.b16 %v4959
    %v4976 = vunpack.c.l.b16 %v4960
    %v4977 = vunpack.c.l.b16 %v4961
    %v4978 = vunpack.c.l.b16 %v4962
    %v4979 = vunpack.c.l.b16 %v4963
    %v4980 = vunpack.c.l.b16 %v4964
    %v4981 = vunpack.c.l.b16 %v4965
    %v4982 = vunpack.c.l.b16 %v4966
    %v4983 = vunpack.c.l.b16 %v4967
    %v4984 = vunpack.c.l.b16 %v4968
    %v4985 = vunpack.c.l.b16 %v4969
    %v4986 = vunpack.c.l.b16 %v4970
    %v4987 = vunpack.c.l.b16 %v4971
    %v4988 = vunpack.c.l.b16 %v4972
    %v4989 = vpack.c.b16 %v4974, %v4973
    %v4990 = vpack.c.b16 %v4976, %v4975
    %v4991 = vpack.c.b16 %v4978, %v4977
    %v4992 = vpack.c.b16 %v4980, %v4979
    %v4993 = vpack.c.b16 %v4982, %v4981
    %v4994 = vpack.c.b16 %v4984, %v4983
    %v4995 = vpack.c.b16 %v4986, %v4985
    %v4996 = vpack.c.b16 %v4988, %v4987
    %v4998 = vshrl.u32 %v4989, 16
    %v5000 = vrot.slane %v4998, 7
    %v5001 = vshll.u32 %v4989, 16
    %v5003 = vor.u32 %v5000, %v5001
    %v5005 = vshrl.u32 %v4990, 16
    %v5007 = vrot.slane %v5005, 7
    %v5008 = vshll.u32 %v4990, 16
    %v5010 = vor.u32 %v5007, %v5008
    %v5011 = vsel %vm4663, %v5000, %v5010
    %v5013 = vshrl.u32 %v4991, 16
    %v5015 = vrot.slane %v5013, 7
    %v5016 = vshll.u32 %v4991, 16
    %v5018 = vor.u32 %v5015, %v5016
    %v5019 = vsel %vm4663, %v5007, %v5018
    %v5021 = vshrl.u32 %v4992, 16
    %v5023 = vrot.slane %v5021, 7
    %v5024 = vshll.u32 %v4992, 16
    %v5026 = vor.u32 %v5023, %v5024
    %v5027 = vsel %vm4663, %v5015, %v5026
    %v5029 = vshrl.u32 %v4993, 16
    %v5031 = vrot.slane %v5029, 7
    %v5032 = vshll.u32 %v4993, 16
    %v5034 = vor.u32 %v5031, %v5032
    %v5035 = vsel %vm4663, %v5023, %v5034
    %v5037 = vshrl.u32 %v4994, 16
    %v5039 = vrot.slane %v5037, 7
    %v5040 = vshll.u32 %v4994, 16
    %v5042 = vor.u32 %v5039, %v5040
    %v5043 = vsel %vm4663, %v5031, %v5042
    %v5045 = vshrl.u32 %v4995, 16
    %v5047 = vrot.slane %v5045, 7
    %v5048 = vshll.u32 %v4995, 16
    %v5050 = vor.u32 %v5047, %v5048
    %v5051 = vsel %vm4663, %v5039, %v5050
    %v5053 = vshrl.u32 %v4996, 16
    %v5055 = vrot.slane %v5053, 7
    %v5056 = vshll.u32 %v4996, 16
    %v5058 = vor.u32 %v5055, %v5056
    %v5059 = vsel %vm4663, %v5047, %v5058
    %vm5060 = vcmp.ne.s16.totalorder %v5003, 0
    %vm5061 = vcmp.ne.s16.totalorder %v5011, 0
    %vm5062 = vcmp.ne.s16.totalorder %v5019, 0
    %vm5063 = vcmp.ne.s16.totalorder %v5027, 0
    %vm5064 = vcmp.ne.s16.totalorder %v5035, 0
    %vm5065 = vcmp.ne.s16.totalorder %v5043, 0
    %vm5066 = vcmp.ne.s16.totalorder %v5051, 0
    %vm5067 = vcmp.ne.s16.totalorder %v5059, 0
    %vm5068 = vcmp.ne.s16.totalorder %v5055, 0
    %v5069 = vsel %vm5060, %v4884, 0
    %v5070 = vsel %vm5061, %v4885, 0
    %v5071 = vsel %vm5062, %v4886, 0
    %v5072 = vsel %vm5063, %v4887, 0
    %v5073 = vsel %vm5064, %v4888, 0
    %v5074 = vsel %vm5065, %v4889, 0
    %v5075 = vsel %vm5066, %v4890, 0
    %v5076 = vsel %vm5067, %v4891, 0
    %v5077 = vsel %vm5068, %v4892, 0
    %v5079 = vshrl.u32 %v5069, 16
    %v5081 = vshll.u32 %v5069, 16
    %v5083 = vrot.slane %v5081, 1
    %v5084 = vor.u32 %v5079, %v5083
    %v5086 = vshll.u32 %v5070, 16
    %v5088 = vrot.slane %v5086, 1
    %v5089 = vsel %vm1551, %v5084, %v5088
    %v5090 = vshrl.u32 %v5070, 16
    %v5092 = vor.u32 %v5090, %v5088
    %v5094 = vshll.u32 %v5071, 16
    %v5096 = vrot.slane %v5094, 1
    %v5097 = vsel %vm1551, %v5092, %v5096
    %v5098 = vshrl.u32 %v5071, 16
    %v5100 = vor.u32 %v5098, %v5096
    %v5102 = vshll.u32 %v5072, 16
    %v5104 = vrot.slane %v5102, 1
    %v5105 = vsel %vm1551, %v5100, %v5104
    %v5106 = vshrl.u32 %v5072, 16
    %v5108 = vor.u32 %v5106, %v5104
    %v5110 = vshll.u32 %v5073, 16
    %v5112 = vrot.slane %v5110, 1
    %v5113 = vsel %vm1551, %v5108, %v5112
    %v5114 = vshrl.u32 %v5073, 16
    %v5116 = vor.u32 %v5114, %v5112
    %v5118 = vshll.u32 %v5074, 16
    %v5120 = vrot.slane %v5118, 1
    %v5121 = vsel %vm1551, %v5116, %v5120
    %v5122 = vshrl.u32 %v5074, 16
    %v5124 = vor.u32 %v5122, %v5120
    %v5126 = vshll.u32 %v5075, 16
    %v5128 = vrot.slane %v5126, 1
    %v5129 = vsel %vm1551, %v5124, %v5128
    %v5130 = vshrl.u32 %v5075, 16
    %v5132 = vor.u32 %v5130, %v5128
    %v5134 = vshll.u32 %v5076, 16
    %v5136 = vrot.slane %v5134, 1
    %v5137 = vsel %vm1551, %v5132, %v5136
    %v5138 = vshrl.u32 %v5076, 16
    %v5140 = vor.u32 %v5138, %v5136
    %v5142 = vshll.u32 %v5077, 16
    %v5144 = vrot.slane %v5142, 1
    %v5145 = vsel %vm1551, %v5140, %v5144
    %5154 = vst [vmem:[#allocation4 + $0x28] sm:$0xff] %v5089
    %5155 = vst [vmem:[#allocation4 + $0x70] sm:$0xff] %v5097
    %5156 = vst [vmem:[#allocation4 + $0xb8] sm:$0xff] %v5105
    %5157 = vst [vmem:[#allocation4 + $0x100] sm:$0xff] %v5113
    %5158 = vst [vmem:[#allocation4 + $0x148] sm:$0xff] %v5121
    %5159 = vst [vmem:[#allocation4 + $0x190] sm:$0xff] %v5129
    %5160 = vst [vmem:[#allocation4 + $0x1d8] sm:$0xff] %v5137
    %5161 = vst [vmem:[#allocation4 + $0x220] sm:$0xff] %v5145
    %v5162 = vld [vmem:[#allocation3 + $0x8] sm:$0xf8]
    %v5163 = vld [vmem:[#allocation3 + $0x10] sm:$0xff]
    %v5164 = vld [vmem:[#allocation3 + $0x18] sm:$0xff]
    %v5165 = vld [vmem:[#allocation3 + $0x20] sm:$0xff]
    %v5166 = vld [vmem:[#allocation3 + $0x28] sm:$0xff]
    %v5167 = vld [vmem:[#allocation3 + $0x30] sm:$0xff]
    %v5168 = vld [vmem:[#allocation3 + $0x38] sm:$0xff]
    %v5169 = vld [vmem:[#allocation3 + $0x40] sm:$0xff]
    %v5170 = vld [vmem:[#allocation3 + $0x48] sm:$0xf]
    %vm5171 = vmand %vm3537, %vm3585
    %vm5172 = vmand %vm3538, %vm3586
    %vm5173 = vmand %vm3539, %vm3587
    %vm5174 = vmand %vm3540, %vm3588
    %vm5175 = vmand %vm3541, %vm3589
    %vm5176 = vmand %vm3542, %vm3590
    %vm5177 = vmand %vm3543, %vm3591
    %vm5178 = vmand %vm3544, %vm3592
    %vm5179 = vmand %vm3545, %vm3593
    %vm5180 = vmand %vm3546, %vm3594
    %vm5181 = vmand %vm3547, %vm3595
    %vm5182 = vmand %vm3548, %vm3596
    %vm5183 = vmand %vm3549, %vm3597
    %vm5184 = vmand %vm3550, %vm3598
    %vm5185 = vmand %vm3551, %vm3599
    %vm5186 = vmand %vm3552, %vm3600
    %v5187 = vsel %vm5171, 1, 0
    %v5188 = vsel %vm5172, 1, 0
    %v5189 = vsel %vm5173, 1, 0
    %v5190 = vsel %vm5174, 1, 0
    %v5191 = vsel %vm5175, 1, 0
    %v5192 = vsel %vm5176, 1, 0
    %v5193 = vsel %vm5177, 1, 0
    %v5194 = vsel %vm5178, 1, 0
    %v5195 = vsel %vm5179, 1, 0
    %v5196 = vsel %vm5180, 1, 0
    %v5197 = vsel %vm5181, 1, 0
    %v5198 = vsel %vm5182, 1, 0
    %v5199 = vsel %vm5183, 1, 0
    %v5200 = vsel %vm5184, 1, 0
    %v5201 = vsel %vm5185, 1, 0
    %v5202 = vsel %vm5186, 1, 0
    %vm5203 = vcmp.eq.s32.totalorder %v5187, 1
    %vm5204 = vcmp.eq.s32.totalorder %v5188, 1
    %vm5205 = vcmp.eq.s32.totalorder %v5189, 1
    %vm5206 = vcmp.eq.s32.totalorder %v5190, 1
    %vm5207 = vcmp.eq.s32.totalorder %v5191, 1
    %vm5208 = vcmp.eq.s32.totalorder %v5192, 1
    %vm5209 = vcmp.eq.s32.totalorder %v5193, 1
    %vm5210 = vcmp.eq.s32.totalorder %v5194, 1
    %vm5211 = vcmp.eq.s32.totalorder %v5195, 1
    %vm5212 = vcmp.eq.s32.totalorder %v5196, 1
    %vm5213 = vcmp.eq.s32.totalorder %v5197, 1
    %vm5214 = vcmp.eq.s32.totalorder %v5198, 1
    %vm5215 = vcmp.eq.s32.totalorder %v5199, 1
    %vm5216 = vcmp.eq.s32.totalorder %v5200, 1
    %vm5217 = vcmp.eq.s32.totalorder %v5201, 1
    %vm5218 = vcmp.eq.s32.totalorder %v5202, 1
    %vm5219 = vmpackc.low %vm5203, %vm5203
    %vm5220 = vmpackc.low %vm5204, %vm5204
    %vm5221 = vmpackc.low %vm5205, %vm5205
    %vm5222 = vmpackc.low %vm5206, %vm5206
    %vm5223 = vmpackc.low %vm5207, %vm5207
    %vm5224 = vmpackc.low %vm5208, %vm5208
    %vm5225 = vmpackc.low %vm5209, %vm5209
    %vm5226 = vmpackc.low %vm5210, %vm5210
    %vm5227 = vmpackc.low %vm5211, %vm5211
    %vm5228 = vmpackc.low %vm5212, %vm5212
    %vm5229 = vmpackc.low %vm5213, %vm5213
    %vm5230 = vmpackc.low %vm5214, %vm5214
    %vm5231 = vmpackc.low %vm5215, %vm5215
    %vm5232 = vmpackc.low %vm5216, %vm5216
    %vm5233 = vmpackc.low %vm5217, %vm5217
    %vm5234 = vmpackc.low %vm5218, %vm5218
    %v5235 = vsel %vm5219, 65537, 0
    %v5236 = vsel %vm5220, 65537, 0
    %v5237 = vsel %vm5221, 65537, 0
    %v5238 = vsel %vm5222, 65537, 0
    %v5239 = vsel %vm5223, 65537, 0
    %v5240 = vsel %vm5224, 65537, 0
    %v5241 = vsel %vm5225, 65537, 0
    %v5242 = vsel %vm5226, 65537, 0
    %v5243 = vsel %vm5227, 65537, 0
    %v5244 = vsel %vm5228, 65537, 0
    %v5245 = vsel %vm5229, 65537, 0
    %v5246 = vsel %vm5230, 65537, 0
    %v5247 = vsel %vm5231, 65537, 0
    %v5248 = vsel %vm5232, 65537, 0
    %v5249 = vsel %vm5233, 65537, 0
    %v5250 = vsel %vm5234, 65537, 0
    %v5251 = vunpack.c.l.b16 %v5235
    %v5252 = vunpack.c.l.b16 %v5236
    %v5253 = vunpack.c.l.b16 %v5237
    %v5254 = vunpack.c.l.b16 %v5238
    %v5255 = vunpack.c.l.b16 %v5239
    %v5256 = vunpack.c.l.b16 %v5240
    %v5257 = vunpack.c.l.b16 %v5241
    %v5258 = vunpack.c.l.b16 %v5242
    %v5259 = vunpack.c.l.b16 %v5243
    %v5260 = vunpack.c.l.b16 %v5244
    %v5261 = vunpack.c.l.b16 %v5245
    %v5262 = vunpack.c.l.b16 %v5246
    %v5263 = vunpack.c.l.b16 %v5247
    %v5264 = vunpack.c.l.b16 %v5248
    %v5265 = vunpack.c.l.b16 %v5249
    %v5266 = vunpack.c.l.b16 %v5250
    %v5267 = vpack.c.b16 %v5252, %v5251
    %v5268 = vpack.c.b16 %v5254, %v5253
    %v5269 = vpack.c.b16 %v5256, %v5255
    %v5270 = vpack.c.b16 %v5258, %v5257
    %v5271 = vpack.c.b16 %v5260, %v5259
    %v5272 = vpack.c.b16 %v5262, %v5261
    %v5273 = vpack.c.b16 %v5264, %v5263
    %v5274 = vpack.c.b16 %v5266, %v5265
    %v5276 = vshrl.u32 %v5267, 16
    %v5278 = vrot.slane %v5276, 4
    %v5279 = vshll.u32 %v5267, 16
    %v5281 = vrot.slane %v5279, 5
    %v5282 = vor.u32 %v5278, %v5281
    %v5284 = vshrl.u32 %v5268, 16
    %v5286 = vrot.slane %v5284, 4
    %v5287 = vshll.u32 %v5268, 16
    %v5289 = vrot.slane %v5287, 5
    %v5290 = vor.u32 %v5286, %v5289
    %v5291 = vsel %vm1943, %v5282, %v5290
    %v5293 = vshrl.u32 %v5269, 16
    %v5295 = vrot.slane %v5293, 4
    %v5296 = vshll.u32 %v5269, 16
    %v5298 = vrot.slane %v5296, 5
    %v5299 = vor.u32 %v5295, %v5298
    %v5300 = vsel %vm1943, %v5290, %v5299
    %v5302 = vshrl.u32 %v5270, 16
    %v5304 = vrot.slane %v5302, 4
    %v5305 = vshll.u32 %v5270, 16
    %v5307 = vrot.slane %v5305, 5
    %v5308 = vor.u32 %v5304, %v5307
    %v5309 = vsel %vm1943, %v5299, %v5308
    %v5311 = vshrl.u32 %v5271, 16
    %v5313 = vrot.slane %v5311, 4
    %v5314 = vshll.u32 %v5271, 16
    %v5316 = vrot.slane %v5314, 5
    %v5317 = vor.u32 %v5313, %v5316
    %v5318 = vsel %vm1943, %v5308, %v5317
    %v5320 = vshrl.u32 %v5272, 16
    %v5322 = vrot.slane %v5320, 4
    %v5323 = vshll.u32 %v5272, 16
    %v5325 = vrot.slane %v5323, 5
    %v5326 = vor.u32 %v5322, %v5325
    %v5327 = vsel %vm1943, %v5317, %v5326
    %v5329 = vshrl.u32 %v5273, 16
    %v5331 = vrot.slane %v5329, 4
    %v5332 = vshll.u32 %v5273, 16
    %v5334 = vrot.slane %v5332, 5
    %v5335 = vor.u32 %v5331, %v5334
    %v5336 = vsel %vm1943, %v5326, %v5335
    %v5338 = vshrl.u32 %v5274, 16
    %v5340 = vrot.slane %v5338, 4
    %v5341 = vshll.u32 %v5274, 16
    %v5343 = vrot.slane %v5341, 5
    %v5344 = vor.u32 %v5340, %v5343
    %v5345 = vsel %vm1943, %v5335, %v5344
    %vm5346 = vcmp.ne.s16.totalorder %v5282, 0
    %vm5347 = vcmp.ne.s16.totalorder %v5291, 0
    %vm5348 = vcmp.ne.s16.totalorder %v5300, 0
    %vm5349 = vcmp.ne.s16.totalorder %v5309, 0
    %vm5350 = vcmp.ne.s16.totalorder %v5318, 0
    %vm5351 = vcmp.ne.s16.totalorder %v5327, 0
    %vm5352 = vcmp.ne.s16.totalorder %v5336, 0
    %vm5353 = vcmp.ne.s16.totalorder %v5345, 0
    %vm5354 = vcmp.ne.s16.totalorder %v5344, 0
    %v5355 = vsel %vm5346, %v5162, 0
    %v5356 = vsel %vm5347, %v5163, 0
    %v5357 = vsel %vm5348, %v5164, 0
    %v5358 = vsel %vm5349, %v5165, 0
    %v5359 = vsel %vm5350, %v5166, 0
    %v5360 = vsel %vm5351, %v5167, 0
    %v5361 = vsel %vm5352, %v5168, 0
    %v5362 = vsel %vm5353, %v5169, 0
    %v5363 = vsel %vm5354, %v5170, 0
    %v5365 = vshrl.u32 %v5355, 16
    %v5367 = vrot.slane %v5365, 3
    %v5368 = vshll.u32 %v5355, 16
    %v5370 = vrot.slane %v5368, 4
    %v5371 = vor.u32 %v5367, %v5370
    %v5373 = vshrl.u32 %v5356, 16
    %v5375 = vrot.slane %v5373, 3
    %v5376 = vshll.u32 %v5356, 16
    %v5378 = vrot.slane %v5376, 4
    %v5379 = vor.u32 %v5375, %v5378
    %v5380 = vsel %vm3899, %v5371, %v5379
    %v5382 = vshrl.u32 %v5357, 16
    %v5384 = vrot.slane %v5382, 3
    %v5385 = vshll.u32 %v5357, 16
    %v5387 = vrot.slane %v5385, 4
    %v5388 = vor.u32 %v5384, %v5387
    %v5389 = vsel %vm3899, %v5379, %v5388
    %v5391 = vshrl.u32 %v5358, 16
    %v5393 = vrot.slane %v5391, 3
    %v5394 = vshll.u32 %v5358, 16
    %v5396 = vrot.slane %v5394, 4
    %v5397 = vor.u32 %v5393, %v5396
    %v5398 = vsel %vm3899, %v5388, %v5397
    %v5400 = vshrl.u32 %v5359, 16
    %v5402 = vrot.slane %v5400, 3
    %v5403 = vshll.u32 %v5359, 16
    %v5405 = vrot.slane %v5403, 4
    %v5406 = vor.u32 %v5402, %v5405
    %v5407 = vsel %vm3899, %v5397, %v5406
    %v5409 = vshrl.u32 %v5360, 16
    %v5411 = vrot.slane %v5409, 3
    %v5412 = vshll.u32 %v5360, 16
    %v5414 = vrot.slane %v5412, 4
    %v5415 = vor.u32 %v5411, %v5414
    %v5416 = vsel %vm3899, %v5406, %v5415
    %v5418 = vshrl.u32 %v5361, 16
    %v5420 = vrot.slane %v5418, 3
    %v5421 = vshll.u32 %v5361, 16
    %v5423 = vrot.slane %v5421, 4
    %v5424 = vor.u32 %v5420, %v5423
    %v5425 = vsel %vm3899, %v5415, %v5424
    %v5427 = vshrl.u32 %v5362, 16
    %v5429 = vrot.slane %v5427, 3
    %v5430 = vshll.u32 %v5362, 16
    %v5432 = vrot.slane %v5430, 4
    %v5433 = vor.u32 %v5429, %v5432
    %v5434 = vsel %vm3899, %v5424, %v5433
    %v5436 = vshrl.u32 %v5363, 16
    %v5438 = vrot.slane %v5436, 3
    %v5439 = vshll.u32 %v5363, 16
    %v5441 = vrot.slane %v5439, 4
    %v5442 = vor.u32 %v5438, %v5441
    %v5443 = vsel %vm3899, %v5433, %v5442
    %5452 = vst [vmem:[#allocation4 + $0x30] sm:$0xff] %v5380
    %5453 = vst [vmem:[#allocation4 + $0x78] sm:$0xff] %v5389
    %5454 = vst [vmem:[#allocation4 + $0xc0] sm:$0xff] %v5398
    %5455 = vst [vmem:[#allocation4 + $0x108] sm:$0xff] %v5407
    %5456 = vst [vmem:[#allocation4 + $0x150] sm:$0xff] %v5416
    %5457 = vst [vmem:[#allocation4 + $0x198] sm:$0xff] %v5425
    %5458 = vst [vmem:[#allocation4 + $0x1e0] sm:$0xff] %v5434
    %5459 = vst [vmem:[#allocation4 + $0x228] sm:$0xff] %v5443
    %v5460 = vld [vmem:[#allocation3 + $0x8] sm:$0xf0]
    %v5461 = vld [vmem:[#allocation3 + $0x10] sm:$0xff]
    %v5462 = vld [vmem:[#allocation3 + $0x18] sm:$0xff]
    %v5463 = vld [vmem:[#allocation3 + $0x20] sm:$0xff]
    %v5464 = vld [vmem:[#allocation3 + $0x28] sm:$0xff]
    %v5465 = vld [vmem:[#allocation3 + $0x30] sm:$0xff]
    %v5466 = vld [vmem:[#allocation3 + $0x38] sm:$0xff]
    %v5467 = vld [vmem:[#allocation3 + $0x40] sm:$0xff]
    %v5468 = vld [vmem:[#allocation3 + $0x48] sm:$0xf]
    %vm5469 = vmand %vm3537, %vm3633
    %vm5470 = vmand %vm3538, %vm3634
    %vm5471 = vmand %vm3539, %vm3635
    %vm5472 = vmand %vm3540, %vm3636
    %vm5473 = vmand %vm3541, %vm3637
    %vm5474 = vmand %vm3542, %vm3638
    %vm5475 = vmand %vm3543, %vm3639
    %vm5476 = vmand %vm3544, %vm3640
    %vm5477 = vmand %vm3545, %vm3641
    %vm5478 = vmand %vm3546, %vm3642
    %vm5479 = vmand %vm3547, %vm3643
    %vm5480 = vmand %vm3548, %vm3644
    %vm5481 = vmand %vm3549, %vm3645
    %vm5482 = vmand %vm3550, %vm3646
    %vm5483 = vmand %vm3551, %vm3647
    %vm5484 = vmand %vm3552, %vm3648
    %v5485 = vsel %vm5469, 1, 0
    %v5486 = vsel %vm5470, 1, 0
    %v5487 = vsel %vm5471, 1, 0
    %v5488 = vsel %vm5472, 1, 0
    %v5489 = vsel %vm5473, 1, 0
    %v5490 = vsel %vm5474, 1, 0
    %v5491 = vsel %vm5475, 1, 0
    %v5492 = vsel %vm5476, 1, 0
    %v5493 = vsel %vm5477, 1, 0
    %v5494 = vsel %vm5478, 1, 0
    %v5495 = vsel %vm5479, 1, 0
    %v5496 = vsel %vm5480, 1, 0
    %v5497 = vsel %vm5481, 1, 0
    %v5498 = vsel %vm5482, 1, 0
    %v5499 = vsel %vm5483, 1, 0
    %v5500 = vsel %vm5484, 1, 0
    %vm5501 = vcmp.eq.s32.totalorder %v5485, 1
    %vm5502 = vcmp.eq.s32.totalorder %v5486, 1
    %vm5503 = vcmp.eq.s32.totalorder %v5487, 1
    %vm5504 = vcmp.eq.s32.totalorder %v5488, 1
    %vm5505 = vcmp.eq.s32.totalorder %v5489, 1
    %vm5506 = vcmp.eq.s32.totalorder %v5490, 1
    %vm5507 = vcmp.eq.s32.totalorder %v5491, 1
    %vm5508 = vcmp.eq.s32.totalorder %v5492, 1
    %vm5509 = vcmp.eq.s32.totalorder %v5493, 1
    %vm5510 = vcmp.eq.s32.totalorder %v5494, 1
    %vm5511 = vcmp.eq.s32.totalorder %v5495, 1
    %vm5512 = vcmp.eq.s32.totalorder %v5496, 1
    %vm5513 = vcmp.eq.s32.totalorder %v5497, 1
    %vm5514 = vcmp.eq.s32.totalorder %v5498, 1
    %vm5515 = vcmp.eq.s32.totalorder %v5499, 1
    %vm5516 = vcmp.eq.s32.totalorder %v5500, 1
    %vm5517 = vmpackc.low %vm5501, %vm5501
    %vm5518 = vmpackc.low %vm5502, %vm5502
    %vm5519 = vmpackc.low %vm5503, %vm5503
    %vm5520 = vmpackc.low %vm5504, %vm5504
    %vm5521 = vmpackc.low %vm5505, %vm5505
    %vm5522 = vmpackc.low %vm5506, %vm5506
    %vm5523 = vmpackc.low %vm5507, %vm5507
    %vm5524 = vmpackc.low %vm5508, %vm5508
    %vm5525 = vmpackc.low %vm5509, %vm5509
    %vm5526 = vmpackc.low %vm5510, %vm5510
    %vm5527 = vmpackc.low %vm5511, %vm5511
    %vm5528 = vmpackc.low %vm5512, %vm5512
    %vm5529 = vmpackc.low %vm5513, %vm5513
    %vm5530 = vmpackc.low %vm5514, %vm5514
    %vm5531 = vmpackc.low %vm5515, %vm5515
    %vm5532 = vmpackc.low %vm5516, %vm5516
    %v5533 = vsel %vm5517, 65537, 0
    %v5534 = vsel %vm5518, 65537, 0
    %v5535 = vsel %vm5519, 65537, 0
    %v5536 = vsel %vm5520, 65537, 0
    %v5537 = vsel %vm5521, 65537, 0
    %v5538 = vsel %vm5522, 65537, 0
    %v5539 = vsel %vm5523, 65537, 0
    %v5540 = vsel %vm5524, 65537, 0
    %v5541 = vsel %vm5525, 65537, 0
    %v5542 = vsel %vm5526, 65537, 0
    %v5543 = vsel %vm5527, 65537, 0
    %v5544 = vsel %vm5528, 65537, 0
    %v5545 = vsel %vm5529, 65537, 0
    %v5546 = vsel %vm5530, 65537, 0
    %v5547 = vsel %vm5531, 65537, 0
    %v5548 = vsel %vm5532, 65537, 0
    %v5549 = vunpack.c.l.b16 %v5533
    %v5550 = vunpack.c.l.b16 %v5534
    %v5551 = vunpack.c.l.b16 %v5535
    %v5552 = vunpack.c.l.b16 %v5536
    %v5553 = vunpack.c.l.b16 %v5537
    %v5554 = vunpack.c.l.b16 %v5538
    %v5555 = vunpack.c.l.b16 %v5539
    %v5556 = vunpack.c.l.b16 %v5540
    %v5557 = vunpack.c.l.b16 %v5541
    %v5558 = vunpack.c.l.b16 %v5542
    %v5559 = vunpack.c.l.b16 %v5543
    %v5560 = vunpack.c.l.b16 %v5544
    %v5561 = vunpack.c.l.b16 %v5545
    %v5562 = vunpack.c.l.b16 %v5546
    %v5563 = vunpack.c.l.b16 %v5547
    %v5564 = vunpack.c.l.b16 %v5548
    %v5565 = vpack.c.b16 %v5549, %v5549
    %v5566 = vpack.c.b16 %v5551, %v5550
    %v5567 = vpack.c.b16 %v5553, %v5552
    %v5568 = vpack.c.b16 %v5555, %v5554
    %v5569 = vpack.c.b16 %v5557, %v5556
    %v5570 = vpack.c.b16 %v5559, %v5558
    %v5571 = vpack.c.b16 %v5561, %v5560
    %v5572 = vpack.c.b16 %v5563, %v5562
    %v5573 = vpack.c.b16 %v5564, %v5564
    %vm5574 = vcmp.ne.s16.totalorder %v5565, 0
    %vm5575 = vcmp.ne.s16.totalorder %v5566, 0
    %vm5576 = vcmp.ne.s16.totalorder %v5567, 0
    %vm5577 = vcmp.ne.s16.totalorder %v5568, 0
    %vm5578 = vcmp.ne.s16.totalorder %v5569, 0
    %vm5579 = vcmp.ne.s16.totalorder %v5570, 0
    %vm5580 = vcmp.ne.s16.totalorder %v5571, 0
    %vm5581 = vcmp.ne.s16.totalorder %v5572, 0
    %vm5582 = vcmp.ne.s16.totalorder %v5573, 0
    %v5583 = vsel %vm5574, %v5460, 0
    %v5584 = vsel %vm5575, %v5461, 0
    %v5585 = vsel %vm5576, %v5462, 0
    %v5586 = vsel %vm5577, %v5463, 0
    %v5587 = vsel %vm5578, %v5464, 0
    %v5588 = vsel %vm5579, %v5465, 0
    %v5589 = vsel %vm5580, %v5466, 0
    %v5590 = vsel %vm5581, %v5467, 0
    %v5591 = vsel %vm5582, %v5468, 0
    %v5601 = vrot.slane %v5583, 4
    %v5602 = vrot.slane %v5584, 4
    %v5603 = vsel %vm4137, %v5601, %v5602
    %v5604 = vrot.slane %v5585, 4
    %v5605 = vsel %vm4137, %v5602, %v5604
    %v5606 = vrot.slane %v5586, 4
    %v5607 = vsel %vm4137, %v5604, %v5606
    %v5608 = vrot.slane %v5587, 4
    %v5609 = vsel %vm4137, %v5606, %v5608
    %v5610 = vrot.slane %v5588, 4
    %v5611 = vsel %vm4137, %v5608, %v5610
    %v5612 = vrot.slane %v5589, 4
    %v5613 = vsel %vm4137, %v5610, %v5612
    %v5614 = vrot.slane %v5590, 4
    %v5615 = vsel %vm4137, %v5612, %v5614
    %v5616 = vrot.slane %v5591, 4
    %v5617 = vsel %vm4137, %v5614, %v5616
    %5626 = vst [vmem:[#allocation4 + $0x38] sm:$0xff] %v5603
    %5627 = vst [vmem:[#allocation4 + $0x80] sm:$0xff] %v5605
    %5628 = vst [vmem:[#allocation4 + $0xc8] sm:$0xff] %v5607
    %5629 = vst [vmem:[#allocation4 + $0x110] sm:$0xff] %v5609
    %5630 = vst [vmem:[#allocation4 + $0x158] sm:$0xff] %v5611
    %5631 = vst [vmem:[#allocation4 + $0x1a0] sm:$0xff] %v5613
    %5632 = vst [vmem:[#allocation4 + $0x1e8] sm:$0xff] %v5615
    %5633 = vst [vmem:[#allocation4 + $0x230] sm:$0xff] %v5617
    %v5634 = vld [vmem:[#allocation3 + $0x8] sm:$0xf0]
    %v5635 = vld [vmem:[#allocation3 + $0x10] sm:$0xff]
    %v5636 = vld [vmem:[#allocation3 + $0x18] sm:$0xff]
    %v5637 = vld [vmem:[#allocation3 + $0x20] sm:$0xff]
    %v5638 = vld [vmem:[#allocation3 + $0x28] sm:$0xff]
    %v5639 = vld [vmem:[#allocation3 + $0x30] sm:$0xff]
    %v5640 = vld [vmem:[#allocation3 + $0x38] sm:$0xff]
    %v5641 = vld [vmem:[#allocation3 + $0x40] sm:$0xff]
    %v5642 = vld [vmem:[#allocation3 + $0x48] sm:$0x1f]
    %vm5643 = vmand %vm3537, %vm3681
    %vm5644 = vmand %vm3538, %vm3682
    %vm5645 = vmand %vm3539, %vm3683
    %vm5646 = vmand %vm3540, %vm3684
    %vm5647 = vmand %vm3541, %vm3685
    %vm5648 = vmand %vm3542, %vm3686
    %vm5649 = vmand %vm3543, %vm3687
    %vm5650 = vmand %vm3544, %vm3688
    %vm5651 = vmand %vm3545, %vm3689
    %vm5652 = vmand %vm3546, %vm3690
    %vm5653 = vmand %vm3547, %vm3691
    %vm5654 = vmand %vm3548, %vm3692
    %vm5655 = vmand %vm3549, %vm3693
    %vm5656 = vmand %vm3550, %vm3694
    %vm5657 = vmand %vm3551, %vm3695
    %vm5658 = vmand %vm3552, %vm3696
    %v5659 = vsel %vm5643, 1, 0
    %v5660 = vsel %vm5644, 1, 0
    %v5661 = vsel %vm5645, 1, 0
    %v5662 = vsel %vm5646, 1, 0
    %v5663 = vsel %vm5647, 1, 0
    %v5664 = vsel %vm5648, 1, 0
    %v5665 = vsel %vm5649, 1, 0
    %v5666 = vsel %vm5650, 1, 0
    %v5667 = vsel %vm5651, 1, 0
    %v5668 = vsel %vm5652, 1, 0
    %v5669 = vsel %vm5653, 1, 0
    %v5670 = vsel %vm5654, 1, 0
    %v5671 = vsel %vm5655, 1, 0
    %v5672 = vsel %vm5656, 1, 0
    %v5673 = vsel %vm5657, 1, 0
    %v5674 = vsel %vm5658, 1, 0
    %vm5675 = vcmp.eq.s32.totalorder %v5659, 1
    %vm5676 = vcmp.eq.s32.totalorder %v5660, 1
    %vm5677 = vcmp.eq.s32.totalorder %v5661, 1
    %vm5678 = vcmp.eq.s32.totalorder %v5662, 1
    %vm5679 = vcmp.eq.s32.totalorder %v5663, 1
    %vm5680 = vcmp.eq.s32.totalorder %v5664, 1
    %vm5681 = vcmp.eq.s32.totalorder %v5665, 1
    %vm5682 = vcmp.eq.s32.totalorder %v5666, 1
    %vm5683 = vcmp.eq.s32.totalorder %v5667, 1
    %vm5684 = vcmp.eq.s32.totalorder %v5668, 1
    %vm5685 = vcmp.eq.s32.totalorder %v5669, 1
    %vm5686 = vcmp.eq.s32.totalorder %v5670, 1
    %vm5687 = vcmp.eq.s32.totalorder %v5671, 1
    %vm5688 = vcmp.eq.s32.totalorder %v5672, 1
    %vm5689 = vcmp.eq.s32.totalorder %v5673, 1
    %vm5690 = vcmp.eq.s32.totalorder %v5674, 1
    %vm5691 = vmpackc.low %vm5675, %vm5675
    %vm5692 = vmpackc.low %vm5676, %vm5676
    %vm5693 = vmpackc.low %vm5677, %vm5677
    %vm5694 = vmpackc.low %vm5678, %vm5678
    %vm5695 = vmpackc.low %vm5679, %vm5679
    %vm5696 = vmpackc.low %vm5680, %vm5680
    %vm5697 = vmpackc.low %vm5681, %vm5681
    %vm5698 = vmpackc.low %vm5682, %vm5682
    %vm5699 = vmpackc.low %vm5683, %vm5683
    %vm5700 = vmpackc.low %vm5684, %vm5684
    %vm5701 = vmpackc.low %vm5685, %vm5685
    %vm5702 = vmpackc.low %vm5686, %vm5686
    %vm5703 = vmpackc.low %vm5687, %vm5687
    %vm5704 = vmpackc.low %vm5688, %vm5688
    %vm5705 = vmpackc.low %vm5689, %vm5689
    %vm5706 = vmpackc.low %vm5690, %vm5690
    %v5707 = vsel %vm5691, 65537, 0
    %v5708 = vsel %vm5692, 65537, 0
    %v5709 = vsel %vm5693, 65537, 0
    %v5710 = vsel %vm5694, 65537, 0
    %v5711 = vsel %vm5695, 65537, 0
    %v5712 = vsel %vm5696, 65537, 0
    %v5713 = vsel %vm5697, 65537, 0
    %v5714 = vsel %vm5698, 65537, 0
    %v5715 = vsel %vm5699, 65537, 0
    %v5716 = vsel %vm5700, 65537, 0
    %v5717 = vsel %vm5701, 65537, 0
    %v5718 = vsel %vm5702, 65537, 0
    %v5719 = vsel %vm5703, 65537, 0
    %v5720 = vsel %vm5704, 65537, 0
    %v5721 = vsel %vm5705, 65537, 0
    %v5722 = vsel %vm5706, 65537, 0
    %v5723 = vunpack.c.l.b16 %v5707
    %v5724 = vunpack.c.l.b16 %v5708
    %v5725 = vunpack.c.l.b16 %v5709
    %v5726 = vunpack.c.l.b16 %v5710
    %v5727 = vunpack.c.l.b16 %v5711
    %v5728 = vunpack.c.l.b16 %v5712
    %v5729 = vunpack.c.l.b16 %v5713
    %v5730 = vunpack.c.l.b16 %v5714
    %v5731 = vunpack.c.l.b16 %v5715
    %v5732 = vunpack.c.l.b16 %v5716
    %v5733 = vunpack.c.l.b16 %v5717
    %v5734 = vunpack.c.l.b16 %v5718
    %v5735 = vunpack.c.l.b16 %v5719
    %v5736 = vunpack.c.l.b16 %v5720
    %v5737 = vunpack.c.l.b16 %v5721
    %v5738 = vunpack.c.l.b16 %v5722
    %v5739 = vpack.c.b16 %v5724, %v5723
    %v5740 = vpack.c.b16 %v5726, %v5725
    %v5741 = vpack.c.b16 %v5728, %v5727
    %v5742 = vpack.c.b16 %v5730, %v5729
    %v5743 = vpack.c.b16 %v5732, %v5731
    %v5744 = vpack.c.b16 %v5734, %v5733
    %v5745 = vpack.c.b16 %v5736, %v5735
    %v5746 = vpack.c.b16 %v5738, %v5737
    %v5748 = vshrl.u32 %v5739, 16
    %v5750 = vrot.slane %v5748, 3
    %v5751 = vshll.u32 %v5739, 16
    %v5753 = vrot.slane %v5751, 4
    %v5754 = vor.u32 %v5750, %v5753
    %v5756 = vshrl.u32 %v5740, 16
    %v5758 = vrot.slane %v5756, 3
    %v5759 = vshll.u32 %v5740, 16
    %v5761 = vrot.slane %v5759, 4
    %v5762 = vor.u32 %v5758, %v5761
    %v5763 = vsel %vm3899, %v5754, %v5762
    %v5765 = vshrl.u32 %v5741, 16
    %v5767 = vrot.slane %v5765, 3
    %v5768 = vshll.u32 %v5741, 16
    %v5770 = vrot.slane %v5768, 4
    %v5771 = vor.u32 %v5767, %v5770
    %v5772 = vsel %vm3899, %v5762, %v5771
    %v5774 = vshrl.u32 %v5742, 16
    %v5776 = vrot.slane %v5774, 3
    %v5777 = vshll.u32 %v5742, 16
    %v5779 = vrot.slane %v5777, 4
    %v5780 = vor.u32 %v5776, %v5779
    %v5781 = vsel %vm3899, %v5771, %v5780
    %v5783 = vshrl.u32 %v5743, 16
    %v5785 = vrot.slane %v5783, 3
    %v5786 = vshll.u32 %v5743, 16
    %v5788 = vrot.slane %v5786, 4
    %v5789 = vor.u32 %v5785, %v5788
    %v5790 = vsel %vm3899, %v5780, %v5789
    %v5792 = vshrl.u32 %v5744, 16
    %v5794 = vrot.slane %v5792, 3
    %v5795 = vshll.u32 %v5744, 16
    %v5797 = vrot.slane %v5795, 4
    %v5798 = vor.u32 %v5794, %v5797
    %v5799 = vsel %vm3899, %v5789, %v5798
    %v5801 = vshrl.u32 %v5745, 16
    %v5803 = vrot.slane %v5801, 3
    %v5804 = vshll.u32 %v5745, 16
    %v5806 = vrot.slane %v5804, 4
    %v5807 = vor.u32 %v5803, %v5806
    %v5808 = vsel %vm3899, %v5798, %v5807
    %v5810 = vshrl.u32 %v5746, 16
    %v5812 = vrot.slane %v5810, 3
    %v5813 = vshll.u32 %v5746, 16
    %v5815 = vrot.slane %v5813, 4
    %v5816 = vor.u32 %v5812, %v5815
    %v5817 = vsel %vm3899, %v5807, %v5816
    %vm5818 = vcmp.ne.s16.totalorder %v5754, 0
    %vm5819 = vcmp.ne.s16.totalorder %v5763, 0
    %vm5820 = vcmp.ne.s16.totalorder %v5772, 0
    %vm5821 = vcmp.ne.s16.totalorder %v5781, 0
    %vm5822 = vcmp.ne.s16.totalorder %v5790, 0
    %vm5823 = vcmp.ne.s16.totalorder %v5799, 0
    %vm5824 = vcmp.ne.s16.totalorder %v5808, 0
    %vm5825 = vcmp.ne.s16.totalorder %v5817, 0
    %vm5826 = vcmp.ne.s16.totalorder %v5816, 0
    %v5827 = vsel %vm5818, %v5634, 0
    %v5828 = vsel %vm5819, %v5635, 0
    %v5829 = vsel %vm5820, %v5636, 0
    %v5830 = vsel %vm5821, %v5637, 0
    %v5831 = vsel %vm5822, %v5638, 0
    %v5832 = vsel %vm5823, %v5639, 0
    %v5833 = vsel %vm5824, %v5640, 0
    %v5834 = vsel %vm5825, %v5641, 0
    %v5835 = vsel %vm5826, %v5642, 0
    %v5837 = vshrl.u32 %v5827, 16
    %v5839 = vrot.slane %v5837, 4
    %v5840 = vshll.u32 %v5827, 16
    %v5842 = vrot.slane %v5840, 5
    %v5843 = vor.u32 %v5839, %v5842
    %v5845 = vshrl.u32 %v5828, 16
    %v5847 = vrot.slane %v5845, 4
    %v5848 = vshll.u32 %v5828, 16
    %v5850 = vrot.slane %v5848, 5
    %v5851 = vor.u32 %v5847, %v5850
    %v5852 = vsel %vm1943, %v5843, %v5851
    %v5854 = vshrl.u32 %v5829, 16
    %v5856 = vrot.slane %v5854, 4
    %v5857 = vshll.u32 %v5829, 16
    %v5859 = vrot.slane %v5857, 5
    %v5860 = vor.u32 %v5856, %v5859
    %v5861 = vsel %vm1943, %v5851, %v5860
    %v5863 = vshrl.u32 %v5830, 16
    %v5865 = vrot.slane %v5863, 4
    %v5866 = vshll.u32 %v5830, 16
    %v5868 = vrot.slane %v5866, 5
    %v5869 = vor.u32 %v5865, %v5868
    %v5870 = vsel %vm1943, %v5860, %v5869
    %v5872 = vshrl.u32 %v5831, 16
    %v5874 = vrot.slane %v5872, 4
    %v5875 = vshll.u32 %v5831, 16
    %v5877 = vrot.slane %v5875, 5
    %v5878 = vor.u32 %v5874, %v5877
    %v5879 = vsel %vm1943, %v5869, %v5878
    %v5881 = vshrl.u32 %v5832, 16
    %v5883 = vrot.slane %v5881, 4
    %v5884 = vshll.u32 %v5832, 16
    %v5886 = vrot.slane %v5884, 5
    %v5887 = vor.u32 %v5883, %v5886
    %v5888 = vsel %vm1943, %v5878, %v5887
    %v5890 = vshrl.u32 %v5833, 16
    %v5892 = vrot.slane %v5890, 4
    %v5893 = vshll.u32 %v5833, 16
    %v5895 = vrot.slane %v5893, 5
    %v5896 = vor.u32 %v5892, %v5895
    %v5897 = vsel %vm1943, %v5887, %v5896
    %v5899 = vshrl.u32 %v5834, 16
    %v5901 = vrot.slane %v5899, 4
    %v5902 = vshll.u32 %v5834, 16
    %v5904 = vrot.slane %v5902, 5
    %v5905 = vor.u32 %v5901, %v5904
    %v5906 = vsel %vm1943, %v5896, %v5905
    %v5908 = vshrl.u32 %v5835, 16
    %v5910 = vrot.slane %v5908, 4
    %v5911 = vshll.u32 %v5835, 16
    %v5913 = vrot.slane %v5911, 5
    %v5914 = vor.u32 %v5910, %v5913
    %v5915 = vsel %vm1943, %v5905, %v5914
    %5924 = vst [vmem:[#allocation4 + $0x40] sm:$0xff] %v5852
    %5925 = vst [vmem:[#allocation4 + $0x88] sm:$0xff] %v5861
    %5926 = vst [vmem:[#allocation4 + $0xd0] sm:$0xff] %v5870
    %5927 = vst [vmem:[#allocation4 + $0x118] sm:$0xff] %v5879
    %5928 = vst [vmem:[#allocation4 + $0x160] sm:$0xff] %v5888
    %5929 = vst [vmem:[#allocation4 + $0x1a8] sm:$0xff] %v5897
    %5930 = vst [vmem:[#allocation4 + $0x1f0] sm:$0xff] %v5906
    %5931 = vst [vmem:[#allocation4 + $0x238] sm:$0xff] %v5915
    %v5932 = vld [vmem:[#allocation4] sm:$0xff]
    %v5933 = vld [vmem:[#allocation4 + $0x8] sm:$0xff]
    %v5934 = vld [vmem:[#allocation4 + $0x10] sm:$0xff]
    %v5935 = vld [vmem:[#allocation4 + $0x18] sm:$0xff]
    %v5936 = vld [vmem:[#allocation4 + $0x20] sm:$0xff]
    %v5937 = vld [vmem:[#allocation4 + $0x28] sm:$0xff]
    %v5938 = vld [vmem:[#allocation4 + $0x30] sm:$0xff]
    %v5939 = vld [vmem:[#allocation4 + $0x38] sm:$0xff]
    %v5940 = vld [vmem:[#allocation4 + $0x40] sm:$0xff]
    %v5941 = vld [vmem:[#allocation4 + $0x48] sm:$0xff]
    %v5942 = vld [vmem:[#allocation4 + $0x50] sm:$0xff]
    %v5943 = vld [vmem:[#allocation4 + $0x58] sm:$0xff]
    %v5944 = vld [vmem:[#allocation4 + $0x60] sm:$0xff]
    %v5945 = vld [vmem:[#allocation4 + $0x68] sm:$0xff]
    %v5946 = vld [vmem:[#allocation4 + $0x70] sm:$0xff]
    %v5947 = vld [vmem:[#allocation4 + $0x78] sm:$0xff]
    %v5948 = vld [vmem:[#allocation4 + $0x80] sm:$0xff]
    %v5949 = vld [vmem:[#allocation4 + $0x88] sm:$0xff]
    %v5950 = vld [vmem:[#allocation4 + $0x90] sm:$0xff]
    %v5951 = vld [vmem:[#allocation4 + $0x98] sm:$0xff]
    %v5952 = vld [vmem:[#allocation4 + $0xa0] sm:$0xff]
    %v5953 = vld [vmem:[#allocation4 + $0xa8] sm:$0xff]
    %v5954 = vld [vmem:[#allocation4 + $0xb0] sm:$0xff]
    %v5955 = vld [vmem:[#allocation4 + $0xb8] sm:$0xff]
    %v5956 = vld [vmem:[#allocation4 + $0xc0] sm:$0xff]
    %v5957 = vld [vmem:[#allocation4 + $0xc8] sm:$0xff]
    %v5958 = vld [vmem:[#allocation4 + $0xd0] sm:$0xff]
    %v5959 = vld [vmem:[#allocation4 + $0xd8] sm:$0xff]
    %v5960 = vld [vmem:[#allocation4 + $0xe0] sm:$0xff]
    %v5961 = vld [vmem:[#allocation4 + $0xe8] sm:$0xff]
    %v5962 = vld [vmem:[#allocation4 + $0xf0] sm:$0xff]
    %v5963 = vld [vmem:[#allocation4 + $0xf8] sm:$0xff]
    %v5964 = vld [vmem:[#allocation4 + $0x100] sm:$0xff]
    %v5965 = vld [vmem:[#allocation4 + $0x108] sm:$0xff]
    %v5966 = vld [vmem:[#allocation4 + $0x110] sm:$0xff]
    %v5967 = vld [vmem:[#allocation4 + $0x118] sm:$0xff]
    %v5968 = vld [vmem:[#allocation4 + $0x120] sm:$0xff]
    %v5969 = vld [vmem:[#allocation4 + $0x128] sm:$0xff]
    %v5970 = vld [vmem:[#allocation4 + $0x130] sm:$0xff]
    %v5971 = vld [vmem:[#allocation4 + $0x138] sm:$0xff]
    %v5972 = vld [vmem:[#allocation4 + $0x140] sm:$0xff]
    %v5973 = vld [vmem:[#allocation4 + $0x148] sm:$0xff]
    %v5974 = vld [vmem:[#allocation4 + $0x150] sm:$0xff]
    %v5975 = vld [vmem:[#allocation4 + $0x158] sm:$0xff]
    %v5976 = vld [vmem:[#allocation4 + $0x160] sm:$0xff]
    %v5977 = vld [vmem:[#allocation4 + $0x168] sm:$0xff]
    %v5978 = vld [vmem:[#allocation4 + $0x170] sm:$0xff]
    %v5979 = vld [vmem:[#allocation4 + $0x178] sm:$0xff]
    %v5980 = vld [vmem:[#allocation4 + $0x180] sm:$0xff]
    %v5981 = vld [vmem:[#allocation4 + $0x188] sm:$0xff]
    %v5982 = vld [vmem:[#allocation4 + $0x190] sm:$0xff]
    %v5983 = vld [vmem:[#allocation4 + $0x198] sm:$0xff]
    %v5984 = vld [vmem:[#allocation4 + $0x1a0] sm:$0xff]
    %v5985 = vld [vmem:[#allocation4 + $0x1a8] sm:$0xff]
    %v5986 = vld [vmem:[#allocation4 + $0x1b0] sm:$0xff]
    %v5987 = vld [vmem:[#allocation4 + $0x1b8] sm:$0xff]
    %v5988 = vld [vmem:[#allocation4 + $0x1c0] sm:$0xff]
    %v5989 = vld [vmem:[#allocation4 + $0x1c8] sm:$0xff]
    %v5990 = vld [vmem:[#allocation4 + $0x1d0] sm:$0xff]
    %v5991 = vld [vmem:[#allocation4 + $0x1d8] sm:$0xff]
    %v5992 = vld [vmem:[#allocation4 + $0x1e0] sm:$0xff]
    %v5993 = vld [vmem:[#allocation4 + $0x1e8] sm:$0xff]
    %v5994 = vld [vmem:[#allocation4 + $0x1f0] sm:$0xff]
    %v5995 = vld [vmem:[#allocation4 + $0x1f8] sm:$0xff]
    %v5996 = vld [vmem:[#allocation4 + $0x200] sm:$0xff]
    %v5997 = vld [vmem:[#allocation4 + $0x208] sm:$0xff]
    %v5998 = vld [vmem:[#allocation4 + $0x210] sm:$0xff]
    %v5999 = vld [vmem:[#allocation4 + $0x218] sm:$0xff]
    %v6000 = vld [vmem:[#allocation4 + $0x220] sm:$0xff]
    %v6001 = vld [vmem:[#allocation4 + $0x228] sm:$0xff]
    %v6002 = vld [vmem:[#allocation4 + $0x230] sm:$0xff]
    %v6003 = vld [vmem:[#allocation4 + $0x238] sm:$0xff]
    %v6004 = vld [vmem:[%s4] sm:$0xf]
    %v6005 = vld [vmem:[%s4 + $0x4] sm:$0xf]
    %v6006 = vld [vmem:[%s4 + $0x8] sm:$0xf]
    %v6007 = vld [vmem:[%s4 + $0xc] sm:$0xf]
    %v6008 = vld [vmem:[%s4 + $0x10] sm:$0xf]
    %v6009 = vld [vmem:[%s4 + $0x14] sm:$0xf]
    %v6010 = vld [vmem:[%s4 + $0x18] sm:$0xf]
    %v6011 = vld [vmem:[%s4 + $0x1c] sm:$0xf]
    %v6012 = vld [vmem:[%s4 + $0x20] sm:$0xf]
    %v6013 = vld [vmem:[%s4 + $0x24] sm:$0xf]
    %v6014 = vld [vmem:[%s4 + $0x28] sm:$0xf]
    %v6015 = vld [vmem:[%s4 + $0x2c] sm:$0xf]
    %v6016 = vld [vmem:[%s4 + $0x30] sm:$0xf]
    %v6017 = vld [vmem:[%s4 + $0x34] sm:$0xf]
    %v6018 = vld [vmem:[%s4 + $0x38] sm:$0xf]
    %v6019 = vld [vmem:[%s4 + $0x3c] sm:$0xf]
    %v6020 = vld [vmem:[%s4 + $0x40] sm:$0xf]
    %v6021 = vld [vmem:[%s4 + $0x44] sm:$0xf]
    %v6022 = vld [vmem:[%s4 + $0x48] sm:$0xf]
    %v6023 = vld [vmem:[%s4 + $0x4c] sm:$0xf]
    %v6024 = vld [vmem:[%s4 + $0x50] sm:$0xf]
    %v6025 = vld [vmem:[%s4 + $0x54] sm:$0xf]
    %v6026 = vld [vmem:[%s4 + $0x58] sm:$0xf]
    %v6027 = vld [vmem:[%s4 + $0x5c] sm:$0xf]
    %v6028 = vld [vmem:[%s4 + $0x60] sm:$0xf]
    %v6029 = vld [vmem:[%s4 + $0x64] sm:$0xf]
    %v6030 = vld [vmem:[%s4 + $0x68] sm:$0xf]
    %v6031 = vld [vmem:[%s4 + $0x6c] sm:$0xf]
    %v6032 = vld [vmem:[%s4 + $0x70] sm:$0xf]
    %v6033 = vld [vmem:[%s4 + $0x74] sm:$0xf]
    %v6034 = vld [vmem:[%s4 + $0x78] sm:$0xf]
    %v6035 = vld [vmem:[%s4 + $0x7c] sm:$0xf]
    %v6036 = vld [vmem:[%s4 + $0x80] sm:$0xf]
    %v6037 = vld [vmem:[%s4 + $0x84] sm:$0xf]
    %v6038 = vld [vmem:[%s4 + $0x88] sm:$0xf]
    %v6039 = vld [vmem:[%s4 + $0x8c] sm:$0xf]
    %v6040 = vld [vmem:[%s4 + $0x90] sm:$0xf]
    %v6041 = vld [vmem:[%s4 + $0x94] sm:$0xf]
    %v6042 = vld [vmem:[%s4 + $0x98] sm:$0xf]
    %v6043 = vld [vmem:[%s4 + $0x9c] sm:$0xf]
    %v6044 = vld [vmem:[%s4 + $0xa0] sm:$0xf]
    %v6045 = vld [vmem:[%s4 + $0xa4] sm:$0xf]
    %v6046 = vld [vmem:[%s4 + $0xa8] sm:$0xf]
    %v6047 = vld [vmem:[%s4 + $0xac] sm:$0xf]
    %v6048 = vld [vmem:[%s4 + $0xb0] sm:$0xf]
    %v6049 = vld [vmem:[%s4 + $0xb4] sm:$0xf]
    %v6050 = vld [vmem:[%s4 + $0xb8] sm:$0xf]
    %v6051 = vld [vmem:[%s4 + $0xbc] sm:$0xf]
    %v6052 = vld [vmem:[%s4 + $0xc0] sm:$0xf]
    %v6053 = vld [vmem:[%s4 + $0xc4] sm:$0xf]
    %v6054 = vld [vmem:[%s4 + $0xc8] sm:$0xf]
    %v6055 = vld [vmem:[%s4 + $0xcc] sm:$0xf]
    %v6056 = vld [vmem:[%s4 + $0xd0] sm:$0xf]
    %v6057 = vld [vmem:[%s4 + $0xd4] sm:$0xf]
    %v6058 = vld [vmem:[%s4 + $0xd8] sm:$0xf]
    %v6059 = vld [vmem:[%s4 + $0xdc] sm:$0xf]
    %v6060 = vld [vmem:[%s4 + $0xe0] sm:$0xf]
    %v6061 = vld [vmem:[%s4 + $0xe4] sm:$0xf]
    %v6062 = vld [vmem:[%s4 + $0xe8] sm:$0xf]
    %v6063 = vld [vmem:[%s4 + $0xec] sm:$0xf]
    %v6064 = vld [vmem:[%s4 + $0xf0] sm:$0xf]
    %v6065 = vld [vmem:[%s4 + $0xf4] sm:$0xf]
    %v6066 = vld [vmem:[%s4 + $0xf8] sm:$0xf]
    %v6067 = vld [vmem:[%s4 + $0xfc] sm:$0xf]
    %v6068 = vld [vmem:[%s4 + $0x100] sm:$0xf]
    %v6069 = vld [vmem:[%s4 + $0x104] sm:$0xf]
    %v6070 = vld [vmem:[%s4 + $0x108] sm:$0xf]
    %v6071 = vld [vmem:[%s4 + $0x10c] sm:$0xf]
    %v6072 = vld [vmem:[%s4 + $0x110] sm:$0xf]
    %v6073 = vld [vmem:[%s4 + $0x114] sm:$0xf]
    %v6074 = vld [vmem:[%s4 + $0x118] sm:$0xf]
    %v6075 = vld [vmem:[%s4 + $0x11c] sm:$0xf]
    %v6076 = vld [vmem:[%s4 + $0x120] sm:$0xf]
    %v6077 = vld [vmem:[%s4 + $0x124] sm:$0xf]
    %v6078 = vld [vmem:[%s4 + $0x128] sm:$0xf]
    %v6079 = vld [vmem:[%s4 + $0x12c] sm:$0xf]
    %v6080 = vld [vmem:[%s4 + $0x130] sm:$0xf]
    %v6081 = vld [vmem:[%s4 + $0x134] sm:$0xf]
    %v6082 = vld [vmem:[%s4 + $0x138] sm:$0xf]
    %v6083 = vld [vmem:[%s4 + $0x13c] sm:$0xf]
    %v6084 = vld [vmem:[%s4 + $0x140] sm:$0xf]
    %v6085 = vld [vmem:[%s4 + $0x144] sm:$0xf]
    %v6086 = vld [vmem:[%s4 + $0x148] sm:$0xf]
    %v6087 = vld [vmem:[%s4 + $0x14c] sm:$0xf]
    %v6088 = vld [vmem:[%s4 + $0x150] sm:$0xf]
    %v6089 = vld [vmem:[%s4 + $0x154] sm:$0xf]
    %v6090 = vld [vmem:[%s4 + $0x158] sm:$0xf]
    %v6091 = vld [vmem:[%s4 + $0x15c] sm:$0xf]
    %v6092 = vld [vmem:[%s4 + $0x160] sm:$0xf]
    %v6093 = vld [vmem:[%s4 + $0x164] sm:$0xf]
    %v6094 = vld [vmem:[%s4 + $0x168] sm:$0xf]
    %v6095 = vld [vmem:[%s4 + $0x16c] sm:$0xf]
    %v6096 = vld [vmem:[%s4 + $0x170] sm:$0xf]
    %v6097 = vld [vmem:[%s4 + $0x174] sm:$0xf]
    %v6098 = vld [vmem:[%s4 + $0x178] sm:$0xf]
    %v6099 = vld [vmem:[%s4 + $0x17c] sm:$0xf]
    %v6100 = vld [vmem:[%s4 + $0x180] sm:$0xf]
    %v6101 = vld [vmem:[%s4 + $0x184] sm:$0xf]
    %v6102 = vld [vmem:[%s4 + $0x188] sm:$0xf]
    %v6103 = vld [vmem:[%s4 + $0x18c] sm:$0xf]
    %v6104 = vld [vmem:[%s4 + $0x190] sm:$0xf]
    %v6105 = vld [vmem:[%s4 + $0x194] sm:$0xf]
    %v6106 = vld [vmem:[%s4 + $0x198] sm:$0xf]
    %v6107 = vld [vmem:[%s4 + $0x19c] sm:$0xf]
    %v6108 = vld [vmem:[%s4 + $0x1a0] sm:$0xf]
    %v6109 = vld [vmem:[%s4 + $0x1a4] sm:$0xf]
    %v6110 = vld [vmem:[%s4 + $0x1a8] sm:$0xf]
    %v6111 = vld [vmem:[%s4 + $0x1ac] sm:$0xf]
    %v6112 = vld [vmem:[%s4 + $0x1b0] sm:$0xf]
    %v6113 = vld [vmem:[%s4 + $0x1b4] sm:$0xf]
    %v6114 = vld [vmem:[%s4 + $0x1b8] sm:$0xf]
    %v6115 = vld [vmem:[%s4 + $0x1bc] sm:$0xf]
    %v6116 = vld [vmem:[%s4 + $0x1c0] sm:$0xf]
    %v6117 = vld [vmem:[%s4 + $0x1c4] sm:$0xf]
    %v6118 = vld [vmem:[%s4 + $0x1c8] sm:$0xf]
    %v6119 = vld [vmem:[%s4 + $0x1cc] sm:$0xf]
    %v6120 = vld [vmem:[%s4 + $0x1d0] sm:$0xf]
    %v6121 = vld [vmem:[%s4 + $0x1d4] sm:$0xf]
    %v6122 = vld [vmem:[%s4 + $0x1d8] sm:$0xf]
    %v6123 = vld [vmem:[%s4 + $0x1dc] sm:$0xf]
    %v6124 = vld [vmem:[%s4 + $0x1e0] sm:$0xf]
    %v6125 = vld [vmem:[%s4 + $0x1e4] sm:$0xf]
    %v6126 = vld [vmem:[%s4 + $0x1e8] sm:$0xf]
    %v6127 = vld [vmem:[%s4 + $0x1ec] sm:$0xf]
    %v6128 = vld [vmem:[%s4 + $0x1f0] sm:$0xf]
    %v6129 = vld [vmem:[%s4 + $0x1f4] sm:$0xf]
    %v6130 = vld [vmem:[%s4 + $0x1f8] sm:$0xf]
    %v6131 = vld [vmem:[%s4 + $0x1fc] sm:$0xf]
    %v6132 = vld [vmem:[%s4 + $0x200] sm:$0xf]
    %v6133 = vld [vmem:[%s4 + $0x204] sm:$0xf]
    %v6134 = vld [vmem:[%s4 + $0x208] sm:$0xf]
    %v6135 = vld [vmem:[%s4 + $0x20c] sm:$0xf]
    %v6136 = vld [vmem:[%s4 + $0x210] sm:$0xf]
    %v6137 = vld [vmem:[%s4 + $0x214] sm:$0xf]
    %v6138 = vld [vmem:[%s4 + $0x218] sm:$0xf]
    %v6139 = vld [vmem:[%s4 + $0x21c] sm:$0xf]
    %v6140 = vld [vmem:[%s4 + $0x220] sm:$0xf]
    %v6141 = vld [vmem:[%s4 + $0x224] sm:$0xf]
    %v6142 = vld [vmem:[%s4 + $0x228] sm:$0xf]
    %v6143 = vld [vmem:[%s4 + $0x22c] sm:$0xf]
    %v6144 = vld [vmem:[%s4 + $0x230] sm:$0xf]
    %v6145 = vld [vmem:[%s4 + $0x234] sm:$0xf]
    %v6146 = vld [vmem:[%s4 + $0x238] sm:$0xf]
    %v6147 = vld [vmem:[%s4 + $0x23c] sm:$0xf]
    %v6292 = vunpack.c.l.b16 %v6004
    %v6293 = vunpack.c.l.b16 %v6005
    %v6294 = vunpack.c.l.b16 %v6006
    %v6295 = vunpack.c.l.b16 %v6007
    %v6296 = vunpack.c.l.b16 %v6008
    %v6297 = vunpack.c.l.b16 %v6009
    %v6298 = vunpack.c.l.b16 %v6010
    %v6299 = vunpack.c.l.b16 %v6011
    %v6300 = vunpack.c.l.b16 %v6012
    %v6301 = vunpack.c.l.b16 %v6013
    %v6302 = vunpack.c.l.b16 %v6014
    %v6303 = vunpack.c.l.b16 %v6015
    %v6304 = vunpack.c.l.b16 %v6016
    %v6305 = vunpack.c.l.b16 %v6017
    %v6306 = vunpack.c.l.b16 %v6018
    %v6307 = vunpack.c.l.b16 %v6019
    %v6308 = vunpack.c.l.b16 %v6020
    %v6309 = vunpack.c.l.b16 %v6021
    %v6310 = vunpack.c.l.b16 %v6022
    %v6311 = vunpack.c.l.b16 %v6023
    %v6312 = vunpack.c.l.b16 %v6024
    %v6313 = vunpack.c.l.b16 %v6025
    %v6314 = vunpack.c.l.b16 %v6026
    %v6315 = vunpack.c.l.b16 %v6027
    %v6316 = vunpack.c.l.b16 %v6028
    %v6317 = vunpack.c.l.b16 %v6029
    %v6318 = vunpack.c.l.b16 %v6030
    %v6319 = vunpack.c.l.b16 %v6031
    %v6320 = vunpack.c.l.b16 %v6032
    %v6321 = vunpack.c.l.b16 %v6033
    %v6322 = vunpack.c.l.b16 %v6034
    %v6323 = vunpack.c.l.b16 %v6035
    %v6324 = vunpack.c.l.b16 %v6036
    %v6325 = vunpack.c.l.b16 %v6037
    %v6326 = vunpack.c.l.b16 %v6038
    %v6327 = vunpack.c.l.b16 %v6039
    %v6328 = vunpack.c.l.b16 %v6040
    %v6329 = vunpack.c.l.b16 %v6041
    %v6330 = vunpack.c.l.b16 %v6042
    %v6331 = vunpack.c.l.b16 %v6043
    %v6332 = vunpack.c.l.b16 %v6044
    %v6333 = vunpack.c.l.b16 %v6045
    %v6334 = vunpack.c.l.b16 %v6046
    %v6335 = vunpack.c.l.b16 %v6047
    %v6336 = vunpack.c.l.b16 %v6048
    %v6337 = vunpack.c.l.b16 %v6049
    %v6338 = vunpack.c.l.b16 %v6050
    %v6339 = vunpack.c.l.b16 %v6051
    %v6340 = vunpack.c.l.b16 %v6052
    %v6341 = vunpack.c.l.b16 %v6053
    %v6342 = vunpack.c.l.b16 %v6054
    %v6343 = vunpack.c.l.b16 %v6055
    %v6344 = vunpack.c.l.b16 %v6056
    %v6345 = vunpack.c.l.b16 %v6057
    %v6346 = vunpack.c.l.b16 %v6058
    %v6347 = vunpack.c.l.b16 %v6059
    %v6348 = vunpack.c.l.b16 %v6060
    %v6349 = vunpack.c.l.b16 %v6061
    %v6350 = vunpack.c.l.b16 %v6062
    %v6351 = vunpack.c.l.b16 %v6063
    %v6352 = vunpack.c.l.b16 %v6064
    %v6353 = vunpack.c.l.b16 %v6065
    %v6354 = vunpack.c.l.b16 %v6066
    %v6355 = vunpack.c.l.b16 %v6067
    %v6356 = vunpack.c.l.b16 %v6068
    %v6357 = vunpack.c.l.b16 %v6069
    %v6358 = vunpack.c.l.b16 %v6070
    %v6359 = vunpack.c.l.b16 %v6071
    %v6360 = vunpack.c.l.b16 %v6072
    %v6361 = vunpack.c.l.b16 %v6073
    %v6362 = vunpack.c.l.b16 %v6074
    %v6363 = vunpack.c.l.b16 %v6075
    %v6364 = vunpack.c.l.b16 %v6076
    %v6365 = vunpack.c.l.b16 %v6077
    %v6366 = vunpack.c.l.b16 %v6078
    %v6367 = vunpack.c.l.b16 %v6079
    %v6368 = vunpack.c.l.b16 %v6080
    %v6369 = vunpack.c.l.b16 %v6081
    %v6370 = vunpack.c.l.b16 %v6082
    %v6371 = vunpack.c.l.b16 %v6083
    %v6372 = vunpack.c.l.b16 %v6084
    %v6373 = vunpack.c.l.b16 %v6085
    %v6374 = vunpack.c.l.b16 %v6086
    %v6375 = vunpack.c.l.b16 %v6087
    %v6376 = vunpack.c.l.b16 %v6088
    %v6377 = vunpack.c.l.b16 %v6089
    %v6378 = vunpack.c.l.b16 %v6090
    %v6379 = vunpack.c.l.b16 %v6091
    %v6380 = vunpack.c.l.b16 %v6092
    %v6381 = vunpack.c.l.b16 %v6093
    %v6382 = vunpack.c.l.b16 %v6094
    %v6383 = vunpack.c.l.b16 %v6095
    %v6384 = vunpack.c.l.b16 %v6096
    %v6385 = vunpack.c.l.b16 %v6097
    %v6386 = vunpack.c.l.b16 %v6098
    %v6387 = vunpack.c.l.b16 %v6099
    %v6388 = vunpack.c.l.b16 %v6100
    %v6389 = vunpack.c.l.b16 %v6101
    %v6390 = vunpack.c.l.b16 %v6102
    %v6391 = vunpack.c.l.b16 %v6103
    %v6392 = vunpack.c.l.b16 %v6104
    %v6393 = vunpack.c.l.b16 %v6105
    %v6394 = vunpack.c.l.b16 %v6106
    %v6395 = vunpack.c.l.b16 %v6107
    %v6396 = vunpack.c.l.b16 %v6108
    %v6397 = vunpack.c.l.b16 %v6109
    %v6398 = vunpack.c.l.b16 %v6110
    %v6399 = vunpack.c.l.b16 %v6111
    %v6400 = vunpack.c.l.b16 %v6112
    %v6401 = vunpack.c.l.b16 %v6113
    %v6402 = vunpack.c.l.b16 %v6114
    %v6403 = vunpack.c.l.b16 %v6115
    %v6404 = vunpack.c.l.b16 %v6116
    %v6405 = vunpack.c.l.b16 %v6117
    %v6406 = vunpack.c.l.b16 %v6118
    %v6407 = vunpack.c.l.b16 %v6119
    %v6408 = vunpack.c.l.b16 %v6120
    %v6409 = vunpack.c.l.b16 %v6121
    %v6410 = vunpack.c.l.b16 %v6122
    %v6411 = vunpack.c.l.b16 %v6123
    %v6412 = vunpack.c.l.b16 %v6124
    %v6413 = vunpack.c.l.b16 %v6125
    %v6414 = vunpack.c.l.b16 %v6126
    %v6415 = vunpack.c.l.b16 %v6127
    %v6416 = vunpack.c.l.b16 %v6128
    %v6417 = vunpack.c.l.b16 %v6129
    %v6418 = vunpack.c.l.b16 %v6130
    %v6419 = vunpack.c.l.b16 %v6131
    %v6420 = vunpack.c.l.b16 %v6132
    %v6421 = vunpack.c.l.b16 %v6133
    %v6422 = vunpack.c.l.b16 %v6134
    %v6423 = vunpack.c.l.b16 %v6135
    %v6424 = vunpack.c.l.b16 %v6136
    %v6425 = vunpack.c.l.b16 %v6137
    %v6426 = vunpack.c.l.b16 %v6138
    %v6427 = vunpack.c.l.b16 %v6139
    %v6428 = vunpack.c.l.b16 %v6140
    %v6429 = vunpack.c.l.b16 %v6141
    %v6430 = vunpack.c.l.b16 %v6142
    %v6431 = vunpack.c.l.b16 %v6143
    %v6432 = vunpack.c.l.b16 %v6144
    %v6433 = vunpack.c.l.b16 %v6145
    %v6434 = vunpack.c.l.b16 %v6146
    %v6435 = vunpack.c.l.b16 %v6147
    %v6436 = vpack.c.b16 %v6293, %v6292
    %v6437 = vpack.c.b16 %v6295, %v6294
    %v6438 = vpack.c.b16 %v6297, %v6296
    %v6439 = vpack.c.b16 %v6299, %v6298
    %v6440 = vpack.c.b16 %v6301, %v6300
    %v6441 = vpack.c.b16 %v6303, %v6302
    %v6442 = vpack.c.b16 %v6305, %v6304
    %v6443 = vpack.c.b16 %v6307, %v6306
    %v6444 = vpack.c.b16 %v6309, %v6308
    %v6445 = vpack.c.b16 %v6311, %v6310
    %v6446 = vpack.c.b16 %v6313, %v6312
    %v6447 = vpack.c.b16 %v6315, %v6314
    %v6448 = vpack.c.b16 %v6317, %v6316
    %v6449 = vpack.c.b16 %v6319, %v6318
    %v6450 = vpack.c.b16 %v6321, %v6320
    %v6451 = vpack.c.b16 %v6323, %v6322
    %v6452 = vpack.c.b16 %v6325, %v6324
    %v6453 = vpack.c.b16 %v6327, %v6326
    %v6454 = vpack.c.b16 %v6329, %v6328
    %v6455 = vpack.c.b16 %v6331, %v6330
    %v6456 = vpack.c.b16 %v6333, %v6332
    %v6457 = vpack.c.b16 %v6335, %v6334
    %v6458 = vpack.c.b16 %v6337, %v6336
    %v6459 = vpack.c.b16 %v6339, %v6338
    %v6460 = vpack.c.b16 %v6341, %v6340
    %v6461 = vpack.c.b16 %v6343, %v6342
    %v6462 = vpack.c.b16 %v6345, %v6344
    %v6463 = vpack.c.b16 %v6347, %v6346
    %v6464 = vpack.c.b16 %v6349, %v6348
    %v6465 = vpack.c.b16 %v6351, %v6350
    %v6466 = vpack.c.b16 %v6353, %v6352
    %v6467 = vpack.c.b16 %v6355, %v6354
    %v6468 = vpack.c.b16 %v6357, %v6356
    %v6469 = vpack.c.b16 %v6359, %v6358
    %v6470 = vpack.c.b16 %v6361, %v6360
    %v6471 = vpack.c.b16 %v6363, %v6362
    %v6472 = vpack.c.b16 %v6365, %v6364
    %v6473 = vpack.c.b16 %v6367, %v6366
    %v6474 = vpack.c.b16 %v6369, %v6368
    %v6475 = vpack.c.b16 %v6371, %v6370
    %v6476 = vpack.c.b16 %v6373, %v6372
    %v6477 = vpack.c.b16 %v6375, %v6374
    %v6478 = vpack.c.b16 %v6377, %v6376
    %v6479 = vpack.c.b16 %v6379, %v6378
    %v6480 = vpack.c.b16 %v6381, %v6380
    %v6481 = vpack.c.b16 %v6383, %v6382
    %v6482 = vpack.c.b16 %v6385, %v6384
    %v6483 = vpack.c.b16 %v6387, %v6386
    %v6484 = vpack.c.b16 %v6389, %v6388
    %v6485 = vpack.c.b16 %v6391, %v6390
    %v6486 = vpack.c.b16 %v6393, %v6392
    %v6487 = vpack.c.b16 %v6395, %v6394
    %v6488 = vpack.c.b16 %v6397, %v6396
    %v6489 = vpack.c.b16 %v6399, %v6398
    %v6490 = vpack.c.b16 %v6401, %v6400
    %v6491 = vpack.c.b16 %v6403, %v6402
    %v6492 = vpack.c.b16 %v6405, %v6404
    %v6493 = vpack.c.b16 %v6407, %v6406
    %v6494 = vpack.c.b16 %v6409, %v6408
    %v6495 = vpack.c.b16 %v6411, %v6410
    %v6496 = vpack.c.b16 %v6413, %v6412
    %v6497 = vpack.c.b16 %v6415, %v6414
    %v6498 = vpack.c.b16 %v6417, %v6416
    %v6499 = vpack.c.b16 %v6419, %v6418
    %v6500 = vpack.c.b16 %v6421, %v6420
    %v6501 = vpack.c.b16 %v6423, %v6422
    %v6502 = vpack.c.b16 %v6425, %v6424
    %v6503 = vpack.c.b16 %v6427, %v6426
    %v6504 = vpack.c.b16 %v6429, %v6428
    %v6505 = vpack.c.b16 %v6431, %v6430
    %v6506 = vpack.c.b16 %v6433, %v6432
    %v6507 = vpack.c.b16 %v6435, %v6434
    %6580 = vmatprep.subr.bf16.mxu0 0
    %6581 = vmatpush1.bf16.msra.mxu0 %v6436
    %6582 = vmatprep.subr.bf16.mxu0 0
    %6583 = vmatpush1.bf16.msra.mxu0 %v6437
    %6584 = vmatprep.subr.bf16.mxu0 0
    %6585 = vmatpush1.bf16.msra.mxu0 %v6438
    %6586 = vmatprep.subr.bf16.mxu0 0
    %6587 = vmatpush1.bf16.msra.mxu0 %v6439
    %6588 = vmatprep.subr.bf16.mxu0 0
    %6589 = vmatpush1.bf16.msra.mxu0 %v6440
    %6590 = vmatprep.subr.bf16.mxu0 0
    %6591 = vmatpush1.bf16.msra.mxu0 %v6441
    %6592 = vmatprep.subr.bf16.mxu0 0
    %6593 = vmatpush1.bf16.msra.mxu0 %v6442
    %6594 = vmatprep.subr.bf16.mxu0 0
    %6595 = vmatpush1.bf16.msra.mxu0 %v6443
    %6596 = vmatprep.subr.bf16.mxu0 0
    %6597 = vmatpush1.bf16.msra.mxu0 %v6444
    %6598 = vmatprep.subr.bf16.mxu0 0
    %6599 = vmatpush1.bf16.msra.mxu0 %v6445
    %6600 = vmatprep.subr.bf16.mxu0 0
    %6601 = vmatpush1.bf16.msra.mxu0 %v6446
    %6602 = vmatprep.subr.bf16.mxu0 0
    %6603 = vmatpush1.bf16.msra.mxu0 %v6447
    %6604 = vmatprep.subr.bf16.mxu0 0
    %6605 = vmatpush1.bf16.msra.mxu0 %v6448
    %6606 = vmatprep.subr.bf16.mxu0 0
    %6607 = vmatpush1.bf16.msra.mxu0 %v6449
    %6608 = vmatprep.subr.bf16.mxu0 0
    %6609 = vmatpush1.bf16.msra.mxu0 %v6450
    %6610 = vmatprep.subr.bf16.mxu0 0
    %6611 = vmatpush1.bf16.msra.mxu0 %v6451
    %6612 = vmatprep.mubr.bf16.mxu0 %v5933
    %6613 = vmatmul.mubr.bf16.gmra.mrb[0].mxu0 %v5932
    %v6614 = vpop.f32.mrb[0].mxu0
    %v6615 = vadd.f32 0.0, %v6614
    %v6616 = vpop.f32.mrb[0].mxu0
    %v6617 = vpop.f32.mrb[0].mxu0
    %v6618 = vadd.f32 0.0, %v6617
    %v6619 = vpop.f32.mrb[0].mxu0
    %6620 = vmatprep.mubr.bf16.mxu0 %v5942
    %6621 = vmatmul.mubr.bf16.gmra.mrb[0].mxu0 %v5941
    %v6622 = vpop.f32.mrb[0].mxu0
    %v6623 = vadd.f32 0.0, %v6622
    %v6624 = vpop.f32.mrb[0].mxu0
    %v6625 = vpop.f32.mrb[0].mxu0
    %v6626 = vadd.f32 0.0, %v6625
    %v6627 = vpop.f32.mrb[0].mxu0
    %6628 = vmatprep.mubr.bf16.mxu0 %v5951
    %6629 = vmatmul.mubr.bf16.gmra.mrb[0].mxu0 %v5950
    %v6630 = vpop.f32.mrb[0].mxu0
    %v6631 = vadd.f32 0.0, %v6630
    %v6632 = vpop.f32.mrb[0].mxu0
    %v6633 = vpop.f32.mrb[0].mxu0
    %v6634 = vadd.f32 0.0, %v6633
    %v6635 = vpop.f32.mrb[0].mxu0
    %6636 = vmatprep.mubr.bf16.mxu0 %v5960
    %6637 = vmatmul.mubr.bf16.gmra.mrb[0].mxu0 %v5959
    %v6638 = vpop.f32.mrb[0].mxu0
    %v6639 = vadd.f32 0.0, %v6638
    %v6640 = vpop.f32.mrb[0].mxu0
    %v6641 = vpop.f32.mrb[0].mxu0
    %v6642 = vadd.f32 0.0, %v6641
    %v6643 = vpop.f32.mrb[0].mxu0
    %6644 = vmatprep.mubr.bf16.mxu0 %v5969
    %6645 = vmatmul.mubr.bf16.gmra.mrb[0].mxu0 %v5968
    %v6646 = vpop.f32.mrb[0].mxu0
    %v6647 = vadd.f32 0.0, %v6646
    %v6648 = vpop.f32.mrb[0].mxu0
    %v6649 = vpop.f32.mrb[0].mxu0
    %v6650 = vadd.f32 0.0, %v6649
    %v6651 = vpop.f32.mrb[0].mxu0
    %6652 = vmatprep.mubr.bf16.mxu0 %v5978
    %6653 = vmatmul.mubr.bf16.gmra.mrb[0].mxu0 %v5977
    %v6654 = vpop.f32.mrb[0].mxu0
    %v6655 = vadd.f32 0.0, %v6654
    %v6656 = vpop.f32.mrb[0].mxu0
    %v6657 = vpop.f32.mrb[0].mxu0
    %v6658 = vadd.f32 0.0, %v6657
    %v6659 = vpop.f32.mrb[0].mxu0
    %6660 = vmatprep.mubr.bf16.mxu0 %v5987
    %6661 = vmatmul.mubr.bf16.gmra.mrb[0].mxu0 %v5986
    %v6662 = vpop.f32.mrb[0].mxu0
    %v6663 = vadd.f32 0.0, %v6662
    %v6664 = vpop.f32.mrb[0].mxu0
    %v6665 = vpop.f32.mrb[0].mxu0
    %v6666 = vadd.f32 0.0, %v6665
    %v6667 = vpop.f32.mrb[0].mxu0
    %6668 = vmatprep.mubr.bf16.mxu0 %v5996
    %6669 = vmatmul.mubr.bf16.gmra.mrb[0].mxu0 %v5995
    %v6670 = vpop.f32.mrb[0].mxu0
    %v6671 = vadd.f32 0.0, %v6670
    %v6672 = vpop.f32.mrb[0].mxu0
    %v6673 = vpop.f32.mrb[0].mxu0
    %v6674 = vadd.f32 0.0, %v6673
    %v6675 = vpop.f32.mrb[0].mxu0
    %6676 = vdwg.mxu0
    %6677 = vmatprep.subr.bf16.mxu0 0
    %6678 = vmatpush1.bf16.msra.mxu0 %v6452
    %6679 = vmatprep.subr.bf16.mxu0 0
    %6680 = vmatpush1.bf16.msra.mxu0 %v6453
    %6681 = vmatprep.subr.bf16.mxu0 0
    %6682 = vmatpush1.bf16.msra.mxu0 %v6454
    %6683 = vmatprep.subr.bf16.mxu0 0
    %6684 = vmatpush1.bf16.msra.mxu0 %v6455
    %6685 = vmatprep.subr.bf16.mxu0 0
    %6686 = vmatpush1.bf16.msra.mxu0 %v6456
    %6687 = vmatprep.subr.bf16.mxu0 0
    %6688 = vmatpush1.bf16.msra.mxu0 %v6457
    %6689 = vmatprep.subr.bf16.mxu0 0
    %6690 = vmatpush1.bf16.msra.mxu0 %v6458
    %6691 = vmatprep.subr.bf16.mxu0 0
    %6692 = vmatpush1.bf16.msra.mxu0 %v6459
    %6693 = vmatprep.subr.bf16.mxu0 0
    %6694 = vmatpush1.bf16.msra.mxu0 %v6460
    %6695 = vmatprep.subr.bf16.mxu0 0
    %6696 = vmatpush1.bf16.msra.mxu0 %v6461
    %6697 = vmatprep.subr.bf16.mxu0 0
    %6698 = vmatpush1.bf16.msra.mxu0 %v6462
    %6699 = vmatprep.subr.bf16.mxu0 0
    %6700 = vmatpush1.bf16.msra.mxu0 %v6463
    %6701 = vmatprep.subr.bf16.mxu0 0
    %6702 = vmatpush1.bf16.msra.mxu0 %v6464
    %6703 = vmatprep.subr.bf16.mxu0 0
    %6704 = vmatpush1.bf16.msra.mxu0 %v6465
    %6705 = vmatprep.subr.bf16.mxu0 0
    %6706 = vmatpush1.bf16.msra.mxu0 %v6466
    %6707 = vmatprep.subr.bf16.mxu0 0
    %6708 = vmatpush1.bf16.msra.mxu0 %v6467
    %6709 = vmatprep.mubr.bf16.mxu0 %v5935
    %6710 = vmatmul.mubr.bf16.gmra.mrb[0].mxu0 %v5934
    %v6711 = vpop.f32.mrb[0].mxu0
    %v6712 = vadd.f32 %v6615, %v6711
    %v6713 = vpop.f32.mrb[0].mxu0
    %v6714 = vpop.f32.mrb[0].mxu0
    %v6715 = vadd.f32 %v6618, %v6714
    %v6716 = vpop.f32.mrb[0].mxu0
    %6717 = vmatprep.mubr.bf16.mxu0 %v5944
    %6718 = vmatmul.mubr.bf16.gmra.mrb[0].mxu0 %v5943
    %v6719 = vpop.f32.mrb[0].mxu0
    %v6720 = vadd.f32 %v6623, %v6719
    %v6721 = vpop.f32.mrb[0].mxu0
    %v6722 = vpop.f32.mrb[0].mxu0
    %v6723 = vadd.f32 %v6626, %v6722
    %v6724 = vpop.f32.mrb[0].mxu0
    %6725 = vmatprep.mubr.bf16.mxu0 %v5953
    %6726 = vmatmul.mubr.bf16.gmra.mrb[0].mxu0 %v5952
    %v6727 = vpop.f32.mrb[0].mxu0
    %v6728 = vadd.f32 %v6631, %v6727
    %v6729 = vpop.f32.mrb[0].mxu0
    %v6730 = vpop.f32.mrb[0].mxu0
    %v6731 = vadd.f32 %v6634, %v6730
    %v6732 = vpop.f32.mrb[0].mxu0
    %6733 = vmatprep.mubr.bf16.mxu0 %v5962
    %6734 = vmatmul.mubr.bf16.gmra.mrb[0].mxu0 %v5961
    %v6735 = vpop.f32.mrb[0].mxu0
    %v6736 = vadd.f32 %v6639, %v6735
    %v6737 = vpop.f32.mrb[0].mxu0
    %v6738 = vpop.f32.mrb[0].mxu0
    %v6739 = vadd.f32 %v6642, %v6738
    %v6740 = vpop.f32.mrb[0].mxu0
    %6741 = vmatprep.mubr.bf16.mxu0 %v5971
    %6742 = vmatmul.mubr.bf16.gmra.mrb[0].mxu0 %v5970
    %v6743 = vpop.f32.mrb[0].mxu0
    %v6744 = vadd.f32 %v6647, %v6743
    %v6745 = vpop.f32.mrb[0].mxu0
    %v6746 = vpop.f32.mrb[0].mxu0
    %v6747 = vadd.f32 %v6650, %v6746
    %v6748 = vpop.f32.mrb[0].mxu0
    %6749 = vmatprep.mubr.bf16.mxu0 %v5980
    %6750 = vmatmul.mubr.bf16.gmra.mrb[0].mxu0 %v5979
    %v6751 = vpop.f32.mrb[0].mxu0
    %v6752 = vadd.f32 %v6655, %v6751
    %v6753 = vpop.f32.mrb[0].mxu0
    %v6754 = vpop.f32.mrb[0].mxu0
    %v6755 = vadd.f32 %v6658, %v6754
    %v6756 = vpop.f32.mrb[0].mxu0
    %6757 = vmatprep.mubr.bf16.mxu0 %v5989
    %6758 = vmatmul.mubr.bf16.gmra.mrb[0].mxu0 %v5988
    %v6759 = vpop.f32.mrb[0].mxu0
    %v6760 = vadd.f32 %v6663, %v6759
    %v6761 = vpop.f32.mrb[0].mxu0
    %v6762 = vpop.f32.mrb[0].mxu0
    %v6763 = vadd.f32 %v6666, %v6762
    %v6764 = vpop.f32.mrb[0].mxu0
    %6765 = vmatprep.mubr.bf16.mxu0 %v5998
    %6766 = vmatmul.mubr.bf16.gmra.mrb[0].mxu0 %v5997
    %v6767 = vpop.f32.mrb[0].mxu0
    %v6768 = vadd.f32 %v6671, %v6767
    %v6769 = vpop.f32.mrb[0].mxu0
    %v6770 = vpop.f32.mrb[0].mxu0
    %v6771 = vadd.f32 %v6674, %v6770
    %v6772 = vpop.f32.mrb[0].mxu0
    %6773 = vdwg.mxu0
    %6774 = vmatprep.subr.bf16.mxu0 0
    %6775 = vmatpush1.bf16.msra.mxu0 %v6468
    %6776 = vmatprep.subr.bf16.mxu0 0
    %6777 = vmatpush1.bf16.msra.mxu0 %v6469
    %6778 = vmatprep.subr.bf16.mxu0 0
    %6779 = vmatpush1.bf16.msra.mxu0 %v6470
    %6780 = vmatprep.subr.bf16.mxu0 0
    %6781 = vmatpush1.bf16.msra.mxu0 %v6471
    %6782 = vmatprep.subr.bf16.mxu0 0
    %6783 = vmatpush1.bf16.msra.mxu0 %v6472
    %6784 = vmatprep.subr.bf16.mxu0 0
    %6785 = vmatpush1.bf16.msra.mxu0 %v6473
    %6786 = vmatprep.subr.bf16.mxu0 0
    %6787 = vmatpush1.bf16.msra.mxu0 %v6474
    %6788 = vmatprep.subr.bf16.mxu0 0
    %6789 = vmatpush1.bf16.msra.mxu0 %v6475
    %6790 = vmatprep.subr.bf16.mxu0 0
    %6791 = vmatpush1.bf16.msra.mxu0 %v6476
    %6792 = vmatprep.subr.bf16.mxu0 0
    %6793 = vmatpush1.bf16.msra.mxu0 %v6477
    %6794 = vmatprep.subr.bf16.mxu0 0
    %6795 = vmatpush1.bf16.msra.mxu0 %v6478
    %6796 = vmatprep.subr.bf16.mxu0 0
    %6797 = vmatpush1.bf16.msra.mxu0 %v6479
    %6798 = vmatprep.subr.bf16.mxu0 0
    %6799 = vmatpush1.bf16.msra.mxu0 %v6480
    %6800 = vmatprep.subr.bf16.mxu0 0
    %6801 = vmatpush1.bf16.msra.mxu0 %v6481
    %6802 = vmatprep.subr.bf16.mxu0 0
    %6803 = vmatpush1.bf16.msra.mxu0 %v6482
    %6804 = vmatprep.subr.bf16.mxu0 0
    %6805 = vmatpush1.bf16.msra.mxu0 %v6483
    %6806 = vmatprep.mubr.bf16.mxu0 %v5937
    %6807 = vmatmul.mubr.bf16.gmra.mrb[0].mxu0 %v5936
    %v6808 = vpop.f32.mrb[0].mxu0
    %v6809 = vadd.f32 %v6712, %v6808
    %v6810 = vpop.f32.mrb[0].mxu0
    %v6811 = vpop.f32.mrb[0].mxu0
    %v6812 = vadd.f32 %v6715, %v6811
    %v6813 = vpop.f32.mrb[0].mxu0
    %6814 = vmatprep.mubr.bf16.mxu0 %v5946
    %6815 = vmatmul.mubr.bf16.gmra.mrb[0].mxu0 %v5945
    %v6816 = vpop.f32.mrb[0].mxu0
    %v6817 = vadd.f32 %v6720, %v6816
    %v6818 = vpop.f32.mrb[0].mxu0
    %v6819 = vpop.f32.mrb[0].mxu0
    %v6820 = vadd.f32 %v6723, %v6819
    %v6821 = vpop.f32.mrb[0].mxu0
    %6822 = vmatprep.mubr.bf16.mxu0 %v5955
    %6823 = vmatmul.mubr.bf16.gmra.mrb[0].mxu0 %v5954
    %v6824 = vpop.f32.mrb[0].mxu0
    %v6825 = vadd.f32 %v6728, %v6824
    %v6826 = vpop.f32.mrb[0].mxu0
    %v6827 = vpop.f32.mrb[0].mxu0
    %v6828 = vadd.f32 %v6731, %v6827
    %v6829 = vpop.f32.mrb[0].mxu0
    %6830 = vmatprep.mubr.bf16.mxu0 %v5964
    %6831 = vmatmul.mubr.bf16.gmra.mrb[0].mxu0 %v5963
    %v6832 = vpop.f32.mrb[0].mxu0
    %v6833 = vadd.f32 %v6736, %v6832
    %v6834 = vpop.f32.mrb[0].mxu0
    %v6835 = vpop.f32.mrb[0].mxu0
    %v6836 = vadd.f32 %v6739, %v6835
    %v6837 = vpop.f32.mrb[0].mxu0
    %6838 = vmatprep.mubr.bf16.mxu0 %v5973
    %6839 = vmatmul.mubr.bf16.gmra.mrb[0].mxu0 %v5972
    %v6840 = vpop.f32.mrb[0].mxu0
    %v6841 = vadd.f32 %v6744, %v6840
    %v6842 = vpop.f32.mrb[0].mxu0
    %v6843 = vpop.f32.mrb[0].mxu0
    %v6844 = vadd.f32 %v6747, %v6843
    %v6845 = vpop.f32.mrb[0].mxu0
    %6846 = vmatprep.mubr.bf16.mxu0 %v5982
    %6847 = vmatmul.mubr.bf16.gmra.mrb[0].mxu0 %v5981
    %v6848 = vpop.f32.mrb[0].mxu0
    %v6849 = vadd.f32 %v6752, %v6848
    %v6850 = vpop.f32.mrb[0].mxu0
    %v6851 = vpop.f32.mrb[0].mxu0
    %v6852 = vadd.f32 %v6755, %v6851
    %v6853 = vpop.f32.mrb[0].mxu0
    %6854 = vmatprep.mubr.bf16.mxu0 %v5991
    %6855 = vmatmul.mubr.bf16.gmra.mrb[0].mxu0 %v5990
    %v6856 = vpop.f32.mrb[0].mxu0
    %v6857 = vadd.f32 %v6760, %v6856
    %v6858 = vpop.f32.mrb[0].mxu0
    %v6859 = vpop.f32.mrb[0].mxu0
    %v6860 = vadd.f32 %v6763, %v6859
    %v6861 = vpop.f32.mrb[0].mxu0
    %6862 = vmatprep.mubr.bf16.mxu0 %v6000
    %6863 = vmatmul.mubr.bf16.gmra.mrb[0].mxu0 %v5999
    %v6864 = vpop.f32.mrb[0].mxu0
    %v6865 = vadd.f32 %v6768, %v6864
    %v6866 = vpop.f32.mrb[0].mxu0
    %v6867 = vpop.f32.mrb[0].mxu0
    %v6868 = vadd.f32 %v6771, %v6867
    %v6869 = vpop.f32.mrb[0].mxu0
    %6870 = vdwg.mxu0
    %6871 = vmatprep.subr.bf16.mxu0 0
    %6872 = vmatpush1.bf16.msra.mxu0 %v6484
    %6873 = vmatprep.subr.bf16.mxu0 0
    %6874 = vmatpush1.bf16.msra.mxu0 %v6485
    %6875 = vmatprep.subr.bf16.mxu0 0
    %6876 = vmatpush1.bf16.msra.mxu0 %v6486
    %6877 = vmatprep.subr.bf16.mxu0 0
    %6878 = vmatpush1.bf16.msra.mxu0 %v6487
    %6879 = vmatprep.subr.bf16.mxu0 0
    %6880 = vmatpush1.bf16.msra.mxu0 %v6488
    %6881 = vmatprep.subr.bf16.mxu0 0
    %6882 = vmatpush1.bf16.msra.mxu0 %v6489
    %6883 = vmatprep.subr.bf16.mxu0 0
    %6884 = vmatpush1.bf16.msra.mxu0 %v6490
    %6885 = vmatprep.subr.bf16.mxu0 0
    %6886 = vmatpush1.bf16.msra.mxu0 %v6491
    %6887 = vmatprep.subr.bf16.mxu0 0
    %6888 = vmatpush1.bf16.msra.mxu0 %v6492
    %6889 = vmatprep.subr.bf16.mxu0 0
    %6890 = vmatpush1.bf16.msra.mxu0 %v6493
    %6891 = vmatprep.subr.bf16.mxu0 0
    %6892 = vmatpush1.bf16.msra.mxu0 %v6494
    %6893 = vmatprep.subr.bf16.mxu0 0
    %6894 = vmatpush1.bf16.msra.mxu0 %v6495
    %6895 = vmatprep.subr.bf16.mxu0 0
    %6896 = vmatpush1.bf16.msra.mxu0 %v6496
    %6897 = vmatprep.subr.bf16.mxu0 0
    %6898 = vmatpush1.bf16.msra.mxu0 %v6497
    %6899 = vmatprep.subr.bf16.mxu0 0
    %6900 = vmatpush1.bf16.msra.mxu0 %v6498
    %6901 = vmatprep.subr.bf16.mxu0 0
    %6902 = vmatpush1.bf16.msra.mxu0 %v6499
    %6903 = vmatprep.mubr.bf16.mxu0 %v5939
    %6904 = vmatmul.mubr.bf16.gmra.mrb[0].mxu0 %v5938
    %v6905 = vpop.f32.mrb[0].mxu0
    %v6906 = vadd.f32 %v6809, %v6905
    %v6907 = vpop.f32.mrb[0].mxu0
    %v6908 = vpop.f32.mrb[0].mxu0
    %v6909 = vadd.f32 %v6812, %v6908
    %v6910 = vpop.f32.mrb[0].mxu0
    %6911 = vmatprep.mubr.bf16.mxu0 %v5948
    %6912 = vmatmul.mubr.bf16.gmra.mrb[0].mxu0 %v5947
    %v6913 = vpop.f32.mrb[0].mxu0
    %v6914 = vadd.f32 %v6817, %v6913
    %v6915 = vpop.f32.mrb[0].mxu0
    %v6916 = vpop.f32.mrb[0].mxu0
    %v6917 = vadd.f32 %v6820, %v6916
    %v6918 = vpop.f32.mrb[0].mxu0
    %6919 = vmatprep.mubr.bf16.mxu0 %v5957
    %6920 = vmatmul.mubr.bf16.gmra.mrb[0].mxu0 %v5956
    %v6921 = vpop.f32.mrb[0].mxu0
    %v6922 = vadd.f32 %v6825, %v6921
    %v6923 = vpop.f32.mrb[0].mxu0
    %v6924 = vpop.f32.mrb[0].mxu0
    %v6925 = vadd.f32 %v6828, %v6924
    %v6926 = vpop.f32.mrb[0].mxu0
    %6927 = vmatprep.mubr.bf16.mxu0 %v5966
    %6928 = vmatmul.mubr.bf16.gmra.mrb[0].mxu0 %v5965
    %v6929 = vpop.f32.mrb[0].mxu0
    %v6930 = vadd.f32 %v6833, %v6929
    %v6931 = vpop.f32.mrb[0].mxu0
    %v6932 = vpop.f32.mrb[0].mxu0
    %v6933 = vadd.f32 %v6836, %v6932
    %v6934 = vpop.f32.mrb[0].mxu0
    %6935 = vmatprep.mubr.bf16.mxu0 %v5975
    %6936 = vmatmul.mubr.bf16.gmra.mrb[0].mxu0 %v5974
    %v6937 = vpop.f32.mrb[0].mxu0
    %v6938 = vadd.f32 %v6841, %v6937
    %v6939 = vpop.f32.mrb[0].mxu0
    %v6940 = vpop.f32.mrb[0].mxu0
    %v6941 = vadd.f32 %v6844, %v6940
    %v6942 = vpop.f32.mrb[0].mxu0
    %6943 = vmatprep.mubr.bf16.mxu0 %v5984
    %6944 = vmatmul.mubr.bf16.gmra.mrb[0].mxu0 %v5983
    %v6945 = vpop.f32.mrb[0].mxu0
    %v6946 = vadd.f32 %v6849, %v6945
    %v6947 = vpop.f32.mrb[0].mxu0
    %v6948 = vpop.f32.mrb[0].mxu0
    %v6949 = vadd.f32 %v6852, %v6948
    %v6950 = vpop.f32.mrb[0].mxu0
    %6951 = vmatprep.mubr.bf16.mxu0 %v5993
    %6952 = vmatmul.mubr.bf16.gmra.mrb[0].mxu0 %v5992
    %v6953 = vpop.f32.mrb[0].mxu0
    %v6954 = vadd.f32 %v6857, %v6953
    %v6955 = vpop.f32.mrb[0].mxu0
    %v6956 = vpop.f32.mrb[0].mxu0
    %v6957 = vadd.f32 %v6860, %v6956
    %v6958 = vpop.f32.mrb[0].mxu0
    %6959 = vmatprep.mubr.bf16.mxu0 %v6002
    %6960 = vmatmul.mubr.bf16.gmra.mrb[0].mxu0 %v6001
    %v6961 = vpop.f32.mrb[0].mxu0
    %v6962 = vadd.f32 %v6865, %v6961
    %v6963 = vpop.f32.mrb[0].mxu0
    %v6964 = vpop.f32.mrb[0].mxu0
    %v6965 = vadd.f32 %v6868, %v6964
    %v6966 = vpop.f32.mrb[0].mxu0
    %6967 = vdwg.mxu0
    %6968 = vmatprep.subr.bf16.mxu0 0
    %6969 = vmatpush1.bf16.msra.mxu0 %v6500
    %6970 = vmatprep.subr.bf16.mxu0 0
    %6971 = vmatpush1.bf16.msra.mxu0 %v6501
    %6972 = vmatprep.subr.bf16.mxu0 0
    %6973 = vmatpush1.bf16.msra.mxu0 %v6502
    %6974 = vmatprep.subr.bf16.mxu0 0
    %6975 = vmatpush1.bf16.msra.mxu0 %v6503
    %6976 = vmatprep.subr.bf16.mxu0 0
    %6977 = vmatpush1.bf16.msra.mxu0 %v6504
    %6978 = vmatprep.subr.bf16.mxu0 0
    %6979 = vmatpush1.bf16.msra.mxu0 %v6505
    %6980 = vmatprep.subr.bf16.mxu0 0
    %6981 = vmatpush1.bf16.msra.mxu0 %v6506
    %6982 = vmatprep.subr.bf16.mxu0 0
    %6983 = vmatpush1.bf16.msra.mxu0 %v6507
    %6984 = vmatprep.subr.bf16.mxu0 0
    %6985 = vmatpush1.bf16.msra.mxu0 0
    %6986 = vmatprep.subr.bf16.mxu0 0
    %6987 = vmatpush1.bf16.msra.mxu0 0
    %6988 = vmatprep.subr.bf16.mxu0 0
    %6989 = vmatpush1.bf16.msra.mxu0 0
    %6990 = vmatprep.subr.bf16.mxu0 0
    %6991 = vmatpush1.bf16.msra.mxu0 0
    %6992 = vmatprep.subr.bf16.mxu0 0
    %6993 = vmatpush1.bf16.msra.mxu0 0
    %6994 = vmatprep.subr.bf16.mxu0 0
    %6995 = vmatpush1.bf16.msra.mxu0 0
    %6996 = vmatprep.subr.bf16.mxu0 0
    %6997 = vmatpush1.bf16.msra.mxu0 0
    %6998 = vmatprep.subr.bf16.mxu0 0
    %6999 = vmatpush1.bf16.msra.mxu0 0
    %7000 = vmatprep.mubr.bf16.mxu0 0
    %7001 = vmatmul.mubr.bf16.gmra.mrb[0].mxu0 %v5940
    %v7002 = vpop.f32.mrb[0].mxu0
    %v7003 = vadd.f32 %v6906, %v7002
    %v7004 = vpop.f32.mrb[0].mxu0
    %v7005 = vpop.f32.mrb[0].mxu0
    %v7006 = vadd.f32 %v6909, %v7005
    %v7007 = vpop.f32.mrb[0].mxu0
    %7008 = vmatprep.mubr.bf16.mxu0 0
    %7009 = vmatmul.mubr.bf16.gmra.mrb[0].mxu0 %v5949
    %v7010 = vpop.f32.mrb[0].mxu0
    %v7011 = vadd.f32 %v6914, %v7010
    %v7012 = vpop.f32.mrb[0].mxu0
    %v7013 = vpop.f32.mrb[0].mxu0
    %v7014 = vadd.f32 %v6917, %v7013
    %v7015 = vpop.f32.mrb[0].mxu0
    %7016 = vmatprep.mubr.bf16.mxu0 0
    %7017 = vmatmul.mubr.bf16.gmra.mrb[0].mxu0 %v5958
    %v7018 = vpop.f32.mrb[0].mxu0
    %v7019 = vadd.f32 %v6922, %v7018
    %v7020 = vpop.f32.mrb[0].mxu0
    %v7021 = vpop.f32.mrb[0].mxu0
    %v7022 = vadd.f32 %v6925, %v7021
    %v7023 = vpop.f32.mrb[0].mxu0
    %7024 = vmatprep.mubr.bf16.mxu0 0
    %7025 = vmatmul.mubr.bf16.gmra.mrb[0].mxu0 %v5967
    %v7026 = vpop.f32.mrb[0].mxu0
    %v7027 = vadd.f32 %v6930, %v7026
    %v7028 = vpop.f32.mrb[0].mxu0
    %v7029 = vpop.f32.mrb[0].mxu0
    %v7030 = vadd.f32 %v6933, %v7029
    %v7031 = vpop.f32.mrb[0].mxu0
    %7032 = vmatprep.mubr.bf16.mxu0 0
    %7033 = vmatmul.mubr.bf16.gmra.mrb[0].mxu0 %v5976
    %v7034 = vpop.f32.mrb[0].mxu0
    %v7035 = vadd.f32 %v6938, %v7034
    %v7036 = vpop.f32.mrb[0].mxu0
    %v7037 = vpop.f32.mrb[0].mxu0
    %v7038 = vadd.f32 %v6941, %v7037
    %v7039 = vpop.f32.mrb[0].mxu0
    %7040 = vmatprep.mubr.bf16.mxu0 0
    %7041 = vmatmul.mubr.bf16.gmra.mrb[0].mxu0 %v5985
    %v7042 = vpop.f32.mrb[0].mxu0
    %v7043 = vadd.f32 %v6946, %v7042
    %v7044 = vpop.f32.mrb[0].mxu0
    %v7045 = vpop.f32.mrb[0].mxu0
    %v7046 = vadd.f32 %v6949, %v7045
    %v7047 = vpop.f32.mrb[0].mxu0
    %7048 = vmatprep.mubr.bf16.mxu0 0
    %7049 = vmatmul.mubr.bf16.gmra.mrb[0].mxu0 %v5994
    %v7050 = vpop.f32.mrb[0].mxu0
    %v7051 = vadd.f32 %v6954, %v7050
    %v7052 = vpop.f32.mrb[0].mxu0
    %v7053 = vpop.f32.mrb[0].mxu0
    %v7054 = vadd.f32 %v6957, %v7053
    %v7055 = vpop.f32.mrb[0].mxu0
    %7056 = vmatprep.mubr.bf16.mxu0 0
    %7057 = vmatmul.mubr.bf16.gmra.mrb[0].mxu0 %v6003
    %v7058 = vpop.f32.mrb[0].mxu0
    %v7059 = vadd.f32 %v6962, %v7058
    %v7060 = vpop.f32.mrb[0].mxu0
    %v7061 = vpop.f32.mrb[0].mxu0
    %v7062 = vadd.f32 %v6965, %v7061
    %v7063 = vpop.f32.mrb[0].mxu0
    %7064 = vdwg.mxu0
    %v7065 = vld [vmem:[%s5] sm:$0x1]
    %v7067 = vlaneseq
    %v7068 = vshrl.u32 %v7067, 7
    %v7069 = vsub.s32 0, %v7068
    %v7070 = vrot.slane %v7065, %v7069
    %v7072 = vmul.f32 %v7003, %v7070
    %v7073 = vmul.f32 %v7006, %v7070
    %v7074 = vmul.f32 %v7011, %v7070
    %v7075 = vmul.f32 %v7014, %v7070
    %v7076 = vmul.f32 %v7019, %v7070
    %v7077 = vmul.f32 %v7022, %v7070
    %v7078 = vmul.f32 %v7027, %v7070
    %v7079 = vmul.f32 %v7030, %v7070
    %v7080 = vmul.f32 %v7035, %v7070
    %v7081 = vmul.f32 %v7038, %v7070
    %v7082 = vmul.f32 %v7043, %v7070
    %v7083 = vmul.f32 %v7046, %v7070
    %v7084 = vmul.f32 %v7051, %v7070
    %v7085 = vmul.f32 %v7054, %v7070
    %v7086 = vmul.f32 %v7059, %v7070
    %v7087 = vmul.f32 %v7062, %v7070
    %v7088 = vld [vmem:[%s6] sm:$0x1]
    %v7090 = vlaneseq
    %v7091 = vshrl.u32 %v7090, 7
    %v7092 = vsub.s32 0, %v7091
    %v7093 = vrot.slane %v7088, %v7092
    %v7095 = vadd.f32 %v7072, %v7093
    %v7096 = vadd.f32 %v7073, %v7093
    %v7097 = vadd.f32 %v7074, %v7093
    %v7098 = vadd.f32 %v7075, %v7093
    %v7099 = vadd.f32 %v7076, %v7093
    %v7100 = vadd.f32 %v7077, %v7093
    %v7101 = vadd.f32 %v7078, %v7093
    %v7102 = vadd.f32 %v7079, %v7093
    %v7103 = vadd.f32 %v7080, %v7093
    %v7104 = vadd.f32 %v7081, %v7093
    %v7105 = vadd.f32 %v7082, %v7093
    %v7106 = vadd.f32 %v7083, %v7093
    %v7107 = vadd.f32 %v7084, %v7093
    %v7108 = vadd.f32 %v7085, %v7093
    %v7109 = vadd.f32 %v7086, %v7093
    %v7110 = vadd.f32 %v7087, %v7093
    %vm7111 = vcmp.gt.f32.partialorder %v7095, 0.0
    %vm7112 = vcmp.gt.f32.partialorder %v7096, 0.0
    %vm7113 = vcmp.gt.f32.partialorder %v7097, 0.0
    %vm7114 = vcmp.gt.f32.partialorder %v7098, 0.0
    %vm7115 = vcmp.gt.f32.partialorder %v7099, 0.0
    %vm7116 = vcmp.gt.f32.partialorder %v7100, 0.0
    %vm7117 = vcmp.gt.f32.partialorder %v7101, 0.0
    %vm7118 = vcmp.gt.f32.partialorder %v7102, 0.0
    %vm7119 = vcmp.gt.f32.partialorder %v7103, 0.0
    %vm7120 = vcmp.gt.f32.partialorder %v7104, 0.0
    %vm7121 = vcmp.gt.f32.partialorder %v7105, 0.0
    %vm7122 = vcmp.gt.f32.partialorder %v7106, 0.0
    %vm7123 = vcmp.gt.f32.partialorder %v7107, 0.0
    %vm7124 = vcmp.gt.f32.partialorder %v7108, 0.0
    %vm7125 = vcmp.gt.f32.partialorder %v7109, 0.0
    %vm7126 = vcmp.gt.f32.partialorder %v7110, 0.0
    %v7127 = vmul.f32 %v7095, 0.1
    %v7128 = vmul.f32 %v7096, 0.1
    %v7129 = vmul.f32 %v7097, 0.1
    %v7130 = vmul.f32 %v7098, 0.1
    %v7131 = vmul.f32 %v7099, 0.1
    %v7132 = vmul.f32 %v7100, 0.1
    %v7133 = vmul.f32 %v7101, 0.1
    %v7134 = vmul.f32 %v7102, 0.1
    %v7135 = vmul.f32 %v7103, 0.1
    %v7136 = vmul.f32 %v7104, 0.1
    %v7137 = vmul.f32 %v7105, 0.1
    %v7138 = vmul.f32 %v7106, 0.1
    %v7139 = vmul.f32 %v7107, 0.1
    %v7140 = vmul.f32 %v7108, 0.1
    %v7141 = vmul.f32 %v7109, 0.1
    %v7142 = vmul.f32 %v7110, 0.1
    %v7143 = vsel %vm7111, %v7095, %v7127
    %v7144 = vsel %vm7112, %v7096, %v7128
    %v7145 = vsel %vm7113, %v7097, %v7129
    %v7146 = vsel %vm7114, %v7098, %v7130
    %v7147 = vsel %vm7115, %v7099, %v7131
    %v7148 = vsel %vm7116, %v7100, %v7132
    %v7149 = vsel %vm7117, %v7101, %v7133
    %v7150 = vsel %vm7118, %v7102, %v7134
    %v7151 = vsel %vm7119, %v7103, %v7135
    %v7152 = vsel %vm7120, %v7104, %v7136
    %v7153 = vsel %vm7121, %v7105, %v7137
    %v7154 = vsel %vm7122, %v7106, %v7138
    %v7155 = vsel %vm7123, %v7107, %v7139
    %v7156 = vsel %vm7124, %v7108, %v7140
    %v7157 = vsel %vm7125, %v7109, %v7141
    %v7158 = vsel %vm7126, %v7110, %v7142
    %v7159 = vpack.c.bf16 %v7144, %v7143
    %v7160 = vpack.c.bf16 %v7146, %v7145
    %v7161 = vpack.c.bf16 %v7148, %v7147
    %v7162 = vpack.c.bf16 %v7150, %v7149
    %v7163 = vpack.c.bf16 %v7152, %v7151
    %v7164 = vpack.c.bf16 %v7154, %v7153
    %v7165 = vpack.c.bf16 %v7156, %v7155
    %v7166 = vpack.c.bf16 %v7158, %v7157
    %vm7167 = vcmask 523264
    %7168 = vst.msk [vmem:[#allocation5] sm:$0xff] %vm7167, %v7159
    %7169 = vst.msk [vmem:[#allocation5 + $0x8] sm:$0xff] %vm7167, %v7160
    %7170 = vst.msk [vmem:[#allocation5 + $0x10] sm:$0xff] %vm7167, %v7161
    %7171 = vst.msk [vmem:[#allocation5 + $0x18] sm:$0xff] %vm7167, %v7162
    %7172 = vst.msk [vmem:[#allocation5 + $0x20] sm:$0xff] %vm7167, %v7163
    %7173 = vst.msk [vmem:[#allocation5 + $0x28] sm:$0xff] %vm7167, %v7164
    %7174 = vst.msk [vmem:[#allocation5 + $0x30] sm:$0xff] %vm7167, %v7165
    %7175 = vst.msk [vmem:[#allocation5 + $0x38] sm:$0xff] %vm7167, %v7166
    %7176 = vst.msk [vmem:[#allocation5 + $0x40] sm:$0xff] %vm7167, 0
    %v7177 = vld [vmem:[#allocation5] sm:$0xff]
    %v7178 = vld [vmem:[#allocation5 + $0x8] sm:$0xff]
    %v7179 = vld [vmem:[#allocation5 + $0x10] sm:$0xff]
    %v7180 = vld [vmem:[#allocation5 + $0x18] sm:$0xff]
    %v7181 = vld [vmem:[#allocation5 + $0x20] sm:$0xff]
    %v7182 = vld [vmem:[#allocation5 + $0x28] sm:$0xff]
    %v7183 = vld [vmem:[#allocation5 + $0x30] sm:$0xff]
    %v7184 = vld [vmem:[#allocation5 + $0x38] sm:$0xff]
    %v7185 = vld [vmem:[#allocation5 + $0x40] sm:$0x1]
    %v7187 = vshrl.u32 %v7177, 16
    %v7189 = vshll.u32 %v7177, 16
    %v7191 = vrot.slane %v7189, 1
    %v7192 = vor.u32 %v7187, %v7191
    %v7194 = vshll.u32 %v7178, 16
    %v7196 = vrot.slane %v7194, 1
    %v7197 = vsel %vm1551, %v7192, %v7196
    %v7198 = vshrl.u32 %v7178, 16
    %v7200 = vor.u32 %v7198, %v7196
    %v7202 = vshll.u32 %v7179, 16
    %v7204 = vrot.slane %v7202, 1
    %v7205 = vsel %vm1551, %v7200, %v7204
    %v7206 = vshrl.u32 %v7179, 16
    %v7208 = vor.u32 %v7206, %v7204
    %v7210 = vshll.u32 %v7180, 16
    %v7212 = vrot.slane %v7210, 1
    %v7213 = vsel %vm1551, %v7208, %v7212
    %v7214 = vshrl.u32 %v7180, 16
    %v7216 = vor.u32 %v7214, %v7212
    %v7218 = vshll.u32 %v7181, 16
    %v7220 = vrot.slane %v7218, 1
    %v7221 = vsel %vm1551, %v7216, %v7220
    %v7222 = vshrl.u32 %v7181, 16
    %v7224 = vor.u32 %v7222, %v7220
    %v7226 = vshll.u32 %v7182, 16
    %v7228 = vrot.slane %v7226, 1
    %v7229 = vsel %vm1551, %v7224, %v7228
    %v7230 = vshrl.u32 %v7182, 16
    %v7232 = vor.u32 %v7230, %v7228
    %v7234 = vshll.u32 %v7183, 16
    %v7236 = vrot.slane %v7234, 1
    %v7237 = vsel %vm1551, %v7232, %v7236
    %v7238 = vshrl.u32 %v7183, 16
    %v7240 = vor.u32 %v7238, %v7236
    %v7242 = vshll.u32 %v7184, 16
    %v7244 = vrot.slane %v7242, 1
    %v7245 = vsel %vm1551, %v7240, %v7244
    %v7246 = vshrl.u32 %v7184, 16
    %v7248 = vor.u32 %v7246, %v7244
    %v7250 = vshll.u32 %v7185, 16
    %v7252 = vrot.slane %v7250, 1
    %v7253 = vsel %vm1551, %v7248, %v7252
    %v7262 = vmax.bf16 %v7159, %v7197
    %v7263 = vmax.bf16 %v7160, %v7205
    %v7264 = vmax.bf16 %v7161, %v7213
    %v7265 = vmax.bf16 %v7162, %v7221
    %v7266 = vmax.bf16 %v7163, %v7229
    %v7267 = vmax.bf16 %v7164, %v7237
    %v7268 = vmax.bf16 %v7165, %v7245
    %v7269 = vmax.bf16 %v7166, %v7253
    %v7270 = vld [vmem:[#allocation5] sm:$0xf0]
    %v7271 = vld [vmem:[#allocation5 + $0x40] sm:$0xf]
    %v7272 = vld [vmem:[#allocation5 + $0x40] sm:$0x1f]
    %v7274 = vshrl.u32 %v7270, 16
    %v7276 = vshll.u32 %v7270, 16
    %v7278 = vrot.slane %v7276, 1
    %v7279 = vor.u32 %v7274, %v7278
    %v7280 = vsel %vm1551, %v7279, %v7196
    %v7282 = vshll.u32 %v7272, 16
    %v7284 = vrot.slane %v7282, 1
    %v7285 = vsel %vm1551, %v7248, %v7284
    %v7286 = vshrl.u32 %v7272, 16
    %v7288 = vor.u32 %v7286, %v7284
    %v7292 = vmax.bf16 %v7270, %v7280
    %v7293 = vmax.bf16 %v7178, %v7205
    %v7294 = vmax.bf16 %v7179, %v7213
    %v7295 = vmax.bf16 %v7180, %v7221
    %v7296 = vmax.bf16 %v7181, %v7229
    %v7297 = vmax.bf16 %v7182, %v7237
    %v7298 = vmax.bf16 %v7183, %v7245
    %v7299 = vmax.bf16 %v7184, %v7285
    %v7300 = vmax.bf16 %v7271, %v7288
    %v7310 = vrot.slane %v7292, 4
    %v7311 = vrot.slane %v7293, 4
    %v7312 = vsel %vm4137, %v7310, %v7311
    %v7313 = vrot.slane %v7294, 4
    %v7314 = vsel %vm4137, %v7311, %v7313
    %v7315 = vrot.slane %v7295, 4
    %v7316 = vsel %vm4137, %v7313, %v7315
    %v7317 = vrot.slane %v7296, 4
    %v7318 = vsel %vm4137, %v7315, %v7317
    %v7319 = vrot.slane %v7297, 4
    %v7320 = vsel %vm4137, %v7317, %v7319
    %v7321 = vrot.slane %v7298, 4
    %v7322 = vsel %vm4137, %v7319, %v7321
    %v7323 = vrot.slane %v7299, 4
    %v7324 = vsel %vm4137, %v7321, %v7323
    %v7325 = vrot.slane %v7300, 4
    %v7326 = vsel %vm4137, %v7323, %v7325
    %v7335 = vmax.bf16 %v7262, %v7312
    %v7336 = vmax.bf16 %v7263, %v7314
    %v7337 = vmax.bf16 %v7264, %v7316
    %v7338 = vmax.bf16 %v7265, %v7318
    %v7339 = vmax.bf16 %v7266, %v7320
    %v7340 = vmax.bf16 %v7267, %v7322
    %v7341 = vmax.bf16 %v7268, %v7324
    %v7342 = vmax.bf16 %v7269, %v7326
    %v7343 = vld [vmem:[%s11] sm:$0xf]
    %v7344 = vld [vmem:[%s11 + $0x4] sm:$0xf]
    %v7345 = vld [vmem:[%s11 + $0x8] sm:$0xf]
    %v7346 = vld [vmem:[%s11 + $0xc] sm:$0xf]
    %v7351 = vunpack.c.l.b16 %v7343
    %v7352 = vunpack.c.l.b16 %v7344
    %v7353 = vunpack.c.l.b16 %v7345
    %v7354 = vunpack.c.l.b16 %v7346
    %v7355 = vpack.c.b16 %v7352, %v7351
    %v7356 = vpack.c.b16 %v7354, %v7353
    %7359 = vmatprep.subr.bf16.mxu0 0
    %7360 = vmatpush1.bf16.msra.mxu0 %v7335
    %7361 = vmatprep.subr.bf16.mxu0 0
    %7362 = vmatpush1.bf16.msra.mxu0 %v7336
    %7363 = vmatprep.subr.bf16.mxu0 0
    %7364 = vmatpush1.bf16.msra.mxu0 %v7337
    %7365 = vmatprep.subr.bf16.mxu0 0
    %7366 = vmatpush1.bf16.msra.mxu0 %v7338
    %7367 = vmatprep.subr.bf16.mxu0 0
    %7368 = vmatpush1.bf16.msra.mxu0 %v7339
    %7369 = vmatprep.subr.bf16.mxu0 0
    %7370 = vmatpush1.bf16.msra.mxu0 %v7340
    %7371 = vmatprep.subr.bf16.mxu0 0
    %7372 = vmatpush1.bf16.msra.mxu0 %v7341
    %7373 = vmatprep.subr.bf16.mxu0 0
    %7374 = vmatpush1.bf16.msra.mxu0 %v7342
    %7375 = vmatprep.subr.bf16.mxu0 0
    %7376 = vmatpush1.bf16.msra.mxu0 0
    %7377 = vmatprep.subr.bf16.mxu0 0
    %7378 = vmatpush1.bf16.msra.mxu0 0
    %7379 = vmatprep.subr.bf16.mxu0 0
    %7380 = vmatpush1.bf16.msra.mxu0 0
    %7381 = vmatprep.subr.bf16.mxu0 0
    %7382 = vmatpush1.bf16.msra.mxu0 0
    %7383 = vmatprep.subr.bf16.mxu0 0
    %7384 = vmatpush1.bf16.msra.mxu0 0
    %7385 = vmatprep.subr.bf16.mxu0 0
    %7386 = vmatpush1.bf16.msra.mxu0 0
    %7387 = vmatprep.subr.bf16.mxu0 0
    %7388 = vmatpush1.bf16.msra.mxu0 0
    %7389 = vmatprep.subr.bf16.mxu0 0
    %7390 = vmatpush1.bf16.msra.mxu0 0
    %7391 = vmatprep.mubr.bf16.mxu0 0
    %7392 = vmatmul.mubr.bf16.gmra.mrb[0].mxu0 %v7355
    %v7393 = vpop.f32.mrb[0].mxu0
    %v7394 = vadd.f32 0.0, %v7393
    %v7395 = vpop.f32.mrb[0].mxu0
    %v7396 = vpop.f32.mrb[0].mxu0
    %v7397 = vadd.f32 0.0, %v7396
    %v7398 = vpop.f32.mrb[0].mxu0
    %7399 = vmatprep.mubr.bf16.mxu0 0
    %7400 = vmatmul.mubr.bf16.gmra.mrb[0].mxu0 %v7356
    %v7401 = vpop.f32.mrb[0].mxu0
    %v7402 = vadd.f32 0.0, %v7401
    %v7403 = vpop.f32.mrb[0].mxu0
    %v7404 = vpop.f32.mrb[0].mxu0
    %v7405 = vadd.f32 0.0, %v7404
    %v7406 = vpop.f32.mrb[0].mxu0
    %7407 = vdwg.mxu0
    %v7408 = vpack.c.bf16 %v7397, %v7394
    %v7409 = vpack.c.bf16 %v7405, %v7402
    %v7412 = vrot.slane %v7408, 4
    %v7413 = vrot.slane %v7409, 4
    %v7414 = vsel %vm4137, %v7412, %v7413
    %vm7418 = vcmask 523268
    %7419 = vst.msk [vmem:[#allocation6] sm:$0xf0] %vm7418, %v7412
    %7420 = vst.msk [vmem:[#allocation6 + $0x8] sm:$0xff] %vm7167, %v7414
    %vm7421 = vcmask 519168
    %7422 = vst.msk [vmem:[#allocation6 + $0x10] sm:$0xf] %vm7421, %v7413
    %v7423 = vshra.s32 %v3345, 2
    %v7424 = vshra.s32 %v3346, 2
    %v7425 = vshra.s32 %v3347, 2
    %v7426 = vshra.s32 %v3348, 2
    %v7427 = vand.u32 %v7423, 3
    %v7428 = vand.u32 %v7424, 3
    %v7429 = vand.u32 %v7425, 3
    %v7430 = vand.u32 %v7426, 3
    %v7431 = vand.u32 %v3345, 3
    %v7432 = vand.u32 %v3346, 3
    %v7433 = vand.u32 %v3347, 3
    %v7434 = vand.u32 %v3348, 3
    %vm7435 = vcmp.ge.s32.totalorder %v7427, 1
    %vm7436 = vcmp.ge.s32.totalorder %v7428, 1
    %vm7437 = vcmp.ge.s32.totalorder %v7429, 1
    %vm7438 = vcmp.ge.s32.totalorder %v7430, 1
    %vm7439 = vcmp.le.s32.totalorder %v7427, 4
    %vm7440 = vcmp.le.s32.totalorder %v7428, 4
    %vm7441 = vcmp.le.s32.totalorder %v7429, 4
    %vm7442 = vcmp.le.s32.totalorder %v7430, 4
    %vm7443 = vmand %vm7435, %vm7439
    %vm7444 = vmand %vm7436, %vm7440
    %vm7445 = vmand %vm7437, %vm7441
    %vm7446 = vmand %vm7438, %vm7442
    %vm7447 = vcmp.ge.s32.totalorder %v7427, 0
    %vm7448 = vcmp.ge.s32.totalorder %v7428, 0
    %vm7449 = vcmp.ge.s32.totalorder %v7429, 0
    %vm7450 = vcmp.ge.s32.totalorder %v7430, 0
    %vm7451 = vcmp.le.s32.totalorder %v7427, 3
    %vm7452 = vcmp.le.s32.totalorder %v7428, 3
    %vm7453 = vcmp.le.s32.totalorder %v7429, 3
    %vm7454 = vcmp.le.s32.totalorder %v7430, 3
    %vm7455 = vmand %vm7447, %vm7451
    %vm7456 = vmand %vm7448, %vm7452
    %vm7457 = vmand %vm7449, %vm7453
    %vm7458 = vmand %vm7450, %vm7454
    %vm7459 = vcmp.ge.s32.totalorder %v7427, 4294967295
    %vm7460 = vcmp.ge.s32.totalorder %v7428, 4294967295
    %vm7461 = vcmp.ge.s32.totalorder %v7429, 4294967295
    %vm7462 = vcmp.ge.s32.totalorder %v7430, 4294967295
    %vm7463 = vcmp.le.s32.totalorder %v7427, 2
    %vm7464 = vcmp.le.s32.totalorder %v7428, 2
    %vm7465 = vcmp.le.s32.totalorder %v7429, 2
    %vm7466 = vcmp.le.s32.totalorder %v7430, 2
    %vm7467 = vmand %vm7459, %vm7463
    %vm7468 = vmand %vm7460, %vm7464
    %vm7469 = vmand %vm7461, %vm7465
    %vm7470 = vmand %vm7462, %vm7466
    %vm7471 = vcmp.ge.s32.totalorder %v7431, 1
    %vm7472 = vcmp.ge.s32.totalorder %v7432, 1
    %vm7473 = vcmp.ge.s32.totalorder %v7433, 1
    %vm7474 = vcmp.ge.s32.totalorder %v7434, 1
    %vm7475 = vcmp.le.s32.totalorder %v7431, 4
    %vm7476 = vcmp.le.s32.totalorder %v7432, 4
    %vm7477 = vcmp.le.s32.totalorder %v7433, 4
    %vm7478 = vcmp.le.s32.totalorder %v7434, 4
    %vm7479 = vmand %vm7471, %vm7475
    %vm7480 = vmand %vm7472, %vm7476
    %vm7481 = vmand %vm7473, %vm7477
    %vm7482 = vmand %vm7474, %vm7478
    %vm7483 = vcmp.ge.s32.totalorder %v7431, 0
    %vm7484 = vcmp.ge.s32.totalorder %v7432, 0
    %vm7485 = vcmp.ge.s32.totalorder %v7433, 0
    %vm7486 = vcmp.ge.s32.totalorder %v7434, 0
    %vm7487 = vcmp.le.s32.totalorder %v7431, 3
    %vm7488 = vcmp.le.s32.totalorder %v7432, 3
    %vm7489 = vcmp.le.s32.totalorder %v7433, 3
    %vm7490 = vcmp.le.s32.totalorder %v7434, 3
    %vm7491 = vmand %vm7483, %vm7487
    %vm7492 = vmand %vm7484, %vm7488
    %vm7493 = vmand %vm7485, %vm7489
    %vm7494 = vmand %vm7486, %vm7490
    %vm7495 = vcmp.ge.s32.totalorder %v7431, 4294967295
    %vm7496 = vcmp.ge.s32.totalorder %v7432, 4294967295
    %vm7497 = vcmp.ge.s32.totalorder %v7433, 4294967295
    %vm7498 = vcmp.ge.s32.totalorder %v7434, 4294967295
    %vm7499 = vcmp.le.s32.totalorder %v7431, 2
    %vm7500 = vcmp.le.s32.totalorder %v7432, 2
    %vm7501 = vcmp.le.s32.totalorder %v7433, 2
    %vm7502 = vcmp.le.s32.totalorder %v7434, 2
    %vm7503 = vmand %vm7495, %vm7499
    %vm7504 = vmand %vm7496, %vm7500
    %vm7505 = vmand %vm7497, %vm7501
    %vm7506 = vmand %vm7498, %vm7502
    %v7507 = vld [vmem:[#allocation6] sm:$0xfe]
    %v7508 = vld [vmem:[#allocation6 + $0x8] sm:$0xff]
    %v7509 = vld [vmem:[#allocation6 + $0x10] sm:$0x3]
    %vm7510 = vmand %vm7443, %vm7479
    %vm7511 = vmand %vm7444, %vm7480
    %vm7512 = vmand %vm7445, %vm7481
    %vm7513 = vmand %vm7446, %vm7482
    %v7514 = vsel %vm7510, 1, 0
    %v7515 = vsel %vm7511, 1, 0
    %v7516 = vsel %vm7512, 1, 0
    %v7517 = vsel %vm7513, 1, 0
    %vm7518 = vcmp.eq.s32.totalorder %v7514, 1
    %vm7519 = vcmp.eq.s32.totalorder %v7515, 1
    %vm7520 = vcmp.eq.s32.totalorder %v7516, 1
    %vm7521 = vcmp.eq.s32.totalorder %v7517, 1
    %vm7522 = vmpackc.low %vm7518, %vm7518
    %vm7523 = vmpackc.low %vm7519, %vm7519
    %vm7524 = vmpackc.low %vm7520, %vm7520
    %vm7525 = vmpackc.low %vm7521, %vm7521
    %v7526 = vsel %vm7522, 65537, 0
    %v7527 = vsel %vm7523, 65537, 0
    %v7528 = vsel %vm7524, 65537, 0
    %v7529 = vsel %vm7525, 65537, 0
    %v7530 = vunpack.c.l.b16 %v7526
    %v7531 = vunpack.c.l.b16 %v7527
    %v7532 = vunpack.c.l.b16 %v7528
    %v7533 = vunpack.c.l.b16 %v7529
    %v7534 = vpack.c.b16 %v7531, %v7530
    %v7535 = vpack.c.b16 %v7533, %v7532
    %vm7536 = vsmask.f32 1280
    %v7538 = vshrl.u32 %v7534, 16
    %v7540 = vrot.slane %v7538, 6
    %v7541 = vshll.u32 %v7534, 16
    %v7543 = vrot.slane %v7541, 7
    %v7544 = vor.u32 %v7540, %v7543
    %v7546 = vshrl.u32 %v7535, 16
    %v7548 = vrot.slane %v7546, 6
    %v7549 = vshll.u32 %v7535, 16
    %v7551 = vrot.slane %v7549, 7
    %v7552 = vor.u32 %v7548, %v7551
    %v7553 = vsel %vm7536, %v7544, %v7552
    %vm7554 = vcmp.ne.s16.totalorder %v7544, 0
    %vm7555 = vcmp.ne.s16.totalorder %v7553, 0
    %vm7556 = vcmp.ne.s16.totalorder %v7552, 0
    %v7557 = vsel %vm7554, %v7507, 0
    %v7558 = vsel %vm7555, %v7508, 0
    %v7559 = vsel %vm7556, %v7509, 0
    %vm7560 = vsmask.f32 6400
    %v7562 = vshrl.u32 %v7557, 16
    %v7564 = vrot.slane %v7562, 1
    %v7565 = vshll.u32 %v7557, 16
    %v7567 = vrot.slane %v7565, 2
    %v7568 = vor.u32 %v7564, %v7567
    %v7570 = vshrl.u32 %v7558, 16
    %v7572 = vrot.slane %v7570, 1
    %v7573 = vshll.u32 %v7558, 16
    %v7575 = vrot.slane %v7573, 2
    %v7576 = vor.u32 %v7572, %v7575
    %v7577 = vsel %vm7560, %v7568, %v7576
    %v7579 = vshrl.u32 %v7559, 16
    %v7581 = vrot.slane %v7579, 1
    %v7582 = vshll.u32 %v7559, 16
    %v7584 = vrot.slane %v7582, 2
    %v7585 = vor.u32 %v7581, %v7584
    %v7586 = vsel %vm7560, %v7576, %v7585
    %7589 = vst.msk [vmem:[#allocation7] sm:$0xff] %vm7167, %v7577
    %7590 = vst.msk [vmem:[#allocation7 + $0x28] sm:$0xff] %vm7167, %v7586
    %v7591 = vld [vmem:[#allocation6] sm:$0xfc]
    %v7592 = vld [vmem:[#allocation6 + $0x8] sm:$0xff]
    %v7593 = vld [vmem:[#allocation6 + $0x10] sm:$0x3]
    %vm7594 = vmand %vm7443, %vm7491
    %vm7595 = vmand %vm7444, %vm7492
    %vm7596 = vmand %vm7445, %vm7493
    %vm7597 = vmand %vm7446, %vm7494
    %v7598 = vsel %vm7594, 1, 0
    %v7599 = vsel %vm7595, 1, 0
    %v7600 = vsel %vm7596, 1, 0
    %v7601 = vsel %vm7597, 1, 0
    %vm7602 = vcmp.eq.s32.totalorder %v7598, 1
    %vm7603 = vcmp.eq.s32.totalorder %v7599, 1
    %vm7604 = vcmp.eq.s32.totalorder %v7600, 1
    %vm7605 = vcmp.eq.s32.totalorder %v7601, 1
    %vm7606 = vmpackc.low %vm7602, %vm7602
    %vm7607 = vmpackc.low %vm7603, %vm7603
    %vm7608 = vmpackc.low %vm7604, %vm7604
    %vm7609 = vmpackc.low %vm7605, %vm7605
    %v7610 = vsel %vm7606, 65537, 0
    %v7611 = vsel %vm7607, 65537, 0
    %v7612 = vsel %vm7608, 65537, 0
    %v7613 = vsel %vm7609, 65537, 0
    %v7614 = vunpack.c.l.b16 %v7610
    %v7615 = vunpack.c.l.b16 %v7611
    %v7616 = vunpack.c.l.b16 %v7612
    %v7617 = vunpack.c.l.b16 %v7613
    %v7618 = vpack.c.b16 %v7615, %v7614
    %v7619 = vpack.c.b16 %v7617, %v7616
    %vm7620 = vcmask 1041408
    %v7621 = vrot.slane %v7618, 6
    %v7622 = vrot.slane %v7619, 6
    %v7623 = vsel %vm7620, %v7621, %v7622
    %vm7624 = vcmp.ne.s16.totalorder %v7621, 0
    %vm7625 = vcmp.ne.s16.totalorder %v7623, 0
    %vm7626 = vcmp.ne.s16.totalorder %v7622, 0
    %v7627 = vsel %vm7624, %v7591, 0
    %v7628 = vsel %vm7625, %v7592, 0
    %v7629 = vsel %vm7626, %v7593, 0
    %vm7633 = vcmask 1045504
    %v7634 = vrot.slane %v7627, 2
    %v7635 = vrot.slane %v7628, 2
    %v7636 = vsel %vm7633, %v7634, %v7635
    %v7637 = vrot.slane %v7629, 2
    %v7638 = vsel %vm7633, %v7635, %v7637
    %7639 = vrot.lane.b32.xlu0 %v7636, 64
    %v7640 = vpop.permute.xlu0 %7639
    %7641 = vrot.lane.b32.xlu0 %v7638, 64
    %v7642 = vpop.permute.xlu0 %7641
    %vm7645 = vcmask 1048064
    %7646 = vst.msk [vmem:[#allocation7] sm:$0xff] %vm7645, %v7640
    %7647 = vst.msk [vmem:[#allocation7 + $0x28] sm:$0xff] %vm7645, %v7642
    %v7648 = vld [vmem:[#allocation6] sm:$0xfc]
    %v7649 = vld [vmem:[#allocation6 + $0x8] sm:$0xff]
    %v7650 = vld [vmem:[#allocation6 + $0x10] sm:$0x7]
    %vm7651 = vmand %vm7443, %vm7503
    %vm7652 = vmand %vm7444, %vm7504
    %vm7653 = vmand %vm7445, %vm7505
    %vm7654 = vmand %vm7446, %vm7506
    %v7655 = vsel %vm7651, 1, 0
    %v7656 = vsel %vm7652, 1, 0
    %v7657 = vsel %vm7653, 1, 0
    %v7658 = vsel %vm7654, 1, 0
    %vm7659 = vcmp.eq.s32.totalorder %v7655, 1
    %vm7660 = vcmp.eq.s32.totalorder %v7656, 1
    %vm7661 = vcmp.eq.s32.totalorder %v7657, 1
    %vm7662 = vcmp.eq.s32.totalorder %v7658, 1
    %vm7663 = vmpackc.low %vm7659, %vm7659
    %vm7664 = vmpackc.low %vm7660, %vm7660
    %vm7665 = vmpackc.low %vm7661, %vm7661
    %vm7666 = vmpackc.low %vm7662, %vm7662
    %v7667 = vsel %vm7663, 65537, 0
    %v7668 = vsel %vm7664, 65537, 0
    %v7669 = vsel %vm7665, 65537, 0
    %v7670 = vsel %vm7666, 65537, 0
    %v7671 = vunpack.c.l.b16 %v7667
    %v7672 = vunpack.c.l.b16 %v7668
    %v7673 = vunpack.c.l.b16 %v7669
    %v7674 = vunpack.c.l.b16 %v7670
    %v7675 = vpack.c.b16 %v7672, %v7671
    %v7676 = vpack.c.b16 %v7674, %v7673
    %vm7677 = vsmask.f32 2304
    %v7679 = vshrl.u32 %v7675, 16
    %v7681 = vrot.slane %v7679, 5
    %v7682 = vshll.u32 %v7675, 16
    %v7684 = vrot.slane %v7682, 6
    %v7685 = vor.u32 %v7681, %v7684
    %v7687 = vshrl.u32 %v7676, 16
    %v7689 = vrot.slane %v7687, 5
    %v7690 = vshll.u32 %v7676, 16
    %v7692 = vrot.slane %v7690, 6
    %v7693 = vor.u32 %v7689, %v7692
    %v7694 = vsel %vm7677, %v7685, %v7693
    %vm7695 = vcmp.ne.s16.totalorder %v7685, 0
    %vm7696 = vcmp.ne.s16.totalorder %v7694, 0
    %vm7697 = vcmp.ne.s16.totalorder %v7693, 0
    %v7698 = vsel %vm7695, %v7648, 0
    %v7699 = vsel %vm7696, %v7649, 0
    %v7700 = vsel %vm7697, %v7650, 0
    %vm7701 = vsmask.f32 5376
    %v7703 = vshrl.u32 %v7698, 16
    %v7705 = vrot.slane %v7703, 2
    %v7706 = vshll.u32 %v7698, 16
    %v7708 = vrot.slane %v7706, 3
    %v7709 = vor.u32 %v7705, %v7708
    %v7711 = vshrl.u32 %v7699, 16
    %v7713 = vrot.slane %v7711, 2
    %v7714 = vshll.u32 %v7699, 16
    %v7716 = vrot.slane %v7714, 3
    %v7717 = vor.u32 %v7713, %v7716
    %v7718 = vsel %vm7701, %v7709, %v7717
    %v7720 = vshrl.u32 %v7700, 16
    %v7722 = vrot.slane %v7720, 2
    %v7723 = vshll.u32 %v7700, 16
    %v7725 = vrot.slane %v7723, 3
    %v7726 = vor.u32 %v7722, %v7725
    %v7727 = vsel %vm7701, %v7717, %v7726
    %7730 = vst.msk [vmem:[#allocation7 + $0x8] sm:$0xff] %vm7167, %v7718
    %7731 = vst.msk [vmem:[#allocation7 + $0x30] sm:$0xff] %vm7167, %v7727
    %v7732 = vld [vmem:[#allocation6] sm:$0xf8]
    %v7733 = vld [vmem:[#allocation6 + $0x8] sm:$0xff]
    %v7734 = vld [vmem:[#allocation6 + $0x10] sm:$0xf]
    %vm7735 = vmand %vm7455, %vm7479
    %vm7736 = vmand %vm7456, %vm7480
    %vm7737 = vmand %vm7457, %vm7481
    %vm7738 = vmand %vm7458, %vm7482
    %v7739 = vsel %vm7735, 1, 0
    %v7740 = vsel %vm7736, 1, 0
    %v7741 = vsel %vm7737, 1, 0
    %v7742 = vsel %vm7738, 1, 0
    %vm7743 = vcmp.eq.s32.totalorder %v7739, 1
    %vm7744 = vcmp.eq.s32.totalorder %v7740, 1
    %vm7745 = vcmp.eq.s32.totalorder %v7741, 1
    %vm7746 = vcmp.eq.s32.totalorder %v7742, 1
    %vm7747 = vmpackc.low %vm7743, %vm7743
    %vm7748 = vmpackc.low %vm7744, %vm7744
    %vm7749 = vmpackc.low %vm7745, %vm7745
    %vm7750 = vmpackc.low %vm7746, %vm7746
    %v7751 = vsel %vm7747, 65537, 0
    %v7752 = vsel %vm7748, 65537, 0
    %v7753 = vsel %vm7749, 65537, 0
    %v7754 = vsel %vm7750, 65537, 0
    %v7755 = vunpack.c.l.b16 %v7751
    %v7756 = vunpack.c.l.b16 %v7752
    %v7757 = vunpack.c.l.b16 %v7753
    %v7758 = vunpack.c.l.b16 %v7754
    %v7759 = vpack.c.b16 %v7756, %v7755
    %v7760 = vpack.c.b16 %v7758, %v7757
    %v7762 = vshrl.u32 %v7759, 16
    %v7764 = vrot.slane %v7762, 4
    %v7765 = vshll.u32 %v7759, 16
    %v7767 = vrot.slane %v7765, 5
    %v7768 = vor.u32 %v7764, %v7767
    %v7770 = vshrl.u32 %v7760, 16
    %v7772 = vrot.slane %v7770, 4
    %v7773 = vshll.u32 %v7760, 16
    %v7775 = vrot.slane %v7773, 5
    %v7776 = vor.u32 %v7772, %v7775
    %v7777 = vsel %vm1943, %v7768, %v7776
    %vm7778 = vcmp.ne.s16.totalorder %v7768, 0
    %vm7779 = vcmp.ne.s16.totalorder %v7777, 0
    %vm7780 = vcmp.ne.s16.totalorder %v7776, 0
    %v7781 = vsel %vm7778, %v7732, 0
    %v7782 = vsel %vm7779, %v7733, 0
    %v7783 = vsel %vm7780, %v7734, 0
    %v7785 = vshrl.u32 %v7781, 16
    %v7787 = vrot.slane %v7785, 3
    %v7788 = vshll.u32 %v7781, 16
    %v7790 = vrot.slane %v7788, 4
    %v7791 = vor.u32 %v7787, %v7790
    %v7793 = vshrl.u32 %v7782, 16
    %v7795 = vrot.slane %v7793, 3
    %v7796 = vshll.u32 %v7782, 16
    %v7798 = vrot.slane %v7796, 4
    %v7799 = vor.u32 %v7795, %v7798
    %v7800 = vsel %vm3899, %v7791, %v7799
    %v7802 = vshrl.u32 %v7783, 16
    %v7804 = vrot.slane %v7802, 3
    %v7805 = vshll.u32 %v7783, 16
    %v7807 = vrot.slane %v7805, 4
    %v7808 = vor.u32 %v7804, %v7807
    %v7809 = vsel %vm3899, %v7799, %v7808
    %7810 = vrot.lane.b32.xlu0 %v7800, 64
    %v7811 = vpop.permute.xlu0 %7810
    %7812 = vrot.lane.b32.xlu0 %v7809, 64
    %v7813 = vpop.permute.xlu0 %7812
    %7816 = vst.msk [vmem:[#allocation7 + $0x8] sm:$0xff] %vm7645, %v7811
    %7817 = vst.msk [vmem:[#allocation7 + $0x30] sm:$0xff] %vm7645, %v7813
    %v7818 = vld [vmem:[#allocation6] sm:$0xf0]
    %v7819 = vld [vmem:[#allocation6 + $0x8] sm:$0xff]
    %v7820 = vld [vmem:[#allocation6 + $0x10] sm:$0xf]
    %vm7821 = vmand %vm7455, %vm7491
    %vm7822 = vmand %vm7456, %vm7492
    %vm7823 = vmand %vm7457, %vm7493
    %vm7824 = vmand %vm7458, %vm7494
    %v7825 = vsel %vm7821, 1, 0
    %v7826 = vsel %vm7822, 1, 0
    %v7827 = vsel %vm7823, 1, 0
    %v7828 = vsel %vm7824, 1, 0
    %vm7829 = vcmp.eq.s32.totalorder %v7825, 1
    %vm7830 = vcmp.eq.s32.totalorder %v7826, 1
    %vm7831 = vcmp.eq.s32.totalorder %v7827, 1
    %vm7832 = vcmp.eq.s32.totalorder %v7828, 1
    %vm7833 = vmpackc.low %vm7829, %vm7829
    %vm7834 = vmpackc.low %vm7830, %vm7830
    %vm7835 = vmpackc.low %vm7831, %vm7831
    %vm7836 = vmpackc.low %vm7832, %vm7832
    %v7837 = vsel %vm7833, 65537, 0
    %v7838 = vsel %vm7834, 65537, 0
    %v7839 = vsel %vm7835, 65537, 0
    %v7840 = vsel %vm7836, 65537, 0
    %v7841 = vunpack.c.l.b16 %v7837
    %v7842 = vunpack.c.l.b16 %v7838
    %v7843 = vunpack.c.l.b16 %v7839
    %v7844 = vunpack.c.l.b16 %v7840
    %v7845 = vpack.c.b16 %v7841, %v7841
    %v7846 = vpack.c.b16 %v7843, %v7842
    %v7847 = vpack.c.b16 %v7844, %v7844
    %vm7848 = vcmp.ne.s16.totalorder %v7845, 0
    %vm7849 = vcmp.ne.s16.totalorder %v7846, 0
    %vm7850 = vcmp.ne.s16.totalorder %v7847, 0
    %v7851 = vsel %vm7848, %v7818, 0
    %v7852 = vsel %vm7849, %v7819, 0
    %v7853 = vsel %vm7850, %v7820, 0
    %v7857 = vrot.slane %v7851, 4
    %v7858 = vrot.slane %v7852, 4
    %v7859 = vsel %vm4137, %v7857, %v7858
    %v7860 = vrot.slane %v7853, 4
    %v7861 = vsel %vm4137, %v7858, %v7860
    %7864 = vst.msk [vmem:[#allocation7 + $0x10] sm:$0xff] %vm7167, %v7859
    %7865 = vst.msk [vmem:[#allocation7 + $0x38] sm:$0xff] %vm7167, %v7861
    %v7866 = vld [vmem:[#allocation6] sm:$0xf0]
    %v7867 = vld [vmem:[#allocation6 + $0x8] sm:$0xff]
    %v7868 = vld [vmem:[#allocation6 + $0x10] sm:$0x1f]
    %vm7869 = vmand %vm7455, %vm7503
    %vm7870 = vmand %vm7456, %vm7504
    %vm7871 = vmand %vm7457, %vm7505
    %vm7872 = vmand %vm7458, %vm7506
    %v7873 = vsel %vm7869, 1, 0
    %v7874 = vsel %vm7870, 1, 0
    %v7875 = vsel %vm7871, 1, 0
    %v7876 = vsel %vm7872, 1, 0
    %vm7877 = vcmp.eq.s32.totalorder %v7873, 1
    %vm7878 = vcmp.eq.s32.totalorder %v7874, 1
    %vm7879 = vcmp.eq.s32.totalorder %v7875, 1
    %vm7880 = vcmp.eq.s32.totalorder %v7876, 1
    %vm7881 = vmpackc.low %vm7877, %vm7877
    %vm7882 = vmpackc.low %vm7878, %vm7878
    %vm7883 = vmpackc.low %vm7879, %vm7879
    %vm7884 = vmpackc.low %vm7880, %vm7880
    %v7885 = vsel %vm7881, 65537, 0
    %v7886 = vsel %vm7882, 65537, 0
    %v7887 = vsel %vm7883, 65537, 0
    %v7888 = vsel %vm7884, 65537, 0
    %v7889 = vunpack.c.l.b16 %v7885
    %v7890 = vunpack.c.l.b16 %v7886
    %v7891 = vunpack.c.l.b16 %v7887
    %v7892 = vunpack.c.l.b16 %v7888
    %v7893 = vpack.c.b16 %v7890, %v7889
    %v7894 = vpack.c.b16 %v7892, %v7891
    %v7896 = vshrl.u32 %v7893, 16
    %v7898 = vrot.slane %v7896, 3
    %v7899 = vshll.u32 %v7893, 16
    %v7901 = vrot.slane %v7899, 4
    %v7902 = vor.u32 %v7898, %v7901
    %v7904 = vshrl.u32 %v7894, 16
    %v7906 = vrot.slane %v7904, 3
    %v7907 = vshll.u32 %v7894, 16
    %v7909 = vrot.slane %v7907, 4
    %v7910 = vor.u32 %v7906, %v7909
    %v7911 = vsel %vm3899, %v7902, %v7910
    %vm7912 = vcmp.ne.s16.totalorder %v7902, 0
    %vm7913 = vcmp.ne.s16.totalorder %v7911, 0
    %vm7914 = vcmp.ne.s16.totalorder %v7910, 0
    %v7915 = vsel %vm7912, %v7866, 0
    %v7916 = vsel %vm7913, %v7867, 0
    %v7917 = vsel %vm7914, %v7868, 0
    %v7919 = vshrl.u32 %v7915, 16
    %v7921 = vrot.slane %v7919, 4
    %v7922 = vshll.u32 %v7915, 16
    %v7924 = vrot.slane %v7922, 5
    %v7925 = vor.u32 %v7921, %v7924
    %v7927 = vshrl.u32 %v7916, 16
    %v7929 = vrot.slane %v7927, 4
    %v7930 = vshll.u32 %v7916, 16
    %v7932 = vrot.slane %v7930, 5
    %v7933 = vor.u32 %v7929, %v7932
    %v7934 = vsel %vm1943, %v7925, %v7933
    %v7936 = vshrl.u32 %v7917, 16
    %v7938 = vrot.slane %v7936, 4
    %v7939 = vshll.u32 %v7917, 16
    %v7941 = vrot.slane %v7939, 5
    %v7942 = vor.u32 %v7938, %v7941
    %v7943 = vsel %vm1943, %v7933, %v7942
    %7944 = vrot.lane.b32.xlu0 %v7934, 64
    %v7945 = vpop.permute.xlu0 %7944
    %7946 = vrot.lane.b32.xlu0 %v7943, 64
    %v7947 = vpop.permute.xlu0 %7946
    %7950 = vst.msk [vmem:[#allocation7 + $0x10] sm:$0xff] %vm7645, %v7945
    %7951 = vst.msk [vmem:[#allocation7 + $0x38] sm:$0xff] %vm7645, %v7947
    %v7952 = vld [vmem:[#allocation6] sm:$0xe0]
    %v7953 = vld [vmem:[#allocation6 + $0x8] sm:$0xff]
    %v7954 = vld [vmem:[#allocation6 + $0x10] sm:$0x3f]
    %vm7955 = vmand %vm7467, %vm7479
    %vm7956 = vmand %vm7468, %vm7480
    %vm7957 = vmand %vm7469, %vm7481
    %vm7958 = vmand %vm7470, %vm7482
    %v7959 = vsel %vm7955, 1, 0
    %v7960 = vsel %vm7956, 1, 0
    %v7961 = vsel %vm7957, 1, 0
    %v7962 = vsel %vm7958, 1, 0
    %vm7963 = vcmp.eq.s32.totalorder %v7959, 1
    %vm7964 = vcmp.eq.s32.totalorder %v7960, 1
    %vm7965 = vcmp.eq.s32.totalorder %v7961, 1
    %vm7966 = vcmp.eq.s32.totalorder %v7962, 1
    %vm7967 = vmpackc.low %vm7963, %vm7963
    %vm7968 = vmpackc.low %vm7964, %vm7964
    %vm7969 = vmpackc.low %vm7965, %vm7965
    %vm7970 = vmpackc.low %vm7966, %vm7966
    %v7971 = vsel %vm7967, 65537, 0
    %v7972 = vsel %vm7968, 65537, 0
    %v7973 = vsel %vm7969, 65537, 0
    %v7974 = vsel %vm7970, 65537, 0
    %v7975 = vunpack.c.l.b16 %v7971
    %v7976 = vunpack.c.l.b16 %v7972
    %v7977 = vunpack.c.l.b16 %v7973
    %v7978 = vunpack.c.l.b16 %v7974
    %v7979 = vpack.c.b16 %v7976, %v7975
    %v7980 = vpack.c.b16 %v7978, %v7977
    %v7982 = vshrl.u32 %v7979, 16
    %v7984 = vrot.slane %v7982, 2
    %v7985 = vshll.u32 %v7979, 16
    %v7987 = vrot.slane %v7985, 3
    %v7988 = vor.u32 %v7984, %v7987
    %v7990 = vshrl.u32 %v7980, 16
    %v7992 = vrot.slane %v7990, 2
    %v7993 = vshll.u32 %v7980, 16
    %v7995 = vrot.slane %v7993, 3
    %v7996 = vor.u32 %v7992, %v7995
    %v7997 = vsel %vm7701, %v7988, %v7996
    %vm7998 = vcmp.ne.s16.totalorder %v7988, 0
    %vm7999 = vcmp.ne.s16.totalorder %v7997, 0
    %vm8000 = vcmp.ne.s16.totalorder %v7996, 0
    %v8001 = vsel %vm7998, %v7952, 0
    %v8002 = vsel %vm7999, %v7953, 0
    %v8003 = vsel %vm8000, %v7954, 0
    %v8005 = vshrl.u32 %v8001, 16
    %v8007 = vrot.slane %v8005, 5
    %v8008 = vshll.u32 %v8001, 16
    %v8010 = vrot.slane %v8008, 6
    %v8011 = vor.u32 %v8007, %v8010
    %v8013 = vshrl.u32 %v8002, 16
    %v8015 = vrot.slane %v8013, 5
    %v8016 = vshll.u32 %v8002, 16
    %v8018 = vrot.slane %v8016, 6
    %v8019 = vor.u32 %v8015, %v8018
    %v8020 = vsel %vm7677, %v8011, %v8019
    %v8022 = vshrl.u32 %v8003, 16
    %v8024 = vrot.slane %v8022, 5
    %v8025 = vshll.u32 %v8003, 16
    %v8027 = vrot.slane %v8025, 6
    %v8028 = vor.u32 %v8024, %v8027
    %v8029 = vsel %vm7677, %v8019, %v8028
    %8032 = vst.msk [vmem:[#allocation7 + $0x18] sm:$0xff] %vm7167, %v8020
    %8033 = vst.msk [vmem:[#allocation7 + $0x40] sm:$0xff] %vm7167, %v8029
    %v8034 = vld [vmem:[#allocation6] sm:$0xc0]
    %v8035 = vld [vmem:[#allocation6 + $0x8] sm:$0xff]
    %v8036 = vld [vmem:[#allocation6 + $0x10] sm:$0x3f]
    %vm8037 = vmand %vm7467, %vm7491
    %vm8038 = vmand %vm7468, %vm7492
    %vm8039 = vmand %vm7469, %vm7493
    %vm8040 = vmand %vm7470, %vm7494
    %v8041 = vsel %vm8037, 1, 0
    %v8042 = vsel %vm8038, 1, 0
    %v8043 = vsel %vm8039, 1, 0
    %v8044 = vsel %vm8040, 1, 0
    %vm8045 = vcmp.eq.s32.totalorder %v8041, 1
    %vm8046 = vcmp.eq.s32.totalorder %v8042, 1
    %vm8047 = vcmp.eq.s32.totalorder %v8043, 1
    %vm8048 = vcmp.eq.s32.totalorder %v8044, 1
    %vm8049 = vmpackc.low %vm8045, %vm8045
    %vm8050 = vmpackc.low %vm8046, %vm8046
    %vm8051 = vmpackc.low %vm8047, %vm8047
    %vm8052 = vmpackc.low %vm8048, %vm8048
    %v8053 = vsel %vm8049, 65537, 0
    %v8054 = vsel %vm8050, 65537, 0
    %v8055 = vsel %vm8051, 65537, 0
    %v8056 = vsel %vm8052, 65537, 0
    %v8057 = vunpack.c.l.b16 %v8053
    %v8058 = vunpack.c.l.b16 %v8054
    %v8059 = vunpack.c.l.b16 %v8055
    %v8060 = vunpack.c.l.b16 %v8056
    %v8061 = vpack.c.b16 %v8058, %v8057
    %v8062 = vpack.c.b16 %v8060, %v8059
    %v8063 = vrot.slane %v8061, 2
    %v8064 = vrot.slane %v8062, 2
    %v8065 = vsel %vm7633, %v8063, %v8064
    %vm8066 = vcmp.ne.s16.totalorder %v8063, 0
    %vm8067 = vcmp.ne.s16.totalorder %v8065, 0
    %vm8068 = vcmp.ne.s16.totalorder %v8064, 0
    %v8069 = vsel %vm8066, %v8034, 0
    %v8070 = vsel %vm8067, %v8035, 0
    %v8071 = vsel %vm8068, %v8036, 0
    %v8075 = vrot.slane %v8069, 6
    %v8076 = vrot.slane %v8070, 6
    %v8077 = vsel %vm7620, %v8075, %v8076
    %v8078 = vrot.slane %v8071, 6
    %v8079 = vsel %vm7620, %v8076, %v8078
    %8080 = vrot.lane.b32.xlu0 %v8077, 64
    %v8081 = vpop.permute.xlu0 %8080
    %8082 = vrot.lane.b32.xlu0 %v8079, 64
    %v8083 = vpop.permute.xlu0 %8082
    %8086 = vst.msk [vmem:[#allocation7 + $0x18] sm:$0xff] %vm7645, %v8081
    %8087 = vst.msk [vmem:[#allocation7 + $0x40] sm:$0xff] %vm7645, %v8083
    %v8088 = vld [vmem:[#allocation6] sm:$0xc0]
    %v8089 = vld [vmem:[#allocation6 + $0x8] sm:$0xff]
    %v8090 = vld [vmem:[#allocation6 + $0x10] sm:$0x7f]
    %vm8091 = vmand %vm7467, %vm7503
    %vm8092 = vmand %vm7468, %vm7504
    %vm8093 = vmand %vm7469, %vm7505
    %vm8094 = vmand %vm7470, %vm7506
    %v8095 = vsel %vm8091, 1, 0
    %v8096 = vsel %vm8092, 1, 0
    %v8097 = vsel %vm8093, 1, 0
    %v8098 = vsel %vm8094, 1, 0
    %vm8099 = vcmp.eq.s32.totalorder %v8095, 1
    %vm8100 = vcmp.eq.s32.totalorder %v8096, 1
    %vm8101 = vcmp.eq.s32.totalorder %v8097, 1
    %vm8102 = vcmp.eq.s32.totalorder %v8098, 1
    %vm8103 = vmpackc.low %vm8099, %vm8099
    %vm8104 = vmpackc.low %vm8100, %vm8100
    %vm8105 = vmpackc.low %vm8101, %vm8101
    %vm8106 = vmpackc.low %vm8102, %vm8102
    %v8107 = vsel %vm8103, 65537, 0
    %v8108 = vsel %vm8104, 65537, 0
    %v8109 = vsel %vm8105, 65537, 0
    %v8110 = vsel %vm8106, 65537, 0
    %v8111 = vunpack.c.l.b16 %v8107
    %v8112 = vunpack.c.l.b16 %v8108
    %v8113 = vunpack.c.l.b16 %v8109
    %v8114 = vunpack.c.l.b16 %v8110
    %v8115 = vpack.c.b16 %v8112, %v8111
    %v8116 = vpack.c.b16 %v8114, %v8113
    %v8118 = vshrl.u32 %v8115, 16
    %v8120 = vrot.slane %v8118, 1
    %v8121 = vshll.u32 %v8115, 16
    %v8123 = vrot.slane %v8121, 2
    %v8124 = vor.u32 %v8120, %v8123
    %v8126 = vshrl.u32 %v8116, 16
    %v8128 = vrot.slane %v8126, 1
    %v8129 = vshll.u32 %v8116, 16
    %v8131 = vrot.slane %v8129, 2
    %v8132 = vor.u32 %v8128, %v8131
    %v8133 = vsel %vm7560, %v8124, %v8132
    %vm8134 = vcmp.ne.s16.totalorder %v8124, 0
    %vm8135 = vcmp.ne.s16.totalorder %v8133, 0
    %vm8136 = vcmp.ne.s16.totalorder %v8132, 0
    %v8137 = vsel %vm8134, %v8088, 0
    %v8138 = vsel %vm8135, %v8089, 0
    %v8139 = vsel %vm8136, %v8090, 0
    %v8141 = vshrl.u32 %v8137, 16
    %v8143 = vrot.slane %v8141, 6
    %v8144 = vshll.u32 %v8137, 16
    %v8146 = vrot.slane %v8144, 7
    %v8147 = vor.u32 %v8143, %v8146
    %v8149 = vshrl.u32 %v8138, 16
    %v8151 = vrot.slane %v8149, 6
    %v8152 = vshll.u32 %v8138, 16
    %v8154 = vrot.slane %v8152, 7
    %v8155 = vor.u32 %v8151, %v8154
    %v8156 = vsel %vm7536, %v8147, %v8155
    %v8158 = vshrl.u32 %v8139, 16
    %v8160 = vrot.slane %v8158, 6
    %v8161 = vshll.u32 %v8139, 16
    %v8163 = vrot.slane %v8161, 7
    %v8164 = vor.u32 %v8160, %v8163
    %v8165 = vsel %vm7536, %v8155, %v8164
    %8168 = vst.msk [vmem:[#allocation7 + $0x20] sm:$0xff] %vm7167, %v8156
    %8169 = vst.msk [vmem:[#allocation7 + $0x48] sm:$0xff] %vm7167, %v8165
    %v8170 = vld [vmem:[#allocation7] sm:$0xff]
    %v8171 = vld [vmem:[#allocation7 + $0x8] sm:$0xff]
    %v8172 = vld [vmem:[#allocation7 + $0x10] sm:$0xff]
    %v8173 = vld [vmem:[#allocation7 + $0x18] sm:$0xff]
    %v8174 = vld [vmem:[#allocation7 + $0x20] sm:$0xff]
    %v8175 = vld [vmem:[#allocation7 + $0x28] sm:$0xff]
    %v8176 = vld [vmem:[#allocation7 + $0x30] sm:$0xff]
    %v8177 = vld [vmem:[#allocation7 + $0x38] sm:$0xff]
    %v8178 = vld [vmem:[#allocation7 + $0x40] sm:$0xff]
    %v8179 = vld [vmem:[#allocation7 + $0x48] sm:$0xff]
    %v8180 = vld [vmem:[%s7] sm:$0xf]
    %v8181 = vld [vmem:[%s7 + $0x4] sm:$0xf]
    %v8182 = vld [vmem:[%s7 + $0x8] sm:$0xf]
    %v8183 = vld [vmem:[%s7 + $0xc] sm:$0xf]
    %v8184 = vld [vmem:[%s7 + $0x10] sm:$0xf]
    %v8185 = vld [vmem:[%s7 + $0x14] sm:$0xf]
    %v8186 = vld [vmem:[%s7 + $0x18] sm:$0xf]
    %v8187 = vld [vmem:[%s7 + $0x1c] sm:$0xf]
    %v8188 = vld [vmem:[%s7 + $0x20] sm:$0xf]
    %v8189 = vld [vmem:[%s7 + $0x24] sm:$0xf]
    %v8190 = vld [vmem:[%s7 + $0x28] sm:$0xf]
    %v8191 = vld [vmem:[%s7 + $0x2c] sm:$0xf]
    %v8192 = vld [vmem:[%s7 + $0x30] sm:$0xf]
    %v8193 = vld [vmem:[%s7 + $0x34] sm:$0xf]
    %v8194 = vld [vmem:[%s7 + $0x38] sm:$0xf]
    %v8195 = vld [vmem:[%s7 + $0x3c] sm:$0xf]
    %v8196 = vld [vmem:[%s7 + $0x40] sm:$0xf]
    %v8197 = vld [vmem:[%s7 + $0x44] sm:$0xf]
    %v8198 = vld [vmem:[%s7 + $0x48] sm:$0xf]
    %v8199 = vld [vmem:[%s7 + $0x4c] sm:$0xf]
    %v8200 = vld [vmem:[%s7 + $0x50] sm:$0xf]
    %v8201 = vld [vmem:[%s7 + $0x54] sm:$0xf]
    %v8202 = vld [vmem:[%s7 + $0x58] sm:$0xf]
    %v8203 = vld [vmem:[%s7 + $0x5c] sm:$0xf]
    %v8204 = vld [vmem:[%s7 + $0x60] sm:$0xf]
    %v8205 = vld [vmem:[%s7 + $0x64] sm:$0xf]
    %v8206 = vld [vmem:[%s7 + $0x68] sm:$0xf]
    %v8207 = vld [vmem:[%s7 + $0x6c] sm:$0xf]
    %v8208 = vld [vmem:[%s7 + $0x70] sm:$0xf]
    %v8209 = vld [vmem:[%s7 + $0x74] sm:$0xf]
    %v8210 = vld [vmem:[%s7 + $0x78] sm:$0xf]
    %v8211 = vld [vmem:[%s7 + $0x7c] sm:$0xf]
    %v8212 = vld [vmem:[%s7 + $0x80] sm:$0xf]
    %v8213 = vld [vmem:[%s7 + $0x84] sm:$0xf]
    %v8214 = vld [vmem:[%s7 + $0x88] sm:$0xf]
    %v8215 = vld [vmem:[%s7 + $0x8c] sm:$0xf]
    %v8216 = vld [vmem:[%s7 + $0x90] sm:$0xf]
    %v8217 = vld [vmem:[%s7 + $0x94] sm:$0xf]
    %v8218 = vld [vmem:[%s7 + $0x98] sm:$0xf]
    %v8219 = vld [vmem:[%s7 + $0x9c] sm:$0xf]
    %v8220 = vld [vmem:[%s7 + $0xa0] sm:$0xf]
    %v8221 = vld [vmem:[%s7 + $0xa4] sm:$0xf]
    %v8222 = vld [vmem:[%s7 + $0xa8] sm:$0xf]
    %v8223 = vld [vmem:[%s7 + $0xac] sm:$0xf]
    %v8224 = vld [vmem:[%s7 + $0xb0] sm:$0xf]
    %v8225 = vld [vmem:[%s7 + $0xb4] sm:$0xf]
    %v8226 = vld [vmem:[%s7 + $0xb8] sm:$0xf]
    %v8227 = vld [vmem:[%s7 + $0xbc] sm:$0xf]
    %v8228 = vld [vmem:[%s7 + $0xc0] sm:$0xf]
    %v8229 = vld [vmem:[%s7 + $0xc4] sm:$0xf]
    %v8230 = vld [vmem:[%s7 + $0xc8] sm:$0xf]
    %v8231 = vld [vmem:[%s7 + $0xcc] sm:$0xf]
    %v8232 = vld [vmem:[%s7 + $0xd0] sm:$0xf]
    %v8233 = vld [vmem:[%s7 + $0xd4] sm:$0xf]
    %v8234 = vld [vmem:[%s7 + $0xd8] sm:$0xf]
    %v8235 = vld [vmem:[%s7 + $0xdc] sm:$0xf]
    %v8236 = vld [vmem:[%s7 + $0xe0] sm:$0xf]
    %v8237 = vld [vmem:[%s7 + $0xe4] sm:$0xf]
    %v8238 = vld [vmem:[%s7 + $0xe8] sm:$0xf]
    %v8239 = vld [vmem:[%s7 + $0xec] sm:$0xf]
    %v8240 = vld [vmem:[%s7 + $0xf0] sm:$0xf]
    %v8241 = vld [vmem:[%s7 + $0xf4] sm:$0xf]
    %v8242 = vld [vmem:[%s7 + $0xf8] sm:$0xf]
    %v8243 = vld [vmem:[%s7 + $0xfc] sm:$0xf]
    %v8244 = vld [vmem:[%s7 + $0x100] sm:$0xf]
    %v8245 = vld [vmem:[%s7 + $0x104] sm:$0xf]
    %v8246 = vld [vmem:[%s7 + $0x108] sm:$0xf]
    %v8247 = vld [vmem:[%s7 + $0x10c] sm:$0xf]
    %v8248 = vld [vmem:[%s7 + $0x110] sm:$0xf]
    %v8249 = vld [vmem:[%s7 + $0x114] sm:$0xf]
    %v8250 = vld [vmem:[%s7 + $0x118] sm:$0xf]
    %v8251 = vld [vmem:[%s7 + $0x11c] sm:$0xf]
    %v8324 = vunpack.c.l.b16 %v8180
    %v8325 = vunpack.c.l.b16 %v8181
    %v8326 = vunpack.c.l.b16 %v8182
    %v8327 = vunpack.c.l.b16 %v8183
    %v8328 = vunpack.c.l.b16 %v8184
    %v8329 = vunpack.c.l.b16 %v8185
    %v8330 = vunpack.c.l.b16 %v8186
    %v8331 = vunpack.c.l.b16 %v8187
    %v8332 = vunpack.c.l.b16 %v8188
    %v8333 = vunpack.c.l.b16 %v8189
    %v8334 = vunpack.c.l.b16 %v8190
    %v8335 = vunpack.c.l.b16 %v8191
    %v8336 = vunpack.c.l.b16 %v8192
    %v8337 = vunpack.c.l.b16 %v8193
    %v8338 = vunpack.c.l.b16 %v8194
    %v8339 = vunpack.c.l.b16 %v8195
    %v8340 = vunpack.c.l.b16 %v8196
    %v8341 = vunpack.c.l.b16 %v8197
    %v8342 = vunpack.c.l.b16 %v8198
    %v8343 = vunpack.c.l.b16 %v8199
    %v8344 = vunpack.c.l.b16 %v8200
    %v8345 = vunpack.c.l.b16 %v8201
    %v8346 = vunpack.c.l.b16 %v8202
    %v8347 = vunpack.c.l.b16 %v8203
    %v8348 = vunpack.c.l.b16 %v8204
    %v8349 = vunpack.c.l.b16 %v8205
    %v8350 = vunpack.c.l.b16 %v8206
    %v8351 = vunpack.c.l.b16 %v8207
    %v8352 = vunpack.c.l.b16 %v8208
    %v8353 = vunpack.c.l.b16 %v8209
    %v8354 = vunpack.c.l.b16 %v8210
    %v8355 = vunpack.c.l.b16 %v8211
    %v8356 = vunpack.c.l.b16 %v8212
    %v8357 = vunpack.c.l.b16 %v8213
    %v8358 = vunpack.c.l.b16 %v8214
    %v8359 = vunpack.c.l.b16 %v8215
    %v8360 = vunpack.c.l.b16 %v8216
    %v8361 = vunpack.c.l.b16 %v8217
    %v8362 = vunpack.c.l.b16 %v8218
    %v8363 = vunpack.c.l.b16 %v8219
    %v8364 = vunpack.c.l.b16 %v8220
    %v8365 = vunpack.c.l.b16 %v8221
    %v8366 = vunpack.c.l.b16 %v8222
    %v8367 = vunpack.c.l.b16 %v8223
    %v8368 = vunpack.c.l.b16 %v8224
    %v8369 = vunpack.c.l.b16 %v8225
    %v8370 = vunpack.c.l.b16 %v8226
    %v8371 = vunpack.c.l.b16 %v8227
    %v8372 = vunpack.c.l.b16 %v8228
    %v8373 = vunpack.c.l.b16 %v8229
    %v8374 = vunpack.c.l.b16 %v8230
    %v8375 = vunpack.c.l.b16 %v8231
    %v8376 = vunpack.c.l.b16 %v8232
    %v8377 = vunpack.c.l.b16 %v8233
    %v8378 = vunpack.c.l.b16 %v8234
    %v8379 = vunpack.c.l.b16 %v8235
    %v8380 = vunpack.c.l.b16 %v8236
    %v8381 = vunpack.c.l.b16 %v8237
    %v8382 = vunpack.c.l.b16 %v8238
    %v8383 = vunpack.c.l.b16 %v8239
    %v8384 = vunpack.c.l.b16 %v8240
    %v8385 = vunpack.c.l.b16 %v8241
    %v8386 = vunpack.c.l.b16 %v8242
    %v8387 = vunpack.c.l.b16 %v8243
    %v8388 = vunpack.c.l.b16 %v8244
    %v8389 = vunpack.c.l.b16 %v8245
    %v8390 = vunpack.c.l.b16 %v8246
    %v8391 = vunpack.c.l.b16 %v8247
    %v8392 = vunpack.c.l.b16 %v8248
    %v8393 = vunpack.c.l.b16 %v8249
    %v8394 = vunpack.c.l.b16 %v8250
    %v8395 = vunpack.c.l.b16 %v8251
    %v8396 = vpack.c.b16 %v8325, %v8324
    %v8397 = vpack.c.b16 %v8327, %v8326
    %v8398 = vpack.c.b16 %v8329, %v8328
    %v8399 = vpack.c.b16 %v8331, %v8330
    %v8400 = vpack.c.b16 %v8333, %v8332
    %v8401 = vpack.c.b16 %v8335, %v8334
    %v8402 = vpack.c.b16 %v8337, %v8336
    %v8403 = vpack.c.b16 %v8339, %v8338
    %v8404 = vpack.c.b16 %v8341, %v8340
    %v8405 = vpack.c.b16 %v8343, %v8342
    %v8406 = vpack.c.b16 %v8345, %v8344
    %v8407 = vpack.c.b16 %v8347, %v8346
    %v8408 = vpack.c.b16 %v8349, %v8348
    %v8409 = vpack.c.b16 %v8351, %v8350
    %v8410 = vpack.c.b16 %v8353, %v8352
    %v8411 = vpack.c.b16 %v8355, %v8354
    %v8412 = vpack.c.b16 %v8357, %v8356
    %v8413 = vpack.c.b16 %v8359, %v8358
    %v8414 = vpack.c.b16 %v8361, %v8360
    %v8415 = vpack.c.b16 %v8363, %v8362
    %v8416 = vpack.c.b16 %v8365, %v8364
    %v8417 = vpack.c.b16 %v8367, %v8366
    %v8418 = vpack.c.b16 %v8369, %v8368
    %v8419 = vpack.c.b16 %v8371, %v8370
    %v8420 = vpack.c.b16 %v8373, %v8372
    %v8421 = vpack.c.b16 %v8375, %v8374
    %v8422 = vpack.c.b16 %v8377, %v8376
    %v8423 = vpack.c.b16 %v8379, %v8378
    %v8424 = vpack.c.b16 %v8381, %v8380
    %v8425 = vpack.c.b16 %v8383, %v8382
    %v8426 = vpack.c.b16 %v8385, %v8384
    %v8427 = vpack.c.b16 %v8387, %v8386
    %v8428 = vpack.c.b16 %v8389, %v8388
    %v8429 = vpack.c.b16 %v8391, %v8390
    %v8430 = vpack.c.b16 %v8393, %v8392
    %v8431 = vpack.c.b16 %v8395, %v8394
    %v8469 = vsel %vm7167, %v8174, 0
    %v8472 = vsel %vm7167, %v8179, 0
    %8474 = vmatprep.subr.bf16.mxu0 0
    %8475 = vmatpush1.bf16.msra.mxu0 %v8396
    %8476 = vmatprep.subr.bf16.mxu0 0
    %8477 = vmatpush1.bf16.msra.mxu0 %v8397
    %8478 = vmatprep.subr.bf16.mxu0 0
    %8479 = vmatpush1.bf16.msra.mxu0 %v8398
    %8480 = vmatprep.subr.bf16.mxu0 0
    %8481 = vmatpush1.bf16.msra.mxu0 %v8399
    %8482 = vmatprep.subr.bf16.mxu0 0
    %8483 = vmatpush1.bf16.msra.mxu0 %v8400
    %8484 = vmatprep.subr.bf16.mxu0 0
    %8485 = vmatpush1.bf16.msra.mxu0 %v8401
    %8486 = vmatprep.subr.bf16.mxu0 0
    %8487 = vmatpush1.bf16.msra.mxu0 %v8402
    %8488 = vmatprep.subr.bf16.mxu0 0
    %8489 = vmatpush1.bf16.msra.mxu0 %v8403
    %8490 = vmatprep.subr.bf16.mxu0 0
    %8491 = vmatpush1.bf16.msra.mxu0 %v8404
    %8492 = vmatprep.subr.bf16.mxu0 0
    %8493 = vmatpush1.bf16.msra.mxu0 %v8405
    %8494 = vmatprep.subr.bf16.mxu0 0
    %8495 = vmatpush1.bf16.msra.mxu0 %v8406
    %8496 = vmatprep.subr.bf16.mxu0 0
    %8497 = vmatpush1.bf16.msra.mxu0 %v8407
    %8498 = vmatprep.subr.bf16.mxu0 0
    %8499 = vmatpush1.bf16.msra.mxu0 %v8408
    %8500 = vmatprep.subr.bf16.mxu0 0
    %8501 = vmatpush1.bf16.msra.mxu0 %v8409
    %8502 = vmatprep.subr.bf16.mxu0 0
    %8503 = vmatpush1.bf16.msra.mxu0 %v8410
    %8504 = vmatprep.subr.bf16.mxu0 0
    %8505 = vmatpush1.bf16.msra.mxu0 %v8411
    %8506 = vmatprep.mubr.bf16.mxu0 %v8171
    %8507 = vmatmul.mubr.bf16.gmra.mrb[0].mxu0 %v8170
    %v8508 = vpop.f32.mrb[0].mxu0
    %v8509 = vadd.f32 0.0, %v8508
    %v8510 = vpop.f32.mrb[0].mxu0
    %v8511 = vpop.f32.mrb[0].mxu0
    %v8512 = vadd.f32 0.0, %v8511
    %v8513 = vpop.f32.mrb[0].mxu0
    %8514 = vmatprep.mubr.bf16.mxu0 %v8176
    %8515 = vmatmul.mubr.bf16.gmra.mrb[0].mxu0 %v8175
    %v8516 = vpop.f32.mrb[0].mxu0
    %v8517 = vadd.f32 0.0, %v8516
    %v8518 = vpop.f32.mrb[0].mxu0
    %v8519 = vpop.f32.mrb[0].mxu0
    %v8520 = vadd.f32 0.0, %v8519
    %v8521 = vpop.f32.mrb[0].mxu0
    %8522 = vdwg.mxu0
    %8523 = vmatprep.subr.bf16.mxu0 0
    %8524 = vmatpush1.bf16.msra.mxu0 %v8412
    %8525 = vmatprep.subr.bf16.mxu0 0
    %8526 = vmatpush1.bf16.msra.mxu0 %v8413
    %8527 = vmatprep.subr.bf16.mxu0 0
    %8528 = vmatpush1.bf16.msra.mxu0 %v8414
    %8529 = vmatprep.subr.bf16.mxu0 0
    %8530 = vmatpush1.bf16.msra.mxu0 %v8415
    %8531 = vmatprep.subr.bf16.mxu0 0
    %8532 = vmatpush1.bf16.msra.mxu0 %v8416
    %8533 = vmatprep.subr.bf16.mxu0 0
    %8534 = vmatpush1.bf16.msra.mxu0 %v8417
    %8535 = vmatprep.subr.bf16.mxu0 0
    %8536 = vmatpush1.bf16.msra.mxu0 %v8418
    %8537 = vmatprep.subr.bf16.mxu0 0
    %8538 = vmatpush1.bf16.msra.mxu0 %v8419
    %8539 = vmatprep.subr.bf16.mxu0 0
    %8540 = vmatpush1.bf16.msra.mxu0 %v8420
    %8541 = vmatprep.subr.bf16.mxu0 0
    %8542 = vmatpush1.bf16.msra.mxu0 %v8421
    %8543 = vmatprep.subr.bf16.mxu0 0
    %8544 = vmatpush1.bf16.msra.mxu0 %v8422
    %8545 = vmatprep.subr.bf16.mxu0 0
    %8546 = vmatpush1.bf16.msra.mxu0 %v8423
    %8547 = vmatprep.subr.bf16.mxu0 0
    %8548 = vmatpush1.bf16.msra.mxu0 %v8424
    %8549 = vmatprep.subr.bf16.mxu0 0
    %8550 = vmatpush1.bf16.msra.mxu0 %v8425
    %8551 = vmatprep.subr.bf16.mxu0 0
    %8552 = vmatpush1.bf16.msra.mxu0 %v8426
    %8553 = vmatprep.subr.bf16.mxu0 0
    %8554 = vmatpush1.bf16.msra.mxu0 %v8427
    %8555 = vmatprep.mubr.bf16.mxu0 %v8173
    %8556 = vmatmul.mubr.bf16.gmra.mrb[0].mxu0 %v8172
    %v8557 = vpop.f32.mrb[0].mxu0
    %v8558 = vadd.f32 %v8509, %v8557
    %v8559 = vpop.f32.mrb[0].mxu0
    %v8560 = vpop.f32.mrb[0].mxu0
    %v8561 = vadd.f32 %v8512, %v8560
    %v8562 = vpop.f32.mrb[0].mxu0
    %8563 = vmatprep.mubr.bf16.mxu0 %v8178
    %8564 = vmatmul.mubr.bf16.gmra.mrb[0].mxu0 %v8177
    %v8565 = vpop.f32.mrb[0].mxu0
    %v8566 = vadd.f32 %v8517, %v8565
    %v8567 = vpop.f32.mrb[0].mxu0
    %v8568 = vpop.f32.mrb[0].mxu0
    %v8569 = vadd.f32 %v8520, %v8568
    %v8570 = vpop.f32.mrb[0].mxu0
    %8571 = vdwg.mxu0
    %8572 = vmatprep.subr.bf16.mxu0 0
    %8573 = vmatpush1.bf16.msra.mxu0 %v8428
    %8574 = vmatprep.subr.bf16.mxu0 0
    %8575 = vmatpush1.bf16.msra.mxu0 %v8429
    %8576 = vmatprep.subr.bf16.mxu0 0
    %8577 = vmatpush1.bf16.msra.mxu0 %v8430
    %8578 = vmatprep.subr.bf16.mxu0 0
    %8579 = vmatpush1.bf16.msra.mxu0 %v8431
    %8580 = vmatprep.subr.bf16.mxu0 0
    %8581 = vmatpush1.bf16.msra.mxu0 0
    %8582 = vmatprep.subr.bf16.mxu0 0
    %8583 = vmatpush1.bf16.msra.mxu0 0
    %8584 = vmatprep.subr.bf16.mxu0 0
    %8585 = vmatpush1.bf16.msra.mxu0 0
    %8586 = vmatprep.subr.bf16.mxu0 0
    %8587 = vmatpush1.bf16.msra.mxu0 0
    %8588 = vmatprep.subr.bf16.mxu0 0
    %8589 = vmatpush1.bf16.msra.mxu0 0
    %8590 = vmatprep.subr.bf16.mxu0 0
    %8591 = vmatpush1.bf16.msra.mxu0 0
    %8592 = vmatprep.subr.bf16.mxu0 0
    %8593 = vmatpush1.bf16.msra.mxu0 0
    %8594 = vmatprep.subr.bf16.mxu0 0
    %8595 = vmatpush1.bf16.msra.mxu0 0
    %8596 = vmatprep.subr.bf16.mxu0 0
    %8597 = vmatpush1.bf16.msra.mxu0 0
    %8598 = vmatprep.subr.bf16.mxu0 0
    %8599 = vmatpush1.bf16.msra.mxu0 0
    %8600 = vmatprep.subr.bf16.mxu0 0
    %8601 = vmatpush1.bf16.msra.mxu0 0
    %8602 = vmatprep.subr.bf16.mxu0 0
    %8603 = vmatpush1.bf16.msra.mxu0 0
    %8604 = vmatprep.mubr.bf16.mxu0 0
    %8605 = vmatmul.mubr.bf16.gmra.mrb[0].mxu0 %v8469
    %v8606 = vpop.f32.mrb[0].mxu0
    %v8607 = vadd.f32 %v8558, %v8606
    %v8608 = vpop.f32.mrb[0].mxu0
    %v8609 = vpop.f32.mrb[0].mxu0
    %v8610 = vadd.f32 %v8561, %v8609
    %v8611 = vpop.f32.mrb[0].mxu0
    %8612 = vmatprep.mubr.bf16.mxu0 0
    %8613 = vmatmul.mubr.bf16.gmra.mrb[0].mxu0 %v8472
    %v8614 = vpop.f32.mrb[0].mxu0
    %v8615 = vadd.f32 %v8566, %v8614
    %v8616 = vpop.f32.mrb[0].mxu0
    %v8617 = vpop.f32.mrb[0].mxu0
    %v8618 = vadd.f32 %v8569, %v8617
    %v8619 = vpop.f32.mrb[0].mxu0
    %8620 = vdwg.mxu0
    %v8621 = vld [vmem:[%s8] sm:$0x1]
    %v8623 = vlaneseq
    %v8624 = vshrl.u32 %v8623, 7
    %v8625 = vsub.s32 0, %v8624
    %v8626 = vrot.slane %v8621, %v8625
    %v8628 = vmul.f32 %v8607, %v8626
    %v8629 = vmul.f32 %v8610, %v8626
    %v8630 = vmul.f32 %v8615, %v8626
    %v8631 = vmul.f32 %v8618, %v8626
    %v8632 = vld [vmem:[%s9] sm:$0x1]
    %v8634 = vlaneseq
    %v8635 = vshrl.u32 %v8634, 7
    %v8636 = vsub.s32 0, %v8635
    %v8637 = vrot.slane %v8632, %v8636
    %v8639 = vadd.f32 %v8628, %v8637
    %v8640 = vadd.f32 %v8629, %v8637
    %v8641 = vadd.f32 %v8630, %v8637
    %v8642 = vadd.f32 %v8631, %v8637
    %vm8643 = vcmp.gt.f32.partialorder %v8639, 0.0
    %vm8644 = vcmp.gt.f32.partialorder %v8640, 0.0
    %vm8645 = vcmp.gt.f32.partialorder %v8641, 0.0
    %vm8646 = vcmp.gt.f32.partialorder %v8642, 0.0
    %v8647 = vmul.f32 %v8639, 0.1
    %v8648 = vmul.f32 %v8640, 0.1
    %v8649 = vmul.f32 %v8641, 0.1
    %v8650 = vmul.f32 %v8642, 0.1
    %v8651 = vsel %vm8643, %v8639, %v8647
    %v8652 = vsel %vm8644, %v8640, %v8648
    %v8653 = vsel %vm8645, %v8641, %v8649
    %v8654 = vsel %vm8646, %v8642, %v8650
    %v8655 = vpack.c.bf16 %v8652, %v8651
    %v8656 = vpack.c.bf16 %v8654, %v8653
    %v8659 = vunpack.c.l.b16 %v8655
    %v8660 = vunpack.c.h.b16 %v8655
    %v8661 = vunpack.c.l.b16 %v8656
    %v8662 = vunpack.c.h.b16 %v8656
    %v8663 = vpack.c.b16 %v8659, %v8659
    %v8664 = vpack.c.b16 %v8660, %v8660
    %v8665 = vpack.c.b16 %v8661, %v8661
    %v8666 = vpack.c.b16 %v8662, %v8662
    %vm8671 = vcmask 257024
    %8672 = vst.msk [vmem:[#allocation8] sm:$0xf] %vm8671, %v8663
    %8673 = vst.msk [vmem:[#allocation8 + $0x4] sm:$0xf] %vm8671, %v8664
    %8674 = vst.msk [vmem:[#allocation8 + $0x8] sm:$0xf] %vm8671, %v8665
    %8675 = vst.msk [vmem:[#allocation8 + $0xc] sm:$0xf] %vm8671, %v8666
    %8676 = vst.msk [vmem:[#allocation8 + $0x10] sm:$0xf] %vm8671, 0
    %v8677 = vld [vmem:[#allocation8] sm:$0xf]
    %v8678 = vld [vmem:[#allocation8 + $0x4] sm:$0xf]
    %v8679 = vld [vmem:[#allocation8 + $0x8] sm:$0xf]
    %v8680 = vld [vmem:[#allocation8 + $0xc] sm:$0xf]
    %v8681 = vld [vmem:[#allocation8 + $0x10] sm:$0x1]
    %v8687 = vunpack.c.l.b16 %v8677
    %v8688 = vunpack.c.l.b16 %v8678
    %v8689 = vunpack.c.l.b16 %v8679
    %v8690 = vunpack.c.l.b16 %v8680
    %v8691 = vunpack.c.l.b16 %v8681
    %v8692 = vpack.c.b16 %v8688, %v8687
    %v8693 = vpack.c.b16 %v8690, %v8689
    %v8694 = vpack.c.b16 %v8691, %v8691
    %v8696 = vshrl.u32 %v8692, 16
    %v8698 = vshll.u32 %v8692, 16
    %v8700 = vrot.slane %v8698, 1
    %v8701 = vor.u32 %v8696, %v8700
    %v8703 = vshll.u32 %v8693, 16
    %v8705 = vrot.slane %v8703, 1
    %v8706 = vsel %vm1551, %v8701, %v8705
    %v8707 = vshrl.u32 %v8693, 16
    %v8709 = vor.u32 %v8707, %v8705
    %v8711 = vshll.u32 %v8694, 16
    %v8713 = vrot.slane %v8711, 1
    %v8714 = vsel %vm1551, %v8709, %v8713
    %v8717 = vmax.bf16 %v8655, %v8706
    %v8718 = vmax.bf16 %v8656, %v8714
    %v8719 = vld [vmem:[#allocation8] sm:$0xc]
    %v8720 = vld [vmem:[#allocation8 + $0x10] sm:$0x3]
    %v8721 = vld [vmem:[#allocation8 + $0x10] sm:$0x7]
    %v8723 = vshrl.u32 %v8719, 16
    %v8725 = vrot.slane %v8723, 4
    %v8726 = vshll.u32 %v8719, 16
    %v8728 = vrot.slane %v8726, 5
    %v8729 = vor.u32 %v8725, %v8728
    %v8730 = vrot.slane %v8729, 4
    %v8732 = vshll.u32 %v8678, 16
    %v8734 = vrot.slane %v8732, 5
    %v8735 = vsel %vm1945, %v8730, %v8734
    %v8736 = vshrl.u32 %v8678, 16
    %v8738 = vrot.slane %v8736, 4
    %v8739 = vor.u32 %v8738, %v8734
    %v8740 = vrot.slane %v8739, 4
    %v8742 = vshll.u32 %v8679, 16
    %v8744 = vrot.slane %v8742, 5
    %v8745 = vsel %vm1945, %v8740, %v8744
    %v8746 = vshrl.u32 %v8679, 16
    %v8748 = vrot.slane %v8746, 4
    %v8749 = vor.u32 %v8748, %v8744
    %v8750 = vrot.slane %v8749, 4
    %v8752 = vshll.u32 %v8680, 16
    %v8754 = vrot.slane %v8752, 5
    %v8755 = vsel %vm1945, %v8750, %v8754
    %v8756 = vshrl.u32 %v8680, 16
    %v8758 = vrot.slane %v8756, 4
    %v8759 = vor.u32 %v8758, %v8754
    %v8760 = vrot.slane %v8759, 4
    %v8762 = vshll.u32 %v8721, 16
    %v8764 = vrot.slane %v8762, 5
    %v8765 = vsel %vm1945, %v8760, %v8764
    %v8766 = vshrl.u32 %v8721, 16
    %v8768 = vrot.slane %v8766, 4
    %v8769 = vor.u32 %v8768, %v8764
    %v8770 = vrot.slane %v8769, 4
    %v8776 = vmax.bf16 %v8719, %v8735
    %v8777 = vmax.bf16 %v8678, %v8745
    %v8778 = vmax.bf16 %v8679, %v8755
    %v8779 = vmax.bf16 %v8680, %v8765
    %v8780 = vmax.bf16 %v8720, %v8770
    %v8786 = vunpack.c.l.b16 %v8776
    %v8787 = vunpack.c.l.b16 %v8777
    %v8788 = vunpack.c.l.b16 %v8778
    %v8789 = vunpack.c.l.b16 %v8779
    %v8790 = vunpack.c.l.b16 %v8780
    %v8791 = vpack.c.b16 %v8787, %v8786
    %v8792 = vpack.c.b16 %v8789, %v8788
    %v8793 = vpack.c.b16 %v8790, %v8790
    %v8794 = vrot.slane %v8791, 2
    %v8795 = vrot.slane %v8792, 2
    %v8796 = vsel %vm7633, %v8794, %v8795
    %v8797 = vrot.slane %v8793, 2
    %v8798 = vsel %vm7633, %v8795, %v8797
    %v8801 = vmax.bf16 %v8717, %v8796
    %v8802 = vmax.bf16 %v8718, %v8798
    %v8803 = vld [vmem:[%s12] sm:$0xf]
    %vm8804 = vcmask 261120
    %v8806 = vsel %vm8804, %v8803, 0
    %8808 = vmatprep.subr.bf16.mxu0 0
    %8809 = vmatpush1.bf16.msra.mxu0 %v8801
    %8810 = vmatprep.subr.bf16.mxu0 0
    %8811 = vmatpush1.bf16.msra.mxu0 %v8802
    %8812 = vmatprep.subr.bf16.mxu0 0
    %8813 = vmatpush1.bf16.msra.mxu0 0
    %8814 = vmatprep.subr.bf16.mxu0 0
    %8815 = vmatpush1.bf16.msra.mxu0 0
    %8816 = vmatprep.subr.bf16.mxu0 0
    %8817 = vmatpush1.bf16.msra.mxu0 0
    %8818 = vmatprep.subr.bf16.mxu0 0
    %8819 = vmatpush1.bf16.msra.mxu0 0
    %8820 = vmatprep.subr.bf16.mxu0 0
    %8821 = vmatpush1.bf16.msra.mxu0 0
    %8822 = vmatprep.subr.bf16.mxu0 0
    %8823 = vmatpush1.bf16.msra.mxu0 0
    %8824 = vmatprep.subr.bf16.mxu0 0
    %8825 = vmatpush1.bf16.msra.mxu0 0
    %8826 = vmatprep.subr.bf16.mxu0 0
    %8827 = vmatpush1.bf16.msra.mxu0 0
    %8828 = vmatprep.subr.bf16.mxu0 0
    %8829 = vmatpush1.bf16.msra.mxu0 0
    %8830 = vmatprep.subr.bf16.mxu0 0
    %8831 = vmatpush1.bf16.msra.mxu0 0
    %8832 = vmatprep.subr.bf16.mxu0 0
    %8833 = vmatpush1.bf16.msra.mxu0 0
    %8834 = vmatprep.subr.bf16.mxu0 0
    %8835 = vmatpush1.bf16.msra.mxu0 0
    %8836 = vmatprep.subr.bf16.mxu0 0
    %8837 = vmatpush1.bf16.msra.mxu0 0
    %8838 = vmatprep.subr.bf16.mxu0 0
    %8839 = vmatpush1.bf16.msra.mxu0 0
    %8840 = vmatprep.mubr.bf16.mxu0 0
    %8841 = vmatmul.mubr.bf16.gmra.mrb[0].mxu0 %v8806
    %v8842 = vpop.f32.mrb[0].mxu0
    %v8843 = vadd.f32 0.0, %v8842
    %v8844 = vpop.f32.mrb[0].mxu0
    %v8845 = vpop.f32.mrb[0].mxu0
    %v8846 = vpop.f32.mrb[0].mxu0
    %8847 = vdwg.mxu0
    %8848 = vst.msk [vmem:[#allocation9] sm:$0xff] %vm8804, %v8843
    // Predicated region
    $region54: #{cnn_forward.1} parent=1 // pred_check
      _
    $region55: #{cnn_forward.1} parent=1 // pred_check_branch
      %8850 = sbr.rel (0) target = $region57
    $region56: #{cnn_forward.1} parent=1 // pred_region
      %s8852 = ssub.s32 128, 128
      %8853 = vsyncadd [#allocation10], %s8852
      %s8855 = sshll.u32 [#allocation9], 4
      %s8856 = int_to_ptr.vmem [resolvable:$true] %s8855
      %8858 = dma.vmem_to_hbm [thread:$0]  %s8856, 128, %s13, [#allocation10]
    $region57: #{cnn_forward.1} parent=1 // pred_fallthru
      _
    // Predicated region
    $region58: #{cnn_forward.1} parent=1 // pred_check
      _
    $region59: #{cnn_forward.1} parent=1 // pred_check_branch
      %8860 = sbr.rel (0) target = $region61
    $region60: #{cnn_forward.1} parent=1 // pred_region
      %8861 = dma.done [#allocation10], 128
    $region61: #{cnn_forward.1} parent=1 // pred_fallthru
      _
    %8862 = vsyncpa [#allocation10], 1

</llo_original>
